<compile_context>
chip_gen: v7x
topology: tpu7x:2x2x1
jax: 0.10.0
libtpu: 0.0.40
codegen_flags: <defaults>
</compile_context>

<pallas_src>
import jax
import jax.numpy as jnp
from jax import lax
from jax.experimental import pallas as pl
from jax.experimental.pallas import tpu as pltpu

LEAKY_SLOPE = 0.1
BN_EPS = 1e-5
LPAD = 16   # left W-pad of the bf16 conv scratch -> 16-sublane-aligned interior writes
PW = 8      # left W-pad of the f32 pool scratch -> 8-sublane-aligned interior writes


# --------------------------------------------------------------------------
# Kernel
# --------------------------------------------------------------------------
def _make_kernel(H, W, K, Cin, Cp, Cmax, Ho, Wo, P, act_dtype):
    """Builds the fused residual-block kernel for fixed static shapes (B=1/step)."""
    HW = H * W
    KK = K * K
    HP = H + 2 * P          # conv scratch rows
    HPOOL = H + 2           # pool scratch rows (1-row -inf border top & bottom)
    HS = 2 * Ho + 1         # pool rows consumed by the W-max stage

    def kernel(x_ref,             # (1, H, W, Cin)       unpadded input (bf16)
               w1_ref, bcat_ref,  # (KK*Cin, 2Cp) bf16, (1, 2Cp) f32  conv1 + fused 1x1 shortcut
               w2_ref, b2_ref,    # (KK*Cp, Cp)  bf16, (1, Cp) f32
               w3_ref, b3_ref,    # (KK*Cp, Cp)  bf16, (1, Cp) f32
               o_ref,             # (1, Ho, Wo*Cp) f32   lane-dense output slab
               pad_ref,           # (1, HP, WSc, Cmax)   act_dtype, zero-bordered conv scratch
               pool_ref):         # (1, HPOOL, WSp, Cp)  f32, -inf-bordered pool scratch
        WSc = pad_ref.shape[2]
        WSp = pool_ref.shape[2]

        # ---- per-step border-only init (cheap; keeps the grid megacore-safe) --
        pad_ref[:, :P, :, :] = jnp.zeros((1, P, WSc, Cmax), act_dtype)
        pad_ref[:, P + H:, :, :] = jnp.zeros((1, P, WSc, Cmax), act_dtype)
        pad_ref[:, P:P + H, LPAD - P:LPAD, :] = jnp.zeros((1, H, P, Cmax), act_dtype)
        pad_ref[:, P:P + H, LPAD + W:LPAD + W + P, :] = jnp.zeros((1, H, P, Cmax), act_dtype)

        pool_ref[:, 0:1, :, :] = jnp.full((1, 1, WSp, Cp), -jnp.inf, jnp.float32)
        pool_ref[:, 1 + H:, :, :] = jnp.full((1, HPOOL - 1 - H, WSp, Cp), -jnp.inf, jnp.float32)
        pool_ref[:, :, :PW, :] = jnp.full((1, HPOOL, PW, Cp), -jnp.inf, jnp.float32)
        pool_ref[:, :, PW + W:, :] = jnp.full((1, HPOOL, WSp - PW - W, Cp), -jnp.inf, jnp.float32)

        def conv_from_pad(w_ref, ci):
            # im2col: one (H*W, K*K*ci) slab -> a single MXU matmul.
            cols = [pad_ref[:, kh:kh + H, LPAD - P + kw:LPAD - P + kw + W, :ci]
                    for kh in range(K) for kw in range(K)]
            patches = jnp.concatenate(cols, axis=-1).reshape(HW, KK * ci)
            return jnp.dot(patches, w_ref[...], preferred_element_type=jnp.float32)

        # ---- stage the (unpadded) input into the zero-bordered conv scratch ---
        pad_ref[:, P:P + H, LPAD:LPAD + W, :Cin] = x_ref[...]

        # ---- conv1 (+ fused 1x1 projection shortcut) -> bias -> relu ----------
        y_all = conv_from_pad(w1_ref, Cin) + bcat_ref[...]
        y1 = jnp.maximum(y_all[:, :Cp], 0.0)          # relu(bn1(conv1(x)))
        sc = y_all[:, Cp:]                            # bnsc(conv1x1(x)), no relu

        # ---- conv2 -> bias -> relu ; += shortcut ; relu ------------------------
        pad_ref[:, P:P + H, LPAD:LPAD + W, :Cp] = (
            y1.reshape(1, H, W, Cp).astype(act_dtype))
        y2 = conv_from_pad(w2_ref, Cp) + b2_ref[...]
        y = jnp.maximum(jnp.maximum(y2, 0.0) + sc, 0.0)

        # ---- conv3 -> bias (no relu before the pool) ---------------------------
        pad_ref[:, P:P + H, LPAD:LPAD + W, :Cp] = (
            y.reshape(1, H, W, Cp).astype(act_dtype))
        y3 = conv_from_pad(w3_ref, Cp) + b3_ref[...]

        # ---- MaxPool2d(kernel=3, stride=2, pad=1) + LeakyReLU(0.1) -------------
        # Separable pool: W direction = 3 stride-2 sublane window reads of
        # exactly the Wo needed columns (down from 9 reads); H direction =
        # free leading-dim pair-selects over only the 2*Ho+1 needed rows.
        pool_ref[:, 1:1 + H, PW:PW + W, :] = y3.reshape(1, H, W, Cp)
        wmax = None
        for dw in range(3):
            win = pool_ref[:, 0:HS, pl.ds(PW - 1 + dw, Wo, 2), :]   # (1, HS, Wo, Cp)
            wmax = win if wmax is None else jnp.maximum(wmax, win)
        ev = wmax[:, 0:2 * Ho].reshape(1, Ho, 2, Wo, Cp)            # rows 2h, 2h+1
        bo = wmax[:, 1:2 * Ho + 1].reshape(1, Ho, 2, Wo, Cp)        # rows 2h+1, 2h+2
        fm = jnp.maximum(jnp.maximum(ev[:, :, 0], ev[:, :, 1]), bo[:, :, 1])
        fm = jnp.where(fm > 0, fm, LEAKY_SLOPE * fm)                # LeakyReLU(0.1)
        o_ref[...] = fm.reshape(1, Ho, Wo * Cp)                     # lane-dense store

    return kernel


# --------------------------------------------------------------------------
# Wrapper (layout change, BN folding into weights, pallas_call)
# --------------------------------------------------------------------------
def fold_bn(bn):
    scale = bn["g"] / jnp.sqrt(bn["v"] + BN_EPS)
    return scale, bn["b"] - bn["m"] * scale


def _vmem_limit_bytes():
    """Generation-aware VMEM budget (3/4 of per-core capacity, capped)."""
    cap = None
    try:
        cap = getattr(pltpu.get_tpu_info(), "vmem_capacity_bytes", None)
    except Exception:
        cap = None
    if not cap:
        cap = 64 * 1024 * 1024          # conservative default (v7x per-core)
    return int(min(cap * 3 // 4, 100 * 1024 * 1024))


def residual_block_forward(x_nchw, params):
    x = jnp.transpose(x_nchw, (0, 2, 3, 1)).astype(jnp.float32)    # NCHW -> NHWC
    N, H, W, Cin = x.shape
    K = params["w1"].shape[0]
    Cp = params["w1"].shape[3]
    P = K // 2
    Cmax = max(Cin, Cp)
    assert K % 2 == 1 and P <= 8 and P <= LPAD, "only small odd kernel_size supported"

    # --- fold BN scale into the conv weights (bias stays separate) -----------
    s1, b1 = fold_bn(params["bn1"])
    s2, b2 = fold_bn(params["bn2"])
    ssc, bsc = fold_bn(params["bnsc"])
    s3, b3 = fold_bn(params["bn3"])

    # conv1 and the 1x1 projection shortcut share the same input, so the
    # shortcut is fused as Cp extra output columns of conv1's im2col matmul
    # (its weights live only on the centre tap).
    wsc_full = jnp.zeros((K, K, Cin, Cp), jnp.float32)
    wsc_full = wsc_full.at[P, P].set(params["wsc"][0, 0] * ssc)
    w1cat = jnp.concatenate([params["w1"] * s1, wsc_full], axis=-1)
    w1cat = w1cat.reshape(K * K * Cin, 2 * Cp)
    bcat = jnp.concatenate([b1, bsc]).reshape(1, 2 * Cp)
    w2f = (params["w2"] * s2).reshape(K * K * Cp, Cp)
    w3f = (params["w3"] * s3).reshape(K * K * Cp, Cp)
    b2r = b2.reshape(1, Cp)
    b3r = b3.reshape(1, Cp)

    # bf16 matmul operands (f32 MXU accumulation; elementwise math stays f32).
    # No host-side pad: the image is staged into the zero-bordered scratch in-kernel.
    mmdt = jnp.bfloat16
    x_bf = x.astype(mmdt)
    w1cat = w1cat.astype(mmdt)
    w2f = w2f.astype(mmdt)
    w3f = w3f.astype(mmdt)

    Ho = (H + 2 - 3) // 2 + 1
    Wo = (W + 2 - 3) // 2 + 1

    WS_conv = LPAD + W + 8          # bf16 conv scratch width (>= P zero cols on right)
    WS_pool = PW + W + 8            # f32 pool scratch width (>= 1 -inf col on right)
    HP = H + 2 * P
    HPOOL = H + 2

    def full_spec(arr):
        nd = arr.ndim
        return pl.BlockSpec(arr.shape, lambda n, _nd=nd: (0,) * _nd)

    kernel = _make_kernel(H, W, K, Cin, Cp, Cmax, Ho, Wo, P, mmdt)

    out = pl.pallas_call(
        kernel,
        out_shape=jax.ShapeDtypeStruct((N, Ho, Wo * Cp), jnp.float32),
        grid_spec=pltpu.PrefetchScalarGridSpec(
            num_scalar_prefetch=0,
            grid=(N,),                       # one image per step: megacore + DMA overlap
            in_specs=[
                pl.BlockSpec((1, H, W, Cin), lambda n: (n, 0, 0, 0)),
                full_spec(w1cat), full_spec(bcat),
                full_spec(w2f), full_spec(b2r),
                full_spec(w3f), full_spec(b3r),
            ],
            out_specs=pl.BlockSpec((1, Ho, Wo * Cp), lambda n: (n, 0, 0)),
            scratch_shapes=[
                pltpu.VMEM((1, HP, WS_conv, Cmax), mmdt),        # conv pad buf
                pltpu.VMEM((1, HPOOL, WS_pool, Cp), jnp.float32),  # pool pad buf
            ],
        ),
        compiler_params=pltpu.CompilerParams(
            # Borders are re-initialised every step, so the batch axis is a
            # true parallel dimension (both TensorCores on v7x).
            dimension_semantics=("parallel",),
            vmem_limit_bytes=_vmem_limit_bytes(),
        ),
    )(x_bf, w1cat, bcat, w2f, b2r, w3f, b3r)

    out = out.reshape(N, Ho, Wo, Cp)                               # undo lane fold
    return jnp.transpose(out, (0, 3, 1, 2))                        # NHWC -> NCHW


# --------------------------------------------------------------------------
# Deterministic parameter init (synthetic; shapes from the module __init__)
# --------------------------------------------------------------------------
def init_params(key, in_planes, planes, kernel_size=3):
    keys = jax.random.split(key, 8)

    def conv_w(k, kh, kw, ci, co):
        fan_in = float(kh * kw * ci)
        return jax.random.normal(k, (kh, kw, ci, co), jnp.float32) / jnp.sqrt(fan_in)

    def bn_p(k):
        k1, k2, k3, k4 = jax.random.split(k, 4)
        return dict(
            g=1.0 + 0.1 * jax.random.normal(k1, (planes,), jnp.float32),
            b=0.1 * jax.random.normal(k2, (planes,), jnp.float32),
            m=0.1 * jax.random.normal(k3, (planes,), jnp.float32),
            v=jax.random.uniform(k4, (planes,), jnp.float32, minval=0.5, maxval=1.5),
        )

    return dict(
        w1=conv_w(keys[0], kernel_size, kernel_size, in_planes, planes), bn1=bn_p(keys[1]),
        w2=conv_w(keys[2], kernel_size, kernel_size, planes, planes),    bn2=bn_p(keys[3]),
        wsc=conv_w(keys[4], 1, 1, in_planes, planes),                    bnsc=bn_p(keys[5]),
        w3=conv_w(keys[6], kernel_size, kernel_size, planes, planes),    bn3=bn_p(keys[7]),
    )


# --------------------------------------------------------------------------
# References
# --------------------------------------------------------------------------
def ref_forward_f32(x_nchw, p):
    """Literal PyTorch-order forward in f32."""
    x = jnp.transpose(x_nchw, (0, 2, 3, 1)).astype(jnp.float32)
    dn = ("NHWC", "HWIO", "NHWC")

    def conv(a, w, padv):
        return lax.conv_general_dilated(a, w, (1, 1), [(padv, padv), (padv, padv)],
                                        dimension_numbers=dn)

    def bn(a, b):
        return (a - b["m"]) * (b["g"] / jnp.sqrt(b["v"] + BN_EPS)) + b["b"]

    relu = lambda t: jnp.maximum(t, 0.0)
    pw = p["w1"].shape[0] // 2
    out = relu(bn(conv(x, p["w1"], pw), p["bn1"]))
    out = relu(bn(conv(out, p["w2"], pw), p["bn2"]))
    out = relu(out + bn(conv(x, p["wsc"], 0), p["bnsc"]))
    out = bn(conv(out, p["w3"], pw), p["bn3"])
    out = lax.reduce_window(out, -jnp.inf, lax.max, (1, 3, 3, 1), (1, 2, 2, 1),
                            [(0, 0), (1, 1), (1, 1), (0, 0)])
    out = jnp.where(out > 0, out, LEAKY_SLOPE * out)
    return jnp.transpose(out, (0, 3, 1, 2))


def ref_forward_matched(x_nchw, p):
    """Same math discretized exactly like the kernel: BN scale folded into
    bf16 conv weights, bf16 activations into the matmuls, f32 accumulation."""
    x = jnp.transpose(x_nchw, (0, 2, 3, 1)).astype(jnp.float32)
    dn = ("NHWC", "HWIO", "NHWC")

    def conv(a, w, padv):
        return lax.conv_general_dilated(
            a.astype(jnp.bfloat16), w.astype(jnp.bfloat16), (1, 1),
            [(padv, padv), (padv, padv)], dimension_numbers=dn,
            preferred_element_type=jnp.float32)

    s1, b1 = fold_bn(p["bn1"])
    s2, b2 = fold_bn(p["bn2"])
    ssc, bsc = fold_bn(p["bnsc"])
    s3, b3 = fold_bn(p["bn3"])
    pw = p["w1"].shape[0] // 2
    y1 = jnp.maximum(conv(x, p["w1"] * s1, pw) + b1, 0.0)
    y2 = jnp.maximum(conv(y1, p["w2"] * s2, pw) + b2, 0.0)
    sc = conv(x, p["wsc"] * ssc, 0) + bsc
    y = jnp.maximum(y2 + sc, 0.0)
    y3 = conv(y, p["w3"] * s3, pw) + b3
    out = lax.reduce_window(y3, -jnp.inf, lax.max, (1, 3, 3, 1), (1, 2, 2, 1),
                            [(0, 0), (1, 1), (1, 1), (0, 0)])
    out = jnp.where(out > 0, out, LEAKY_SLOPE * out)
    return jnp.transpose(out, (0, 3, 1, 2))


# --------------------------------------------------------------------------
if __name__ == "__main__":
    N, in_planes, planes, H, W = 2, 4, 8, 16, 16

    key = jax.random.PRNGKey(0)
    kx, kp = jax.random.split(key)
    x = jax.random.normal(kx, (N, in_planes, H, W), jnp.float32)   # NCHW, like PyTorch
    params = init_params(kp, in_planes, planes, kernel_size=3)

    out = jax.jit(residual_block_forward)(x, params)
    out = jax.block_until_ready(out)
    assert out.shape == (N, planes, 8, 8), out.shape

    # strict check vs a reference using the kernel's exact bf16-matmul discretization
    ref_m = ref_forward_matched(x, params)
    err_m = float(jnp.max(jnp.abs(out - ref_m)))
    assert jnp.allclose(out, ref_m, atol=2e-3, rtol=2e-3), err_m

    # loose check vs the pure-f32 PyTorch-order forward (bf16 matmul noise only)
    ref_f = ref_forward_f32(x, params)
    err_f = float(jnp.max(jnp.abs(out - ref_f)))
    assert jnp.allclose(out, ref_f, atol=1e-1, rtol=1e-1), err_f

    print("KERNEL_OK")
</pallas_src>

<mosaic_0001>
module attributes {stable_mosaic.version = 11 : i64} {
  func.func @kernel(%arg0: i32, %arg1: memref<1x16x16x4xbf16, #tpu.memory_space<vmem>>, %arg2: memref<36x16xbf16, #tpu.memory_space<vmem>>, %arg3: memref<1x16xf32, #tpu.memory_space<vmem>>, %arg4: memref<72x8xbf16, #tpu.memory_space<vmem>>, %arg5: memref<1x8xf32, #tpu.memory_space<vmem>>, %arg6: memref<72x8xbf16, #tpu.memory_space<vmem>>, %arg7: memref<1x8xf32, #tpu.memory_space<vmem>>, %arg8: memref<1x8x64xf32, #tpu.memory_space<vmem>>, %arg9: memref<1x18x40x8xbf16, #tpu.memory_space<vmem>>, %arg10: memref<1x18x32x8xf32, #tpu.memory_space<vmem>>) attributes {dimension_semantics = [#tpu.dimension_semantics<parallel>], iteration_bounds = array<i64: 2>, scalar_prefetch = 0 : i64, scratch_operands = 2 : i64, tpu.core_type = #tpu.core_type<tc>, window_params = [{transform_indices = @transform_0, window_bounds = array<i64: 1, 16, 16, 4>}, {pipeline_mode = #tpu.pipeline_mode<synchronous>, transform_indices = @transform_1, window_bounds = array<i64: 36, 16>}, {pipeline_mode = #tpu.pipeline_mode<synchronous>, transform_indices = @transform_2, window_bounds = array<i64: 1, 16>}, {pipeline_mode = #tpu.pipeline_mode<synchronous>, transform_indices = @transform_3, window_bounds = array<i64: 72, 8>}, {pipeline_mode = #tpu.pipeline_mode<synchronous>, transform_indices = @transform_4, window_bounds = array<i64: 1, 8>}, {pipeline_mode = #tpu.pipeline_mode<synchronous>, transform_indices = @transform_5, window_bounds = array<i64: 72, 8>}, {pipeline_mode = #tpu.pipeline_mode<synchronous>, transform_indices = @transform_6, window_bounds = array<i64: 1, 8>}, {transform_indices = @transform_7, window_bounds = array<i64: 1, 8, 64>}]} {
    %cst = arith.constant 0.000000e+00 : bf16
    %0 = vector.broadcast %cst : bf16 to vector<1x1x40x8xbf16>
    %c0 = arith.constant 0 : index
    %c0_0 = arith.constant 0 : index
    %c0_1 = arith.constant 0 : index
    %c0_2 = arith.constant 0 : index
    %1 = vector.load %arg9[%c0, %c0_0, %c0_1, %c0_2] : memref<1x18x40x8xbf16, #tpu.memory_space<vmem>>, vector<1x1x40x8xbf16>
    tpu.vector_store %arg9[%c0, %c0_0, %c0_1, %c0_2], %0 {strides = array<i32>} : memref<1x18x40x8xbf16, #tpu.memory_space<vmem>>, vector<1x1x40x8xbf16>,
    %cst_3 = arith.constant 0.000000e+00 : bf16
    %2 = vector.broadcast %cst_3 : bf16 to vector<1x1x40x8xbf16>
    %c0_4 = arith.constant 0 : index
    %c17 = arith.constant 17 : index
    %c0_5 = arith.constant 0 : index
    %c0_6 = arith.constant 0 : index
    %3 = vector.load %arg9[%c0_4, %c17, %c0_5, %c0_6] : memref<1x18x40x8xbf16, #tpu.memory_space<vmem>>, vector<1x1x40x8xbf16>
    tpu.vector_store %arg9[%c0_4, %c17, %c0_5, %c0_6], %2 {strides = array<i32>} : memref<1x18x40x8xbf16, #tpu.memory_space<vmem>>, vector<1x1x40x8xbf16>,
    %cst_7 = arith.constant 0.000000e+00 : bf16
    %4 = vector.broadcast %cst_7 : bf16 to vector<1x16x1x8xbf16>
    %c0_8 = arith.constant 0 : index
    %c1 = arith.constant 1 : index
    %c15 = arith.constant 15 : index
    %c0_9 = arith.constant 0 : index
    %5 = vector.load %arg9[%c0_8, %c1, %c15, %c0_9] : memref<1x18x40x8xbf16, #tpu.memory_space<vmem>>, vector<1x16x1x8xbf16>
    tpu.vector_store %arg9[%c0_8, %c1, %c15, %c0_9], %4 {strides = array<i32>} : memref<1x18x40x8xbf16, #tpu.memory_space<vmem>>, vector<1x16x1x8xbf16>,
    %cst_10 = arith.constant 0.000000e+00 : bf16
    %6 = vector.broadcast %cst_10 : bf16 to vector<1x16x1x8xbf16>
    %c0_11 = arith.constant 0 : index
    %c1_12 = arith.constant 1 : index
    %c32 = arith.constant 32 : index
    %c0_13 = arith.constant 0 : index
    %7 = vector.load %arg9[%c0_11, %c1_12, %c32, %c0_13] : memref<1x18x40x8xbf16, #tpu.memory_space<vmem>>, vector<1x16x1x8xbf16>
    tpu.vector_store %arg9[%c0_11, %c1_12, %c32, %c0_13], %6 {strides = array<i32>} : memref<1x18x40x8xbf16, #tpu.memory_space<vmem>>, vector<1x16x1x8xbf16>,
    %cst_14 = arith.constant 0xFF800000 : f32
    %8 = vector.broadcast %cst_14 : f32 to vector<1x1x32x8xf32>
    %c0_15 = arith.constant 0 : index
    %c0_16 = arith.constant 0 : index
    %c0_17 = arith.constant 0 : index
    %c0_18 = arith.constant 0 : index
    %9 = vector.load %arg10[%c0_15, %c0_16, %c0_17, %c0_18] : memref<1x18x32x8xf32, #tpu.memory_space<vmem>>, vector<1x1x32x8xf32>
    tpu.vector_store %arg10[%c0_15, %c0_16, %c0_17, %c0_18], %8 {strides = array<i32>} : memref<1x18x32x8xf32, #tpu.memory_space<vmem>>, vector<1x1x32x8xf32>,
    %cst_19 = arith.constant 0xFF800000 : f32
    %10 = vector.broadcast %cst_19 : f32 to vector<1x1x32x8xf32>
    %c0_20 = arith.constant 0 : index
    %c17_21 = arith.constant 17 : index
    %c0_22 = arith.constant 0 : index
    %c0_23 = arith.constant 0 : index
    %11 = vector.load %arg10[%c0_20, %c17_21, %c0_22, %c0_23] : memref<1x18x32x8xf32, #tpu.memory_space<vmem>>, vector<1x1x32x8xf32>
    tpu.vector_store %arg10[%c0_20, %c17_21, %c0_22, %c0_23], %10 {strides = array<i32>} : memref<1x18x32x8xf32, #tpu.memory_space<vmem>>, vector<1x1x32x8xf32>,
    %cst_24 = arith.constant 0xFF800000 : f32
    %12 = vector.broadcast %cst_24 : f32 to vector<1x18x8x8xf32>
    %c0_25 = arith.constant 0 : index
    %c0_26 = arith.constant 0 : index
    %c0_27 = arith.constant 0 : index
    %c0_28 = arith.constant 0 : index
    %13 = vector.load %arg10[%c0_25, %c0_26, %c0_27, %c0_28] : memref<1x18x32x8xf32, #tpu.memory_space<vmem>>, vector<1x18x8x8xf32>
    tpu.vector_store %arg10[%c0_25, %c0_26, %c0_27, %c0_28], %12 {strides = array<i32>} : memref<1x18x32x8xf32, #tpu.memory_space<vmem>>, vector<1x18x8x8xf32>,
    %cst_29 = arith.constant 0xFF800000 : f32
    %14 = vector.broadcast %cst_29 : f32 to vector<1x18x8x8xf32>
    %c0_30 = arith.constant 0 : index
    %c0_31 = arith.constant 0 : index
    %c24 = arith.constant 24 : index
    %c0_32 = arith.constant 0 : index
    %15 = vector.load %arg10[%c0_30, %c0_31, %c24, %c0_32] : memref<1x18x32x8xf32, #tpu.memory_space<vmem>>, vector<1x18x8x8xf32>
    tpu.vector_store %arg10[%c0_30, %c0_31, %c24, %c0_32], %14 {strides = array<i32>} : memref<1x18x32x8xf32, #tpu.memory_space<vmem>>, vector<1x18x8x8xf32>,
    %c0_33 = arith.constant 0 : index
    %c0_34 = arith.constant 0 : index
    %c0_35 = arith.constant 0 : index
    %c0_36 = arith.constant 0 : index
    %16 = vector.load %arg1[%c0_33, %c0_34, %c0_35, %c0_36] : memref<1x16x16x4xbf16, #tpu.memory_space<vmem>>, vector<1x16x16x4xbf16>
    %c0_37 = arith.constant 0 : index
    %c1_38 = arith.constant 1 : index
    %c16 = arith.constant 16 : index
    %c0_39 = arith.constant 0 : index
    %17 = vector.load %arg9[%c0_37, %c1_38, %c16, %c0_39] : memref<1x18x40x8xbf16, #tpu.memory_space<vmem>>, vector<1x16x16x4xbf16>
    tpu.vector_store %arg9[%c0_37, %c1_38, %c16, %c0_39], %16 {strides = array<i32>} : memref<1x18x40x8xbf16, #tpu.memory_space<vmem>>, vector<1x16x16x4xbf16>,
    %c0_40 = arith.constant 0 : index
    %c0_41 = arith.constant 0 : index
    %c15_42 = arith.constant 15 : index
    %c0_43 = arith.constant 0 : index
    %18 = vector.load %arg9[%c0_40, %c0_41, %c15_42, %c0_43] : memref<1x18x40x8xbf16, #tpu.memory_space<vmem>>, vector<1x16x16x4xbf16>
    %c0_44 = arith.constant 0 : index
    %c0_45 = arith.constant 0 : index
    %c16_46 = arith.constant 16 : index
    %c0_47 = arith.constant 0 : index
    %19 = vector.load %arg9[%c0_44, %c0_45, %c16_46, %c0_47] : memref<1x18x40x8xbf16, #tpu.memory_space<vmem>>, vector<1x16x16x4xbf16>
    %c0_48 = arith.constant 0 : index
    %c0_49 = arith.constant 0 : index
    %c17_50 = arith.constant 17 : index
    %c0_51 = arith.constant 0 : index
    %20 = vector.load %arg9[%c0_48, %c0_49, %c17_50, %c0_51] : memref<1x18x40x8xbf16, #tpu.memory_space<vmem>>, vector<1x16x16x4xbf16>
    %c0_52 = arith.constant 0 : index
    %c1_53 = arith.constant 1 : index
    %c15_54 = arith.constant 15 : index
    %c0_55 = arith.constant 0 : index
    %21 = vector.load %arg9[%c0_52, %c1_53, %c15_54, %c0_55] : memref<1x18x40x8xbf16, #tpu.memory_space<vmem>>, vector<1x16x16x4xbf16>
    %c0_56 = arith.constant 0 : index
    %c1_57 = arith.constant 1 : index
    %c16_58 = arith.constant 16 : index
    %c0_59 = arith.constant 0 : index
    %22 = vector.load %arg9[%c0_56, %c1_57, %c16_58, %c0_59] : memref<1x18x40x8xbf16, #tpu.memory_space<vmem>>, vector<1x16x16x4xbf16>
    %c0_60 = arith.constant 0 : index
    %c1_61 = arith.constant 1 : index
    %c17_62 = arith.constant 17 : index
    %c0_63 = arith.constant 0 : index
    %23 = vector.load %arg9[%c0_60, %c1_61, %c17_62, %c0_63] : memref<1x18x40x8xbf16, #tpu.memory_space<vmem>>, vector<1x16x16x4xbf16>
    %c0_64 = arith.constant 0 : index
    %c2 = arith.constant 2 : index
    %c15_65 = arith.constant 15 : index
    %c0_66 = arith.constant 0 : index
    %24 = vector.load %arg9[%c0_64, %c2, %c15_65, %c0_66] : memref<1x18x40x8xbf16, #tpu.memory_space<vmem>>, vector<1x16x16x4xbf16>
    %c0_67 = arith.constant 0 : index
    %c2_68 = arith.constant 2 : index
    %c16_69 = arith.constant 16 : index
    %c0_70 = arith.constant 0 : index
    %25 = vector.load %arg9[%c0_67, %c2_68, %c16_69, %c0_70] : memref<1x18x40x8xbf16, #tpu.memory_space<vmem>>, vector<1x16x16x4xbf16>
    %c0_71 = arith.constant 0 : index
    %c2_72 = arith.constant 2 : index
    %c17_73 = arith.constant 17 : index
    %c0_74 = arith.constant 0 : index
    %26 = vector.load %arg9[%c0_71, %c2_72, %c17_73, %c0_74] : memref<1x18x40x8xbf16, #tpu.memory_space<vmem>>, vector<1x16x16x4xbf16>
    %27 = tpu.concatenate %18, %19, %20, %21, %22, %23, %24, %25, %26 in 3 : vector<1x16x16x4xbf16>, vector<1x16x16x4xbf16>, vector<1x16x16x4xbf16>, vector<1x16x16x4xbf16>, vector<1x16x16x4xbf16>, vector<1x16x16x4xbf16>, vector<1x16x16x4xbf16>, vector<1x16x16x4xbf16>, vector<1x16x16x4xbf16> -> vector<1x16x16x36xbf16>
    %28 = vector.shape_cast %27 : vector<1x16x16x36xbf16> to vector<256x36xbf16>
    %c0_75 = arith.constant 0 : index
    %c0_76 = arith.constant 0 : index
    %29 = vector.load %arg2[%c0_75, %c0_76] : memref<36x16xbf16, #tpu.memory_space<vmem>>, vector<36x16xbf16>
    %cst_77 = arith.constant dense<0.000000e+00> : vector<256x16xf32>
    %30 = tpu.matmul %28, %29, %cst_77 {dimension_numbers = #tpu.dot_dimension_numbers<[1], [0], [0], [1], [0, 0, 1, 1], [], []>} : vector<256x36xbf16>, vector<36x16xbf16>, vector<256x16xf32> -> vector<256x16xf32>
    %c0_78 = arith.constant 0 : index
    %c0_79 = arith.constant 0 : index
    %31 = vector.load %arg3[%c0_78, %c0_79] : memref<1x16xf32, #tpu.memory_space<vmem>>, vector<1x16xf32>
    %32 = vector.broadcast %31 : vector<1x16xf32> to vector<256x16xf32>
    %33 = arith.addf %30, %32 : vector<256x16xf32>
    %34 = vector.extract_strided_slice %33 {offsets = [0, 0], sizes = [256, 8], strides = [1, 1]} : vector<256x16xf32> to vector<256x8xf32>
    %cst_80 = arith.constant 0.000000e+00 : f32
    %35 = vector.broadcast %cst_80 : f32 to vector<256x8xf32>
    %36 = arith.maximumf %34, %35 : vector<256x8xf32>
    %37 = vector.extract_strided_slice %33 {offsets = [0, 8], sizes = [256, 8], strides = [1, 1]} : vector<256x16xf32> to vector<256x8xf32>
    %38 = vector.shape_cast %36 : vector<256x8xf32> to vector<1x16x16x8xf32>
    %39 = arith.truncf %38 : vector<1x16x16x8xf32> to vector<1x16x16x8xbf16>
    %c0_81 = arith.constant 0 : index
    %c1_82 = arith.constant 1 : index
    %c16_83 = arith.constant 16 : index
    %c0_84 = arith.constant 0 : index
    %40 = vector.load %arg9[%c0_81, %c1_82, %c16_83, %c0_84] : memref<1x18x40x8xbf16, #tpu.memory_space<vmem>>, vector<1x16x16x8xbf16>
    tpu.vector_store %arg9[%c0_81, %c1_82, %c16_83, %c0_84], %39 {strides = array<i32>} : memref<1x18x40x8xbf16, #tpu.memory_space<vmem>>, vector<1x16x16x8xbf16>,
    %c0_85 = arith.constant 0 : index
    %c0_86 = arith.constant 0 : index
    %c15_87 = arith.constant 15 : index
    %c0_88 = arith.constant 0 : index
    %41 = vector.load %arg9[%c0_85, %c0_86, %c15_87, %c0_88] : memref<1x18x40x8xbf16, #tpu.memory_space<vmem>>, vector<1x16x16x8xbf16>
    %c0_89 = arith.constant 0 : index
    %c0_90 = arith.constant 0 : index
    %c16_91 = arith.constant 16 : index
    %c0_92 = arith.constant 0 : index
    %42 = vector.load %arg9[%c0_89, %c0_90, %c16_91, %c0_92] : memref<1x18x40x8xbf16, #tpu.memory_space<vmem>>, vector<1x16x16x8xbf16>
    %c0_93 = arith.constant 0 : index
    %c0_94 = arith.constant 0 : index
    %c17_95 = arith.constant 17 : index
    %c0_96 = arith.constant 0 : index
    %43 = vector.load %arg9[%c0_93, %c0_94, %c17_95, %c0_96] : memref<1x18x40x8xbf16, #tpu.memory_space<vmem>>, vector<1x16x16x8xbf16>
    %c0_97 = arith.constant 0 : index
    %c1_98 = arith.constant 1 : index
    %c15_99 = arith.constant 15 : index
    %c0_100 = arith.constant 0 : index
    %44 = vector.load %arg9[%c0_97, %c1_98, %c15_99, %c0_100] : memref<1x18x40x8xbf16, #tpu.memory_space<vmem>>, vector<1x16x16x8xbf16>
    %c0_101 = arith.constant 0 : index
    %c1_102 = arith.constant 1 : index
    %c16_103 = arith.constant 16 : index
    %c0_104 = arith.constant 0 : index
    %45 = vector.load %arg9[%c0_101, %c1_102, %c16_103, %c0_104] : memref<1x18x40x8xbf16, #tpu.memory_space<vmem>>, vector<1x16x16x8xbf16>
    %c0_105 = arith.constant 0 : index
    %c1_106 = arith.constant 1 : index
    %c17_107 = arith.constant 17 : index
    %c0_108 = arith.constant 0 : index
    %46 = vector.load %arg9[%c0_105, %c1_106, %c17_107, %c0_108] : memref<1x18x40x8xbf16, #tpu.memory_space<vmem>>, vector<1x16x16x8xbf16>
    %c0_109 = arith.constant 0 : index
    %c2_110 = arith.constant 2 : index
    %c15_111 = arith.constant 15 : index
    %c0_112 = arith.constant 0 : index
    %47 = vector.load %arg9[%c0_109, %c2_110, %c15_111, %c0_112] : memref<1x18x40x8xbf16, #tpu.memory_space<vmem>>, vector<1x16x16x8xbf16>
    %c0_113 = arith.constant 0 : index
    %c2_114 = arith.constant 2 : index
    %c16_115 = arith.constant 16 : index
    %c0_116 = arith.constant 0 : index
    %48 = vector.load %arg9[%c0_113, %c2_114, %c16_115, %c0_116] : memref<1x18x40x8xbf16, #tpu.memory_space<vmem>>, vector<1x16x16x8xbf16>
    %c0_117 = arith.constant 0 : index
    %c2_118 = arith.constant 2 : index
    %c17_119 = arith.constant 17 : index
    %c0_120 = arith.constant 0 : index
    %49 = vector.load %arg9[%c0_117, %c2_118, %c17_119, %c0_120] : memref<1x18x40x8xbf16, #tpu.memory_space<vmem>>, vector<1x16x16x8xbf16>
    %50 = tpu.concatenate %41, %42, %43, %44, %45, %46, %47, %48, %49 in 3 : vector<1x16x16x8xbf16>, vector<1x16x16x8xbf16>, vector<1x16x16x8xbf16>, vector<1x16x16x8xbf16>, vector<1x16x16x8xbf16>, vector<1x16x16x8xbf16>, vector<1x16x16x8xbf16>, vector<1x16x16x8xbf16>, vector<1x16x16x8xbf16> -> vector<1x16x16x72xbf16>
    %51 = vector.shape_cast %50 : vector<1x16x16x72xbf16> to vector<256x72xbf16>
    %c0_121 = arith.constant 0 : index
    %c0_122 = arith.constant 0 : index
    %52 = vector.load %arg4[%c0_121, %c0_122] : memref<72x8xbf16, #tpu.memory_space<vmem>>, vector<72x8xbf16>
    %cst_123 = arith.constant dense<0.000000e+00> : vector<256x8xf32>
    %53 = tpu.matmul %51, %52, %cst_123 {dimension_numbers = #tpu.dot_dimension_numbers<[1], [0], [0], [1], [0, 0, 1, 1], [], []>} : vector<256x72xbf16>, vector<72x8xbf16>, vector<256x8xf32> -> vector<256x8xf32>
    %c0_124 = arith.constant 0 : index
    %c0_125 = arith.constant 0 : index
    %54 = vector.load %arg5[%c0_124, %c0_125] : memref<1x8xf32, #tpu.memory_space<vmem>>, vector<1x8xf32>
    %55 = vector.broadcast %54 : vector<1x8xf32> to vector<256x8xf32>
    %56 = arith.addf %53, %55 : vector<256x8xf32>
    %cst_126 = arith.constant 0.000000e+00 : f32
    %57 = vector.broadcast %cst_126 : f32 to vector<256x8xf32>
    %58 = arith.maximumf %56, %57 : vector<256x8xf32>
    %59 = arith.addf %58, %37 : vector<256x8xf32>
    %cst_127 = arith.constant 0.000000e+00 : f32
    %60 = vector.broadcast %cst_127 : f32 to vector<256x8xf32>
    %61 = arith.maximumf %59, %60 : vector<256x8xf32>
    %62 = vector.shape_cast %61 : vector<256x8xf32> to vector<1x16x16x8xf32>
    %63 = arith.truncf %62 : vector<1x16x16x8xf32> to vector<1x16x16x8xbf16>
    %c0_128 = arith.constant 0 : index
    %c1_129 = arith.constant 1 : index
    %c16_130 = arith.constant 16 : index
    %c0_131 = arith.constant 0 : index
    %64 = vector.load %arg9[%c0_128, %c1_129, %c16_130, %c0_131] : memref<1x18x40x8xbf16, #tpu.memory_space<vmem>>, vector<1x16x16x8xbf16>
    tpu.vector_store %arg9[%c0_128, %c1_129, %c16_130, %c0_131], %63 {strides = array<i32>} : memref<1x18x40x8xbf16, #tpu.memory_space<vmem>>, vector<1x16x16x8xbf16>,
    %c0_132 = arith.constant 0 : index
    %c0_133 = arith.constant 0 : index
    %c15_134 = arith.constant 15 : index
    %c0_135 = arith.constant 0 : index
    %65 = vector.load %arg9[%c0_132, %c0_133, %c15_134, %c0_135] : memref<1x18x40x8xbf16, #tpu.memory_space<vmem>>, vector<1x16x16x8xbf16>
    %c0_136 = arith.constant 0 : index
    %c0_137 = arith.constant 0 : index
    %c16_138 = arith.constant 16 : index
    %c0_139 = arith.constant 0 : index
    %66 = vector.load %arg9[%c0_136, %c0_137, %c16_138, %c0_139] : memref<1x18x40x8xbf16, #tpu.memory_space<vmem>>, vector<1x16x16x8xbf16>
    %c0_140 = arith.constant 0 : index
    %c0_141 = arith.constant 0 : index
    %c17_142 = arith.constant 17 : index
    %c0_143 = arith.constant 0 : index
    %67 = vector.load %arg9[%c0_140, %c0_141, %c17_142, %c0_143] : memref<1x18x40x8xbf16, #tpu.memory_space<vmem>>, vector<1x16x16x8xbf16>
    %c0_144 = arith.constant 0 : index
    %c1_145 = arith.constant 1 : index
    %c15_146 = arith.constant 15 : index
    %c0_147 = arith.constant 0 : index
    %68 = vector.load %arg9[%c0_144, %c1_145, %c15_146, %c0_147] : memref<1x18x40x8xbf16, #tpu.memory_space<vmem>>, vector<1x16x16x8xbf16>
    %c0_148 = arith.constant 0 : index
    %c1_149 = arith.constant 1 : index
    %c16_150 = arith.constant 16 : index
    %c0_151 = arith.constant 0 : index
    %69 = vector.load %arg9[%c0_148, %c1_149, %c16_150, %c0_151] : memref<1x18x40x8xbf16, #tpu.memory_space<vmem>>, vector<1x16x16x8xbf16>
    %c0_152 = arith.constant 0 : index
    %c1_153 = arith.constant 1 : index
    %c17_154 = arith.constant 17 : index
    %c0_155 = arith.constant 0 : index
    %70 = vector.load %arg9[%c0_152, %c1_153, %c17_154, %c0_155] : memref<1x18x40x8xbf16, #tpu.memory_space<vmem>>, vector<1x16x16x8xbf16>
    %c0_156 = arith.constant 0 : index
    %c2_157 = arith.constant 2 : index
    %c15_158 = arith.constant 15 : index
    %c0_159 = arith.constant 0 : index
    %71 = vector.load %arg9[%c0_156, %c2_157, %c15_158, %c0_159] : memref<1x18x40x8xbf16, #tpu.memory_space<vmem>>, vector<1x16x16x8xbf16>
    %c0_160 = arith.constant 0 : index
    %c2_161 = arith.constant 2 : index
    %c16_162 = arith.constant 16 : index
    %c0_163 = arith.constant 0 : index
    %72 = vector.load %arg9[%c0_160, %c2_161, %c16_162, %c0_163] : memref<1x18x40x8xbf16, #tpu.memory_space<vmem>>, vector<1x16x16x8xbf16>
    %c0_164 = arith.constant 0 : index
    %c2_165 = arith.constant 2 : index
    %c17_166 = arith.constant 17 : index
    %c0_167 = arith.constant 0 : index
    %73 = vector.load %arg9[%c0_164, %c2_165, %c17_166, %c0_167] : memref<1x18x40x8xbf16, #tpu.memory_space<vmem>>, vector<1x16x16x8xbf16>
    %74 = tpu.concatenate %65, %66, %67, %68, %69, %70, %71, %72, %73 in 3 : vector<1x16x16x8xbf16>, vector<1x16x16x8xbf16>, vector<1x16x16x8xbf16>, vector<1x16x16x8xbf16>, vector<1x16x16x8xbf16>, vector<1x16x16x8xbf16>, vector<1x16x16x8xbf16>, vector<1x16x16x8xbf16>, vector<1x16x16x8xbf16> -> vector<1x16x16x72xbf16>
    %75 = vector.shape_cast %74 : vector<1x16x16x72xbf16> to vector<256x72xbf16>
    %c0_168 = arith.constant 0 : index
    %c0_169 = arith.constant 0 : index
    %76 = vector.load %arg6[%c0_168, %c0_169] : memref<72x8xbf16, #tpu.memory_space<vmem>>, vector<72x8xbf16>
    %cst_170 = arith.constant dense<0.000000e+00> : vector<256x8xf32>
    %77 = tpu.matmul %75, %76, %cst_170 {dimension_numbers = #tpu.dot_dimension_numbers<[1], [0], [0], [1], [0, 0, 1, 1], [], []>} : vector<256x72xbf16>, vector<72x8xbf16>, vector<256x8xf32> -> vector<256x8xf32>
    %c0_171 = arith.constant 0 : index
    %c0_172 = arith.constant 0 : index
    %78 = vector.load %arg7[%c0_171, %c0_172] : memref<1x8xf32, #tpu.memory_space<vmem>>, vector<1x8xf32>
    %79 = vector.broadcast %78 : vector<1x8xf32> to vector<256x8xf32>
    %80 = arith.addf %77, %79 : vector<256x8xf32>
    %81 = vector.shape_cast %80 : vector<256x8xf32> to vector<1x16x16x8xf32>
    %c0_173 = arith.constant 0 : index
    %c1_174 = arith.constant 1 : index
    %c8 = arith.constant 8 : index
    %c0_175 = arith.constant 0 : index
    %82 = vector.load %arg10[%c0_173, %c1_174, %c8, %c0_175] : memref<1x18x32x8xf32, #tpu.memory_space<vmem>>, vector<1x16x16x8xf32>
    tpu.vector_store %arg10[%c0_173, %c1_174, %c8, %c0_175], %81 {strides = array<i32>} : memref<1x18x32x8xf32, #tpu.memory_space<vmem>>, vector<1x16x16x8xf32>,
    %c0_176 = arith.constant 0 : index
    %c0_177 = arith.constant 0 : index
    %c7 = arith.constant 7 : index
    %c0_178 = arith.constant 0 : index
    %83 = tpu.strided_load %arg10[%c0_176, %c0_177, %c7, %c0_178] {strides = array<i32: 1, 1, 2, 1>} : memref<1x18x32x8xf32, #tpu.memory_space<vmem>>, vector<1x17x8x8xf32>
    %c0_179 = arith.constant 0 : index
    %c0_180 = arith.constant 0 : index
    %c8_181 = arith.constant 8 : index
    %c0_182 = arith.constant 0 : index
    %84 = tpu.strided_load %arg10[%c0_179, %c0_180, %c8_181, %c0_182] {strides = array<i32: 1, 1, 2, 1>} : memref<1x18x32x8xf32, #tpu.memory_space<vmem>>, vector<1x17x8x8xf32>
    %85 = arith.maximumf %83, %84 : vector<1x17x8x8xf32>
    %c0_183 = arith.constant 0 : index
    %c0_184 = arith.constant 0 : index
    %c9 = arith.constant 9 : index
    %c0_185 = arith.constant 0 : index
    %86 = tpu.strided_load %arg10[%c0_183, %c0_184, %c9, %c0_185] {strides = array<i32: 1, 1, 2, 1>} : memref<1x18x32x8xf32, #tpu.memory_space<vmem>>, vector<1x17x8x8xf32>
    %87 = arith.maximumf %85, %86 : vector<1x17x8x8xf32>
    %88 = vector.extract_strided_slice %87 {offsets = [0, 0, 0, 0], sizes = [1, 16, 8, 8], strides = [1, 1, 1, 1]} : vector<1x17x8x8xf32> to vector<1x16x8x8xf32>
    %89 = vector.shape_cast %88 : vector<1x16x8x8xf32> to vector<1x8x2x8x8xf32>
    %90 = vector.extract_strided_slice %87 {offsets = [0, 1, 0, 0], sizes = [1, 16, 8, 8], strides = [1, 1, 1, 1]} : vector<1x17x8x8xf32> to vector<1x16x8x8xf32>
    %91 = vector.shape_cast %90 : vector<1x16x8x8xf32> to vector<1x8x2x8x8xf32>
    %92 = vector.extract_strided_slice %89 {offsets = [0, 0, 0, 0, 0], sizes = [1, 8, 1, 8, 8], strides = [1, 1, 1, 1, 1]} : vector<1x8x2x8x8xf32> to vector<1x8x1x8x8xf32>
    %93 = vector.shape_cast %92 : vector<1x8x1x8x8xf32> to vector<1x8x8x8xf32>
    %94 = vector.extract_strided_slice %89 {offsets = [0, 0, 1, 0, 0], sizes = [1, 8, 1, 8, 8], strides = [1, 1, 1, 1, 1]} : vector<1x8x2x8x8xf32> to vector<1x8x1x8x8xf32>
    %95 = vector.shape_cast %94 : vector<1x8x1x8x8xf32> to vector<1x8x8x8xf32>
    %96 = arith.maximumf %93, %95 : vector<1x8x8x8xf32>
    %97 = vector.extract_strided_slice %91 {offsets = [0, 0, 1, 0, 0], sizes = [1, 8, 1, 8, 8], strides = [1, 1, 1, 1, 1]} : vector<1x8x2x8x8xf32> to vector<1x8x1x8x8xf32>
    %98 = vector.shape_cast %97 : vector<1x8x1x8x8xf32> to vector<1x8x8x8xf32>
    %99 = arith.maximumf %96, %98 : vector<1x8x8x8xf32>
    %cst_186 = arith.constant 0.000000e+00 : f32
    %100 = vector.broadcast %cst_186 : f32 to vector<1x8x8x8xf32>
    %101 = arith.cmpf ogt, %99, %100 : vector<1x8x8x8xf32>
    %cst_187 = arith.constant 1.000000e-01 : f32
    %102 = vector.broadcast %cst_187 : f32 to vector<1x8x8x8xf32>
    %103 = arith.mulf %102, %99 : vector<1x8x8x8xf32>
    %104 = arith.select %101, %99, %103 : vector<1x8x8x8xi1>, vector<1x8x8x8xf32>
    %105 = vector.shape_cast %104 : vector<1x8x8x8xf32> to vector<1x8x64xf32>
    %c0_188 = arith.constant 0 : index
    %c0_189 = arith.constant 0 : index
    %c0_190 = arith.constant 0 : index
    %106 = vector.load %arg8[%c0_188, %c0_189, %c0_190] : memref<1x8x64xf32, #tpu.memory_space<vmem>>, vector<1x8x64xf32>
    tpu.vector_store %arg8[%c0_188, %c0_189, %c0_190], %105 {strides = array<i32>} : memref<1x8x64xf32, #tpu.memory_space<vmem>>, vector<1x8x64xf32>,
    return
  }
  func.func @transform_0(%arg0: i32) -> (i32, i32, i32, i32) {
    %c0_i32 = arith.constant 0 : i32
    %c0_i32_0 = arith.constant 0 : i32
    %c0_i32_1 = arith.constant 0 : i32
    %c0_i32_2 = arith.constant 0 : i32
    return %arg0, %c0_i32, %c0_i32_0, %c0_i32_1 : i32, i32, i32, i32
  }
  func.func @transform_1(%arg0: i32) -> (i32, i32) {
    %c0_i32 = arith.constant 0 : i32
    %c0_i32_0 = arith.constant 0 : i32
    %c0_i32_1 = arith.constant 0 : i32
    return %c0_i32, %c0_i32_0 : i32, i32
  }
  func.func @transform_2(%arg0: i32) -> (i32, i32) {
    %c0_i32 = arith.constant 0 : i32
    %c0_i32_0 = arith.constant 0 : i32
    %c0_i32_1 = arith.constant 0 : i32
    return %c0_i32, %c0_i32_0 : i32, i32
  }
  func.func @transform_3(%arg0: i32) -> (i32, i32) {
    %c0_i32 = arith.constant 0 : i32
    %c0_i32_0 = arith.constant 0 : i32
    %c0_i32_1 = arith.constant 0 : i32
    return %c0_i32, %c0_i32_0 : i32, i32
  }
  func.func @transform_4(%arg0: i32) -> (i32, i32) {
    %c0_i32 = arith.constant 0 : i32
    %c0_i32_0 = arith.constant 0 : i32
    %c0_i32_1 = arith.constant 0 : i32
    return %c0_i32, %c0_i32_0 : i32, i32
  }
  func.func @transform_5(%arg0: i32) -> (i32, i32) {
    %c0_i32 = arith.constant 0 : i32
    %c0_i32_0 = arith.constant 0 : i32
    %c0_i32_1 = arith.constant 0 : i32
    return %c0_i32, %c0_i32_0 : i32, i32
  }
  func.func @transform_6(%arg0: i32) -> (i32, i32) {
    %c0_i32 = arith.constant 0 : i32
    %c0_i32_0 = arith.constant 0 : i32
    %c0_i32_1 = arith.constant 0 : i32
    return %c0_i32, %c0_i32_0 : i32, i32
  }
  func.func @transform_7(%arg0: i32) -> (i32, i32, i32) {
    %c0_i32 = arith.constant 0 : i32
    %c0_i32_0 = arith.constant 0 : i32
    %c0_i32_1 = arith.constant 0 : i32
    return %arg0, %c0_i32, %c0_i32_0 : i32, i32, i32
  }
}

</mosaic_0001>

<llo_original>
// kernel: residual_block_forward.1
$region0: #{residual_block_forward.1}
  #allocation0 [shape = 'u32[]', space=smem, size = 0x4, offset = 0x4, fixed_abs, tag = 'smem constant byte address 0x4 - core index']
  #allocation1 [shape = 'u32[144,128]{1,0:T(1,128)}', space=vmem, size = 0x12000, scoped, tag = 'internal scratch']
  #allocation2 [shape = 'bf16[1,18,40,8]{3,2,1,0:T(8,128)(2,1)}', space=vmem, size = 0x2d000, scoped, tag = 'scratch operand']
  #allocation3 [shape = 'f32[1,18,32,8]{3,2,1,0:T(8,128)}', space=vmem, size = 0x48000, scoped, tag = 'scratch operand']
  %s0 = inlined_call_operand.vmem [shape: bf16[2,16,16,4], index: 0, kind: input, shape index: {}]
  %s1 = inlined_call_operand.vmem [shape: bf16[36,16], index: 1, kind: input, shape index: {}]
  %s2 = inlined_call_operand.vmem [shape: f32[1,16], index: 2, kind: input, shape index: {}]
  %s3 = inlined_call_operand.vmem [shape: bf16[72,8], index: 3, kind: input, shape index: {}]
  %s4 = inlined_call_operand.vmem [shape: f32[1,8], index: 4, kind: input, shape index: {}]
  %s5 = inlined_call_operand.vmem [shape: bf16[72,8], index: 5, kind: input, shape index: {}]
  %s6 = inlined_call_operand.vmem [shape: f32[1,8], index: 6, kind: input, shape index: {}]
  %s7 = inlined_call_operand.vmem [shape: f32[2,8,64], index: 7, kind: output, shape index: {}]
  %s8 = sld [smem:[#allocation0]]
  $region61: #{residual_block_forward.1} parent=0
    _
  %s10 = ssub.s32 1, %s8
  %s11 = scalar_select 0, %s10, %s8
  loop: start=0, step=1, limit=4
  $region2: #{residual_block_forward.1} parent=0 // loop_pre_header
    _
  $region3: #{residual_block_forward.1} parent=0 // loop_header
    %s13 = sphi 0, %s17
    %p14 = scmp.ge.s32.totalorder %s13, 4
    %s23 = sphi 0, %s25
    %s26 = sphi 0, %s23
    %s27 = sphi 0, %s26
    %s43 = sphi 0, %s27
    %s47 = sphi 0, %s47
    %s49 = sphi 0, %s47
    %s50 = sphi 0, %s49
    %s64 = sphi 0, %s50
    %s68 = sphi 0, %s68
    %s70 = sphi 0, %s68
    %s71 = sphi 0, %s70
    %s85 = sphi 0, %s71
    %s89 = sphi 0, %s89
    %s91 = sphi 0, %s89
    %s92 = sphi 0, %s91
    %s106 = sphi 0, %s92
    %s110 = sphi 0, %s110
    %s112 = sphi 0, %s110
    %s113 = sphi 0, %s112
    %s127 = sphi 0, %s113
    %s131 = sphi 0, %s131
    %s133 = sphi 0, %s131
    %s134 = sphi 0, %s133
    %s148 = sphi 0, %s134
    %s152 = sphi 0, %s152
    %s154 = sphi 0, %s152
    %s155 = sphi 0, %s154
    %s169 = sphi 0, %s155
    %s175 = sphi 0, %s177
    %s178 = sphi 0, %s175
    %s179 = sphi 0, %s178
    %s195 = sphi 0, %s179
  $region4: #{residual_block_forward.1} parent=0 // loop_header_branch
    %16 = sbr.rel (%p14) target = $region8
  $region5: #{residual_block_forward.1} parent=0 // loop_body
    %s18 = ssub.s32 %s13, 1
    %s19 = ssub.s32 %s13, 2
    %s20 = sadd.s32 %s13, 1
    %s21 = ssub.s32 %s13, %s20
    %p22 = scmp.eq.s32.totalorder %s21, 0
    %s24 = sadd.s32 %s23, 1
    %s25 = scalar_select %p22, %s23, %s24
    %p28 = pneg %p22
    %p29 = scmp.eq.s32.totalorder %s13, 1
    %p30 = por %p28, %p29
    %p31 = scmp.ne.s32.totalorder %s23, %s26
    %p32 = scmp.eq.s32.totalorder %s13, 0
    %p33 = por %p31, %p32
    %p34 = scmp.ne.s32.totalorder %s23, %s26
    %p35 = scmp.eq.s32.totalorder %s18, 1
    %p36 = por %p34, %p35
    %p37 = scmp.ne.s32.totalorder %s26, %s27
    %p38 = scmp.eq.s32.totalorder %s18, 0
    %p39 = por %p37, %p38
    %p40 = scmp.ne.s32.totalorder %s26, %s27
    %p41 = scmp.eq.s32.totalorder %s19, 1
    %p42 = por %p40, %p41
    %p44 = scmp.ne.s32.totalorder %s27, %s43
    %p45 = scmp.eq.s32.totalorder %s19, 0
    %p46 = por %p44, %p45
    %s48 = sadd.s32 %s47, 1
    %p51 = scmp.eq.s32.totalorder %s13, 1
    %p52 = scmp.ne.s32.totalorder %s47, %s49
    %p53 = scmp.eq.s32.totalorder %s13, 0
    %p54 = por %p52, %p53
    %p55 = scmp.ne.s32.totalorder %s47, %s49
    %p56 = scmp.eq.s32.totalorder %s18, 1
    %p57 = por %p55, %p56
    %p58 = scmp.ne.s32.totalorder %s49, %s50
    %p59 = scmp.eq.s32.totalorder %s18, 0
    %p60 = por %p58, %p59
    %p61 = scmp.ne.s32.totalorder %s49, %s50
    %p62 = scmp.eq.s32.totalorder %s19, 1
    %p63 = por %p61, %p62
    %p65 = scmp.ne.s32.totalorder %s50, %s64
    %p66 = scmp.eq.s32.totalorder %s19, 0
    %p67 = por %p65, %p66
    %s69 = sadd.s32 %s68, 1
    %p72 = scmp.eq.s32.totalorder %s13, 1
    %p73 = scmp.ne.s32.totalorder %s68, %s70
    %p74 = scmp.eq.s32.totalorder %s13, 0
    %p75 = por %p73, %p74
    %p76 = scmp.ne.s32.totalorder %s68, %s70
    %p77 = scmp.eq.s32.totalorder %s18, 1
    %p78 = por %p76, %p77
    %p79 = scmp.ne.s32.totalorder %s70, %s71
    %p80 = scmp.eq.s32.totalorder %s18, 0
    %p81 = por %p79, %p80
    %p82 = scmp.ne.s32.totalorder %s70, %s71
    %p83 = scmp.eq.s32.totalorder %s19, 1
    %p84 = por %p82, %p83
    %p86 = scmp.ne.s32.totalorder %s71, %s85
    %p87 = scmp.eq.s32.totalorder %s19, 0
    %p88 = por %p86, %p87
    %s90 = sadd.s32 %s89, 1
    %p93 = scmp.eq.s32.totalorder %s13, 1
    %p94 = scmp.ne.s32.totalorder %s89, %s91
    %p95 = scmp.eq.s32.totalorder %s13, 0
    %p96 = por %p94, %p95
    %p97 = scmp.ne.s32.totalorder %s89, %s91
    %p98 = scmp.eq.s32.totalorder %s18, 1
    %p99 = por %p97, %p98
    %p100 = scmp.ne.s32.totalorder %s91, %s92
    %p101 = scmp.eq.s32.totalorder %s18, 0
    %p102 = por %p100, %p101
    %p103 = scmp.ne.s32.totalorder %s91, %s92
    %p104 = scmp.eq.s32.totalorder %s19, 1
    %p105 = por %p103, %p104
    %p107 = scmp.ne.s32.totalorder %s92, %s106
    %p108 = scmp.eq.s32.totalorder %s19, 0
    %p109 = por %p107, %p108
    %s111 = sadd.s32 %s110, 1
    %p114 = scmp.eq.s32.totalorder %s13, 1
    %p115 = scmp.ne.s32.totalorder %s110, %s112
    %p116 = scmp.eq.s32.totalorder %s13, 0
    %p117 = por %p115, %p116
    %p118 = scmp.ne.s32.totalorder %s110, %s112
    %p119 = scmp.eq.s32.totalorder %s18, 1
    %p120 = por %p118, %p119
    %p121 = scmp.ne.s32.totalorder %s112, %s113
    %p122 = scmp.eq.s32.totalorder %s18, 0
    %p123 = por %p121, %p122
    %p124 = scmp.ne.s32.totalorder %s112, %s113
    %p125 = scmp.eq.s32.totalorder %s19, 1
    %p126 = por %p124, %p125
    %p128 = scmp.ne.s32.totalorder %s113, %s127
    %p129 = scmp.eq.s32.totalorder %s19, 0
    %p130 = por %p128, %p129
    %s132 = sadd.s32 %s131, 1
    %p135 = scmp.eq.s32.totalorder %s13, 1
    %p136 = scmp.ne.s32.totalorder %s131, %s133
    %p137 = scmp.eq.s32.totalorder %s13, 0
    %p138 = por %p136, %p137
    %p139 = scmp.ne.s32.totalorder %s131, %s133
    %p140 = scmp.eq.s32.totalorder %s18, 1
    %p141 = por %p139, %p140
    %p142 = scmp.ne.s32.totalorder %s133, %s134
    %p143 = scmp.eq.s32.totalorder %s18, 0
    %p144 = por %p142, %p143
    %p145 = scmp.ne.s32.totalorder %s133, %s134
    %p146 = scmp.eq.s32.totalorder %s19, 1
    %p147 = por %p145, %p146
    %p149 = scmp.ne.s32.totalorder %s134, %s148
    %p150 = scmp.eq.s32.totalorder %s19, 0
    %p151 = por %p149, %p150
    %s153 = sadd.s32 %s152, 1
    %p156 = scmp.eq.s32.totalorder %s13, 1
    %p157 = scmp.ne.s32.totalorder %s152, %s154
    %p158 = scmp.eq.s32.totalorder %s13, 0
    %p159 = por %p157, %p158
    %p160 = scmp.ne.s32.totalorder %s152, %s154
    %p161 = scmp.eq.s32.totalorder %s18, 1
    %p162 = por %p160, %p161
    %p163 = scmp.ne.s32.totalorder %s154, %s155
    %p164 = scmp.eq.s32.totalorder %s18, 0
    %p165 = por %p163, %p164
    %p166 = scmp.ne.s32.totalorder %s154, %s155
    %p167 = scmp.eq.s32.totalorder %s19, 1
    %p168 = por %p166, %p167
    %p170 = scmp.ne.s32.totalorder %s155, %s169
    %p171 = scmp.eq.s32.totalorder %s19, 0
    %p172 = por %p170, %p171
    %s173 = ssub.s32 %s13, %s20
    %p174 = scmp.eq.s32.totalorder %s173, 0
    %s176 = sadd.s32 %s175, 1
    %s177 = scalar_select %p174, %s175, %s176
    %p180 = pneg %p174
    %p181 = scmp.eq.s32.totalorder %s13, 1
    %p182 = por %p180, %p181
    %p183 = scmp.ne.s32.totalorder %s175, %s178
    %p184 = scmp.eq.s32.totalorder %s13, 0
    %p185 = por %p183, %p184
    %p186 = scmp.ne.s32.totalorder %s175, %s178
    %p187 = scmp.eq.s32.totalorder %s18, 1
    %p188 = por %p186, %p187
    %p189 = scmp.ne.s32.totalorder %s178, %s179
    %p190 = scmp.eq.s32.totalorder %s18, 0
    %p191 = por %p189, %p190
    %p192 = scmp.ne.s32.totalorder %s178, %s179
    %p193 = scmp.eq.s32.totalorder %s19, 1
    %p194 = por %p192, %p193
    %p196 = scmp.ne.s32.totalorder %s179, %s195
    %p197 = scmp.eq.s32.totalorder %s19, 0
    %p198 = por %p196, %p197
    %p199 = scmp.le.s32.totalorder 1, %s13
    %p200 = scmp.lt.s32.totalorder %s13, 3
    %p201 = pnand %p199, %p200
    %p202 = pneg %p201
    // Predicated region
    $region9: #{residual_block_forward.1} parent=5 // pred_check
      _
    $region10: #{residual_block_forward.1} parent=5 // pred_check_branch
      %204 = sbr.rel (%p201) target = $region12
    $region11: #{residual_block_forward.1} parent=5 // pred_region
      %s205 = ssub.s32 %s13, 1
      // Predicated region
      $region13: #{residual_block_forward.1} parent=11 // pred_check
        %p206 = pneg %p60
      $region14: #{residual_block_forward.1} parent=11 // pred_check_branch
        %208 = sbr.rel (%p206) target = $region16
      $region15: #{residual_block_forward.1} parent=11 // pred_region
        _
      $region16: #{residual_block_forward.1} parent=11 // pred_fallthru
        _
      // Predicated region
      $region17: #{residual_block_forward.1} parent=11 // pred_check
        %p209 = pneg %p81
      $region18: #{residual_block_forward.1} parent=11 // pred_check_branch
        %211 = sbr.rel (%p209) target = $region20
      $region19: #{residual_block_forward.1} parent=11 // pred_region
        _
      $region20: #{residual_block_forward.1} parent=11 // pred_fallthru
        _
      // Predicated region
      $region21: #{residual_block_forward.1} parent=11 // pred_check
        %p212 = pneg %p102
      $region22: #{residual_block_forward.1} parent=11 // pred_check_branch
        %214 = sbr.rel (%p212) target = $region24
      $region23: #{residual_block_forward.1} parent=11 // pred_region
        _
      $region24: #{residual_block_forward.1} parent=11 // pred_fallthru
        _
      // Predicated region
      $region25: #{residual_block_forward.1} parent=11 // pred_check
        %p215 = pneg %p123
      $region26: #{residual_block_forward.1} parent=11 // pred_check_branch
        %217 = sbr.rel (%p215) target = $region28
      $region27: #{residual_block_forward.1} parent=11 // pred_region
        _
      $region28: #{residual_block_forward.1} parent=11 // pred_fallthru
        _
      // Predicated region
      $region29: #{residual_block_forward.1} parent=11 // pred_check
        %p218 = pneg %p144
      $region30: #{residual_block_forward.1} parent=11 // pred_check_branch
        %220 = sbr.rel (%p218) target = $region32
      $region31: #{residual_block_forward.1} parent=11 // pred_region
        _
      $region32: #{residual_block_forward.1} parent=11 // pred_fallthru
        _
      // Predicated region
      $region33: #{residual_block_forward.1} parent=11 // pred_check
        %p221 = pneg %p165
      $region34: #{residual_block_forward.1} parent=11 // pred_check_branch
        %223 = sbr.rel (%p221) target = $region36
      $region35: #{residual_block_forward.1} parent=11 // pred_region
        _
      $region36: #{residual_block_forward.1} parent=11 // pred_fallthru
        _
    $region12: #{residual_block_forward.1} parent=5 // pred_fallthru
      _
    %p224 = scmp.lt.s32.totalorder %s13, 2
    // Predicated region
    $region37: #{residual_block_forward.1} parent=5 // pred_check
      %p225 = pneg %p224
    $region38: #{residual_block_forward.1} parent=5 // pred_check_branch
      %227 = sbr.rel (%p225) target = $region40
    $region39: #{residual_block_forward.1} parent=5 // pred_region
      // Predicated region
      $region41: #{residual_block_forward.1} parent=39 // pred_check
        %p228 = pneg %p33
      $region42: #{residual_block_forward.1} parent=39 // pred_check_branch
        %230 = sbr.rel (%p228) target = $region44
      $region43: #{residual_block_forward.1} parent=39 // pred_region
        %p231 = scmp.lt.s32.totalorder %s13, 1
        %s232 = scalar_select %p231, %s13, 1
        %s233 = smul.addr %s232, 32
        %s234 = smul.addr %s233, 4
        %s235 = scalar_lea.vmem %s0, %s234
      $region44: #{residual_block_forward.1} parent=39 // pred_fallthru
        _
    $region40: #{residual_block_forward.1} parent=5 // pred_fallthru
      _
    %p236 = scmp.le.s32.totalorder 1, %s13
    %p237 = scmp.lt.s32.totalorder %s13, 3
    %p238 = pnand %p236, %p237
    %p239 = pneg %p238
    // Predicated region
    $region45: #{residual_block_forward.1} parent=5 // pred_check
      _
    $region46: #{residual_block_forward.1} parent=5 // pred_check_branch
      %241 = sbr.rel (%p238) target = $region48
    $region47: #{residual_block_forward.1} parent=5 // pred_region
      %s242 = ssub.s32 %s13, 1
      %p243 = scmp.lt.s32.totalorder %s18, 1
      %s244 = scalar_select %p243, %s18, 1
      %s245 = smul.addr %s244, 32
      %s246 = smul.addr %s245, 4
      %s247 = scalar_lea.vmem %s0, %s246
      %p248 = pneg %p39
      %p249 = pneg %p36
      %p250 = pneg %p60
      %p251 = pneg %p57
      %p252 = pneg %p81
      %p253 = pneg %p78
      %p254 = pneg %p102
      %p255 = pneg %p99
      %p256 = pneg %p123
      %p257 = pneg %p120
      %p258 = pneg %p144
      %p259 = pneg %p141
      %p260 = pneg %p165
      %p261 = pneg %p162
      %p262 = pneg %p191
      %p263 = pneg %p188
      %p264 = scmp.lt.s32.totalorder %s18, 1
      %s265 = scalar_select %p264, %s18, 1
      %s266 = smul.addr %s265, 8
      %s267 = scalar_lea.vmem %s7, %s266
      %p268 = scmp.lt.s32.totalorder %s18, 1
      %s269 = scalar_select %p268, %s18, 1
      %s270 = smul.addr %s269, 32
      %s271 = smul.addr %s270, 4
      %s272 = scalar_lea.vmem %s0, %s271
      %p273 = scmp.lt.s32.totalorder %s18, 1
      %s274 = scalar_select %p273, %s18, 1
      %s275 = smul.addr %s274, 8
      %s276 = scalar_lea.vmem %s7, %s275
      %vm278 = vcmask 60416
      %279 = vst.msk [vmem:[#allocation2] sm:$0xf] %vm278, 0
      %280 = vst.msk [vmem:[#allocation2 + $0x4] sm:$0xf] %vm278, 0
      %281 = vst.msk [vmem:[#allocation2 + $0x8] sm:$0xf] %vm278, 0
      %282 = vst.msk [vmem:[#allocation2 + $0xc] sm:$0xf] %vm278, 0
      %283 = vst.msk [vmem:[#allocation2 + $0x10] sm:$0xf] %vm278, 0
      %s284 = scalar_lea.vmem [#allocation2], 340
      %285 = vst.msk [vmem:[%s284] sm:$0xf] %vm278, 0
      %286 = vst.msk [vmem:[%s284 + $0x4] sm:$0xf] %vm278, 0
      %287 = vst.msk [vmem:[%s284 + $0x8] sm:$0xf] %vm278, 0
      %288 = vst.msk [vmem:[%s284 + $0xc] sm:$0xf] %vm278, 0
      %289 = vst.msk [vmem:[%s284 + $0x10] sm:$0xf] %vm278, 0
      %s290 = scalar_lea.vmem [#allocation2], 20
      %vm291 = vcmask 60419
      %vm292 = vsmask.f32 7950
      %vm293 = vmand %vm291, %vm292
      %v294 = vld [vmem:[%s290 + $0x4] sm:$0x8]
      %v295 = vsel %vm293, 0, %v294
      %296 = vst [vmem:[%s290 + $0x4] sm:$0x8] %v295
      %v297 = vld [vmem:[%s290 + $0x18] sm:$0x8]
      %v298 = vsel %vm293, 0, %v297
      %299 = vst [vmem:[%s290 + $0x18] sm:$0x8] %v298
      %v300 = vld [vmem:[%s290 + $0x2c] sm:$0x8]
      %v301 = vsel %vm293, 0, %v300
      %302 = vst [vmem:[%s290 + $0x2c] sm:$0x8] %v301
      %v303 = vld [vmem:[%s290 + $0x40] sm:$0x8]
      %v304 = vsel %vm293, 0, %v303
      %305 = vst [vmem:[%s290 + $0x40] sm:$0x8] %v304
      %v306 = vld [vmem:[%s290 + $0x54] sm:$0x8]
      %v307 = vsel %vm293, 0, %v306
      %308 = vst [vmem:[%s290 + $0x54] sm:$0x8] %v307
      %v309 = vld [vmem:[%s290 + $0x68] sm:$0x8]
      %v310 = vsel %vm293, 0, %v309
      %311 = vst [vmem:[%s290 + $0x68] sm:$0x8] %v310
      %v312 = vld [vmem:[%s290 + $0x7c] sm:$0x8]
      %v313 = vsel %vm293, 0, %v312
      %314 = vst [vmem:[%s290 + $0x7c] sm:$0x8] %v313
      %v315 = vld [vmem:[%s290 + $0x90] sm:$0x8]
      %v316 = vsel %vm293, 0, %v315
      %317 = vst [vmem:[%s290 + $0x90] sm:$0x8] %v316
      %v318 = vld [vmem:[%s290 + $0xa4] sm:$0x8]
      %v319 = vsel %vm293, 0, %v318
      %320 = vst [vmem:[%s290 + $0xa4] sm:$0x8] %v319
      %v321 = vld [vmem:[%s290 + $0xb8] sm:$0x8]
      %v322 = vsel %vm293, 0, %v321
      %323 = vst [vmem:[%s290 + $0xb8] sm:$0x8] %v322
      %v324 = vld [vmem:[%s290 + $0xcc] sm:$0x8]
      %v325 = vsel %vm293, 0, %v324
      %326 = vst [vmem:[%s290 + $0xcc] sm:$0x8] %v325
      %v327 = vld [vmem:[%s290 + $0xe0] sm:$0x8]
      %v328 = vsel %vm293, 0, %v327
      %329 = vst [vmem:[%s290 + $0xe0] sm:$0x8] %v328
      %v330 = vld [vmem:[%s290 + $0xf4] sm:$0x8]
      %v331 = vsel %vm293, 0, %v330
      %332 = vst [vmem:[%s290 + $0xf4] sm:$0x8] %v331
      %v333 = vld [vmem:[%s290 + $0x108] sm:$0x8]
      %v334 = vsel %vm293, 0, %v333
      %335 = vst [vmem:[%s290 + $0x108] sm:$0x8] %v334
      %v336 = vld [vmem:[%s290 + $0x11c] sm:$0x8]
      %v337 = vsel %vm293, 0, %v336
      %338 = vst [vmem:[%s290 + $0x11c] sm:$0x8] %v337
      %v339 = vld [vmem:[%s290 + $0x130] sm:$0x8]
      %v340 = vsel %vm293, 0, %v339
      %341 = vst [vmem:[%s290 + $0x130] sm:$0x8] %v340
      %vm342 = vcmask 57344
      %vm343 = vsmask.f32 256
      %vm344 = vmand %vm342, %vm343
      %v345 = vld [vmem:[%s290 + $0x10] sm:$0x1]
      %v346 = vsel %vm344, 0, %v345
      %347 = vst [vmem:[%s290 + $0x10] sm:$0x1] %v346
      %v348 = vld [vmem:[%s290 + $0x24] sm:$0x1]
      %v349 = vsel %vm344, 0, %v348
      %350 = vst [vmem:[%s290 + $0x24] sm:$0x1] %v349
      %v351 = vld [vmem:[%s290 + $0x38] sm:$0x1]
      %v352 = vsel %vm344, 0, %v351
      %353 = vst [vmem:[%s290 + $0x38] sm:$0x1] %v352
      %v354 = vld [vmem:[%s290 + $0x4c] sm:$0x1]
      %v355 = vsel %vm344, 0, %v354
      %356 = vst [vmem:[%s290 + $0x4c] sm:$0x1] %v355
      %v357 = vld [vmem:[%s290 + $0x60] sm:$0x1]
      %v358 = vsel %vm344, 0, %v357
      %359 = vst [vmem:[%s290 + $0x60] sm:$0x1] %v358
      %v360 = vld [vmem:[%s290 + $0x74] sm:$0x1]
      %v361 = vsel %vm344, 0, %v360
      %362 = vst [vmem:[%s290 + $0x74] sm:$0x1] %v361
      %v363 = vld [vmem:[%s290 + $0x88] sm:$0x1]
      %v364 = vsel %vm344, 0, %v363
      %365 = vst [vmem:[%s290 + $0x88] sm:$0x1] %v364
      %v366 = vld [vmem:[%s290 + $0x9c] sm:$0x1]
      %v367 = vsel %vm344, 0, %v366
      %368 = vst [vmem:[%s290 + $0x9c] sm:$0x1] %v367
      %v369 = vld [vmem:[%s290 + $0xb0] sm:$0x1]
      %v370 = vsel %vm344, 0, %v369
      %371 = vst [vmem:[%s290 + $0xb0] sm:$0x1] %v370
      %v372 = vld [vmem:[%s290 + $0xc4] sm:$0x1]
      %v373 = vsel %vm344, 0, %v372
      %374 = vst [vmem:[%s290 + $0xc4] sm:$0x1] %v373
      %v375 = vld [vmem:[%s290 + $0xd8] sm:$0x1]
      %v376 = vsel %vm344, 0, %v375
      %377 = vst [vmem:[%s290 + $0xd8] sm:$0x1] %v376
      %v378 = vld [vmem:[%s290 + $0xec] sm:$0x1]
      %v379 = vsel %vm344, 0, %v378
      %380 = vst [vmem:[%s290 + $0xec] sm:$0x1] %v379
      %v381 = vld [vmem:[%s290 + $0x100] sm:$0x1]
      %v382 = vsel %vm344, 0, %v381
      %383 = vst [vmem:[%s290 + $0x100] sm:$0x1] %v382
      %v384 = vld [vmem:[%s290 + $0x114] sm:$0x1]
      %v385 = vsel %vm344, 0, %v384
      %386 = vst [vmem:[%s290 + $0x114] sm:$0x1] %v385
      %v387 = vld [vmem:[%s290 + $0x128] sm:$0x1]
      %v388 = vsel %vm344, 0, %v387
      %389 = vst [vmem:[%s290 + $0x128] sm:$0x1] %v388
      %v390 = vld [vmem:[%s290 + $0x13c] sm:$0x1]
      %v391 = vsel %vm344, 0, %v390
      %392 = vst [vmem:[%s290 + $0x13c] sm:$0x1] %v391
      %vm393 = vcmask 64512
      %394 = vst.msk [vmem:[#allocation3] sm:$0xff] %vm393, -inf
      %395 = vst.msk [vmem:[#allocation3 + $0x8] sm:$0xff] %vm393, -inf
      %396 = vst.msk [vmem:[#allocation3 + $0x10] sm:$0xff] %vm393, -inf
      %397 = vst.msk [vmem:[#allocation3 + $0x18] sm:$0xff] %vm393, -inf
      %s398 = scalar_lea.vmem [#allocation3], 544
      %399 = vst.msk [vmem:[%s398] sm:$0xff] %vm393, -inf
      %400 = vst.msk [vmem:[%s398 + $0x8] sm:$0xff] %vm393, -inf
      %401 = vst.msk [vmem:[%s398 + $0x10] sm:$0xff] %vm393, -inf
      %402 = vst.msk [vmem:[%s398 + $0x18] sm:$0xff] %vm393, -inf
      %403 = vst.msk [vmem:[#allocation3] sm:$0xff] %vm393, -inf
      %404 = vst.msk [vmem:[#allocation3 + $0x20] sm:$0xff] %vm393, -inf
      %405 = vst.msk [vmem:[#allocation3 + $0x40] sm:$0xff] %vm393, -inf
      %406 = vst.msk [vmem:[#allocation3 + $0x60] sm:$0xff] %vm393, -inf
      %407 = vst.msk [vmem:[#allocation3 + $0x80] sm:$0xff] %vm393, -inf
      %408 = vst.msk [vmem:[#allocation3 + $0xa0] sm:$0xff] %vm393, -inf
      %409 = vst.msk [vmem:[#allocation3 + $0xc0] sm:$0xff] %vm393, -inf
      %410 = vst.msk [vmem:[#allocation3 + $0xe0] sm:$0xff] %vm393, -inf
      %411 = vst.msk [vmem:[#allocation3 + $0x100] sm:$0xff] %vm393, -inf
      %412 = vst.msk [vmem:[#allocation3 + $0x120] sm:$0xff] %vm393, -inf
      %413 = vst.msk [vmem:[#allocation3 + $0x140] sm:$0xff] %vm393, -inf
      %414 = vst.msk [vmem:[#allocation3 + $0x160] sm:$0xff] %vm393, -inf
      %415 = vst.msk [vmem:[#allocation3 + $0x180] sm:$0xff] %vm393, -inf
      %416 = vst.msk [vmem:[#allocation3 + $0x1a0] sm:$0xff] %vm393, -inf
      %417 = vst.msk [vmem:[#allocation3 + $0x1c0] sm:$0xff] %vm393, -inf
      %418 = vst.msk [vmem:[#allocation3 + $0x1e0] sm:$0xff] %vm393, -inf
      %419 = vst.msk [vmem:[#allocation3 + $0x200] sm:$0xff] %vm393, -inf
      %420 = vst.msk [vmem:[#allocation3 + $0x220] sm:$0xff] %vm393, -inf
      %421 = vst.msk [vmem:[#allocation3 + $0x18] sm:$0xff] %vm393, -inf
      %422 = vst.msk [vmem:[#allocation3 + $0x38] sm:$0xff] %vm393, -inf
      %423 = vst.msk [vmem:[#allocation3 + $0x58] sm:$0xff] %vm393, -inf
      %424 = vst.msk [vmem:[#allocation3 + $0x78] sm:$0xff] %vm393, -inf
      %425 = vst.msk [vmem:[#allocation3 + $0x98] sm:$0xff] %vm393, -inf
      %426 = vst.msk [vmem:[#allocation3 + $0xb8] sm:$0xff] %vm393, -inf
      %427 = vst.msk [vmem:[#allocation3 + $0xd8] sm:$0xff] %vm393, -inf
      %428 = vst.msk [vmem:[#allocation3 + $0xf8] sm:$0xff] %vm393, -inf
      %429 = vst.msk [vmem:[#allocation3 + $0x118] sm:$0xff] %vm393, -inf
      %430 = vst.msk [vmem:[#allocation3 + $0x138] sm:$0xff] %vm393, -inf
      %431 = vst.msk [vmem:[#allocation3 + $0x158] sm:$0xff] %vm393, -inf
      %432 = vst.msk [vmem:[#allocation3 + $0x178] sm:$0xff] %vm393, -inf
      %433 = vst.msk [vmem:[#allocation3 + $0x198] sm:$0xff] %vm393, -inf
      %434 = vst.msk [vmem:[#allocation3 + $0x1b8] sm:$0xff] %vm393, -inf
      %435 = vst.msk [vmem:[#allocation3 + $0x1d8] sm:$0xff] %vm393, -inf
      %436 = vst.msk [vmem:[#allocation3 + $0x1f8] sm:$0xff] %vm393, -inf
      %437 = vst.msk [vmem:[#allocation3 + $0x218] sm:$0xff] %vm393, -inf
      %438 = vst.msk [vmem:[#allocation3 + $0x238] sm:$0xff] %vm393, -inf
      %v439 = vld [vmem:[%s272] sm:$0xf]
      %v440 = vld [vmem:[%s272 + $0x4] sm:$0xf]
      %v441 = vld [vmem:[%s272 + $0x8] sm:$0xf]
      %v442 = vld [vmem:[%s272 + $0xc] sm:$0xf]
      %v443 = vld [vmem:[%s272 + $0x10] sm:$0xf]
      %v444 = vld [vmem:[%s272 + $0x14] sm:$0xf]
      %v445 = vld [vmem:[%s272 + $0x18] sm:$0xf]
      %v446 = vld [vmem:[%s272 + $0x1c] sm:$0xf]
      %v447 = vld [vmem:[%s272 + $0x20] sm:$0xf]
      %v448 = vld [vmem:[%s272 + $0x24] sm:$0xf]
      %v449 = vld [vmem:[%s272 + $0x28] sm:$0xf]
      %v450 = vld [vmem:[%s272 + $0x2c] sm:$0xf]
      %v451 = vld [vmem:[%s272 + $0x30] sm:$0xf]
      %v452 = vld [vmem:[%s272 + $0x34] sm:$0xf]
      %v453 = vld [vmem:[%s272 + $0x38] sm:$0xf]
      %v454 = vld [vmem:[%s272 + $0x3c] sm:$0xf]
      %v455 = vld [vmem:[%s272 + $0x40] sm:$0xf]
      %v456 = vld [vmem:[%s272 + $0x44] sm:$0xf]
      %v457 = vld [vmem:[%s272 + $0x48] sm:$0xf]
      %v458 = vld [vmem:[%s272 + $0x4c] sm:$0xf]
      %v459 = vld [vmem:[%s272 + $0x50] sm:$0xf]
      %v460 = vld [vmem:[%s272 + $0x54] sm:$0xf]
      %v461 = vld [vmem:[%s272 + $0x58] sm:$0xf]
      %v462 = vld [vmem:[%s272 + $0x5c] sm:$0xf]
      %v463 = vld [vmem:[%s272 + $0x60] sm:$0xf]
      %v464 = vld [vmem:[%s272 + $0x64] sm:$0xf]
      %v465 = vld [vmem:[%s272 + $0x68] sm:$0xf]
      %v466 = vld [vmem:[%s272 + $0x6c] sm:$0xf]
      %v467 = vld [vmem:[%s272 + $0x70] sm:$0xf]
      %v468 = vld [vmem:[%s272 + $0x74] sm:$0xf]
      %v469 = vld [vmem:[%s272 + $0x78] sm:$0xf]
      %v470 = vld [vmem:[%s272 + $0x7c] sm:$0xf]
      %vm471 = vcmask 27648
      %472 = vst.msk [vmem:[%s290 + $0x8] sm:$0xf] %vm471, %v439
      %473 = vst.msk [vmem:[%s290 + $0xc] sm:$0xf] %vm471, %v440
      %474 = vst.msk [vmem:[%s290 + $0x1c] sm:$0xf] %vm471, %v441
      %475 = vst.msk [vmem:[%s290 + $0x20] sm:$0xf] %vm471, %v442
      %476 = vst.msk [vmem:[%s290 + $0x30] sm:$0xf] %vm471, %v443
      %477 = vst.msk [vmem:[%s290 + $0x34] sm:$0xf] %vm471, %v444
      %478 = vst.msk [vmem:[%s290 + $0x44] sm:$0xf] %vm471, %v445
      %479 = vst.msk [vmem:[%s290 + $0x48] sm:$0xf] %vm471, %v446
      %480 = vst.msk [vmem:[%s290 + $0x58] sm:$0xf] %vm471, %v447
      %481 = vst.msk [vmem:[%s290 + $0x5c] sm:$0xf] %vm471, %v448
      %482 = vst.msk [vmem:[%s290 + $0x6c] sm:$0xf] %vm471, %v449
      %483 = vst.msk [vmem:[%s290 + $0x70] sm:$0xf] %vm471, %v450
      %484 = vst.msk [vmem:[%s290 + $0x80] sm:$0xf] %vm471, %v451
      %485 = vst.msk [vmem:[%s290 + $0x84] sm:$0xf] %vm471, %v452
      %486 = vst.msk [vmem:[%s290 + $0x94] sm:$0xf] %vm471, %v453
      %487 = vst.msk [vmem:[%s290 + $0x98] sm:$0xf] %vm471, %v454
      %488 = vst.msk [vmem:[%s290 + $0xa8] sm:$0xf] %vm471, %v455
      %489 = vst.msk [vmem:[%s290 + $0xac] sm:$0xf] %vm471, %v456
      %490 = vst.msk [vmem:[%s290 + $0xbc] sm:$0xf] %vm471, %v457
      %491 = vst.msk [vmem:[%s290 + $0xc0] sm:$0xf] %vm471, %v458
      %492 = vst.msk [vmem:[%s290 + $0xd0] sm:$0xf] %vm471, %v459
      %493 = vst.msk [vmem:[%s290 + $0xd4] sm:$0xf] %vm471, %v460
      %494 = vst.msk [vmem:[%s290 + $0xe4] sm:$0xf] %vm471, %v461
      %495 = vst.msk [vmem:[%s290 + $0xe8] sm:$0xf] %vm471, %v462
      %496 = vst.msk [vmem:[%s290 + $0xf8] sm:$0xf] %vm471, %v463
      %497 = vst.msk [vmem:[%s290 + $0xfc] sm:$0xf] %vm471, %v464
      %498 = vst.msk [vmem:[%s290 + $0x10c] sm:$0xf] %vm471, %v465
      %499 = vst.msk [vmem:[%s290 + $0x110] sm:$0xf] %vm471, %v466
      %500 = vst.msk [vmem:[%s290 + $0x120] sm:$0xf] %vm471, %v467
      %501 = vst.msk [vmem:[%s290 + $0x124] sm:$0xf] %vm471, %v468
      %502 = vst.msk [vmem:[%s290 + $0x134] sm:$0xf] %vm471, %v469
      %503 = vst.msk [vmem:[%s290 + $0x138] sm:$0xf] %vm471, %v470
      %v504 = vld [vmem:[#allocation2 + $0x4] sm:$0x8]
      %v505 = vld [vmem:[#allocation2 + $0x8] sm:$0xf]
      %v506 = vld [vmem:[#allocation2 + $0xc] sm:$0xf]
      %v507 = vld [vmem:[#allocation2 + $0x18] sm:$0x8]
      %v508 = vld [vmem:[#allocation2 + $0x1c] sm:$0xf]
      %v509 = vld [vmem:[#allocation2 + $0x20] sm:$0xf]
      %v510 = vld [vmem:[#allocation2 + $0x2c] sm:$0x8]
      %v511 = vld [vmem:[#allocation2 + $0x30] sm:$0xf]
      %v512 = vld [vmem:[#allocation2 + $0x34] sm:$0xf]
      %v513 = vld [vmem:[#allocation2 + $0x40] sm:$0x8]
      %v514 = vld [vmem:[#allocation2 + $0x44] sm:$0xf]
      %v515 = vld [vmem:[#allocation2 + $0x48] sm:$0xf]
      %v516 = vld [vmem:[#allocation2 + $0x54] sm:$0x8]
      %v517 = vld [vmem:[#allocation2 + $0x58] sm:$0xf]
      %v518 = vld [vmem:[#allocation2 + $0x5c] sm:$0xf]
      %v519 = vld [vmem:[#allocation2 + $0x68] sm:$0x8]
      %v520 = vld [vmem:[#allocation2 + $0x6c] sm:$0xf]
      %v521 = vld [vmem:[#allocation2 + $0x70] sm:$0xf]
      %v522 = vld [vmem:[#allocation2 + $0x7c] sm:$0x8]
      %v523 = vld [vmem:[#allocation2 + $0x80] sm:$0xf]
      %v524 = vld [vmem:[#allocation2 + $0x84] sm:$0xf]
      %v525 = vld [vmem:[#allocation2 + $0x90] sm:$0x8]
      %v526 = vld [vmem:[#allocation2 + $0x94] sm:$0xf]
      %v527 = vld [vmem:[#allocation2 + $0x98] sm:$0xf]
      %v528 = vld [vmem:[#allocation2 + $0xa4] sm:$0x8]
      %v529 = vld [vmem:[#allocation2 + $0xa8] sm:$0xf]
      %v530 = vld [vmem:[#allocation2 + $0xac] sm:$0xf]
      %v531 = vld [vmem:[#allocation2 + $0xb8] sm:$0x8]
      %v532 = vld [vmem:[#allocation2 + $0xbc] sm:$0xf]
      %v533 = vld [vmem:[#allocation2 + $0xc0] sm:$0xf]
      %v534 = vld [vmem:[#allocation2 + $0xcc] sm:$0x8]
      %v535 = vld [vmem:[#allocation2 + $0xd0] sm:$0xf]
      %v536 = vld [vmem:[#allocation2 + $0xd4] sm:$0xf]
      %v537 = vld [vmem:[#allocation2 + $0xe0] sm:$0x8]
      %v538 = vld [vmem:[#allocation2 + $0xe4] sm:$0xf]
      %v539 = vld [vmem:[#allocation2 + $0xe8] sm:$0xf]
      %v540 = vld [vmem:[#allocation2 + $0xf4] sm:$0x8]
      %v541 = vld [vmem:[#allocation2 + $0xf8] sm:$0xf]
      %v542 = vld [vmem:[#allocation2 + $0xfc] sm:$0xf]
      %v543 = vld [vmem:[#allocation2 + $0x108] sm:$0x8]
      %v544 = vld [vmem:[#allocation2 + $0x10c] sm:$0xf]
      %v545 = vld [vmem:[#allocation2 + $0x110] sm:$0xf]
      %v546 = vld [vmem:[#allocation2 + $0x11c] sm:$0x8]
      %v547 = vld [vmem:[#allocation2 + $0x120] sm:$0xf]
      %v548 = vld [vmem:[#allocation2 + $0x124] sm:$0xf]
      %v549 = vld [vmem:[#allocation2 + $0x130] sm:$0x8]
      %v550 = vld [vmem:[#allocation2 + $0x134] sm:$0xf]
      %v551 = vld [vmem:[#allocation2 + $0x138] sm:$0xf]
      %v552 = vld [vmem:[#allocation2 + $0x10] sm:$0x1]
      %v553 = vld [vmem:[#allocation2 + $0x24] sm:$0x1]
      %v554 = vld [vmem:[#allocation2 + $0x38] sm:$0x1]
      %v555 = vld [vmem:[#allocation2 + $0x4c] sm:$0x1]
      %v556 = vld [vmem:[#allocation2 + $0x60] sm:$0x1]
      %v557 = vld [vmem:[#allocation2 + $0x74] sm:$0x1]
      %v558 = vld [vmem:[#allocation2 + $0x88] sm:$0x1]
      %v559 = vld [vmem:[#allocation2 + $0x9c] sm:$0x1]
      %v560 = vld [vmem:[#allocation2 + $0xb0] sm:$0x1]
      %v561 = vld [vmem:[#allocation2 + $0xc4] sm:$0x1]
      %v562 = vld [vmem:[#allocation2 + $0xd8] sm:$0x1]
      %v563 = vld [vmem:[#allocation2 + $0xec] sm:$0x1]
      %v564 = vld [vmem:[#allocation2 + $0x100] sm:$0x1]
      %v565 = vld [vmem:[#allocation2 + $0x114] sm:$0x1]
      %v566 = vld [vmem:[#allocation2 + $0x128] sm:$0x1]
      %v567 = vld [vmem:[#allocation2 + $0x13c] sm:$0x1]
      %v568 = vld [vmem:[%s290 + $0x4] sm:$0x8]
      %v569 = vld [vmem:[%s290 + $0x8] sm:$0xf]
      %v570 = vld [vmem:[%s290 + $0xc] sm:$0xf]
      %v571 = vld [vmem:[%s290 + $0x18] sm:$0x8]
      %v572 = vld [vmem:[%s290 + $0x1c] sm:$0xf]
      %v573 = vld [vmem:[%s290 + $0x20] sm:$0xf]
      %v574 = vld [vmem:[%s290 + $0x2c] sm:$0x8]
      %v575 = vld [vmem:[%s290 + $0x30] sm:$0xf]
      %v576 = vld [vmem:[%s290 + $0x34] sm:$0xf]
      %v577 = vld [vmem:[%s290 + $0x40] sm:$0x8]
      %v578 = vld [vmem:[%s290 + $0x44] sm:$0xf]
      %v579 = vld [vmem:[%s290 + $0x48] sm:$0xf]
      %v580 = vld [vmem:[%s290 + $0x54] sm:$0x8]
      %v581 = vld [vmem:[%s290 + $0x58] sm:$0xf]
      %v582 = vld [vmem:[%s290 + $0x5c] sm:$0xf]
      %v583 = vld [vmem:[%s290 + $0x68] sm:$0x8]
      %v584 = vld [vmem:[%s290 + $0x6c] sm:$0xf]
      %v585 = vld [vmem:[%s290 + $0x70] sm:$0xf]
      %v586 = vld [vmem:[%s290 + $0x7c] sm:$0x8]
      %v587 = vld [vmem:[%s290 + $0x80] sm:$0xf]
      %v588 = vld [vmem:[%s290 + $0x84] sm:$0xf]
      %v589 = vld [vmem:[%s290 + $0x90] sm:$0x8]
      %v590 = vld [vmem:[%s290 + $0x94] sm:$0xf]
      %v591 = vld [vmem:[%s290 + $0x98] sm:$0xf]
      %v592 = vld [vmem:[%s290 + $0xa4] sm:$0x8]
      %v593 = vld [vmem:[%s290 + $0xa8] sm:$0xf]
      %v594 = vld [vmem:[%s290 + $0xac] sm:$0xf]
      %v595 = vld [vmem:[%s290 + $0xb8] sm:$0x8]
      %v596 = vld [vmem:[%s290 + $0xbc] sm:$0xf]
      %v597 = vld [vmem:[%s290 + $0xc0] sm:$0xf]
      %v598 = vld [vmem:[%s290 + $0xcc] sm:$0x8]
      %v599 = vld [vmem:[%s290 + $0xd0] sm:$0xf]
      %v600 = vld [vmem:[%s290 + $0xd4] sm:$0xf]
      %v601 = vld [vmem:[%s290 + $0xe0] sm:$0x8]
      %v602 = vld [vmem:[%s290 + $0xe4] sm:$0xf]
      %v603 = vld [vmem:[%s290 + $0xe8] sm:$0xf]
      %v604 = vld [vmem:[%s290 + $0xf4] sm:$0x8]
      %v605 = vld [vmem:[%s290 + $0xf8] sm:$0xf]
      %v606 = vld [vmem:[%s290 + $0xfc] sm:$0xf]
      %v607 = vld [vmem:[%s290 + $0x108] sm:$0x8]
      %v608 = vld [vmem:[%s290 + $0x10c] sm:$0xf]
      %v609 = vld [vmem:[%s290 + $0x110] sm:$0xf]
      %v610 = vld [vmem:[%s290 + $0x11c] sm:$0x8]
      %v611 = vld [vmem:[%s290 + $0x120] sm:$0xf]
      %v612 = vld [vmem:[%s290 + $0x124] sm:$0xf]
      %v613 = vld [vmem:[%s290 + $0x130] sm:$0x8]
      %v614 = vld [vmem:[%s290 + $0x134] sm:$0xf]
      %v615 = vld [vmem:[%s290 + $0x138] sm:$0xf]
      %v616 = vld [vmem:[%s290 + $0x10] sm:$0x1]
      %v617 = vld [vmem:[%s290 + $0x24] sm:$0x1]
      %v618 = vld [vmem:[%s290 + $0x38] sm:$0x1]
      %v619 = vld [vmem:[%s290 + $0x4c] sm:$0x1]
      %v620 = vld [vmem:[%s290 + $0x60] sm:$0x1]
      %v621 = vld [vmem:[%s290 + $0x74] sm:$0x1]
      %v622 = vld [vmem:[%s290 + $0x88] sm:$0x1]
      %v623 = vld [vmem:[%s290 + $0x9c] sm:$0x1]
      %v624 = vld [vmem:[%s290 + $0xb0] sm:$0x1]
      %v625 = vld [vmem:[%s290 + $0xc4] sm:$0x1]
      %v626 = vld [vmem:[%s290 + $0xd8] sm:$0x1]
      %v627 = vld [vmem:[%s290 + $0xec] sm:$0x1]
      %v628 = vld [vmem:[%s290 + $0x100] sm:$0x1]
      %v629 = vld [vmem:[%s290 + $0x114] sm:$0x1]
      %v630 = vld [vmem:[%s290 + $0x128] sm:$0x1]
      %v631 = vld [vmem:[%s290 + $0x13c] sm:$0x1]
      %s632 = scalar_lea.vmem [#allocation2], 40
      %v633 = vld [vmem:[%s632 + $0x4] sm:$0x8]
      %v634 = vld [vmem:[%s632 + $0x8] sm:$0xf]
      %v635 = vld [vmem:[%s632 + $0xc] sm:$0xf]
      %v636 = vld [vmem:[%s632 + $0x18] sm:$0x8]
      %v637 = vld [vmem:[%s632 + $0x1c] sm:$0xf]
      %v638 = vld [vmem:[%s632 + $0x20] sm:$0xf]
      %v639 = vld [vmem:[%s632 + $0x2c] sm:$0x8]
      %v640 = vld [vmem:[%s632 + $0x30] sm:$0xf]
      %v641 = vld [vmem:[%s632 + $0x34] sm:$0xf]
      %v642 = vld [vmem:[%s632 + $0x40] sm:$0x8]
      %v643 = vld [vmem:[%s632 + $0x44] sm:$0xf]
      %v644 = vld [vmem:[%s632 + $0x48] sm:$0xf]
      %v645 = vld [vmem:[%s632 + $0x54] sm:$0x8]
      %v646 = vld [vmem:[%s632 + $0x58] sm:$0xf]
      %v647 = vld [vmem:[%s632 + $0x5c] sm:$0xf]
      %v648 = vld [vmem:[%s632 + $0x68] sm:$0x8]
      %v649 = vld [vmem:[%s632 + $0x6c] sm:$0xf]
      %v650 = vld [vmem:[%s632 + $0x70] sm:$0xf]
      %v651 = vld [vmem:[%s632 + $0x7c] sm:$0x8]
      %v652 = vld [vmem:[%s632 + $0x80] sm:$0xf]
      %v653 = vld [vmem:[%s632 + $0x84] sm:$0xf]
      %v654 = vld [vmem:[%s632 + $0x90] sm:$0x8]
      %v655 = vld [vmem:[%s632 + $0x94] sm:$0xf]
      %v656 = vld [vmem:[%s632 + $0x98] sm:$0xf]
      %v657 = vld [vmem:[%s632 + $0xa4] sm:$0x8]
      %v658 = vld [vmem:[%s632 + $0xa8] sm:$0xf]
      %v659 = vld [vmem:[%s632 + $0xac] sm:$0xf]
      %v660 = vld [vmem:[%s632 + $0xb8] sm:$0x8]
      %v661 = vld [vmem:[%s632 + $0xbc] sm:$0xf]
      %v662 = vld [vmem:[%s632 + $0xc0] sm:$0xf]
      %v663 = vld [vmem:[%s632 + $0xcc] sm:$0x8]
      %v664 = vld [vmem:[%s632 + $0xd0] sm:$0xf]
      %v665 = vld [vmem:[%s632 + $0xd4] sm:$0xf]
      %v666 = vld [vmem:[%s632 + $0xe0] sm:$0x8]
      %v667 = vld [vmem:[%s632 + $0xe4] sm:$0xf]
      %v668 = vld [vmem:[%s632 + $0xe8] sm:$0xf]
      %v669 = vld [vmem:[%s632 + $0xf4] sm:$0x8]
      %v670 = vld [vmem:[%s632 + $0xf8] sm:$0xf]
      %v671 = vld [vmem:[%s632 + $0xfc] sm:$0xf]
      %v672 = vld [vmem:[%s632 + $0x108] sm:$0x8]
      %v673 = vld [vmem:[%s632 + $0x10c] sm:$0xf]
      %v674 = vld [vmem:[%s632 + $0x110] sm:$0xf]
      %v675 = vld [vmem:[%s632 + $0x11c] sm:$0x8]
      %v676 = vld [vmem:[%s632 + $0x120] sm:$0xf]
      %v677 = vld [vmem:[%s632 + $0x124] sm:$0xf]
      %v678 = vld [vmem:[%s632 + $0x130] sm:$0x8]
      %v679 = vld [vmem:[%s632 + $0x134] sm:$0xf]
      %v680 = vld [vmem:[%s632 + $0x138] sm:$0xf]
      %v681 = vld [vmem:[%s632 + $0x10] sm:$0x1]
      %v682 = vld [vmem:[%s632 + $0x24] sm:$0x1]
      %v683 = vld [vmem:[%s632 + $0x38] sm:$0x1]
      %v684 = vld [vmem:[%s632 + $0x4c] sm:$0x1]
      %v685 = vld [vmem:[%s632 + $0x60] sm:$0x1]
      %v686 = vld [vmem:[%s632 + $0x74] sm:$0x1]
      %v687 = vld [vmem:[%s632 + $0x88] sm:$0x1]
      %v688 = vld [vmem:[%s632 + $0x9c] sm:$0x1]
      %v689 = vld [vmem:[%s632 + $0xb0] sm:$0x1]
      %v690 = vld [vmem:[%s632 + $0xc4] sm:$0x1]
      %v691 = vld [vmem:[%s632 + $0xd8] sm:$0x1]
      %v692 = vld [vmem:[%s632 + $0xec] sm:$0x1]
      %v693 = vld [vmem:[%s632 + $0x100] sm:$0x1]
      %v694 = vld [vmem:[%s632 + $0x114] sm:$0x1]
      %v695 = vld [vmem:[%s632 + $0x128] sm:$0x1]
      %v696 = vld [vmem:[%s632 + $0x13c] sm:$0x1]
      %v745 = vunpack.c.l.b16 %v504
      %v746 = vunpack.c.l.b16 %v505
      %v747 = vunpack.c.l.b16 %v506
      %v748 = vunpack.c.l.b16 %v507
      %v749 = vunpack.c.l.b16 %v508
      %v750 = vunpack.c.l.b16 %v509
      %v751 = vunpack.c.l.b16 %v510
      %v752 = vunpack.c.l.b16 %v511
      %v753 = vunpack.c.l.b16 %v512
      %v754 = vunpack.c.l.b16 %v513
      %v755 = vunpack.c.l.b16 %v514
      %v756 = vunpack.c.l.b16 %v515
      %v757 = vunpack.c.l.b16 %v516
      %v758 = vunpack.c.l.b16 %v517
      %v759 = vunpack.c.l.b16 %v518
      %v760 = vunpack.c.l.b16 %v519
      %v761 = vunpack.c.l.b16 %v520
      %v762 = vunpack.c.l.b16 %v521
      %v763 = vunpack.c.l.b16 %v522
      %v764 = vunpack.c.l.b16 %v523
      %v765 = vunpack.c.l.b16 %v524
      %v766 = vunpack.c.l.b16 %v525
      %v767 = vunpack.c.l.b16 %v526
      %v768 = vunpack.c.l.b16 %v527
      %v769 = vunpack.c.l.b16 %v528
      %v770 = vunpack.c.l.b16 %v529
      %v771 = vunpack.c.l.b16 %v530
      %v772 = vunpack.c.l.b16 %v531
      %v773 = vunpack.c.l.b16 %v532
      %v774 = vunpack.c.l.b16 %v533
      %v775 = vunpack.c.l.b16 %v534
      %v776 = vunpack.c.l.b16 %v535
      %v777 = vunpack.c.l.b16 %v536
      %v778 = vunpack.c.l.b16 %v537
      %v779 = vunpack.c.l.b16 %v538
      %v780 = vunpack.c.l.b16 %v539
      %v781 = vunpack.c.l.b16 %v540
      %v782 = vunpack.c.l.b16 %v541
      %v783 = vunpack.c.l.b16 %v542
      %v784 = vunpack.c.l.b16 %v543
      %v785 = vunpack.c.l.b16 %v544
      %v786 = vunpack.c.l.b16 %v545
      %v787 = vunpack.c.l.b16 %v546
      %v788 = vunpack.c.l.b16 %v547
      %v789 = vunpack.c.l.b16 %v548
      %v790 = vunpack.c.l.b16 %v549
      %v791 = vunpack.c.l.b16 %v550
      %v792 = vunpack.c.l.b16 %v551
      %v793 = vpack.c.b16 %v746, %v745
      %v794 = vpack.c.b16 %v747, %v747
      %v795 = vpack.c.b16 %v749, %v748
      %v796 = vpack.c.b16 %v750, %v750
      %v797 = vpack.c.b16 %v752, %v751
      %v798 = vpack.c.b16 %v753, %v753
      %v799 = vpack.c.b16 %v755, %v754
      %v800 = vpack.c.b16 %v756, %v756
      %v801 = vpack.c.b16 %v758, %v757
      %v802 = vpack.c.b16 %v759, %v759
      %v803 = vpack.c.b16 %v761, %v760
      %v804 = vpack.c.b16 %v762, %v762
      %v805 = vpack.c.b16 %v764, %v763
      %v806 = vpack.c.b16 %v765, %v765
      %v807 = vpack.c.b16 %v767, %v766
      %v808 = vpack.c.b16 %v768, %v768
      %v809 = vpack.c.b16 %v770, %v769
      %v810 = vpack.c.b16 %v771, %v771
      %v811 = vpack.c.b16 %v773, %v772
      %v812 = vpack.c.b16 %v774, %v774
      %v813 = vpack.c.b16 %v776, %v775
      %v814 = vpack.c.b16 %v777, %v777
      %v815 = vpack.c.b16 %v779, %v778
      %v816 = vpack.c.b16 %v780, %v780
      %v817 = vpack.c.b16 %v782, %v781
      %v818 = vpack.c.b16 %v783, %v783
      %v819 = vpack.c.b16 %v785, %v784
      %v820 = vpack.c.b16 %v786, %v786
      %v821 = vpack.c.b16 %v788, %v787
      %v822 = vpack.c.b16 %v789, %v789
      %v823 = vpack.c.b16 %v791, %v790
      %v824 = vpack.c.b16 %v792, %v792
      %v825 = vpack.c.b16 %v747, %v746
      %v826 = vpack.c.b16 %v750, %v749
      %v827 = vpack.c.b16 %v753, %v752
      %v828 = vpack.c.b16 %v756, %v755
      %v829 = vpack.c.b16 %v759, %v758
      %v830 = vpack.c.b16 %v762, %v761
      %v831 = vpack.c.b16 %v765, %v764
      %v832 = vpack.c.b16 %v768, %v767
      %v833 = vpack.c.b16 %v771, %v770
      %v834 = vpack.c.b16 %v774, %v773
      %v835 = vpack.c.b16 %v777, %v776
      %v836 = vpack.c.b16 %v780, %v779
      %v837 = vpack.c.b16 %v783, %v782
      %v838 = vpack.c.b16 %v786, %v785
      %v839 = vpack.c.b16 %v789, %v788
      %v840 = vpack.c.b16 %v792, %v791
      %v842 = vshrl.u32 %v825, 16
      %v844 = vrot.slane %v842, 4
      %v845 = vshll.u32 %v825, 16
      %v847 = vrot.slane %v845, 5
      %v848 = vor.u32 %v844, %v847
      %v850 = vshrl.u32 %v826, 16
      %v852 = vrot.slane %v850, 4
      %v853 = vshll.u32 %v826, 16
      %v855 = vrot.slane %v853, 5
      %v856 = vor.u32 %v852, %v855
      %v858 = vshrl.u32 %v827, 16
      %v860 = vrot.slane %v858, 4
      %v861 = vshll.u32 %v827, 16
      %v863 = vrot.slane %v861, 5
      %v864 = vor.u32 %v860, %v863
      %v866 = vshrl.u32 %v828, 16
      %v868 = vrot.slane %v866, 4
      %v869 = vshll.u32 %v828, 16
      %v871 = vrot.slane %v869, 5
      %v872 = vor.u32 %v868, %v871
      %v874 = vshrl.u32 %v829, 16
      %v876 = vrot.slane %v874, 4
      %v877 = vshll.u32 %v829, 16
      %v879 = vrot.slane %v877, 5
      %v880 = vor.u32 %v876, %v879
      %v882 = vshrl.u32 %v830, 16
      %v884 = vrot.slane %v882, 4
      %v885 = vshll.u32 %v830, 16
      %v887 = vrot.slane %v885, 5
      %v888 = vor.u32 %v884, %v887
      %v890 = vshrl.u32 %v831, 16
      %v892 = vrot.slane %v890, 4
      %v893 = vshll.u32 %v831, 16
      %v895 = vrot.slane %v893, 5
      %v896 = vor.u32 %v892, %v895
      %v898 = vshrl.u32 %v832, 16
      %v900 = vrot.slane %v898, 4
      %v901 = vshll.u32 %v832, 16
      %v903 = vrot.slane %v901, 5
      %v904 = vor.u32 %v900, %v903
      %v906 = vshrl.u32 %v833, 16
      %v908 = vrot.slane %v906, 4
      %v909 = vshll.u32 %v833, 16
      %v911 = vrot.slane %v909, 5
      %v912 = vor.u32 %v908, %v911
      %v914 = vshrl.u32 %v834, 16
      %v916 = vrot.slane %v914, 4
      %v917 = vshll.u32 %v834, 16
      %v919 = vrot.slane %v917, 5
      %v920 = vor.u32 %v916, %v919
      %v922 = vshrl.u32 %v835, 16
      %v924 = vrot.slane %v922, 4
      %v925 = vshll.u32 %v835, 16
      %v927 = vrot.slane %v925, 5
      %v928 = vor.u32 %v924, %v927
      %v930 = vshrl.u32 %v836, 16
      %v932 = vrot.slane %v930, 4
      %v933 = vshll.u32 %v836, 16
      %v935 = vrot.slane %v933, 5
      %v936 = vor.u32 %v932, %v935
      %v938 = vshrl.u32 %v837, 16
      %v940 = vrot.slane %v938, 4
      %v941 = vshll.u32 %v837, 16
      %v943 = vrot.slane %v941, 5
      %v944 = vor.u32 %v940, %v943
      %v946 = vshrl.u32 %v838, 16
      %v948 = vrot.slane %v946, 4
      %v949 = vshll.u32 %v838, 16
      %v951 = vrot.slane %v949, 5
      %v952 = vor.u32 %v948, %v951
      %v954 = vshrl.u32 %v839, 16
      %v956 = vrot.slane %v954, 4
      %v957 = vshll.u32 %v839, 16
      %v959 = vrot.slane %v957, 5
      %v960 = vor.u32 %v956, %v959
      %v962 = vshrl.u32 %v840, 16
      %v964 = vrot.slane %v962, 4
      %v965 = vshll.u32 %v840, 16
      %v967 = vrot.slane %v965, 5
      %v968 = vor.u32 %v964, %v967
      %969 = vrot.lane.b32.xlu0 %v848, 4
      %v970 = vpop.permute.xlu0 %969
      %971 = vrot.lane.b32.xlu0 %v856, 4
      %v972 = vpop.permute.xlu0 %971
      %973 = vrot.lane.b32.xlu0 %v864, 4
      %v974 = vpop.permute.xlu0 %973
      %975 = vrot.lane.b32.xlu0 %v872, 4
      %v976 = vpop.permute.xlu0 %975
      %977 = vrot.lane.b32.xlu0 %v880, 4
      %v978 = vpop.permute.xlu0 %977
      %979 = vrot.lane.b32.xlu0 %v888, 4
      %v980 = vpop.permute.xlu0 %979
      %981 = vrot.lane.b32.xlu0 %v896, 4
      %v982 = vpop.permute.xlu0 %981
      %983 = vrot.lane.b32.xlu0 %v904, 4
      %v984 = vpop.permute.xlu0 %983
      %985 = vrot.lane.b32.xlu0 %v912, 4
      %v986 = vpop.permute.xlu0 %985
      %987 = vrot.lane.b32.xlu0 %v920, 4
      %v988 = vpop.permute.xlu0 %987
      %989 = vrot.lane.b32.xlu0 %v928, 4
      %v990 = vpop.permute.xlu0 %989
      %991 = vrot.lane.b32.xlu0 %v936, 4
      %v992 = vpop.permute.xlu0 %991
      %993 = vrot.lane.b32.xlu0 %v944, 4
      %v994 = vpop.permute.xlu0 %993
      %995 = vrot.lane.b32.xlu0 %v952, 4
      %v996 = vpop.permute.xlu0 %995
      %997 = vrot.lane.b32.xlu0 %v960, 4
      %v998 = vpop.permute.xlu0 %997
      %999 = vrot.lane.b32.xlu0 %v968, 4
      %v1000 = vpop.permute.xlu0 %999
      %v1017 = vunpack.c.l.b16 %v552
      %v1018 = vunpack.c.l.b16 %v553
      %v1019 = vunpack.c.l.b16 %v554
      %v1020 = vunpack.c.l.b16 %v555
      %v1021 = vunpack.c.l.b16 %v556
      %v1022 = vunpack.c.l.b16 %v557
      %v1023 = vunpack.c.l.b16 %v558
      %v1024 = vunpack.c.l.b16 %v559
      %v1025 = vunpack.c.l.b16 %v560
      %v1026 = vunpack.c.l.b16 %v561
      %v1027 = vunpack.c.l.b16 %v562
      %v1028 = vunpack.c.l.b16 %v563
      %v1029 = vunpack.c.l.b16 %v564
      %v1030 = vunpack.c.l.b16 %v565
      %v1031 = vunpack.c.l.b16 %v566
      %v1032 = vunpack.c.l.b16 %v567
      %v1033 = vpack.c.b16 %v1017, %v1017
      %v1034 = vpack.c.b16 %v1018, %v1018
      %v1035 = vpack.c.b16 %v1019, %v1019
      %v1036 = vpack.c.b16 %v1020, %v1020
      %v1037 = vpack.c.b16 %v1021, %v1021
      %v1038 = vpack.c.b16 %v1022, %v1022
      %v1039 = vpack.c.b16 %v1023, %v1023
      %v1040 = vpack.c.b16 %v1024, %v1024
      %v1041 = vpack.c.b16 %v1025, %v1025
      %v1042 = vpack.c.b16 %v1026, %v1026
      %v1043 = vpack.c.b16 %v1027, %v1027
      %v1044 = vpack.c.b16 %v1028, %v1028
      %v1045 = vpack.c.b16 %v1029, %v1029
      %v1046 = vpack.c.b16 %v1030, %v1030
      %v1047 = vpack.c.b16 %v1031, %v1031
      %v1048 = vpack.c.b16 %v1032, %v1032
      %vm1049 = vcmask 1042432
      %v1050 = vrot.slane %v825, 5
      %v1051 = vrot.slane %v1033, 5
      %v1052 = vsel %vm1049, %v1050, %v1051
      %v1053 = vrot.slane %v826, 5
      %v1054 = vrot.slane %v1034, 5
      %v1055 = vsel %vm1049, %v1053, %v1054
      %v1056 = vrot.slane %v827, 5
      %v1057 = vrot.slane %v1035, 5
      %v1058 = vsel %vm1049, %v1056, %v1057
      %v1059 = vrot.slane %v828, 5
      %v1060 = vrot.slane %v1036, 5
      %v1061 = vsel %vm1049, %v1059, %v1060
      %v1062 = vrot.slane %v829, 5
      %v1063 = vrot.slane %v1037, 5
      %v1064 = vsel %vm1049, %v1062, %v1063
      %v1065 = vrot.slane %v830, 5
      %v1066 = vrot.slane %v1038, 5
      %v1067 = vsel %vm1049, %v1065, %v1066
      %v1068 = vrot.slane %v831, 5
      %v1069 = vrot.slane %v1039, 5
      %v1070 = vsel %vm1049, %v1068, %v1069
      %v1071 = vrot.slane %v832, 5
      %v1072 = vrot.slane %v1040, 5
      %v1073 = vsel %vm1049, %v1071, %v1072
      %v1074 = vrot.slane %v833, 5
      %v1075 = vrot.slane %v1041, 5
      %v1076 = vsel %vm1049, %v1074, %v1075
      %v1077 = vrot.slane %v834, 5
      %v1078 = vrot.slane %v1042, 5
      %v1079 = vsel %vm1049, %v1077, %v1078
      %v1080 = vrot.slane %v835, 5
      %v1081 = vrot.slane %v1043, 5
      %v1082 = vsel %vm1049, %v1080, %v1081
      %v1083 = vrot.slane %v836, 5
      %v1084 = vrot.slane %v1044, 5
      %v1085 = vsel %vm1049, %v1083, %v1084
      %v1086 = vrot.slane %v837, 5
      %v1087 = vrot.slane %v1045, 5
      %v1088 = vsel %vm1049, %v1086, %v1087
      %v1089 = vrot.slane %v838, 5
      %v1090 = vrot.slane %v1046, 5
      %v1091 = vsel %vm1049, %v1089, %v1090
      %v1092 = vrot.slane %v839, 5
      %v1093 = vrot.slane %v1047, 5
      %v1094 = vsel %vm1049, %v1092, %v1093
      %v1095 = vrot.slane %v840, 5
      %v1096 = vrot.slane %v1048, 5
      %v1097 = vsel %vm1049, %v1095, %v1096
      %1098 = vrot.lane.b32.xlu0 %v1050, 8
      %v1099 = vpop.permute.xlu0 %1098
      %1100 = vrot.lane.b32.xlu0 %v1052, 8
      %v1101 = vpop.permute.xlu0 %1100
      %1102 = vrot.lane.b32.xlu0 %v1053, 8
      %v1103 = vpop.permute.xlu0 %1102
      %1104 = vrot.lane.b32.xlu0 %v1055, 8
      %v1105 = vpop.permute.xlu0 %1104
      %1106 = vrot.lane.b32.xlu0 %v1056, 8
      %v1107 = vpop.permute.xlu0 %1106
      %1108 = vrot.lane.b32.xlu0 %v1058, 8
      %v1109 = vpop.permute.xlu0 %1108
      %1110 = vrot.lane.b32.xlu0 %v1059, 8
      %v1111 = vpop.permute.xlu0 %1110
      %1112 = vrot.lane.b32.xlu0 %v1061, 8
      %v1113 = vpop.permute.xlu0 %1112
      %1114 = vrot.lane.b32.xlu0 %v1062, 8
      %v1115 = vpop.permute.xlu0 %1114
      %1116 = vrot.lane.b32.xlu0 %v1064, 8
      %v1117 = vpop.permute.xlu0 %1116
      %1118 = vrot.lane.b32.xlu0 %v1065, 8
      %v1119 = vpop.permute.xlu0 %1118
      %1120 = vrot.lane.b32.xlu0 %v1067, 8
      %v1121 = vpop.permute.xlu0 %1120
      %1122 = vrot.lane.b32.xlu0 %v1068, 8
      %v1123 = vpop.permute.xlu0 %1122
      %1124 = vrot.lane.b32.xlu0 %v1070, 8
      %v1125 = vpop.permute.xlu0 %1124
      %1126 = vrot.lane.b32.xlu0 %v1071, 8
      %v1127 = vpop.permute.xlu0 %1126
      %1128 = vrot.lane.b32.xlu0 %v1073, 8
      %v1129 = vpop.permute.xlu0 %1128
      %1130 = vrot.lane.b32.xlu0 %v1074, 8
      %v1131 = vpop.permute.xlu0 %1130
      %1132 = vrot.lane.b32.xlu0 %v1076, 8
      %v1133 = vpop.permute.xlu0 %1132
      %1134 = vrot.lane.b32.xlu0 %v1077, 8
      %v1135 = vpop.permute.xlu0 %1134
      %1136 = vrot.lane.b32.xlu0 %v1079, 8
      %v1137 = vpop.permute.xlu0 %1136
      %1138 = vrot.lane.b32.xlu0 %v1080, 8
      %v1139 = vpop.permute.xlu0 %1138
      %1140 = vrot.lane.b32.xlu0 %v1082, 8
      %v1141 = vpop.permute.xlu0 %1140
      %1142 = vrot.lane.b32.xlu0 %v1083, 8
      %v1143 = vpop.permute.xlu0 %1142
      %1144 = vrot.lane.b32.xlu0 %v1085, 8
      %v1145 = vpop.permute.xlu0 %1144
      %1146 = vrot.lane.b32.xlu0 %v1086, 8
      %v1147 = vpop.permute.xlu0 %1146
      %1148 = vrot.lane.b32.xlu0 %v1088, 8
      %v1149 = vpop.permute.xlu0 %1148
      %1150 = vrot.lane.b32.xlu0 %v1089, 8
      %v1151 = vpop.permute.xlu0 %1150
      %1152 = vrot.lane.b32.xlu0 %v1091, 8
      %v1153 = vpop.permute.xlu0 %1152
      %1154 = vrot.lane.b32.xlu0 %v1092, 8
      %v1155 = vpop.permute.xlu0 %1154
      %1156 = vrot.lane.b32.xlu0 %v1094, 8
      %v1157 = vpop.permute.xlu0 %1156
      %1158 = vrot.lane.b32.xlu0 %v1095, 8
      %v1159 = vpop.permute.xlu0 %1158
      %1160 = vrot.lane.b32.xlu0 %v1097, 8
      %v1161 = vpop.permute.xlu0 %1160
      %v1210 = vunpack.c.l.b16 %v568
      %v1211 = vunpack.c.l.b16 %v569
      %v1212 = vunpack.c.l.b16 %v570
      %v1213 = vunpack.c.l.b16 %v571
      %v1214 = vunpack.c.l.b16 %v572
      %v1215 = vunpack.c.l.b16 %v573
      %v1216 = vunpack.c.l.b16 %v574
      %v1217 = vunpack.c.l.b16 %v575
      %v1218 = vunpack.c.l.b16 %v576
      %v1219 = vunpack.c.l.b16 %v577
      %v1220 = vunpack.c.l.b16 %v578
      %v1221 = vunpack.c.l.b16 %v579
      %v1222 = vunpack.c.l.b16 %v580
      %v1223 = vunpack.c.l.b16 %v581
      %v1224 = vunpack.c.l.b16 %v582
      %v1225 = vunpack.c.l.b16 %v583
      %v1226 = vunpack.c.l.b16 %v584
      %v1227 = vunpack.c.l.b16 %v585
      %v1228 = vunpack.c.l.b16 %v586
      %v1229 = vunpack.c.l.b16 %v587
      %v1230 = vunpack.c.l.b16 %v588
      %v1231 = vunpack.c.l.b16 %v589
      %v1232 = vunpack.c.l.b16 %v590
      %v1233 = vunpack.c.l.b16 %v591
      %v1234 = vunpack.c.l.b16 %v592
      %v1235 = vunpack.c.l.b16 %v593
      %v1236 = vunpack.c.l.b16 %v594
      %v1237 = vunpack.c.l.b16 %v595
      %v1238 = vunpack.c.l.b16 %v596
      %v1239 = vunpack.c.l.b16 %v597
      %v1240 = vunpack.c.l.b16 %v598
      %v1241 = vunpack.c.l.b16 %v599
      %v1242 = vunpack.c.l.b16 %v600
      %v1243 = vunpack.c.l.b16 %v601
      %v1244 = vunpack.c.l.b16 %v602
      %v1245 = vunpack.c.l.b16 %v603
      %v1246 = vunpack.c.l.b16 %v604
      %v1247 = vunpack.c.l.b16 %v605
      %v1248 = vunpack.c.l.b16 %v606
      %v1249 = vunpack.c.l.b16 %v607
      %v1250 = vunpack.c.l.b16 %v608
      %v1251 = vunpack.c.l.b16 %v609
      %v1252 = vunpack.c.l.b16 %v610
      %v1253 = vunpack.c.l.b16 %v611
      %v1254 = vunpack.c.l.b16 %v612
      %v1255 = vunpack.c.l.b16 %v613
      %v1256 = vunpack.c.l.b16 %v614
      %v1257 = vunpack.c.l.b16 %v615
      %v1258 = vpack.c.b16 %v1211, %v1210
      %v1259 = vpack.c.b16 %v1212, %v1212
      %v1260 = vpack.c.b16 %v1214, %v1213
      %v1261 = vpack.c.b16 %v1215, %v1215
      %v1262 = vpack.c.b16 %v1217, %v1216
      %v1263 = vpack.c.b16 %v1218, %v1218
      %v1264 = vpack.c.b16 %v1220, %v1219
      %v1265 = vpack.c.b16 %v1221, %v1221
      %v1266 = vpack.c.b16 %v1223, %v1222
      %v1267 = vpack.c.b16 %v1224, %v1224
      %v1268 = vpack.c.b16 %v1226, %v1225
      %v1269 = vpack.c.b16 %v1227, %v1227
      %v1270 = vpack.c.b16 %v1229, %v1228
      %v1271 = vpack.c.b16 %v1230, %v1230
      %v1272 = vpack.c.b16 %v1232, %v1231
      %v1273 = vpack.c.b16 %v1233, %v1233
      %v1274 = vpack.c.b16 %v1235, %v1234
      %v1275 = vpack.c.b16 %v1236, %v1236
      %v1276 = vpack.c.b16 %v1238, %v1237
      %v1277 = vpack.c.b16 %v1239, %v1239
      %v1278 = vpack.c.b16 %v1241, %v1240
      %v1279 = vpack.c.b16 %v1242, %v1242
      %v1280 = vpack.c.b16 %v1244, %v1243
      %v1281 = vpack.c.b16 %v1245, %v1245
      %v1282 = vpack.c.b16 %v1247, %v1246
      %v1283 = vpack.c.b16 %v1248, %v1248
      %v1284 = vpack.c.b16 %v1250, %v1249
      %v1285 = vpack.c.b16 %v1251, %v1251
      %v1286 = vpack.c.b16 %v1253, %v1252
      %v1287 = vpack.c.b16 %v1254, %v1254
      %v1288 = vpack.c.b16 %v1256, %v1255
      %v1289 = vpack.c.b16 %v1257, %v1257
      %1290 = vrot.lane.b32.xlu0 %v1258, 12
      %v1291 = vpop.permute.xlu0 %1290
      %1292 = vrot.lane.b32.xlu0 %v1259, 12
      %v1293 = vpop.permute.xlu0 %1292
      %1294 = vrot.lane.b32.xlu0 %v1260, 12
      %v1295 = vpop.permute.xlu0 %1294
      %1296 = vrot.lane.b32.xlu0 %v1261, 12
      %v1297 = vpop.permute.xlu0 %1296
      %1298 = vrot.lane.b32.xlu0 %v1262, 12
      %v1299 = vpop.permute.xlu0 %1298
      %1300 = vrot.lane.b32.xlu0 %v1263, 12
      %v1301 = vpop.permute.xlu0 %1300
      %1302 = vrot.lane.b32.xlu0 %v1264, 12
      %v1303 = vpop.permute.xlu0 %1302
      %1304 = vrot.lane.b32.xlu0 %v1265, 12
      %v1305 = vpop.permute.xlu0 %1304
      %1306 = vrot.lane.b32.xlu0 %v1266, 12
      %v1307 = vpop.permute.xlu0 %1306
      %1308 = vrot.lane.b32.xlu0 %v1267, 12
      %v1309 = vpop.permute.xlu0 %1308
      %1310 = vrot.lane.b32.xlu0 %v1268, 12
      %v1311 = vpop.permute.xlu0 %1310
      %1312 = vrot.lane.b32.xlu0 %v1269, 12
      %v1313 = vpop.permute.xlu0 %1312
      %1314 = vrot.lane.b32.xlu0 %v1270, 12
      %v1315 = vpop.permute.xlu0 %1314
      %1316 = vrot.lane.b32.xlu0 %v1271, 12
      %v1317 = vpop.permute.xlu0 %1316
      %1318 = vrot.lane.b32.xlu0 %v1272, 12
      %v1319 = vpop.permute.xlu0 %1318
      %1320 = vrot.lane.b32.xlu0 %v1273, 12
      %v1321 = vpop.permute.xlu0 %1320
      %1322 = vrot.lane.b32.xlu0 %v1274, 12
      %v1323 = vpop.permute.xlu0 %1322
      %1324 = vrot.lane.b32.xlu0 %v1275, 12
      %v1325 = vpop.permute.xlu0 %1324
      %1326 = vrot.lane.b32.xlu0 %v1276, 12
      %v1327 = vpop.permute.xlu0 %1326
      %1328 = vrot.lane.b32.xlu0 %v1277, 12
      %v1329 = vpop.permute.xlu0 %1328
      %1330 = vrot.lane.b32.xlu0 %v1278, 12
      %v1331 = vpop.permute.xlu0 %1330
      %1332 = vrot.lane.b32.xlu0 %v1279, 12
      %v1333 = vpop.permute.xlu0 %1332
      %1334 = vrot.lane.b32.xlu0 %v1280, 12
      %v1335 = vpop.permute.xlu0 %1334
      %1336 = vrot.lane.b32.xlu0 %v1281, 12
      %v1337 = vpop.permute.xlu0 %1336
      %1338 = vrot.lane.b32.xlu0 %v1282, 12
      %v1339 = vpop.permute.xlu0 %1338
      %1340 = vrot.lane.b32.xlu0 %v1283, 12
      %v1341 = vpop.permute.xlu0 %1340
      %1342 = vrot.lane.b32.xlu0 %v1284, 12
      %v1343 = vpop.permute.xlu0 %1342
      %1344 = vrot.lane.b32.xlu0 %v1285, 12
      %v1345 = vpop.permute.xlu0 %1344
      %1346 = vrot.lane.b32.xlu0 %v1286, 12
      %v1347 = vpop.permute.xlu0 %1346
      %1348 = vrot.lane.b32.xlu0 %v1287, 12
      %v1349 = vpop.permute.xlu0 %1348
      %1350 = vrot.lane.b32.xlu0 %v1288, 12
      %v1351 = vpop.permute.xlu0 %1350
      %1352 = vrot.lane.b32.xlu0 %v1289, 12
      %v1353 = vpop.permute.xlu0 %1352
      %v1354 = vpack.c.b16 %v1212, %v1211
      %v1355 = vpack.c.b16 %v1215, %v1214
      %v1356 = vpack.c.b16 %v1218, %v1217
      %v1357 = vpack.c.b16 %v1221, %v1220
      %v1358 = vpack.c.b16 %v1224, %v1223
      %v1359 = vpack.c.b16 %v1227, %v1226
      %v1360 = vpack.c.b16 %v1230, %v1229
      %v1361 = vpack.c.b16 %v1233, %v1232
      %v1362 = vpack.c.b16 %v1236, %v1235
      %v1363 = vpack.c.b16 %v1239, %v1238
      %v1364 = vpack.c.b16 %v1242, %v1241
      %v1365 = vpack.c.b16 %v1245, %v1244
      %v1366 = vpack.c.b16 %v1248, %v1247
      %v1367 = vpack.c.b16 %v1251, %v1250
      %v1368 = vpack.c.b16 %v1254, %v1253
      %v1369 = vpack.c.b16 %v1257, %v1256
      %v1371 = vshrl.u32 %v1354, 16
      %v1373 = vrot.slane %v1371, 4
      %v1374 = vshll.u32 %v1354, 16
      %v1376 = vrot.slane %v1374, 5
      %v1377 = vor.u32 %v1373, %v1376
      %v1379 = vshrl.u32 %v1355, 16
      %v1381 = vrot.slane %v1379, 4
      %v1382 = vshll.u32 %v1355, 16
      %v1384 = vrot.slane %v1382, 5
      %v1385 = vor.u32 %v1381, %v1384
      %v1387 = vshrl.u32 %v1356, 16
      %v1389 = vrot.slane %v1387, 4
      %v1390 = vshll.u32 %v1356, 16
      %v1392 = vrot.slane %v1390, 5
      %v1393 = vor.u32 %v1389, %v1392
      %v1395 = vshrl.u32 %v1357, 16
      %v1397 = vrot.slane %v1395, 4
      %v1398 = vshll.u32 %v1357, 16
      %v1400 = vrot.slane %v1398, 5
      %v1401 = vor.u32 %v1397, %v1400
      %v1403 = vshrl.u32 %v1358, 16
      %v1405 = vrot.slane %v1403, 4
      %v1406 = vshll.u32 %v1358, 16
      %v1408 = vrot.slane %v1406, 5
      %v1409 = vor.u32 %v1405, %v1408
      %v1411 = vshrl.u32 %v1359, 16
      %v1413 = vrot.slane %v1411, 4
      %v1414 = vshll.u32 %v1359, 16
      %v1416 = vrot.slane %v1414, 5
      %v1417 = vor.u32 %v1413, %v1416
      %v1419 = vshrl.u32 %v1360, 16
      %v1421 = vrot.slane %v1419, 4
      %v1422 = vshll.u32 %v1360, 16
      %v1424 = vrot.slane %v1422, 5
      %v1425 = vor.u32 %v1421, %v1424
      %v1427 = vshrl.u32 %v1361, 16
      %v1429 = vrot.slane %v1427, 4
      %v1430 = vshll.u32 %v1361, 16
      %v1432 = vrot.slane %v1430, 5
      %v1433 = vor.u32 %v1429, %v1432
      %v1435 = vshrl.u32 %v1362, 16
      %v1437 = vrot.slane %v1435, 4
      %v1438 = vshll.u32 %v1362, 16
      %v1440 = vrot.slane %v1438, 5
      %v1441 = vor.u32 %v1437, %v1440
      %v1443 = vshrl.u32 %v1363, 16
      %v1445 = vrot.slane %v1443, 4
      %v1446 = vshll.u32 %v1363, 16
      %v1448 = vrot.slane %v1446, 5
      %v1449 = vor.u32 %v1445, %v1448
      %v1451 = vshrl.u32 %v1364, 16
      %v1453 = vrot.slane %v1451, 4
      %v1454 = vshll.u32 %v1364, 16
      %v1456 = vrot.slane %v1454, 5
      %v1457 = vor.u32 %v1453, %v1456
      %v1459 = vshrl.u32 %v1365, 16
      %v1461 = vrot.slane %v1459, 4
      %v1462 = vshll.u32 %v1365, 16
      %v1464 = vrot.slane %v1462, 5
      %v1465 = vor.u32 %v1461, %v1464
      %v1467 = vshrl.u32 %v1366, 16
      %v1469 = vrot.slane %v1467, 4
      %v1470 = vshll.u32 %v1366, 16
      %v1472 = vrot.slane %v1470, 5
      %v1473 = vor.u32 %v1469, %v1472
      %v1475 = vshrl.u32 %v1367, 16
      %v1477 = vrot.slane %v1475, 4
      %v1478 = vshll.u32 %v1367, 16
      %v1480 = vrot.slane %v1478, 5
      %v1481 = vor.u32 %v1477, %v1480
      %v1483 = vshrl.u32 %v1368, 16
      %v1485 = vrot.slane %v1483, 4
      %v1486 = vshll.u32 %v1368, 16
      %v1488 = vrot.slane %v1486, 5
      %v1489 = vor.u32 %v1485, %v1488
      %v1491 = vshrl.u32 %v1369, 16
      %v1493 = vrot.slane %v1491, 4
      %v1494 = vshll.u32 %v1369, 16
      %v1496 = vrot.slane %v1494, 5
      %v1497 = vor.u32 %v1493, %v1496
      %1498 = vrot.lane.b32.xlu0 %v1377, 16
      %v1499 = vpop.permute.xlu0 %1498
      %1500 = vrot.lane.b32.xlu0 %v1385, 16
      %v1501 = vpop.permute.xlu0 %1500
      %1502 = vrot.lane.b32.xlu0 %v1393, 16
      %v1503 = vpop.permute.xlu0 %1502
      %1504 = vrot.lane.b32.xlu0 %v1401, 16
      %v1505 = vpop.permute.xlu0 %1504
      %1506 = vrot.lane.b32.xlu0 %v1409, 16
      %v1507 = vpop.permute.xlu0 %1506
      %1508 = vrot.lane.b32.xlu0 %v1417, 16
      %v1509 = vpop.permute.xlu0 %1508
      %1510 = vrot.lane.b32.xlu0 %v1425, 16
      %v1511 = vpop.permute.xlu0 %1510
      %1512 = vrot.lane.b32.xlu0 %v1433, 16
      %v1513 = vpop.permute.xlu0 %1512
      %1514 = vrot.lane.b32.xlu0 %v1441, 16
      %v1515 = vpop.permute.xlu0 %1514
      %1516 = vrot.lane.b32.xlu0 %v1449, 16
      %v1517 = vpop.permute.xlu0 %1516
      %1518 = vrot.lane.b32.xlu0 %v1457, 16
      %v1519 = vpop.permute.xlu0 %1518
      %1520 = vrot.lane.b32.xlu0 %v1465, 16
      %v1521 = vpop.permute.xlu0 %1520
      %1522 = vrot.lane.b32.xlu0 %v1473, 16
      %v1523 = vpop.permute.xlu0 %1522
      %1524 = vrot.lane.b32.xlu0 %v1481, 16
      %v1525 = vpop.permute.xlu0 %1524
      %1526 = vrot.lane.b32.xlu0 %v1489, 16
      %v1527 = vpop.permute.xlu0 %1526
      %1528 = vrot.lane.b32.xlu0 %v1497, 16
      %v1529 = vpop.permute.xlu0 %1528
      %v1546 = vunpack.c.l.b16 %v616
      %v1547 = vunpack.c.l.b16 %v617
      %v1548 = vunpack.c.l.b16 %v618
      %v1549 = vunpack.c.l.b16 %v619
      %v1550 = vunpack.c.l.b16 %v620
      %v1551 = vunpack.c.l.b16 %v621
      %v1552 = vunpack.c.l.b16 %v622
      %v1553 = vunpack.c.l.b16 %v623
      %v1554 = vunpack.c.l.b16 %v624
      %v1555 = vunpack.c.l.b16 %v625
      %v1556 = vunpack.c.l.b16 %v626
      %v1557 = vunpack.c.l.b16 %v627
      %v1558 = vunpack.c.l.b16 %v628
      %v1559 = vunpack.c.l.b16 %v629
      %v1560 = vunpack.c.l.b16 %v630
      %v1561 = vunpack.c.l.b16 %v631
      %v1562 = vpack.c.b16 %v1546, %v1546
      %v1563 = vpack.c.b16 %v1547, %v1547
      %v1564 = vpack.c.b16 %v1548, %v1548
      %v1565 = vpack.c.b16 %v1549, %v1549
      %v1566 = vpack.c.b16 %v1550, %v1550
      %v1567 = vpack.c.b16 %v1551, %v1551
      %v1568 = vpack.c.b16 %v1552, %v1552
      %v1569 = vpack.c.b16 %v1553, %v1553
      %v1570 = vpack.c.b16 %v1554, %v1554
      %v1571 = vpack.c.b16 %v1555, %v1555
      %v1572 = vpack.c.b16 %v1556, %v1556
      %v1573 = vpack.c.b16 %v1557, %v1557
      %v1574 = vpack.c.b16 %v1558, %v1558
      %v1575 = vpack.c.b16 %v1559, %v1559
      %v1576 = vpack.c.b16 %v1560, %v1560
      %v1577 = vpack.c.b16 %v1561, %v1561
      %v1578 = vrot.slane %v1354, 5
      %v1579 = vrot.slane %v1562, 5
      %v1580 = vsel %vm1049, %v1578, %v1579
      %v1581 = vrot.slane %v1355, 5
      %v1582 = vrot.slane %v1563, 5
      %v1583 = vsel %vm1049, %v1581, %v1582
      %v1584 = vrot.slane %v1356, 5
      %v1585 = vrot.slane %v1564, 5
      %v1586 = vsel %vm1049, %v1584, %v1585
      %v1587 = vrot.slane %v1357, 5
      %v1588 = vrot.slane %v1565, 5
      %v1589 = vsel %vm1049, %v1587, %v1588
      %v1590 = vrot.slane %v1358, 5
      %v1591 = vrot.slane %v1566, 5
      %v1592 = vsel %vm1049, %v1590, %v1591
      %v1593 = vrot.slane %v1359, 5
      %v1594 = vrot.slane %v1567, 5
      %v1595 = vsel %vm1049, %v1593, %v1594
      %v1596 = vrot.slane %v1360, 5
      %v1597 = vrot.slane %v1568, 5
      %v1598 = vsel %vm1049, %v1596, %v1597
      %v1599 = vrot.slane %v1361, 5
      %v1600 = vrot.slane %v1569, 5
      %v1601 = vsel %vm1049, %v1599, %v1600
      %v1602 = vrot.slane %v1362, 5
      %v1603 = vrot.slane %v1570, 5
      %v1604 = vsel %vm1049, %v1602, %v1603
      %v1605 = vrot.slane %v1363, 5
      %v1606 = vrot.slane %v1571, 5
      %v1607 = vsel %vm1049, %v1605, %v1606
      %v1608 = vrot.slane %v1364, 5
      %v1609 = vrot.slane %v1572, 5
      %v1610 = vsel %vm1049, %v1608, %v1609
      %v1611 = vrot.slane %v1365, 5
      %v1612 = vrot.slane %v1573, 5
      %v1613 = vsel %vm1049, %v1611, %v1612
      %v1614 = vrot.slane %v1366, 5
      %v1615 = vrot.slane %v1574, 5
      %v1616 = vsel %vm1049, %v1614, %v1615
      %v1617 = vrot.slane %v1367, 5
      %v1618 = vrot.slane %v1575, 5
      %v1619 = vsel %vm1049, %v1617, %v1618
      %v1620 = vrot.slane %v1368, 5
      %v1621 = vrot.slane %v1576, 5
      %v1622 = vsel %vm1049, %v1620, %v1621
      %v1623 = vrot.slane %v1369, 5
      %v1624 = vrot.slane %v1577, 5
      %v1625 = vsel %vm1049, %v1623, %v1624
      %1626 = vrot.lane.b32.xlu0 %v1578, 20
      %v1627 = vpop.permute.xlu0 %1626
      %1628 = vrot.lane.b32.xlu0 %v1580, 20
      %v1629 = vpop.permute.xlu0 %1628
      %1630 = vrot.lane.b32.xlu0 %v1581, 20
      %v1631 = vpop.permute.xlu0 %1630
      %1632 = vrot.lane.b32.xlu0 %v1583, 20
      %v1633 = vpop.permute.xlu0 %1632
      %1634 = vrot.lane.b32.xlu0 %v1584, 20
      %v1635 = vpop.permute.xlu0 %1634
      %1636 = vrot.lane.b32.xlu0 %v1586, 20
      %v1637 = vpop.permute.xlu0 %1636
      %1638 = vrot.lane.b32.xlu0 %v1587, 20
      %v1639 = vpop.permute.xlu0 %1638
      %1640 = vrot.lane.b32.xlu0 %v1589, 20
      %v1641 = vpop.permute.xlu0 %1640
      %1642 = vrot.lane.b32.xlu0 %v1590, 20
      %v1643 = vpop.permute.xlu0 %1642
      %1644 = vrot.lane.b32.xlu0 %v1592, 20
      %v1645 = vpop.permute.xlu0 %1644
      %1646 = vrot.lane.b32.xlu0 %v1593, 20
      %v1647 = vpop.permute.xlu0 %1646
      %1648 = vrot.lane.b32.xlu0 %v1595, 20
      %v1649 = vpop.permute.xlu0 %1648
      %1650 = vrot.lane.b32.xlu0 %v1596, 20
      %v1651 = vpop.permute.xlu0 %1650
      %1652 = vrot.lane.b32.xlu0 %v1598, 20
      %v1653 = vpop.permute.xlu0 %1652
      %1654 = vrot.lane.b32.xlu0 %v1599, 20
      %v1655 = vpop.permute.xlu0 %1654
      %1656 = vrot.lane.b32.xlu0 %v1601, 20
      %v1657 = vpop.permute.xlu0 %1656
      %1658 = vrot.lane.b32.xlu0 %v1602, 20
      %v1659 = vpop.permute.xlu0 %1658
      %1660 = vrot.lane.b32.xlu0 %v1604, 20
      %v1661 = vpop.permute.xlu0 %1660
      %1662 = vrot.lane.b32.xlu0 %v1605, 20
      %v1663 = vpop.permute.xlu0 %1662
      %1664 = vrot.lane.b32.xlu0 %v1607, 20
      %v1665 = vpop.permute.xlu0 %1664
      %1666 = vrot.lane.b32.xlu0 %v1608, 20
      %v1667 = vpop.permute.xlu0 %1666
      %1668 = vrot.lane.b32.xlu0 %v1610, 20
      %v1669 = vpop.permute.xlu0 %1668
      %1670 = vrot.lane.b32.xlu0 %v1611, 20
      %v1671 = vpop.permute.xlu0 %1670
      %1672 = vrot.lane.b32.xlu0 %v1613, 20
      %v1673 = vpop.permute.xlu0 %1672
      %1674 = vrot.lane.b32.xlu0 %v1614, 20
      %v1675 = vpop.permute.xlu0 %1674
      %1676 = vrot.lane.b32.xlu0 %v1616, 20
      %v1677 = vpop.permute.xlu0 %1676
      %1678 = vrot.lane.b32.xlu0 %v1617, 20
      %v1679 = vpop.permute.xlu0 %1678
      %1680 = vrot.lane.b32.xlu0 %v1619, 20
      %v1681 = vpop.permute.xlu0 %1680
      %1682 = vrot.lane.b32.xlu0 %v1620, 20
      %v1683 = vpop.permute.xlu0 %1682
      %1684 = vrot.lane.b32.xlu0 %v1622, 20
      %v1685 = vpop.permute.xlu0 %1684
      %1686 = vrot.lane.b32.xlu0 %v1623, 20
      %v1687 = vpop.permute.xlu0 %1686
      %1688 = vrot.lane.b32.xlu0 %v1625, 20
      %v1689 = vpop.permute.xlu0 %1688
      %v1738 = vunpack.c.l.b16 %v633
      %v1739 = vunpack.c.l.b16 %v634
      %v1740 = vunpack.c.l.b16 %v635
      %v1741 = vunpack.c.l.b16 %v636
      %v1742 = vunpack.c.l.b16 %v637
      %v1743 = vunpack.c.l.b16 %v638
      %v1744 = vunpack.c.l.b16 %v639
      %v1745 = vunpack.c.l.b16 %v640
      %v1746 = vunpack.c.l.b16 %v641
      %v1747 = vunpack.c.l.b16 %v642
      %v1748 = vunpack.c.l.b16 %v643
      %v1749 = vunpack.c.l.b16 %v644
      %v1750 = vunpack.c.l.b16 %v645
      %v1751 = vunpack.c.l.b16 %v646
      %v1752 = vunpack.c.l.b16 %v647
      %v1753 = vunpack.c.l.b16 %v648
      %v1754 = vunpack.c.l.b16 %v649
      %v1755 = vunpack.c.l.b16 %v650
      %v1756 = vunpack.c.l.b16 %v651
      %v1757 = vunpack.c.l.b16 %v652
      %v1758 = vunpack.c.l.b16 %v653
      %v1759 = vunpack.c.l.b16 %v654
      %v1760 = vunpack.c.l.b16 %v655
      %v1761 = vunpack.c.l.b16 %v656
      %v1762 = vunpack.c.l.b16 %v657
      %v1763 = vunpack.c.l.b16 %v658
      %v1764 = vunpack.c.l.b16 %v659
      %v1765 = vunpack.c.l.b16 %v660
      %v1766 = vunpack.c.l.b16 %v661
      %v1767 = vunpack.c.l.b16 %v662
      %v1768 = vunpack.c.l.b16 %v663
      %v1769 = vunpack.c.l.b16 %v664
      %v1770 = vunpack.c.l.b16 %v665
      %v1771 = vunpack.c.l.b16 %v666
      %v1772 = vunpack.c.l.b16 %v667
      %v1773 = vunpack.c.l.b16 %v668
      %v1774 = vunpack.c.l.b16 %v669
      %v1775 = vunpack.c.l.b16 %v670
      %v1776 = vunpack.c.l.b16 %v671
      %v1777 = vunpack.c.l.b16 %v672
      %v1778 = vunpack.c.l.b16 %v673
      %v1779 = vunpack.c.l.b16 %v674
      %v1780 = vunpack.c.l.b16 %v675
      %v1781 = vunpack.c.l.b16 %v676
      %v1782 = vunpack.c.l.b16 %v677
      %v1783 = vunpack.c.l.b16 %v678
      %v1784 = vunpack.c.l.b16 %v679
      %v1785 = vunpack.c.l.b16 %v680
      %v1786 = vpack.c.b16 %v1739, %v1738
      %v1787 = vpack.c.b16 %v1740, %v1740
      %v1788 = vpack.c.b16 %v1742, %v1741
      %v1789 = vpack.c.b16 %v1743, %v1743
      %v1790 = vpack.c.b16 %v1745, %v1744
      %v1791 = vpack.c.b16 %v1746, %v1746
      %v1792 = vpack.c.b16 %v1748, %v1747
      %v1793 = vpack.c.b16 %v1749, %v1749
      %v1794 = vpack.c.b16 %v1751, %v1750
      %v1795 = vpack.c.b16 %v1752, %v1752
      %v1796 = vpack.c.b16 %v1754, %v1753
      %v1797 = vpack.c.b16 %v1755, %v1755
      %v1798 = vpack.c.b16 %v1757, %v1756
      %v1799 = vpack.c.b16 %v1758, %v1758
      %v1800 = vpack.c.b16 %v1760, %v1759
      %v1801 = vpack.c.b16 %v1761, %v1761
      %v1802 = vpack.c.b16 %v1763, %v1762
      %v1803 = vpack.c.b16 %v1764, %v1764
      %v1804 = vpack.c.b16 %v1766, %v1765
      %v1805 = vpack.c.b16 %v1767, %v1767
      %v1806 = vpack.c.b16 %v1769, %v1768
      %v1807 = vpack.c.b16 %v1770, %v1770
      %v1808 = vpack.c.b16 %v1772, %v1771
      %v1809 = vpack.c.b16 %v1773, %v1773
      %v1810 = vpack.c.b16 %v1775, %v1774
      %v1811 = vpack.c.b16 %v1776, %v1776
      %v1812 = vpack.c.b16 %v1778, %v1777
      %v1813 = vpack.c.b16 %v1779, %v1779
      %v1814 = vpack.c.b16 %v1781, %v1780
      %v1815 = vpack.c.b16 %v1782, %v1782
      %v1816 = vpack.c.b16 %v1784, %v1783
      %v1817 = vpack.c.b16 %v1785, %v1785
      %1818 = vrot.lane.b32.xlu0 %v1786, 24
      %v1819 = vpop.permute.xlu0 %1818
      %1820 = vrot.lane.b32.xlu0 %v1787, 24
      %v1821 = vpop.permute.xlu0 %1820
      %1822 = vrot.lane.b32.xlu0 %v1788, 24
      %v1823 = vpop.permute.xlu0 %1822
      %1824 = vrot.lane.b32.xlu0 %v1789, 24
      %v1825 = vpop.permute.xlu0 %1824
      %1826 = vrot.lane.b32.xlu0 %v1790, 24
      %v1827 = vpop.permute.xlu0 %1826
      %1828 = vrot.lane.b32.xlu0 %v1791, 24
      %v1829 = vpop.permute.xlu0 %1828
      %1830 = vrot.lane.b32.xlu0 %v1792, 24
      %v1831 = vpop.permute.xlu0 %1830
      %1832 = vrot.lane.b32.xlu0 %v1793, 24
      %v1833 = vpop.permute.xlu0 %1832
      %1834 = vrot.lane.b32.xlu0 %v1794, 24
      %v1835 = vpop.permute.xlu0 %1834
      %1836 = vrot.lane.b32.xlu0 %v1795, 24
      %v1837 = vpop.permute.xlu0 %1836
      %1838 = vrot.lane.b32.xlu0 %v1796, 24
      %v1839 = vpop.permute.xlu0 %1838
      %1840 = vrot.lane.b32.xlu0 %v1797, 24
      %v1841 = vpop.permute.xlu0 %1840
      %1842 = vrot.lane.b32.xlu0 %v1798, 24
      %v1843 = vpop.permute.xlu0 %1842
      %1844 = vrot.lane.b32.xlu0 %v1799, 24
      %v1845 = vpop.permute.xlu0 %1844
      %1846 = vrot.lane.b32.xlu0 %v1800, 24
      %v1847 = vpop.permute.xlu0 %1846
      %1848 = vrot.lane.b32.xlu0 %v1801, 24
      %v1849 = vpop.permute.xlu0 %1848
      %1850 = vrot.lane.b32.xlu0 %v1802, 24
      %v1851 = vpop.permute.xlu0 %1850
      %1852 = vrot.lane.b32.xlu0 %v1803, 24
      %v1853 = vpop.permute.xlu0 %1852
      %1854 = vrot.lane.b32.xlu0 %v1804, 24
      %v1855 = vpop.permute.xlu0 %1854
      %1856 = vrot.lane.b32.xlu0 %v1805, 24
      %v1857 = vpop.permute.xlu0 %1856
      %1858 = vrot.lane.b32.xlu0 %v1806, 24
      %v1859 = vpop.permute.xlu0 %1858
      %1860 = vrot.lane.b32.xlu0 %v1807, 24
      %v1861 = vpop.permute.xlu0 %1860
      %1862 = vrot.lane.b32.xlu0 %v1808, 24
      %v1863 = vpop.permute.xlu0 %1862
      %1864 = vrot.lane.b32.xlu0 %v1809, 24
      %v1865 = vpop.permute.xlu0 %1864
      %1866 = vrot.lane.b32.xlu0 %v1810, 24
      %v1867 = vpop.permute.xlu0 %1866
      %1868 = vrot.lane.b32.xlu0 %v1811, 24
      %v1869 = vpop.permute.xlu0 %1868
      %1870 = vrot.lane.b32.xlu0 %v1812, 24
      %v1871 = vpop.permute.xlu0 %1870
      %1872 = vrot.lane.b32.xlu0 %v1813, 24
      %v1873 = vpop.permute.xlu0 %1872
      %1874 = vrot.lane.b32.xlu0 %v1814, 24
      %v1875 = vpop.permute.xlu0 %1874
      %1876 = vrot.lane.b32.xlu0 %v1815, 24
      %v1877 = vpop.permute.xlu0 %1876
      %1878 = vrot.lane.b32.xlu0 %v1816, 24
      %v1879 = vpop.permute.xlu0 %1878
      %1880 = vrot.lane.b32.xlu0 %v1817, 24
      %v1881 = vpop.permute.xlu0 %1880
      %v1882 = vpack.c.b16 %v1740, %v1739
      %v1883 = vpack.c.b16 %v1743, %v1742
      %v1884 = vpack.c.b16 %v1746, %v1745
      %v1885 = vpack.c.b16 %v1749, %v1748
      %v1886 = vpack.c.b16 %v1752, %v1751
      %v1887 = vpack.c.b16 %v1755, %v1754
      %v1888 = vpack.c.b16 %v1758, %v1757
      %v1889 = vpack.c.b16 %v1761, %v1760
      %v1890 = vpack.c.b16 %v1764, %v1763
      %v1891 = vpack.c.b16 %v1767, %v1766
      %v1892 = vpack.c.b16 %v1770, %v1769
      %v1893 = vpack.c.b16 %v1773, %v1772
      %v1894 = vpack.c.b16 %v1776, %v1775
      %v1895 = vpack.c.b16 %v1779, %v1778
      %v1896 = vpack.c.b16 %v1782, %v1781
      %v1897 = vpack.c.b16 %v1785, %v1784
      %v1899 = vshrl.u32 %v1882, 16
      %v1901 = vrot.slane %v1899, 4
      %v1902 = vshll.u32 %v1882, 16
      %v1904 = vrot.slane %v1902, 5
      %v1905 = vor.u32 %v1901, %v1904
      %v1907 = vshrl.u32 %v1883, 16
      %v1909 = vrot.slane %v1907, 4
      %v1910 = vshll.u32 %v1883, 16
      %v1912 = vrot.slane %v1910, 5
      %v1913 = vor.u32 %v1909, %v1912
      %v1915 = vshrl.u32 %v1884, 16
      %v1917 = vrot.slane %v1915, 4
      %v1918 = vshll.u32 %v1884, 16
      %v1920 = vrot.slane %v1918, 5
      %v1921 = vor.u32 %v1917, %v1920
      %v1923 = vshrl.u32 %v1885, 16
      %v1925 = vrot.slane %v1923, 4
      %v1926 = vshll.u32 %v1885, 16
      %v1928 = vrot.slane %v1926, 5
      %v1929 = vor.u32 %v1925, %v1928
      %v1931 = vshrl.u32 %v1886, 16
      %v1933 = vrot.slane %v1931, 4
      %v1934 = vshll.u32 %v1886, 16
      %v1936 = vrot.slane %v1934, 5
      %v1937 = vor.u32 %v1933, %v1936
      %v1939 = vshrl.u32 %v1887, 16
      %v1941 = vrot.slane %v1939, 4
      %v1942 = vshll.u32 %v1887, 16
      %v1944 = vrot.slane %v1942, 5
      %v1945 = vor.u32 %v1941, %v1944
      %v1947 = vshrl.u32 %v1888, 16
      %v1949 = vrot.slane %v1947, 4
      %v1950 = vshll.u32 %v1888, 16
      %v1952 = vrot.slane %v1950, 5
      %v1953 = vor.u32 %v1949, %v1952
      %v1955 = vshrl.u32 %v1889, 16
      %v1957 = vrot.slane %v1955, 4
      %v1958 = vshll.u32 %v1889, 16
      %v1960 = vrot.slane %v1958, 5
      %v1961 = vor.u32 %v1957, %v1960
      %v1963 = vshrl.u32 %v1890, 16
      %v1965 = vrot.slane %v1963, 4
      %v1966 = vshll.u32 %v1890, 16
      %v1968 = vrot.slane %v1966, 5
      %v1969 = vor.u32 %v1965, %v1968
      %v1971 = vshrl.u32 %v1891, 16
      %v1973 = vrot.slane %v1971, 4
      %v1974 = vshll.u32 %v1891, 16
      %v1976 = vrot.slane %v1974, 5
      %v1977 = vor.u32 %v1973, %v1976
      %v1979 = vshrl.u32 %v1892, 16
      %v1981 = vrot.slane %v1979, 4
      %v1982 = vshll.u32 %v1892, 16
      %v1984 = vrot.slane %v1982, 5
      %v1985 = vor.u32 %v1981, %v1984
      %v1987 = vshrl.u32 %v1893, 16
      %v1989 = vrot.slane %v1987, 4
      %v1990 = vshll.u32 %v1893, 16
      %v1992 = vrot.slane %v1990, 5
      %v1993 = vor.u32 %v1989, %v1992
      %v1995 = vshrl.u32 %v1894, 16
      %v1997 = vrot.slane %v1995, 4
      %v1998 = vshll.u32 %v1894, 16
      %v2000 = vrot.slane %v1998, 5
      %v2001 = vor.u32 %v1997, %v2000
      %v2003 = vshrl.u32 %v1895, 16
      %v2005 = vrot.slane %v2003, 4
      %v2006 = vshll.u32 %v1895, 16
      %v2008 = vrot.slane %v2006, 5
      %v2009 = vor.u32 %v2005, %v2008
      %v2011 = vshrl.u32 %v1896, 16
      %v2013 = vrot.slane %v2011, 4
      %v2014 = vshll.u32 %v1896, 16
      %v2016 = vrot.slane %v2014, 5
      %v2017 = vor.u32 %v2013, %v2016
      %v2019 = vshrl.u32 %v1897, 16
      %v2021 = vrot.slane %v2019, 4
      %v2022 = vshll.u32 %v1897, 16
      %v2024 = vrot.slane %v2022, 5
      %v2025 = vor.u32 %v2021, %v2024
      %2026 = vrot.lane.b32.xlu0 %v1905, 28
      %v2027 = vpop.permute.xlu0 %2026
      %2028 = vrot.lane.b32.xlu0 %v1913, 28
      %v2029 = vpop.permute.xlu0 %2028
      %2030 = vrot.lane.b32.xlu0 %v1921, 28
      %v2031 = vpop.permute.xlu0 %2030
      %2032 = vrot.lane.b32.xlu0 %v1929, 28
      %v2033 = vpop.permute.xlu0 %2032
      %2034 = vrot.lane.b32.xlu0 %v1937, 28
      %v2035 = vpop.permute.xlu0 %2034
      %2036 = vrot.lane.b32.xlu0 %v1945, 28
      %v2037 = vpop.permute.xlu0 %2036
      %2038 = vrot.lane.b32.xlu0 %v1953, 28
      %v2039 = vpop.permute.xlu0 %2038
      %2040 = vrot.lane.b32.xlu0 %v1961, 28
      %v2041 = vpop.permute.xlu0 %2040
      %2042 = vrot.lane.b32.xlu0 %v1969, 28
      %v2043 = vpop.permute.xlu0 %2042
      %2044 = vrot.lane.b32.xlu0 %v1977, 28
      %v2045 = vpop.permute.xlu0 %2044
      %2046 = vrot.lane.b32.xlu0 %v1985, 28
      %v2047 = vpop.permute.xlu0 %2046
      %2048 = vrot.lane.b32.xlu0 %v1993, 28
      %v2049 = vpop.permute.xlu0 %2048
      %2050 = vrot.lane.b32.xlu0 %v2001, 28
      %v2051 = vpop.permute.xlu0 %2050
      %2052 = vrot.lane.b32.xlu0 %v2009, 28
      %v2053 = vpop.permute.xlu0 %2052
      %2054 = vrot.lane.b32.xlu0 %v2017, 28
      %v2055 = vpop.permute.xlu0 %2054
      %2056 = vrot.lane.b32.xlu0 %v2025, 28
      %v2057 = vpop.permute.xlu0 %2056
      %v2074 = vunpack.c.l.b16 %v681
      %v2075 = vunpack.c.l.b16 %v682
      %v2076 = vunpack.c.l.b16 %v683
      %v2077 = vunpack.c.l.b16 %v684
      %v2078 = vunpack.c.l.b16 %v685
      %v2079 = vunpack.c.l.b16 %v686
      %v2080 = vunpack.c.l.b16 %v687
      %v2081 = vunpack.c.l.b16 %v688
      %v2082 = vunpack.c.l.b16 %v689
      %v2083 = vunpack.c.l.b16 %v690
      %v2084 = vunpack.c.l.b16 %v691
      %v2085 = vunpack.c.l.b16 %v692
      %v2086 = vunpack.c.l.b16 %v693
      %v2087 = vunpack.c.l.b16 %v694
      %v2088 = vunpack.c.l.b16 %v695
      %v2089 = vunpack.c.l.b16 %v696
      %v2090 = vpack.c.b16 %v2074, %v2074
      %v2091 = vpack.c.b16 %v2075, %v2075
      %v2092 = vpack.c.b16 %v2076, %v2076
      %v2093 = vpack.c.b16 %v2077, %v2077
      %v2094 = vpack.c.b16 %v2078, %v2078
      %v2095 = vpack.c.b16 %v2079, %v2079
      %v2096 = vpack.c.b16 %v2080, %v2080
      %v2097 = vpack.c.b16 %v2081, %v2081
      %v2098 = vpack.c.b16 %v2082, %v2082
      %v2099 = vpack.c.b16 %v2083, %v2083
      %v2100 = vpack.c.b16 %v2084, %v2084
      %v2101 = vpack.c.b16 %v2085, %v2085
      %v2102 = vpack.c.b16 %v2086, %v2086
      %v2103 = vpack.c.b16 %v2087, %v2087
      %v2104 = vpack.c.b16 %v2088, %v2088
      %v2105 = vpack.c.b16 %v2089, %v2089
      %v2106 = vrot.slane %v1882, 5
      %v2107 = vrot.slane %v2090, 5
      %v2108 = vsel %vm1049, %v2106, %v2107
      %v2109 = vrot.slane %v1883, 5
      %v2110 = vrot.slane %v2091, 5
      %v2111 = vsel %vm1049, %v2109, %v2110
      %v2112 = vrot.slane %v1884, 5
      %v2113 = vrot.slane %v2092, 5
      %v2114 = vsel %vm1049, %v2112, %v2113
      %v2115 = vrot.slane %v1885, 5
      %v2116 = vrot.slane %v2093, 5
      %v2117 = vsel %vm1049, %v2115, %v2116
      %v2118 = vrot.slane %v1886, 5
      %v2119 = vrot.slane %v2094, 5
      %v2120 = vsel %vm1049, %v2118, %v2119
      %v2121 = vrot.slane %v1887, 5
      %v2122 = vrot.slane %v2095, 5
      %v2123 = vsel %vm1049, %v2121, %v2122
      %v2124 = vrot.slane %v1888, 5
      %v2125 = vrot.slane %v2096, 5
      %v2126 = vsel %vm1049, %v2124, %v2125
      %v2127 = vrot.slane %v1889, 5
      %v2128 = vrot.slane %v2097, 5
      %v2129 = vsel %vm1049, %v2127, %v2128
      %v2130 = vrot.slane %v1890, 5
      %v2131 = vrot.slane %v2098, 5
      %v2132 = vsel %vm1049, %v2130, %v2131
      %v2133 = vrot.slane %v1891, 5
      %v2134 = vrot.slane %v2099, 5
      %v2135 = vsel %vm1049, %v2133, %v2134
      %v2136 = vrot.slane %v1892, 5
      %v2137 = vrot.slane %v2100, 5
      %v2138 = vsel %vm1049, %v2136, %v2137
      %v2139 = vrot.slane %v1893, 5
      %v2140 = vrot.slane %v2101, 5
      %v2141 = vsel %vm1049, %v2139, %v2140
      %v2142 = vrot.slane %v1894, 5
      %v2143 = vrot.slane %v2102, 5
      %v2144 = vsel %vm1049, %v2142, %v2143
      %v2145 = vrot.slane %v1895, 5
      %v2146 = vrot.slane %v2103, 5
      %v2147 = vsel %vm1049, %v2145, %v2146
      %v2148 = vrot.slane %v1896, 5
      %v2149 = vrot.slane %v2104, 5
      %v2150 = vsel %vm1049, %v2148, %v2149
      %v2151 = vrot.slane %v1897, 5
      %v2152 = vrot.slane %v2105, 5
      %v2153 = vsel %vm1049, %v2151, %v2152
      %2154 = vrot.lane.b32.xlu0 %v2106, 32
      %v2155 = vpop.permute.xlu0 %2154
      %2156 = vrot.lane.b32.xlu0 %v2108, 32
      %v2157 = vpop.permute.xlu0 %2156
      %2158 = vrot.lane.b32.xlu0 %v2109, 32
      %v2159 = vpop.permute.xlu0 %2158
      %2160 = vrot.lane.b32.xlu0 %v2111, 32
      %v2161 = vpop.permute.xlu0 %2160
      %2162 = vrot.lane.b32.xlu0 %v2112, 32
      %v2163 = vpop.permute.xlu0 %2162
      %2164 = vrot.lane.b32.xlu0 %v2114, 32
      %v2165 = vpop.permute.xlu0 %2164
      %2166 = vrot.lane.b32.xlu0 %v2115, 32
      %v2167 = vpop.permute.xlu0 %2166
      %2168 = vrot.lane.b32.xlu0 %v2117, 32
      %v2169 = vpop.permute.xlu0 %2168
      %2170 = vrot.lane.b32.xlu0 %v2118, 32
      %v2171 = vpop.permute.xlu0 %2170
      %2172 = vrot.lane.b32.xlu0 %v2120, 32
      %v2173 = vpop.permute.xlu0 %2172
      %2174 = vrot.lane.b32.xlu0 %v2121, 32
      %v2175 = vpop.permute.xlu0 %2174
      %2176 = vrot.lane.b32.xlu0 %v2123, 32
      %v2177 = vpop.permute.xlu0 %2176
      %2178 = vrot.lane.b32.xlu0 %v2124, 32
      %v2179 = vpop.permute.xlu0 %2178
      %2180 = vrot.lane.b32.xlu0 %v2126, 32
      %v2181 = vpop.permute.xlu0 %2180
      %2182 = vrot.lane.b32.xlu0 %v2127, 32
      %v2183 = vpop.permute.xlu0 %2182
      %2184 = vrot.lane.b32.xlu0 %v2129, 32
      %v2185 = vpop.permute.xlu0 %2184
      %2186 = vrot.lane.b32.xlu0 %v2130, 32
      %v2187 = vpop.permute.xlu0 %2186
      %2188 = vrot.lane.b32.xlu0 %v2132, 32
      %v2189 = vpop.permute.xlu0 %2188
      %2190 = vrot.lane.b32.xlu0 %v2133, 32
      %v2191 = vpop.permute.xlu0 %2190
      %2192 = vrot.lane.b32.xlu0 %v2135, 32
      %v2193 = vpop.permute.xlu0 %2192
      %2194 = vrot.lane.b32.xlu0 %v2136, 32
      %v2195 = vpop.permute.xlu0 %2194
      %2196 = vrot.lane.b32.xlu0 %v2138, 32
      %v2197 = vpop.permute.xlu0 %2196
      %2198 = vrot.lane.b32.xlu0 %v2139, 32
      %v2199 = vpop.permute.xlu0 %2198
      %2200 = vrot.lane.b32.xlu0 %v2141, 32
      %v2201 = vpop.permute.xlu0 %2200
      %2202 = vrot.lane.b32.xlu0 %v2142, 32
      %v2203 = vpop.permute.xlu0 %2202
      %2204 = vrot.lane.b32.xlu0 %v2144, 32
      %v2205 = vpop.permute.xlu0 %2204
      %2206 = vrot.lane.b32.xlu0 %v2145, 32
      %v2207 = vpop.permute.xlu0 %2206
      %2208 = vrot.lane.b32.xlu0 %v2147, 32
      %v2209 = vpop.permute.xlu0 %2208
      %2210 = vrot.lane.b32.xlu0 %v2148, 32
      %v2211 = vpop.permute.xlu0 %2210
      %2212 = vrot.lane.b32.xlu0 %v2150, 32
      %v2213 = vpop.permute.xlu0 %2212
      %2214 = vrot.lane.b32.xlu0 %v2151, 32
      %v2215 = vpop.permute.xlu0 %2214
      %2216 = vrot.lane.b32.xlu0 %v2153, 32
      %v2217 = vpop.permute.xlu0 %2216
      %vm2218 = vcmask 31744
      %v2221 = vsel %vm2218, %v793, %v970
      %v2223 = vsel %vm2218, %v794, %v970
      %v2226 = vsel %vm2218, %v795, %v972
      %v2228 = vsel %vm2218, %v796, %v972
      %v2231 = vsel %vm2218, %v797, %v974
      %v2233 = vsel %vm2218, %v798, %v974
      %v2236 = vsel %vm2218, %v799, %v976
      %v2238 = vsel %vm2218, %v800, %v976
      %v2241 = vsel %vm2218, %v801, %v978
      %v2243 = vsel %vm2218, %v802, %v978
      %v2246 = vsel %vm2218, %v803, %v980
      %v2248 = vsel %vm2218, %v804, %v980
      %v2251 = vsel %vm2218, %v805, %v982
      %v2253 = vsel %vm2218, %v806, %v982
      %v2256 = vsel %vm2218, %v807, %v984
      %v2258 = vsel %vm2218, %v808, %v984
      %v2261 = vsel %vm2218, %v809, %v986
      %v2263 = vsel %vm2218, %v810, %v986
      %v2266 = vsel %vm2218, %v811, %v988
      %v2268 = vsel %vm2218, %v812, %v988
      %v2271 = vsel %vm2218, %v813, %v990
      %v2273 = vsel %vm2218, %v814, %v990
      %v2276 = vsel %vm2218, %v815, %v992
      %v2278 = vsel %vm2218, %v816, %v992
      %v2281 = vsel %vm2218, %v817, %v994
      %v2283 = vsel %vm2218, %v818, %v994
      %v2286 = vsel %vm2218, %v819, %v996
      %v2288 = vsel %vm2218, %v820, %v996
      %v2291 = vsel %vm2218, %v821, %v998
      %v2293 = vsel %vm2218, %v822, %v998
      %v2296 = vsel %vm2218, %v823, %v1000
      %v2298 = vsel %vm2218, %v824, %v1000
      %v2300 = vsel %vm393, %v2221, %v1099
      %v2302 = vsel %vm393, %v2223, %v1101
      %v2304 = vsel %vm393, %v2226, %v1103
      %v2306 = vsel %vm393, %v2228, %v1105
      %v2308 = vsel %vm393, %v2231, %v1107
      %v2310 = vsel %vm393, %v2233, %v1109
      %v2312 = vsel %vm393, %v2236, %v1111
      %v2314 = vsel %vm393, %v2238, %v1113
      %v2316 = vsel %vm393, %v2241, %v1115
      %v2318 = vsel %vm393, %v2243, %v1117
      %v2320 = vsel %vm393, %v2246, %v1119
      %v2322 = vsel %vm393, %v2248, %v1121
      %v2324 = vsel %vm393, %v2251, %v1123
      %v2326 = vsel %vm393, %v2253, %v1125
      %v2328 = vsel %vm393, %v2256, %v1127
      %v2330 = vsel %vm393, %v2258, %v1129
      %v2332 = vsel %vm393, %v2261, %v1131
      %v2334 = vsel %vm393, %v2263, %v1133
      %v2336 = vsel %vm393, %v2266, %v1135
      %v2338 = vsel %vm393, %v2268, %v1137
      %v2340 = vsel %vm393, %v2271, %v1139
      %v2342 = vsel %vm393, %v2273, %v1141
      %v2344 = vsel %vm393, %v2276, %v1143
      %v2346 = vsel %vm393, %v2278, %v1145
      %v2348 = vsel %vm393, %v2281, %v1147
      %v2350 = vsel %vm393, %v2283, %v1149
      %v2352 = vsel %vm393, %v2286, %v1151
      %v2354 = vsel %vm393, %v2288, %v1153
      %v2356 = vsel %vm393, %v2291, %v1155
      %v2358 = vsel %vm393, %v2293, %v1157
      %v2360 = vsel %vm393, %v2296, %v1159
      %v2362 = vsel %vm393, %v2298, %v1161
      %vm2363 = vcmask 97280
      %v2365 = vsel %vm2363, %v2300, %v1291
      %v2367 = vsel %vm2363, %v2302, %v1293
      %v2369 = vsel %vm2363, %v2304, %v1295
      %v2371 = vsel %vm2363, %v2306, %v1297
      %v2373 = vsel %vm2363, %v2308, %v1299
      %v2375 = vsel %vm2363, %v2310, %v1301
      %v2377 = vsel %vm2363, %v2312, %v1303
      %v2379 = vsel %vm2363, %v2314, %v1305
      %v2381 = vsel %vm2363, %v2316, %v1307
      %v2383 = vsel %vm2363, %v2318, %v1309
      %v2385 = vsel %vm2363, %v2320, %v1311
      %v2387 = vsel %vm2363, %v2322, %v1313
      %v2389 = vsel %vm2363, %v2324, %v1315
      %v2391 = vsel %vm2363, %v2326, %v1317
      %v2393 = vsel %vm2363, %v2328, %v1319
      %v2395 = vsel %vm2363, %v2330, %v1321
      %v2397 = vsel %vm2363, %v2332, %v1323
      %v2399 = vsel %vm2363, %v2334, %v1325
      %v2401 = vsel %vm2363, %v2336, %v1327
      %v2403 = vsel %vm2363, %v2338, %v1329
      %v2405 = vsel %vm2363, %v2340, %v1331
      %v2407 = vsel %vm2363, %v2342, %v1333
      %v2409 = vsel %vm2363, %v2344, %v1335
      %v2411 = vsel %vm2363, %v2346, %v1337
      %v2413 = vsel %vm2363, %v2348, %v1339
      %v2415 = vsel %vm2363, %v2350, %v1341
      %v2417 = vsel %vm2363, %v2352, %v1343
      %v2419 = vsel %vm2363, %v2354, %v1345
      %v2421 = vsel %vm2363, %v2356, %v1347
      %v2423 = vsel %vm2363, %v2358, %v1349
      %v2425 = vsel %vm2363, %v2360, %v1351
      %v2427 = vsel %vm2363, %v2362, %v1353
      %vm2428 = vcmask 130048
      %v2430 = vsel %vm2428, %v2365, %v1499
      %v2431 = vsel %vm2428, %v2367, %v1499
      %v2433 = vsel %vm2428, %v2369, %v1501
      %v2434 = vsel %vm2428, %v2371, %v1501
      %v2436 = vsel %vm2428, %v2373, %v1503
      %v2437 = vsel %vm2428, %v2375, %v1503
      %v2439 = vsel %vm2428, %v2377, %v1505
      %v2440 = vsel %vm2428, %v2379, %v1505
      %v2442 = vsel %vm2428, %v2381, %v1507
      %v2443 = vsel %vm2428, %v2383, %v1507
      %v2445 = vsel %vm2428, %v2385, %v1509
      %v2446 = vsel %vm2428, %v2387, %v1509
      %v2448 = vsel %vm2428, %v2389, %v1511
      %v2449 = vsel %vm2428, %v2391, %v1511
      %v2451 = vsel %vm2428, %v2393, %v1513
      %v2452 = vsel %vm2428, %v2395, %v1513
      %v2454 = vsel %vm2428, %v2397, %v1515
      %v2455 = vsel %vm2428, %v2399, %v1515
      %v2457 = vsel %vm2428, %v2401, %v1517
      %v2458 = vsel %vm2428, %v2403, %v1517
      %v2460 = vsel %vm2428, %v2405, %v1519
      %v2461 = vsel %vm2428, %v2407, %v1519
      %v2463 = vsel %vm2428, %v2409, %v1521
      %v2464 = vsel %vm2428, %v2411, %v1521
      %v2466 = vsel %vm2428, %v2413, %v1523
      %v2467 = vsel %vm2428, %v2415, %v1523
      %v2469 = vsel %vm2428, %v2417, %v1525
      %v2470 = vsel %vm2428, %v2419, %v1525
      %v2472 = vsel %vm2428, %v2421, %v1527
      %v2473 = vsel %vm2428, %v2423, %v1527
      %v2475 = vsel %vm2428, %v2425, %v1529
      %v2476 = vsel %vm2428, %v2427, %v1529
      %vm2477 = vcmask 162816
      %v2479 = vsel %vm2477, %v2430, %v1627
      %v2481 = vsel %vm2477, %v2431, %v1629
      %v2483 = vsel %vm2477, %v2433, %v1631
      %v2485 = vsel %vm2477, %v2434, %v1633
      %v2487 = vsel %vm2477, %v2436, %v1635
      %v2489 = vsel %vm2477, %v2437, %v1637
      %v2491 = vsel %vm2477, %v2439, %v1639
      %v2493 = vsel %vm2477, %v2440, %v1641
      %v2495 = vsel %vm2477, %v2442, %v1643
      %v2497 = vsel %vm2477, %v2443, %v1645
      %v2499 = vsel %vm2477, %v2445, %v1647
      %v2501 = vsel %vm2477, %v2446, %v1649
      %v2503 = vsel %vm2477, %v2448, %v1651
      %v2505 = vsel %vm2477, %v2449, %v1653
      %v2507 = vsel %vm2477, %v2451, %v1655
      %v2509 = vsel %vm2477, %v2452, %v1657
      %v2511 = vsel %vm2477, %v2454, %v1659
      %v2513 = vsel %vm2477, %v2455, %v1661
      %v2515 = vsel %vm2477, %v2457, %v1663
      %v2517 = vsel %vm2477, %v2458, %v1665
      %v2519 = vsel %vm2477, %v2460, %v1667
      %v2521 = vsel %vm2477, %v2461, %v1669
      %v2523 = vsel %vm2477, %v2463, %v1671
      %v2525 = vsel %vm2477, %v2464, %v1673
      %v2527 = vsel %vm2477, %v2466, %v1675
      %v2529 = vsel %vm2477, %v2467, %v1677
      %v2531 = vsel %vm2477, %v2469, %v1679
      %v2533 = vsel %vm2477, %v2470, %v1681
      %v2535 = vsel %vm2477, %v2472, %v1683
      %v2537 = vsel %vm2477, %v2473, %v1685
      %v2539 = vsel %vm2477, %v2475, %v1687
      %v2541 = vsel %vm2477, %v2476, %v1689
      %vm2542 = vcmask 195584
      %v2544 = vsel %vm2542, %v2479, %v1819
      %v2546 = vsel %vm2542, %v2481, %v1821
      %v2548 = vsel %vm2542, %v2483, %v1823
      %v2550 = vsel %vm2542, %v2485, %v1825
      %v2552 = vsel %vm2542, %v2487, %v1827
      %v2554 = vsel %vm2542, %v2489, %v1829
      %v2556 = vsel %vm2542, %v2491, %v1831
      %v2558 = vsel %vm2542, %v2493, %v1833
      %v2560 = vsel %vm2542, %v2495, %v1835
      %v2562 = vsel %vm2542, %v2497, %v1837
      %v2564 = vsel %vm2542, %v2499, %v1839
      %v2566 = vsel %vm2542, %v2501, %v1841
      %v2568 = vsel %vm2542, %v2503, %v1843
      %v2570 = vsel %vm2542, %v2505, %v1845
      %v2572 = vsel %vm2542, %v2507, %v1847
      %v2574 = vsel %vm2542, %v2509, %v1849
      %v2576 = vsel %vm2542, %v2511, %v1851
      %v2578 = vsel %vm2542, %v2513, %v1853
      %v2580 = vsel %vm2542, %v2515, %v1855
      %v2582 = vsel %vm2542, %v2517, %v1857
      %v2584 = vsel %vm2542, %v2519, %v1859
      %v2586 = vsel %vm2542, %v2521, %v1861
      %v2588 = vsel %vm2542, %v2523, %v1863
      %v2590 = vsel %vm2542, %v2525, %v1865
      %v2592 = vsel %vm2542, %v2527, %v1867
      %v2594 = vsel %vm2542, %v2529, %v1869
      %v2596 = vsel %vm2542, %v2531, %v1871
      %v2598 = vsel %vm2542, %v2533, %v1873
      %v2600 = vsel %vm2542, %v2535, %v1875
      %v2602 = vsel %vm2542, %v2537, %v1877
      %v2604 = vsel %vm2542, %v2539, %v1879
      %v2606 = vsel %vm2542, %v2541, %v1881
      %vm2607 = vcmask 228352
      %v2609 = vsel %vm2607, %v2544, %v2027
      %v2610 = vsel %vm2607, %v2546, %v2027
      %v2612 = vsel %vm2607, %v2548, %v2029
      %v2613 = vsel %vm2607, %v2550, %v2029
      %v2615 = vsel %vm2607, %v2552, %v2031
      %v2616 = vsel %vm2607, %v2554, %v2031
      %v2618 = vsel %vm2607, %v2556, %v2033
      %v2619 = vsel %vm2607, %v2558, %v2033
      %v2621 = vsel %vm2607, %v2560, %v2035
      %v2622 = vsel %vm2607, %v2562, %v2035
      %v2624 = vsel %vm2607, %v2564, %v2037
      %v2625 = vsel %vm2607, %v2566, %v2037
      %v2627 = vsel %vm2607, %v2568, %v2039
      %v2628 = vsel %vm2607, %v2570, %v2039
      %v2630 = vsel %vm2607, %v2572, %v2041
      %v2631 = vsel %vm2607, %v2574, %v2041
      %v2633 = vsel %vm2607, %v2576, %v2043
      %v2634 = vsel %vm2607, %v2578, %v2043
      %v2636 = vsel %vm2607, %v2580, %v2045
      %v2637 = vsel %vm2607, %v2582, %v2045
      %v2639 = vsel %vm2607, %v2584, %v2047
      %v2640 = vsel %vm2607, %v2586, %v2047
      %v2642 = vsel %vm2607, %v2588, %v2049
      %v2643 = vsel %vm2607, %v2590, %v2049
      %v2645 = vsel %vm2607, %v2592, %v2051
      %v2646 = vsel %vm2607, %v2594, %v2051
      %v2648 = vsel %vm2607, %v2596, %v2053
      %v2649 = vsel %vm2607, %v2598, %v2053
      %v2651 = vsel %vm2607, %v2600, %v2055
      %v2652 = vsel %vm2607, %v2602, %v2055
      %v2654 = vsel %vm2607, %v2604, %v2057
      %v2655 = vsel %vm2607, %v2606, %v2057
      %vm2656 = vcmask 261120
      %v2658 = vsel %vm2656, %v2609, %v2155
      %v2660 = vsel %vm2656, %v2610, %v2157
      %v2662 = vsel %vm2656, %v2612, %v2159
      %v2664 = vsel %vm2656, %v2613, %v2161
      %v2666 = vsel %vm2656, %v2615, %v2163
      %v2668 = vsel %vm2656, %v2616, %v2165
      %v2670 = vsel %vm2656, %v2618, %v2167
      %v2672 = vsel %vm2656, %v2619, %v2169
      %v2674 = vsel %vm2656, %v2621, %v2171
      %v2676 = vsel %vm2656, %v2622, %v2173
      %v2678 = vsel %vm2656, %v2624, %v2175
      %v2680 = vsel %vm2656, %v2625, %v2177
      %v2682 = vsel %vm2656, %v2627, %v2179
      %v2684 = vsel %vm2656, %v2628, %v2181
      %v2686 = vsel %vm2656, %v2630, %v2183
      %v2688 = vsel %vm2656, %v2631, %v2185
      %v2690 = vsel %vm2656, %v2633, %v2187
      %v2692 = vsel %vm2656, %v2634, %v2189
      %v2694 = vsel %vm2656, %v2636, %v2191
      %v2696 = vsel %vm2656, %v2637, %v2193
      %v2698 = vsel %vm2656, %v2639, %v2195
      %v2700 = vsel %vm2656, %v2640, %v2197
      %v2702 = vsel %vm2656, %v2642, %v2199
      %v2704 = vsel %vm2656, %v2643, %v2201
      %v2706 = vsel %vm2656, %v2645, %v2203
      %v2708 = vsel %vm2656, %v2646, %v2205
      %v2710 = vsel %vm2656, %v2648, %v2207
      %v2712 = vsel %vm2656, %v2649, %v2209
      %v2714 = vsel %vm2656, %v2651, %v2211
      %v2716 = vsel %vm2656, %v2652, %v2213
      %v2718 = vsel %vm2656, %v2654, %v2215
      %v2720 = vsel %vm2656, %v2655, %v2217
      %vm2721 = vsmask.f32 4352
      %v2722 = vshrl.u32 %v2658, 16
      %v2724 = vrot.slane %v2722, 3
      %v2725 = vshll.u32 %v2658, 16
      %v2727 = vrot.slane %v2725, 4
      %v2728 = vor.u32 %v2724, %v2727
      %v2729 = vshrl.u32 %v2660, 16
      %v2731 = vrot.slane %v2729, 3
      %v2732 = vshll.u32 %v2660, 16
      %v2734 = vrot.slane %v2732, 4
      %v2735 = vor.u32 %v2731, %v2734
      %v2736 = vsel %vm2721, %v2728, %v2735
      %v2737 = vshrl.u32 %v2662, 16
      %v2739 = vrot.slane %v2737, 3
      %v2740 = vshll.u32 %v2662, 16
      %v2742 = vrot.slane %v2740, 4
      %v2743 = vor.u32 %v2739, %v2742
      %v2744 = vshrl.u32 %v2664, 16
      %v2746 = vrot.slane %v2744, 3
      %v2747 = vshll.u32 %v2664, 16
      %v2749 = vrot.slane %v2747, 4
      %v2750 = vor.u32 %v2746, %v2749
      %v2751 = vsel %vm2721, %v2743, %v2750
      %v2752 = vshrl.u32 %v2666, 16
      %v2754 = vrot.slane %v2752, 3
      %v2755 = vshll.u32 %v2666, 16
      %v2757 = vrot.slane %v2755, 4
      %v2758 = vor.u32 %v2754, %v2757
      %v2759 = vshrl.u32 %v2668, 16
      %v2761 = vrot.slane %v2759, 3
      %v2762 = vshll.u32 %v2668, 16
      %v2764 = vrot.slane %v2762, 4
      %v2765 = vor.u32 %v2761, %v2764
      %v2766 = vsel %vm2721, %v2758, %v2765
      %v2767 = vshrl.u32 %v2670, 16
      %v2769 = vrot.slane %v2767, 3
      %v2770 = vshll.u32 %v2670, 16
      %v2772 = vrot.slane %v2770, 4
      %v2773 = vor.u32 %v2769, %v2772
      %v2774 = vshrl.u32 %v2672, 16
      %v2776 = vrot.slane %v2774, 3
      %v2777 = vshll.u32 %v2672, 16
      %v2779 = vrot.slane %v2777, 4
      %v2780 = vor.u32 %v2776, %v2779
      %v2781 = vsel %vm2721, %v2773, %v2780
      %v2782 = vshrl.u32 %v2674, 16
      %v2784 = vrot.slane %v2782, 3
      %v2785 = vshll.u32 %v2674, 16
      %v2787 = vrot.slane %v2785, 4
      %v2788 = vor.u32 %v2784, %v2787
      %v2789 = vshrl.u32 %v2676, 16
      %v2791 = vrot.slane %v2789, 3
      %v2792 = vshll.u32 %v2676, 16
      %v2794 = vrot.slane %v2792, 4
      %v2795 = vor.u32 %v2791, %v2794
      %v2796 = vsel %vm2721, %v2788, %v2795
      %v2797 = vshrl.u32 %v2678, 16
      %v2799 = vrot.slane %v2797, 3
      %v2800 = vshll.u32 %v2678, 16
      %v2802 = vrot.slane %v2800, 4
      %v2803 = vor.u32 %v2799, %v2802
      %v2804 = vshrl.u32 %v2680, 16
      %v2806 = vrot.slane %v2804, 3
      %v2807 = vshll.u32 %v2680, 16
      %v2809 = vrot.slane %v2807, 4
      %v2810 = vor.u32 %v2806, %v2809
      %v2811 = vsel %vm2721, %v2803, %v2810
      %v2812 = vshrl.u32 %v2682, 16
      %v2814 = vrot.slane %v2812, 3
      %v2815 = vshll.u32 %v2682, 16
      %v2817 = vrot.slane %v2815, 4
      %v2818 = vor.u32 %v2814, %v2817
      %v2819 = vshrl.u32 %v2684, 16
      %v2821 = vrot.slane %v2819, 3
      %v2822 = vshll.u32 %v2684, 16
      %v2824 = vrot.slane %v2822, 4
      %v2825 = vor.u32 %v2821, %v2824
      %v2826 = vsel %vm2721, %v2818, %v2825
      %v2827 = vshrl.u32 %v2686, 16
      %v2829 = vrot.slane %v2827, 3
      %v2830 = vshll.u32 %v2686, 16
      %v2832 = vrot.slane %v2830, 4
      %v2833 = vor.u32 %v2829, %v2832
      %v2834 = vshrl.u32 %v2688, 16
      %v2836 = vrot.slane %v2834, 3
      %v2837 = vshll.u32 %v2688, 16
      %v2839 = vrot.slane %v2837, 4
      %v2840 = vor.u32 %v2836, %v2839
      %v2841 = vsel %vm2721, %v2833, %v2840
      %v2842 = vshrl.u32 %v2690, 16
      %v2844 = vrot.slane %v2842, 3
      %v2845 = vshll.u32 %v2690, 16
      %v2847 = vrot.slane %v2845, 4
      %v2848 = vor.u32 %v2844, %v2847
      %v2849 = vshrl.u32 %v2692, 16
      %v2851 = vrot.slane %v2849, 3
      %v2852 = vshll.u32 %v2692, 16
      %v2854 = vrot.slane %v2852, 4
      %v2855 = vor.u32 %v2851, %v2854
      %v2856 = vsel %vm2721, %v2848, %v2855
      %v2857 = vshrl.u32 %v2694, 16
      %v2859 = vrot.slane %v2857, 3
      %v2860 = vshll.u32 %v2694, 16
      %v2862 = vrot.slane %v2860, 4
      %v2863 = vor.u32 %v2859, %v2862
      %v2864 = vshrl.u32 %v2696, 16
      %v2866 = vrot.slane %v2864, 3
      %v2867 = vshll.u32 %v2696, 16
      %v2869 = vrot.slane %v2867, 4
      %v2870 = vor.u32 %v2866, %v2869
      %v2871 = vsel %vm2721, %v2863, %v2870
      %v2872 = vshrl.u32 %v2698, 16
      %v2874 = vrot.slane %v2872, 3
      %v2875 = vshll.u32 %v2698, 16
      %v2877 = vrot.slane %v2875, 4
      %v2878 = vor.u32 %v2874, %v2877
      %v2879 = vshrl.u32 %v2700, 16
      %v2881 = vrot.slane %v2879, 3
      %v2882 = vshll.u32 %v2700, 16
      %v2884 = vrot.slane %v2882, 4
      %v2885 = vor.u32 %v2881, %v2884
      %v2886 = vsel %vm2721, %v2878, %v2885
      %v2887 = vshrl.u32 %v2702, 16
      %v2889 = vrot.slane %v2887, 3
      %v2890 = vshll.u32 %v2702, 16
      %v2892 = vrot.slane %v2890, 4
      %v2893 = vor.u32 %v2889, %v2892
      %v2894 = vshrl.u32 %v2704, 16
      %v2896 = vrot.slane %v2894, 3
      %v2897 = vshll.u32 %v2704, 16
      %v2899 = vrot.slane %v2897, 4
      %v2900 = vor.u32 %v2896, %v2899
      %v2901 = vsel %vm2721, %v2893, %v2900
      %v2902 = vshrl.u32 %v2706, 16
      %v2904 = vrot.slane %v2902, 3
      %v2905 = vshll.u32 %v2706, 16
      %v2907 = vrot.slane %v2905, 4
      %v2908 = vor.u32 %v2904, %v2907
      %v2909 = vshrl.u32 %v2708, 16
      %v2911 = vrot.slane %v2909, 3
      %v2912 = vshll.u32 %v2708, 16
      %v2914 = vrot.slane %v2912, 4
      %v2915 = vor.u32 %v2911, %v2914
      %v2916 = vsel %vm2721, %v2908, %v2915
      %v2917 = vshrl.u32 %v2710, 16
      %v2919 = vrot.slane %v2917, 3
      %v2920 = vshll.u32 %v2710, 16
      %v2922 = vrot.slane %v2920, 4
      %v2923 = vor.u32 %v2919, %v2922
      %v2924 = vshrl.u32 %v2712, 16
      %v2926 = vrot.slane %v2924, 3
      %v2927 = vshll.u32 %v2712, 16
      %v2929 = vrot.slane %v2927, 4
      %v2930 = vor.u32 %v2926, %v2929
      %v2931 = vsel %vm2721, %v2923, %v2930
      %v2932 = vshrl.u32 %v2714, 16
      %v2934 = vrot.slane %v2932, 3
      %v2935 = vshll.u32 %v2714, 16
      %v2937 = vrot.slane %v2935, 4
      %v2938 = vor.u32 %v2934, %v2937
      %v2939 = vshrl.u32 %v2716, 16
      %v2941 = vrot.slane %v2939, 3
      %v2942 = vshll.u32 %v2716, 16
      %v2944 = vrot.slane %v2942, 4
      %v2945 = vor.u32 %v2941, %v2944
      %v2946 = vsel %vm2721, %v2938, %v2945
      %v2947 = vshrl.u32 %v2718, 16
      %v2949 = vrot.slane %v2947, 3
      %v2950 = vshll.u32 %v2718, 16
      %v2952 = vrot.slane %v2950, 4
      %v2953 = vor.u32 %v2949, %v2952
      %v2954 = vshrl.u32 %v2720, 16
      %v2956 = vrot.slane %v2954, 3
      %v2957 = vshll.u32 %v2720, 16
      %v2959 = vrot.slane %v2957, 4
      %v2960 = vor.u32 %v2956, %v2959
      %v2961 = vsel %vm2721, %v2953, %v2960
      %v2962 = vld [vmem:[%s1] sm:$0xf]
      %v2963 = vld [vmem:[%s1 + $0x4] sm:$0xf]
      %v2964 = vld [vmem:[%s1 + $0x8] sm:$0xf]
      %v2965 = vld [vmem:[%s1 + $0xc] sm:$0xf]
      %v2966 = vld [vmem:[%s1 + $0x10] sm:$0x3]
      %v2967 = vld [vmem:[%s2] sm:$0x1]
      %v2969 = vlaneseq
      %v2970 = vshrl.u32 %v2969, 7
      %v2971 = vsub.s32 0, %v2970
      %v2972 = vrot.slane %v2967, %v2971
      %v2979 = vunpack.c.l.b16 %v2962
      %v2980 = vunpack.c.l.b16 %v2963
      %v2981 = vunpack.c.l.b16 %v2964
      %v2982 = vunpack.c.l.b16 %v2965
      %v2983 = vunpack.c.l.b16 %v2966
      %v2984 = vpack.c.b16 %v2980, %v2979
      %v2985 = vpack.c.b16 %v2982, %v2981
      %v2986 = vpack.c.b16 %v2983, %v2983
      %vm2989 = vcmask 293888
      %v2991 = vsel %vm2989, %v2736, 0
      %v2994 = vsel %vm2989, %v2751, 0
      %v2997 = vsel %vm2989, %v2766, 0
      %v3000 = vsel %vm2989, %v2781, 0
      %v3003 = vsel %vm2989, %v2796, 0
      %v3006 = vsel %vm2989, %v2811, 0
      %v3009 = vsel %vm2989, %v2826, 0
      %v3012 = vsel %vm2989, %v2841, 0
      %v3015 = vsel %vm2989, %v2856, 0
      %v3018 = vsel %vm2989, %v2871, 0
      %v3021 = vsel %vm2989, %v2886, 0
      %v3024 = vsel %vm2989, %v2901, 0
      %v3027 = vsel %vm2989, %v2916, 0
      %v3030 = vsel %vm2989, %v2931, 0
      %v3033 = vsel %vm2989, %v2946, 0
      %v3036 = vsel %vm2989, %v2961, 0
      %vm3038 = vcmask 1041408
      %v3040 = vsel %vm3038, %v2986, 0
      %3042 = vmatprep.subr.bf16.mxu0 0
      %3043 = vmatpush1.bf16.msra.mxu0 %v2984
      %3044 = vmatprep.subr.bf16.mxu0 0
      %3045 = vmatpush1.bf16.msra.mxu0 %v2985
      %3046 = vmatprep.subr.bf16.mxu0 0
      %3047 = vmatpush1.bf16.msra.mxu0 %v3040
      %3048 = vmatprep.subr.bf16.mxu0 0
      %3049 = vmatpush1.bf16.msra.mxu0 0
      %3050 = vmatprep.subr.bf16.mxu0 0
      %3051 = vmatpush1.bf16.msra.mxu0 0
      %3052 = vmatprep.subr.bf16.mxu0 0
      %3053 = vmatpush1.bf16.msra.mxu0 0
      %3054 = vmatprep.subr.bf16.mxu0 0
      %3055 = vmatpush1.bf16.msra.mxu0 0
      %3056 = vmatprep.subr.bf16.mxu0 0
      %3057 = vmatpush1.bf16.msra.mxu0 0
      %3058 = vmatprep.subr.bf16.mxu0 0
      %3059 = vmatpush1.bf16.msra.mxu0 0
      %3060 = vmatprep.subr.bf16.mxu0 0
      %3061 = vmatpush1.bf16.msra.mxu0 0
      %3062 = vmatprep.subr.bf16.mxu0 0
      %3063 = vmatpush1.bf16.msra.mxu0 0
      %3064 = vmatprep.subr.bf16.mxu0 0
      %3065 = vmatpush1.bf16.msra.mxu0 0
      %3066 = vmatprep.subr.bf16.mxu0 0
      %3067 = vmatpush1.bf16.msra.mxu0 0
      %3068 = vmatprep.subr.bf16.mxu0 0
      %3069 = vmatpush1.bf16.msra.mxu0 0
      %3070 = vmatprep.subr.bf16.mxu0 0
      %3071 = vmatpush1.bf16.msra.mxu0 0
      %3072 = vmatprep.subr.bf16.mxu0 0
      %3073 = vmatpush1.bf16.msra.mxu0 0
      %3074 = vmatprep.mubr.bf16.mxu0 0
      %3075 = vmatmul.mubr.bf16.gmra.mrb[0].mxu0 %v2991
      %v3076 = vpop.f32.mrb[0].mxu0
      %v3077 = vadd.f32 %v2972, %v3076
      %v3078 = vpop.f32.mrb[0].mxu0
      %v3079 = vpop.f32.mrb[0].mxu0
      %v3080 = vadd.f32 %v2972, %v3079
      %v3081 = vpop.f32.mrb[0].mxu0
      %3082 = vmatprep.mubr.bf16.mxu0 0
      %3083 = vmatmul.mubr.bf16.gmra.mrb[0].mxu0 %v2994
      %v3084 = vpop.f32.mrb[0].mxu0
      %v3085 = vadd.f32 %v2972, %v3084
      %v3086 = vpop.f32.mrb[0].mxu0
      %v3087 = vpop.f32.mrb[0].mxu0
      %v3088 = vadd.f32 %v2972, %v3087
      %v3089 = vpop.f32.mrb[0].mxu0
      %3090 = vmatprep.mubr.bf16.mxu0 0
      %3091 = vmatmul.mubr.bf16.gmra.mrb[0].mxu0 %v2997
      %v3092 = vpop.f32.mrb[0].mxu0
      %v3093 = vadd.f32 %v2972, %v3092
      %v3094 = vpop.f32.mrb[0].mxu0
      %v3095 = vpop.f32.mrb[0].mxu0
      %v3096 = vadd.f32 %v2972, %v3095
      %v3097 = vpop.f32.mrb[0].mxu0
      %3098 = vmatprep.mubr.bf16.mxu0 0
      %3099 = vmatmul.mubr.bf16.gmra.mrb[0].mxu0 %v3000
      %v3100 = vpop.f32.mrb[0].mxu0
      %v3101 = vadd.f32 %v2972, %v3100
      %v3102 = vpop.f32.mrb[0].mxu0
      %v3103 = vpop.f32.mrb[0].mxu0
      %v3104 = vadd.f32 %v2972, %v3103
      %v3105 = vpop.f32.mrb[0].mxu0
      %3106 = vmatprep.mubr.bf16.mxu0 0
      %3107 = vmatmul.mubr.bf16.gmra.mrb[0].mxu0 %v3003
      %v3108 = vpop.f32.mrb[0].mxu0
      %v3109 = vadd.f32 %v2972, %v3108
      %v3110 = vpop.f32.mrb[0].mxu0
      %v3111 = vpop.f32.mrb[0].mxu0
      %v3112 = vadd.f32 %v2972, %v3111
      %v3113 = vpop.f32.mrb[0].mxu0
      %3114 = vmatprep.mubr.bf16.mxu0 0
      %3115 = vmatmul.mubr.bf16.gmra.mrb[0].mxu0 %v3006
      %v3116 = vpop.f32.mrb[0].mxu0
      %v3117 = vadd.f32 %v2972, %v3116
      %v3118 = vpop.f32.mrb[0].mxu0
      %v3119 = vpop.f32.mrb[0].mxu0
      %v3120 = vadd.f32 %v2972, %v3119
      %v3121 = vpop.f32.mrb[0].mxu0
      %3122 = vmatprep.mubr.bf16.mxu0 0
      %3123 = vmatmul.mubr.bf16.gmra.mrb[0].mxu0 %v3009
      %v3124 = vpop.f32.mrb[0].mxu0
      %v3125 = vadd.f32 %v2972, %v3124
      %v3126 = vpop.f32.mrb[0].mxu0
      %v3127 = vpop.f32.mrb[0].mxu0
      %v3128 = vadd.f32 %v2972, %v3127
      %v3129 = vpop.f32.mrb[0].mxu0
      %3130 = vmatprep.mubr.bf16.mxu0 0
      %3131 = vmatmul.mubr.bf16.gmra.mrb[0].mxu0 %v3012
      %v3132 = vpop.f32.mrb[0].mxu0
      %v3133 = vadd.f32 %v2972, %v3132
      %v3134 = vpop.f32.mrb[0].mxu0
      %v3135 = vpop.f32.mrb[0].mxu0
      %v3136 = vadd.f32 %v2972, %v3135
      %v3137 = vpop.f32.mrb[0].mxu0
      %3138 = vmatprep.mubr.bf16.mxu0 0
      %3139 = vmatmul.mubr.bf16.gmra.mrb[0].mxu0 %v3015
      %v3140 = vpop.f32.mrb[0].mxu0
      %v3141 = vadd.f32 %v2972, %v3140
      %v3142 = vpop.f32.mrb[0].mxu0
      %v3143 = vpop.f32.mrb[0].mxu0
      %v3144 = vadd.f32 %v2972, %v3143
      %v3145 = vpop.f32.mrb[0].mxu0
      %3146 = vmatprep.mubr.bf16.mxu0 0
      %3147 = vmatmul.mubr.bf16.gmra.mrb[0].mxu0 %v3018
      %v3148 = vpop.f32.mrb[0].mxu0
      %v3149 = vadd.f32 %v2972, %v3148
      %v3150 = vpop.f32.mrb[0].mxu0
      %v3151 = vpop.f32.mrb[0].mxu0
      %v3152 = vadd.f32 %v2972, %v3151
      %v3153 = vpop.f32.mrb[0].mxu0
      %3154 = vmatprep.mubr.bf16.mxu0 0
      %3155 = vmatmul.mubr.bf16.gmra.mrb[0].mxu0 %v3021
      %v3156 = vpop.f32.mrb[0].mxu0
      %v3157 = vadd.f32 %v2972, %v3156
      %v3158 = vpop.f32.mrb[0].mxu0
      %v3159 = vpop.f32.mrb[0].mxu0
      %v3160 = vadd.f32 %v2972, %v3159
      %v3161 = vpop.f32.mrb[0].mxu0
      %3162 = vmatprep.mubr.bf16.mxu0 0
      %3163 = vmatmul.mubr.bf16.gmra.mrb[0].mxu0 %v3024
      %v3164 = vpop.f32.mrb[0].mxu0
      %v3165 = vadd.f32 %v2972, %v3164
      %v3166 = vpop.f32.mrb[0].mxu0
      %v3167 = vpop.f32.mrb[0].mxu0
      %v3168 = vadd.f32 %v2972, %v3167
      %v3169 = vpop.f32.mrb[0].mxu0
      %3170 = vmatprep.mubr.bf16.mxu0 0
      %3171 = vmatmul.mubr.bf16.gmra.mrb[0].mxu0 %v3027
      %v3172 = vpop.f32.mrb[0].mxu0
      %v3173 = vadd.f32 %v2972, %v3172
      %v3174 = vpop.f32.mrb[0].mxu0
      %v3175 = vpop.f32.mrb[0].mxu0
      %v3176 = vadd.f32 %v2972, %v3175
      %v3177 = vpop.f32.mrb[0].mxu0
      %3178 = vmatprep.mubr.bf16.mxu0 0
      %3179 = vmatmul.mubr.bf16.gmra.mrb[0].mxu0 %v3030
      %v3180 = vpop.f32.mrb[0].mxu0
      %v3181 = vadd.f32 %v2972, %v3180
      %v3182 = vpop.f32.mrb[0].mxu0
      %v3183 = vpop.f32.mrb[0].mxu0
      %v3184 = vadd.f32 %v2972, %v3183
      %v3185 = vpop.f32.mrb[0].mxu0
      %3186 = vmatprep.mubr.bf16.mxu0 0
      %3187 = vmatmul.mubr.bf16.gmra.mrb[0].mxu0 %v3033
      %v3188 = vpop.f32.mrb[0].mxu0
      %v3189 = vadd.f32 %v2972, %v3188
      %v3190 = vpop.f32.mrb[0].mxu0
      %v3191 = vpop.f32.mrb[0].mxu0
      %v3192 = vadd.f32 %v2972, %v3191
      %v3193 = vpop.f32.mrb[0].mxu0
      %3194 = vmatprep.mubr.bf16.mxu0 0
      %3195 = vmatmul.mubr.bf16.gmra.mrb[0].mxu0 %v3036
      %v3196 = vpop.f32.mrb[0].mxu0
      %v3197 = vadd.f32 %v2972, %v3196
      %v3198 = vpop.f32.mrb[0].mxu0
      %v3199 = vpop.f32.mrb[0].mxu0
      %v3200 = vadd.f32 %v2972, %v3199
      %v3201 = vpop.f32.mrb[0].mxu0
      %3202 = vdwg.mxu0
      %v3203 = vmax.f32 %v3077, 0.0
      %v3204 = vmax.f32 %v3080, 0.0
      %v3205 = vmax.f32 %v3085, 0.0
      %v3206 = vmax.f32 %v3088, 0.0
      %v3207 = vmax.f32 %v3093, 0.0
      %v3208 = vmax.f32 %v3096, 0.0
      %v3209 = vmax.f32 %v3101, 0.0
      %v3210 = vmax.f32 %v3104, 0.0
      %v3211 = vmax.f32 %v3109, 0.0
      %v3212 = vmax.f32 %v3112, 0.0
      %v3213 = vmax.f32 %v3117, 0.0
      %v3214 = vmax.f32 %v3120, 0.0
      %v3215 = vmax.f32 %v3125, 0.0
      %v3216 = vmax.f32 %v3128, 0.0
      %v3217 = vmax.f32 %v3133, 0.0
      %v3218 = vmax.f32 %v3136, 0.0
      %v3219 = vmax.f32 %v3141, 0.0
      %v3220 = vmax.f32 %v3144, 0.0
      %v3221 = vmax.f32 %v3149, 0.0
      %v3222 = vmax.f32 %v3152, 0.0
      %v3223 = vmax.f32 %v3157, 0.0
      %v3224 = vmax.f32 %v3160, 0.0
      %v3225 = vmax.f32 %v3165, 0.0
      %v3226 = vmax.f32 %v3168, 0.0
      %v3227 = vmax.f32 %v3173, 0.0
      %v3228 = vmax.f32 %v3176, 0.0
      %v3229 = vmax.f32 %v3181, 0.0
      %v3230 = vmax.f32 %v3184, 0.0
      %v3231 = vmax.f32 %v3189, 0.0
      %v3232 = vmax.f32 %v3192, 0.0
      %v3233 = vmax.f32 %v3197, 0.0
      %v3234 = vmax.f32 %v3200, 0.0
      %v3235 = vpack.c.bf16 %v3204, %v3203
      %v3236 = vpack.c.bf16 %v3206, %v3205
      %v3237 = vpack.c.bf16 %v3208, %v3207
      %v3238 = vpack.c.bf16 %v3210, %v3209
      %v3239 = vpack.c.bf16 %v3212, %v3211
      %v3240 = vpack.c.bf16 %v3214, %v3213
      %v3241 = vpack.c.bf16 %v3216, %v3215
      %v3242 = vpack.c.bf16 %v3218, %v3217
      %v3243 = vpack.c.bf16 %v3220, %v3219
      %v3244 = vpack.c.bf16 %v3222, %v3221
      %v3245 = vpack.c.bf16 %v3224, %v3223
      %v3246 = vpack.c.bf16 %v3226, %v3225
      %v3247 = vpack.c.bf16 %v3228, %v3227
      %v3248 = vpack.c.bf16 %v3230, %v3229
      %v3249 = vpack.c.bf16 %v3232, %v3231
      %v3250 = vpack.c.bf16 %v3234, %v3233
      %v3267 = vunpack.c.l.b16 %v3235
      %v3268 = vunpack.c.h.b16 %v3235
      %v3269 = vunpack.c.l.b16 %v3236
      %v3270 = vunpack.c.h.b16 %v3236
      %v3271 = vunpack.c.l.b16 %v3237
      %v3272 = vunpack.c.h.b16 %v3237
      %v3273 = vunpack.c.l.b16 %v3238
      %v3274 = vunpack.c.h.b16 %v3238
      %v3275 = vunpack.c.l.b16 %v3239
      %v3276 = vunpack.c.h.b16 %v3239
      %v3277 = vunpack.c.l.b16 %v3240
      %v3278 = vunpack.c.h.b16 %v3240
      %v3279 = vunpack.c.l.b16 %v3241
      %v3280 = vunpack.c.h.b16 %v3241
      %v3281 = vunpack.c.l.b16 %v3242
      %v3282 = vunpack.c.h.b16 %v3242
      %v3283 = vunpack.c.l.b16 %v3243
      %v3284 = vunpack.c.h.b16 %v3243
      %v3285 = vunpack.c.l.b16 %v3244
      %v3286 = vunpack.c.h.b16 %v3244
      %v3287 = vunpack.c.l.b16 %v3245
      %v3288 = vunpack.c.h.b16 %v3245
      %v3289 = vunpack.c.l.b16 %v3246
      %v3290 = vunpack.c.h.b16 %v3246
      %v3291 = vunpack.c.l.b16 %v3247
      %v3292 = vunpack.c.h.b16 %v3247
      %v3293 = vunpack.c.l.b16 %v3248
      %v3294 = vunpack.c.h.b16 %v3248
      %v3295 = vunpack.c.l.b16 %v3249
      %v3296 = vunpack.c.h.b16 %v3249
      %v3297 = vunpack.c.l.b16 %v3250
      %v3298 = vunpack.c.h.b16 %v3250
      %v3299 = vpack.c.b16 %v3267, %v3267
      %v3300 = vpack.c.b16 %v3268, %v3268
      %v3301 = vpack.c.b16 %v3269, %v3269
      %v3302 = vpack.c.b16 %v3270, %v3270
      %v3303 = vpack.c.b16 %v3271, %v3271
      %v3304 = vpack.c.b16 %v3272, %v3272
      %v3305 = vpack.c.b16 %v3273, %v3273
      %v3306 = vpack.c.b16 %v3274, %v3274
      %v3307 = vpack.c.b16 %v3275, %v3275
      %v3308 = vpack.c.b16 %v3276, %v3276
      %v3309 = vpack.c.b16 %v3277, %v3277
      %v3310 = vpack.c.b16 %v3278, %v3278
      %v3311 = vpack.c.b16 %v3279, %v3279
      %v3312 = vpack.c.b16 %v3280, %v3280
      %v3313 = vpack.c.b16 %v3281, %v3281
      %v3314 = vpack.c.b16 %v3282, %v3282
      %v3315 = vpack.c.b16 %v3283, %v3283
      %v3316 = vpack.c.b16 %v3284, %v3284
      %v3317 = vpack.c.b16 %v3285, %v3285
      %v3318 = vpack.c.b16 %v3286, %v3286
      %v3319 = vpack.c.b16 %v3287, %v3287
      %v3320 = vpack.c.b16 %v3288, %v3288
      %v3321 = vpack.c.b16 %v3289, %v3289
      %v3322 = vpack.c.b16 %v3290, %v3290
      %v3323 = vpack.c.b16 %v3291, %v3291
      %v3324 = vpack.c.b16 %v3292, %v3292
      %v3325 = vpack.c.b16 %v3293, %v3293
      %v3326 = vpack.c.b16 %v3294, %v3294
      %v3327 = vpack.c.b16 %v3295, %v3295
      %v3328 = vpack.c.b16 %v3296, %v3296
      %v3329 = vpack.c.b16 %v3297, %v3297
      %v3330 = vpack.c.b16 %v3298, %v3298
      %3363 = vst.msk [vmem:[%s290 + $0x8] sm:$0xf] %vm278, %v3299
      %3364 = vst.msk [vmem:[%s290 + $0xc] sm:$0xf] %vm278, %v3300
      %3365 = vst.msk [vmem:[%s290 + $0x1c] sm:$0xf] %vm278, %v3301
      %3366 = vst.msk [vmem:[%s290 + $0x20] sm:$0xf] %vm278, %v3302
      %3367 = vst.msk [vmem:[%s290 + $0x30] sm:$0xf] %vm278, %v3303
      %3368 = vst.msk [vmem:[%s290 + $0x34] sm:$0xf] %vm278, %v3304
      %3369 = vst.msk [vmem:[%s290 + $0x44] sm:$0xf] %vm278, %v3305
      %3370 = vst.msk [vmem:[%s290 + $0x48] sm:$0xf] %vm278, %v3306
      %3371 = vst.msk [vmem:[%s290 + $0x58] sm:$0xf] %vm278, %v3307
      %3372 = vst.msk [vmem:[%s290 + $0x5c] sm:$0xf] %vm278, %v3308
      %3373 = vst.msk [vmem:[%s290 + $0x6c] sm:$0xf] %vm278, %v3309
      %3374 = vst.msk [vmem:[%s290 + $0x70] sm:$0xf] %vm278, %v3310
      %3375 = vst.msk [vmem:[%s290 + $0x80] sm:$0xf] %vm278, %v3311
      %3376 = vst.msk [vmem:[%s290 + $0x84] sm:$0xf] %vm278, %v3312
      %3377 = vst.msk [vmem:[%s290 + $0x94] sm:$0xf] %vm278, %v3313
      %3378 = vst.msk [vmem:[%s290 + $0x98] sm:$0xf] %vm278, %v3314
      %3379 = vst.msk [vmem:[%s290 + $0xa8] sm:$0xf] %vm278, %v3315
      %3380 = vst.msk [vmem:[%s290 + $0xac] sm:$0xf] %vm278, %v3316
      %3381 = vst.msk [vmem:[%s290 + $0xbc] sm:$0xf] %vm278, %v3317
      %3382 = vst.msk [vmem:[%s290 + $0xc0] sm:$0xf] %vm278, %v3318
      %3383 = vst.msk [vmem:[%s290 + $0xd0] sm:$0xf] %vm278, %v3319
      %3384 = vst.msk [vmem:[%s290 + $0xd4] sm:$0xf] %vm278, %v3320
      %3385 = vst.msk [vmem:[%s290 + $0xe4] sm:$0xf] %vm278, %v3321
      %3386 = vst.msk [vmem:[%s290 + $0xe8] sm:$0xf] %vm278, %v3322
      %3387 = vst.msk [vmem:[%s290 + $0xf8] sm:$0xf] %vm278, %v3323
      %3388 = vst.msk [vmem:[%s290 + $0xfc] sm:$0xf] %vm278, %v3324
      %3389 = vst.msk [vmem:[%s290 + $0x10c] sm:$0xf] %vm278, %v3325
      %3390 = vst.msk [vmem:[%s290 + $0x110] sm:$0xf] %vm278, %v3326
      %3391 = vst.msk [vmem:[%s290 + $0x120] sm:$0xf] %vm278, %v3327
      %3392 = vst.msk [vmem:[%s290 + $0x124] sm:$0xf] %vm278, %v3328
      %3393 = vst.msk [vmem:[%s290 + $0x134] sm:$0xf] %vm278, %v3329
      %3394 = vst.msk [vmem:[%s290 + $0x138] sm:$0xf] %vm278, %v3330
      %v3395 = vld [vmem:[#allocation2 + $0x4] sm:$0x8]
      %v3396 = vld [vmem:[#allocation2 + $0x8] sm:$0xf]
      %v3397 = vld [vmem:[#allocation2 + $0xc] sm:$0xf]
      %v3398 = vld [vmem:[#allocation2 + $0x18] sm:$0x8]
      %v3399 = vld [vmem:[#allocation2 + $0x1c] sm:$0xf]
      %v3400 = vld [vmem:[#allocation2 + $0x20] sm:$0xf]
      %v3401 = vld [vmem:[#allocation2 + $0x2c] sm:$0x8]
      %v3402 = vld [vmem:[#allocation2 + $0x30] sm:$0xf]
      %v3403 = vld [vmem:[#allocation2 + $0x34] sm:$0xf]
      %v3404 = vld [vmem:[#allocation2 + $0x40] sm:$0x8]
      %v3405 = vld [vmem:[#allocation2 + $0x44] sm:$0xf]
      %v3406 = vld [vmem:[#allocation2 + $0x48] sm:$0xf]
      %v3407 = vld [vmem:[#allocation2 + $0x54] sm:$0x8]
      %v3408 = vld [vmem:[#allocation2 + $0x58] sm:$0xf]
      %v3409 = vld [vmem:[#allocation2 + $0x5c] sm:$0xf]
      %v3410 = vld [vmem:[#allocation2 + $0x68] sm:$0x8]
      %v3411 = vld [vmem:[#allocation2 + $0x6c] sm:$0xf]
      %v3412 = vld [vmem:[#allocation2 + $0x70] sm:$0xf]
      %v3413 = vld [vmem:[#allocation2 + $0x7c] sm:$0x8]
      %v3414 = vld [vmem:[#allocation2 + $0x80] sm:$0xf]
      %v3415 = vld [vmem:[#allocation2 + $0x84] sm:$0xf]
      %v3416 = vld [vmem:[#allocation2 + $0x90] sm:$0x8]
      %v3417 = vld [vmem:[#allocation2 + $0x94] sm:$0xf]
      %v3418 = vld [vmem:[#allocation2 + $0x98] sm:$0xf]
      %v3419 = vld [vmem:[#allocation2 + $0xa4] sm:$0x8]
      %v3420 = vld [vmem:[#allocation2 + $0xa8] sm:$0xf]
      %v3421 = vld [vmem:[#allocation2 + $0xac] sm:$0xf]
      %v3422 = vld [vmem:[#allocation2 + $0xb8] sm:$0x8]
      %v3423 = vld [vmem:[#allocation2 + $0xbc] sm:$0xf]
      %v3424 = vld [vmem:[#allocation2 + $0xc0] sm:$0xf]
      %v3425 = vld [vmem:[#allocation2 + $0xcc] sm:$0x8]
      %v3426 = vld [vmem:[#allocation2 + $0xd0] sm:$0xf]
      %v3427 = vld [vmem:[#allocation2 + $0xd4] sm:$0xf]
      %v3428 = vld [vmem:[#allocation2 + $0xe0] sm:$0x8]
      %v3429 = vld [vmem:[#allocation2 + $0xe4] sm:$0xf]
      %v3430 = vld [vmem:[#allocation2 + $0xe8] sm:$0xf]
      %v3431 = vld [vmem:[#allocation2 + $0xf4] sm:$0x8]
      %v3432 = vld [vmem:[#allocation2 + $0xf8] sm:$0xf]
      %v3433 = vld [vmem:[#allocation2 + $0xfc] sm:$0xf]
      %v3434 = vld [vmem:[#allocation2 + $0x108] sm:$0x8]
      %v3435 = vld [vmem:[#allocation2 + $0x10c] sm:$0xf]
      %v3436 = vld [vmem:[#allocation2 + $0x110] sm:$0xf]
      %v3437 = vld [vmem:[#allocation2 + $0x11c] sm:$0x8]
      %v3438 = vld [vmem:[#allocation2 + $0x120] sm:$0xf]
      %v3439 = vld [vmem:[#allocation2 + $0x124] sm:$0xf]
      %v3440 = vld [vmem:[#allocation2 + $0x130] sm:$0x8]
      %v3441 = vld [vmem:[#allocation2 + $0x134] sm:$0xf]
      %v3442 = vld [vmem:[#allocation2 + $0x138] sm:$0xf]
      %v3443 = vld [vmem:[#allocation2 + $0x10] sm:$0x1]
      %v3444 = vld [vmem:[#allocation2 + $0x24] sm:$0x1]
      %v3445 = vld [vmem:[#allocation2 + $0x38] sm:$0x1]
      %v3446 = vld [vmem:[#allocation2 + $0x4c] sm:$0x1]
      %v3447 = vld [vmem:[#allocation2 + $0x60] sm:$0x1]
      %v3448 = vld [vmem:[#allocation2 + $0x74] sm:$0x1]
      %v3449 = vld [vmem:[#allocation2 + $0x88] sm:$0x1]
      %v3450 = vld [vmem:[#allocation2 + $0x9c] sm:$0x1]
      %v3451 = vld [vmem:[#allocation2 + $0xb0] sm:$0x1]
      %v3452 = vld [vmem:[#allocation2 + $0xc4] sm:$0x1]
      %v3453 = vld [vmem:[#allocation2 + $0xd8] sm:$0x1]
      %v3454 = vld [vmem:[#allocation2 + $0xec] sm:$0x1]
      %v3455 = vld [vmem:[#allocation2 + $0x100] sm:$0x1]
      %v3456 = vld [vmem:[#allocation2 + $0x114] sm:$0x1]
      %v3457 = vld [vmem:[#allocation2 + $0x128] sm:$0x1]
      %v3458 = vld [vmem:[#allocation2 + $0x13c] sm:$0x1]
      %v3459 = vld [vmem:[%s290 + $0x4] sm:$0x8]
      %v3460 = vld [vmem:[%s290 + $0x8] sm:$0xf]
      %v3461 = vld [vmem:[%s290 + $0xc] sm:$0xf]
      %v3462 = vld [vmem:[%s290 + $0x18] sm:$0x8]
      %v3463 = vld [vmem:[%s290 + $0x1c] sm:$0xf]
      %v3464 = vld [vmem:[%s290 + $0x20] sm:$0xf]
      %v3465 = vld [vmem:[%s290 + $0x2c] sm:$0x8]
      %v3466 = vld [vmem:[%s290 + $0x30] sm:$0xf]
      %v3467 = vld [vmem:[%s290 + $0x34] sm:$0xf]
      %v3468 = vld [vmem:[%s290 + $0x40] sm:$0x8]
      %v3469 = vld [vmem:[%s290 + $0x44] sm:$0xf]
      %v3470 = vld [vmem:[%s290 + $0x48] sm:$0xf]
      %v3471 = vld [vmem:[%s290 + $0x54] sm:$0x8]
      %v3472 = vld [vmem:[%s290 + $0x58] sm:$0xf]
      %v3473 = vld [vmem:[%s290 + $0x5c] sm:$0xf]
      %v3474 = vld [vmem:[%s290 + $0x68] sm:$0x8]
      %v3475 = vld [vmem:[%s290 + $0x6c] sm:$0xf]
      %v3476 = vld [vmem:[%s290 + $0x70] sm:$0xf]
      %v3477 = vld [vmem:[%s290 + $0x7c] sm:$0x8]
      %v3478 = vld [vmem:[%s290 + $0x80] sm:$0xf]
      %v3479 = vld [vmem:[%s290 + $0x84] sm:$0xf]
      %v3480 = vld [vmem:[%s290 + $0x90] sm:$0x8]
      %v3481 = vld [vmem:[%s290 + $0x94] sm:$0xf]
      %v3482 = vld [vmem:[%s290 + $0x98] sm:$0xf]
      %v3483 = vld [vmem:[%s290 + $0xa4] sm:$0x8]
      %v3484 = vld [vmem:[%s290 + $0xa8] sm:$0xf]
      %v3485 = vld [vmem:[%s290 + $0xac] sm:$0xf]
      %v3486 = vld [vmem:[%s290 + $0xb8] sm:$0x8]
      %v3487 = vld [vmem:[%s290 + $0xbc] sm:$0xf]
      %v3488 = vld [vmem:[%s290 + $0xc0] sm:$0xf]
      %v3489 = vld [vmem:[%s290 + $0xcc] sm:$0x8]
      %v3490 = vld [vmem:[%s290 + $0xd0] sm:$0xf]
      %v3491 = vld [vmem:[%s290 + $0xd4] sm:$0xf]
      %v3492 = vld [vmem:[%s290 + $0xe0] sm:$0x8]
      %v3493 = vld [vmem:[%s290 + $0xe4] sm:$0xf]
      %v3494 = vld [vmem:[%s290 + $0xe8] sm:$0xf]
      %v3495 = vld [vmem:[%s290 + $0xf4] sm:$0x8]
      %v3496 = vld [vmem:[%s290 + $0xf8] sm:$0xf]
      %v3497 = vld [vmem:[%s290 + $0xfc] sm:$0xf]
      %v3498 = vld [vmem:[%s290 + $0x108] sm:$0x8]
      %v3499 = vld [vmem:[%s290 + $0x10c] sm:$0xf]
      %v3500 = vld [vmem:[%s290 + $0x110] sm:$0xf]
      %v3501 = vld [vmem:[%s290 + $0x11c] sm:$0x8]
      %v3502 = vld [vmem:[%s290 + $0x120] sm:$0xf]
      %v3503 = vld [vmem:[%s290 + $0x124] sm:$0xf]
      %v3504 = vld [vmem:[%s290 + $0x130] sm:$0x8]
      %v3505 = vld [vmem:[%s290 + $0x134] sm:$0xf]
      %v3506 = vld [vmem:[%s290 + $0x138] sm:$0xf]
      %v3507 = vld [vmem:[%s290 + $0x10] sm:$0x1]
      %v3508 = vld [vmem:[%s290 + $0x24] sm:$0x1]
      %v3509 = vld [vmem:[%s290 + $0x38] sm:$0x1]
      %v3510 = vld [vmem:[%s290 + $0x4c] sm:$0x1]
      %v3511 = vld [vmem:[%s290 + $0x60] sm:$0x1]
      %v3512 = vld [vmem:[%s290 + $0x74] sm:$0x1]
      %v3513 = vld [vmem:[%s290 + $0x88] sm:$0x1]
      %v3514 = vld [vmem:[%s290 + $0x9c] sm:$0x1]
      %v3515 = vld [vmem:[%s290 + $0xb0] sm:$0x1]
      %v3516 = vld [vmem:[%s290 + $0xc4] sm:$0x1]
      %v3517 = vld [vmem:[%s290 + $0xd8] sm:$0x1]
      %v3518 = vld [vmem:[%s290 + $0xec] sm:$0x1]
      %v3519 = vld [vmem:[%s290 + $0x100] sm:$0x1]
      %v3520 = vld [vmem:[%s290 + $0x114] sm:$0x1]
      %v3521 = vld [vmem:[%s290 + $0x128] sm:$0x1]
      %v3522 = vld [vmem:[%s290 + $0x13c] sm:$0x1]
      %v3523 = vld [vmem:[%s632 + $0x4] sm:$0x8]
      %v3524 = vld [vmem:[%s632 + $0x8] sm:$0xf]
      %v3525 = vld [vmem:[%s632 + $0xc] sm:$0xf]
      %v3526 = vld [vmem:[%s632 + $0x18] sm:$0x8]
      %v3527 = vld [vmem:[%s632 + $0x1c] sm:$0xf]
      %v3528 = vld [vmem:[%s632 + $0x20] sm:$0xf]
      %v3529 = vld [vmem:[%s632 + $0x2c] sm:$0x8]
      %v3530 = vld [vmem:[%s632 + $0x30] sm:$0xf]
      %v3531 = vld [vmem:[%s632 + $0x34] sm:$0xf]
      %v3532 = vld [vmem:[%s632 + $0x40] sm:$0x8]
      %v3533 = vld [vmem:[%s632 + $0x44] sm:$0xf]
      %v3534 = vld [vmem:[%s632 + $0x48] sm:$0xf]
      %v3535 = vld [vmem:[%s632 + $0x54] sm:$0x8]
      %v3536 = vld [vmem:[%s632 + $0x58] sm:$0xf]
      %v3537 = vld [vmem:[%s632 + $0x5c] sm:$0xf]
      %v3538 = vld [vmem:[%s632 + $0x68] sm:$0x8]
      %v3539 = vld [vmem:[%s632 + $0x6c] sm:$0xf]
      %v3540 = vld [vmem:[%s632 + $0x70] sm:$0xf]
      %v3541 = vld [vmem:[%s632 + $0x7c] sm:$0x8]
      %v3542 = vld [vmem:[%s632 + $0x80] sm:$0xf]
      %v3543 = vld [vmem:[%s632 + $0x84] sm:$0xf]
      %v3544 = vld [vmem:[%s632 + $0x90] sm:$0x8]
      %v3545 = vld [vmem:[%s632 + $0x94] sm:$0xf]
      %v3546 = vld [vmem:[%s632 + $0x98] sm:$0xf]
      %v3547 = vld [vmem:[%s632 + $0xa4] sm:$0x8]
      %v3548 = vld [vmem:[%s632 + $0xa8] sm:$0xf]
      %v3549 = vld [vmem:[%s632 + $0xac] sm:$0xf]
      %v3550 = vld [vmem:[%s632 + $0xb8] sm:$0x8]
      %v3551 = vld [vmem:[%s632 + $0xbc] sm:$0xf]
      %v3552 = vld [vmem:[%s632 + $0xc0] sm:$0xf]
      %v3553 = vld [vmem:[%s632 + $0xcc] sm:$0x8]
      %v3554 = vld [vmem:[%s632 + $0xd0] sm:$0xf]
      %v3555 = vld [vmem:[%s632 + $0xd4] sm:$0xf]
      %v3556 = vld [vmem:[%s632 + $0xe0] sm:$0x8]
      %v3557 = vld [vmem:[%s632 + $0xe4] sm:$0xf]
      %v3558 = vld [vmem:[%s632 + $0xe8] sm:$0xf]
      %v3559 = vld [vmem:[%s632 + $0xf4] sm:$0x8]
      %v3560 = vld [vmem:[%s632 + $0xf8] sm:$0xf]
      %v3561 = vld [vmem:[%s632 + $0xfc] sm:$0xf]
      %v3562 = vld [vmem:[%s632 + $0x108] sm:$0x8]
      %v3563 = vld [vmem:[%s632 + $0x10c] sm:$0xf]
      %v3564 = vld [vmem:[%s632 + $0x110] sm:$0xf]
      %v3565 = vld [vmem:[%s632 + $0x11c] sm:$0x8]
      %v3566 = vld [vmem:[%s632 + $0x120] sm:$0xf]
      %v3567 = vld [vmem:[%s632 + $0x124] sm:$0xf]
      %v3568 = vld [vmem:[%s632 + $0x130] sm:$0x8]
      %v3569 = vld [vmem:[%s632 + $0x134] sm:$0xf]
      %v3570 = vld [vmem:[%s632 + $0x138] sm:$0xf]
      %v3571 = vld [vmem:[%s632 + $0x10] sm:$0x1]
      %v3572 = vld [vmem:[%s632 + $0x24] sm:$0x1]
      %v3573 = vld [vmem:[%s632 + $0x38] sm:$0x1]
      %v3574 = vld [vmem:[%s632 + $0x4c] sm:$0x1]
      %v3575 = vld [vmem:[%s632 + $0x60] sm:$0x1]
      %v3576 = vld [vmem:[%s632 + $0x74] sm:$0x1]
      %v3577 = vld [vmem:[%s632 + $0x88] sm:$0x1]
      %v3578 = vld [vmem:[%s632 + $0x9c] sm:$0x1]
      %v3579 = vld [vmem:[%s632 + $0xb0] sm:$0x1]
      %v3580 = vld [vmem:[%s632 + $0xc4] sm:$0x1]
      %v3581 = vld [vmem:[%s632 + $0xd8] sm:$0x1]
      %v3582 = vld [vmem:[%s632 + $0xec] sm:$0x1]
      %v3583 = vld [vmem:[%s632 + $0x100] sm:$0x1]
      %v3584 = vld [vmem:[%s632 + $0x114] sm:$0x1]
      %v3585 = vld [vmem:[%s632 + $0x128] sm:$0x1]
      %v3586 = vld [vmem:[%s632 + $0x13c] sm:$0x1]
      %v3635 = vunpack.c.l.b16 %v3395
      %v3636 = vunpack.c.l.b16 %v3396
      %v3637 = vunpack.c.l.b16 %v3397
      %v3638 = vunpack.c.l.b16 %v3398
      %v3639 = vunpack.c.l.b16 %v3399
      %v3640 = vunpack.c.l.b16 %v3400
      %v3641 = vunpack.c.l.b16 %v3401
      %v3642 = vunpack.c.l.b16 %v3402
      %v3643 = vunpack.c.l.b16 %v3403
      %v3644 = vunpack.c.l.b16 %v3404
      %v3645 = vunpack.c.l.b16 %v3405
      %v3646 = vunpack.c.l.b16 %v3406
      %v3647 = vunpack.c.l.b16 %v3407
      %v3648 = vunpack.c.l.b16 %v3408
      %v3649 = vunpack.c.l.b16 %v3409
      %v3650 = vunpack.c.l.b16 %v3410
      %v3651 = vunpack.c.l.b16 %v3411
      %v3652 = vunpack.c.l.b16 %v3412
      %v3653 = vunpack.c.l.b16 %v3413
      %v3654 = vunpack.c.l.b16 %v3414
      %v3655 = vunpack.c.l.b16 %v3415
      %v3656 = vunpack.c.l.b16 %v3416
      %v3657 = vunpack.c.l.b16 %v3417
      %v3658 = vunpack.c.l.b16 %v3418
      %v3659 = vunpack.c.l.b16 %v3419
      %v3660 = vunpack.c.l.b16 %v3420
      %v3661 = vunpack.c.l.b16 %v3421
      %v3662 = vunpack.c.l.b16 %v3422
      %v3663 = vunpack.c.l.b16 %v3423
      %v3664 = vunpack.c.l.b16 %v3424
      %v3665 = vunpack.c.l.b16 %v3425
      %v3666 = vunpack.c.l.b16 %v3426
      %v3667 = vunpack.c.l.b16 %v3427
      %v3668 = vunpack.c.l.b16 %v3428
      %v3669 = vunpack.c.l.b16 %v3429
      %v3670 = vunpack.c.l.b16 %v3430
      %v3671 = vunpack.c.l.b16 %v3431
      %v3672 = vunpack.c.l.b16 %v3432
      %v3673 = vunpack.c.l.b16 %v3433
      %v3674 = vunpack.c.l.b16 %v3434
      %v3675 = vunpack.c.l.b16 %v3435
      %v3676 = vunpack.c.l.b16 %v3436
      %v3677 = vunpack.c.l.b16 %v3437
      %v3678 = vunpack.c.l.b16 %v3438
      %v3679 = vunpack.c.l.b16 %v3439
      %v3680 = vunpack.c.l.b16 %v3440
      %v3681 = vunpack.c.l.b16 %v3441
      %v3682 = vunpack.c.l.b16 %v3442
      %v3683 = vpack.c.b16 %v3636, %v3635
      %v3684 = vpack.c.b16 %v3637, %v3637
      %v3685 = vpack.c.b16 %v3639, %v3638
      %v3686 = vpack.c.b16 %v3640, %v3640
      %v3687 = vpack.c.b16 %v3642, %v3641
      %v3688 = vpack.c.b16 %v3643, %v3643
      %v3689 = vpack.c.b16 %v3645, %v3644
      %v3690 = vpack.c.b16 %v3646, %v3646
      %v3691 = vpack.c.b16 %v3648, %v3647
      %v3692 = vpack.c.b16 %v3649, %v3649
      %v3693 = vpack.c.b16 %v3651, %v3650
      %v3694 = vpack.c.b16 %v3652, %v3652
      %v3695 = vpack.c.b16 %v3654, %v3653
      %v3696 = vpack.c.b16 %v3655, %v3655
      %v3697 = vpack.c.b16 %v3657, %v3656
      %v3698 = vpack.c.b16 %v3658, %v3658
      %v3699 = vpack.c.b16 %v3660, %v3659
      %v3700 = vpack.c.b16 %v3661, %v3661
      %v3701 = vpack.c.b16 %v3663, %v3662
      %v3702 = vpack.c.b16 %v3664, %v3664
      %v3703 = vpack.c.b16 %v3666, %v3665
      %v3704 = vpack.c.b16 %v3667, %v3667
      %v3705 = vpack.c.b16 %v3669, %v3668
      %v3706 = vpack.c.b16 %v3670, %v3670
      %v3707 = vpack.c.b16 %v3672, %v3671
      %v3708 = vpack.c.b16 %v3673, %v3673
      %v3709 = vpack.c.b16 %v3675, %v3674
      %v3710 = vpack.c.b16 %v3676, %v3676
      %v3711 = vpack.c.b16 %v3678, %v3677
      %v3712 = vpack.c.b16 %v3679, %v3679
      %v3713 = vpack.c.b16 %v3681, %v3680
      %v3714 = vpack.c.b16 %v3682, %v3682
      %v3715 = vpack.c.b16 %v3637, %v3636
      %v3716 = vpack.c.b16 %v3640, %v3639
      %v3717 = vpack.c.b16 %v3643, %v3642
      %v3718 = vpack.c.b16 %v3646, %v3645
      %v3719 = vpack.c.b16 %v3649, %v3648
      %v3720 = vpack.c.b16 %v3652, %v3651
      %v3721 = vpack.c.b16 %v3655, %v3654
      %v3722 = vpack.c.b16 %v3658, %v3657
      %v3723 = vpack.c.b16 %v3661, %v3660
      %v3724 = vpack.c.b16 %v3664, %v3663
      %v3725 = vpack.c.b16 %v3667, %v3666
      %v3726 = vpack.c.b16 %v3670, %v3669
      %v3727 = vpack.c.b16 %v3673, %v3672
      %v3728 = vpack.c.b16 %v3676, %v3675
      %v3729 = vpack.c.b16 %v3679, %v3678
      %v3730 = vpack.c.b16 %v3682, %v3681
      %v3732 = vshrl.u32 %v3715, 16
      %v3734 = vrot.slane %v3732, 4
      %v3735 = vshll.u32 %v3715, 16
      %v3737 = vrot.slane %v3735, 5
      %v3738 = vor.u32 %v3734, %v3737
      %v3740 = vshrl.u32 %v3716, 16
      %v3742 = vrot.slane %v3740, 4
      %v3743 = vshll.u32 %v3716, 16
      %v3745 = vrot.slane %v3743, 5
      %v3746 = vor.u32 %v3742, %v3745
      %v3748 = vshrl.u32 %v3717, 16
      %v3750 = vrot.slane %v3748, 4
      %v3751 = vshll.u32 %v3717, 16
      %v3753 = vrot.slane %v3751, 5
      %v3754 = vor.u32 %v3750, %v3753
      %v3756 = vshrl.u32 %v3718, 16
      %v3758 = vrot.slane %v3756, 4
      %v3759 = vshll.u32 %v3718, 16
      %v3761 = vrot.slane %v3759, 5
      %v3762 = vor.u32 %v3758, %v3761
      %v3764 = vshrl.u32 %v3719, 16
      %v3766 = vrot.slane %v3764, 4
      %v3767 = vshll.u32 %v3719, 16
      %v3769 = vrot.slane %v3767, 5
      %v3770 = vor.u32 %v3766, %v3769
      %v3772 = vshrl.u32 %v3720, 16
      %v3774 = vrot.slane %v3772, 4
      %v3775 = vshll.u32 %v3720, 16
      %v3777 = vrot.slane %v3775, 5
      %v3778 = vor.u32 %v3774, %v3777
      %v3780 = vshrl.u32 %v3721, 16
      %v3782 = vrot.slane %v3780, 4
      %v3783 = vshll.u32 %v3721, 16
      %v3785 = vrot.slane %v3783, 5
      %v3786 = vor.u32 %v3782, %v3785
      %v3788 = vshrl.u32 %v3722, 16
      %v3790 = vrot.slane %v3788, 4
      %v3791 = vshll.u32 %v3722, 16
      %v3793 = vrot.slane %v3791, 5
      %v3794 = vor.u32 %v3790, %v3793
      %v3796 = vshrl.u32 %v3723, 16
      %v3798 = vrot.slane %v3796, 4
      %v3799 = vshll.u32 %v3723, 16
      %v3801 = vrot.slane %v3799, 5
      %v3802 = vor.u32 %v3798, %v3801
      %v3804 = vshrl.u32 %v3724, 16
      %v3806 = vrot.slane %v3804, 4
      %v3807 = vshll.u32 %v3724, 16
      %v3809 = vrot.slane %v3807, 5
      %v3810 = vor.u32 %v3806, %v3809
      %v3812 = vshrl.u32 %v3725, 16
      %v3814 = vrot.slane %v3812, 4
      %v3815 = vshll.u32 %v3725, 16
      %v3817 = vrot.slane %v3815, 5
      %v3818 = vor.u32 %v3814, %v3817
      %v3820 = vshrl.u32 %v3726, 16
      %v3822 = vrot.slane %v3820, 4
      %v3823 = vshll.u32 %v3726, 16
      %v3825 = vrot.slane %v3823, 5
      %v3826 = vor.u32 %v3822, %v3825
      %v3828 = vshrl.u32 %v3727, 16
      %v3830 = vrot.slane %v3828, 4
      %v3831 = vshll.u32 %v3727, 16
      %v3833 = vrot.slane %v3831, 5
      %v3834 = vor.u32 %v3830, %v3833
      %v3836 = vshrl.u32 %v3728, 16
      %v3838 = vrot.slane %v3836, 4
      %v3839 = vshll.u32 %v3728, 16
      %v3841 = vrot.slane %v3839, 5
      %v3842 = vor.u32 %v3838, %v3841
      %v3844 = vshrl.u32 %v3729, 16
      %v3846 = vrot.slane %v3844, 4
      %v3847 = vshll.u32 %v3729, 16
      %v3849 = vrot.slane %v3847, 5
      %v3850 = vor.u32 %v3846, %v3849
      %v3852 = vshrl.u32 %v3730, 16
      %v3854 = vrot.slane %v3852, 4
      %v3855 = vshll.u32 %v3730, 16
      %v3857 = vrot.slane %v3855, 5
      %v3858 = vor.u32 %v3854, %v3857
      %3859 = vrot.lane.b32.xlu0 %v3738, 8
      %v3860 = vpop.permute.xlu0 %3859
      %3861 = vrot.lane.b32.xlu0 %v3746, 8
      %v3862 = vpop.permute.xlu0 %3861
      %3863 = vrot.lane.b32.xlu0 %v3754, 8
      %v3864 = vpop.permute.xlu0 %3863
      %3865 = vrot.lane.b32.xlu0 %v3762, 8
      %v3866 = vpop.permute.xlu0 %3865
      %3867 = vrot.lane.b32.xlu0 %v3770, 8
      %v3868 = vpop.permute.xlu0 %3867
      %3869 = vrot.lane.b32.xlu0 %v3778, 8
      %v3870 = vpop.permute.xlu0 %3869
      %3871 = vrot.lane.b32.xlu0 %v3786, 8
      %v3872 = vpop.permute.xlu0 %3871
      %3873 = vrot.lane.b32.xlu0 %v3794, 8
      %v3874 = vpop.permute.xlu0 %3873
      %3875 = vrot.lane.b32.xlu0 %v3802, 8
      %v3876 = vpop.permute.xlu0 %3875
      %3877 = vrot.lane.b32.xlu0 %v3810, 8
      %v3878 = vpop.permute.xlu0 %3877
      %3879 = vrot.lane.b32.xlu0 %v3818, 8
      %v3880 = vpop.permute.xlu0 %3879
      %3881 = vrot.lane.b32.xlu0 %v3826, 8
      %v3882 = vpop.permute.xlu0 %3881
      %3883 = vrot.lane.b32.xlu0 %v3834, 8
      %v3884 = vpop.permute.xlu0 %3883
      %3885 = vrot.lane.b32.xlu0 %v3842, 8
      %v3886 = vpop.permute.xlu0 %3885
      %3887 = vrot.lane.b32.xlu0 %v3850, 8
      %v3888 = vpop.permute.xlu0 %3887
      %3889 = vrot.lane.b32.xlu0 %v3858, 8
      %v3890 = vpop.permute.xlu0 %3889
      %v3907 = vunpack.c.l.b16 %v3443
      %v3908 = vunpack.c.l.b16 %v3444
      %v3909 = vunpack.c.l.b16 %v3445
      %v3910 = vunpack.c.l.b16 %v3446
      %v3911 = vunpack.c.l.b16 %v3447
      %v3912 = vunpack.c.l.b16 %v3448
      %v3913 = vunpack.c.l.b16 %v3449
      %v3914 = vunpack.c.l.b16 %v3450
      %v3915 = vunpack.c.l.b16 %v3451
      %v3916 = vunpack.c.l.b16 %v3452
      %v3917 = vunpack.c.l.b16 %v3453
      %v3918 = vunpack.c.l.b16 %v3454
      %v3919 = vunpack.c.l.b16 %v3455
      %v3920 = vunpack.c.l.b16 %v3456
      %v3921 = vunpack.c.l.b16 %v3457
      %v3922 = vunpack.c.l.b16 %v3458
      %v3923 = vpack.c.b16 %v3907, %v3907
      %v3924 = vpack.c.b16 %v3908, %v3908
      %v3925 = vpack.c.b16 %v3909, %v3909
      %v3926 = vpack.c.b16 %v3910, %v3910
      %v3927 = vpack.c.b16 %v3911, %v3911
      %v3928 = vpack.c.b16 %v3912, %v3912
      %v3929 = vpack.c.b16 %v3913, %v3913
      %v3930 = vpack.c.b16 %v3914, %v3914
      %v3931 = vpack.c.b16 %v3915, %v3915
      %v3932 = vpack.c.b16 %v3916, %v3916
      %v3933 = vpack.c.b16 %v3917, %v3917
      %v3934 = vpack.c.b16 %v3918, %v3918
      %v3935 = vpack.c.b16 %v3919, %v3919
      %v3936 = vpack.c.b16 %v3920, %v3920
      %v3937 = vpack.c.b16 %v3921, %v3921
      %v3938 = vpack.c.b16 %v3922, %v3922
      %v3939 = vrot.slane %v3715, 5
      %v3940 = vrot.slane %v3923, 5
      %v3941 = vsel %vm1049, %v3939, %v3940
      %v3942 = vrot.slane %v3716, 5
      %v3943 = vrot.slane %v3924, 5
      %v3944 = vsel %vm1049, %v3942, %v3943
      %v3945 = vrot.slane %v3717, 5
      %v3946 = vrot.slane %v3925, 5
      %v3947 = vsel %vm1049, %v3945, %v3946
      %v3948 = vrot.slane %v3718, 5
      %v3949 = vrot.slane %v3926, 5
      %v3950 = vsel %vm1049, %v3948, %v3949
      %v3951 = vrot.slane %v3719, 5
      %v3952 = vrot.slane %v3927, 5
      %v3953 = vsel %vm1049, %v3951, %v3952
      %v3954 = vrot.slane %v3720, 5
      %v3955 = vrot.slane %v3928, 5
      %v3956 = vsel %vm1049, %v3954, %v3955
      %v3957 = vrot.slane %v3721, 5
      %v3958 = vrot.slane %v3929, 5
      %v3959 = vsel %vm1049, %v3957, %v3958
      %v3960 = vrot.slane %v3722, 5
      %v3961 = vrot.slane %v3930, 5
      %v3962 = vsel %vm1049, %v3960, %v3961
      %v3963 = vrot.slane %v3723, 5
      %v3964 = vrot.slane %v3931, 5
      %v3965 = vsel %vm1049, %v3963, %v3964
      %v3966 = vrot.slane %v3724, 5
      %v3967 = vrot.slane %v3932, 5
      %v3968 = vsel %vm1049, %v3966, %v3967
      %v3969 = vrot.slane %v3725, 5
      %v3970 = vrot.slane %v3933, 5
      %v3971 = vsel %vm1049, %v3969, %v3970
      %v3972 = vrot.slane %v3726, 5
      %v3973 = vrot.slane %v3934, 5
      %v3974 = vsel %vm1049, %v3972, %v3973
      %v3975 = vrot.slane %v3727, 5
      %v3976 = vrot.slane %v3935, 5
      %v3977 = vsel %vm1049, %v3975, %v3976
      %v3978 = vrot.slane %v3728, 5
      %v3979 = vrot.slane %v3936, 5
      %v3980 = vsel %vm1049, %v3978, %v3979
      %v3981 = vrot.slane %v3729, 5
      %v3982 = vrot.slane %v3937, 5
      %v3983 = vsel %vm1049, %v3981, %v3982
      %v3984 = vrot.slane %v3730, 5
      %v3985 = vrot.slane %v3938, 5
      %v3986 = vsel %vm1049, %v3984, %v3985
      %3987 = vrot.lane.b32.xlu0 %v3939, 16
      %v3988 = vpop.permute.xlu0 %3987
      %3989 = vrot.lane.b32.xlu0 %v3941, 16
      %v3990 = vpop.permute.xlu0 %3989
      %3991 = vrot.lane.b32.xlu0 %v3942, 16
      %v3992 = vpop.permute.xlu0 %3991
      %3993 = vrot.lane.b32.xlu0 %v3944, 16
      %v3994 = vpop.permute.xlu0 %3993
      %3995 = vrot.lane.b32.xlu0 %v3945, 16
      %v3996 = vpop.permute.xlu0 %3995
      %3997 = vrot.lane.b32.xlu0 %v3947, 16
      %v3998 = vpop.permute.xlu0 %3997
      %3999 = vrot.lane.b32.xlu0 %v3948, 16
      %v4000 = vpop.permute.xlu0 %3999
      %4001 = vrot.lane.b32.xlu0 %v3950, 16
      %v4002 = vpop.permute.xlu0 %4001
      %4003 = vrot.lane.b32.xlu0 %v3951, 16
      %v4004 = vpop.permute.xlu0 %4003
      %4005 = vrot.lane.b32.xlu0 %v3953, 16
      %v4006 = vpop.permute.xlu0 %4005
      %4007 = vrot.lane.b32.xlu0 %v3954, 16
      %v4008 = vpop.permute.xlu0 %4007
      %4009 = vrot.lane.b32.xlu0 %v3956, 16
      %v4010 = vpop.permute.xlu0 %4009
      %4011 = vrot.lane.b32.xlu0 %v3957, 16
      %v4012 = vpop.permute.xlu0 %4011
      %4013 = vrot.lane.b32.xlu0 %v3959, 16
      %v4014 = vpop.permute.xlu0 %4013
      %4015 = vrot.lane.b32.xlu0 %v3960, 16
      %v4016 = vpop.permute.xlu0 %4015
      %4017 = vrot.lane.b32.xlu0 %v3962, 16
      %v4018 = vpop.permute.xlu0 %4017
      %4019 = vrot.lane.b32.xlu0 %v3963, 16
      %v4020 = vpop.permute.xlu0 %4019
      %4021 = vrot.lane.b32.xlu0 %v3965, 16
      %v4022 = vpop.permute.xlu0 %4021
      %4023 = vrot.lane.b32.xlu0 %v3966, 16
      %v4024 = vpop.permute.xlu0 %4023
      %4025 = vrot.lane.b32.xlu0 %v3968, 16
      %v4026 = vpop.permute.xlu0 %4025
      %4027 = vrot.lane.b32.xlu0 %v3969, 16
      %v4028 = vpop.permute.xlu0 %4027
      %4029 = vrot.lane.b32.xlu0 %v3971, 16
      %v4030 = vpop.permute.xlu0 %4029
      %4031 = vrot.lane.b32.xlu0 %v3972, 16
      %v4032 = vpop.permute.xlu0 %4031
      %4033 = vrot.lane.b32.xlu0 %v3974, 16
      %v4034 = vpop.permute.xlu0 %4033
      %4035 = vrot.lane.b32.xlu0 %v3975, 16
      %v4036 = vpop.permute.xlu0 %4035
      %4037 = vrot.lane.b32.xlu0 %v3977, 16
      %v4038 = vpop.permute.xlu0 %4037
      %4039 = vrot.lane.b32.xlu0 %v3978, 16
      %v4040 = vpop.permute.xlu0 %4039
      %4041 = vrot.lane.b32.xlu0 %v3980, 16
      %v4042 = vpop.permute.xlu0 %4041
      %4043 = vrot.lane.b32.xlu0 %v3981, 16
      %v4044 = vpop.permute.xlu0 %4043
      %4045 = vrot.lane.b32.xlu0 %v3983, 16
      %v4046 = vpop.permute.xlu0 %4045
      %4047 = vrot.lane.b32.xlu0 %v3984, 16
      %v4048 = vpop.permute.xlu0 %4047
      %4049 = vrot.lane.b32.xlu0 %v3986, 16
      %v4050 = vpop.permute.xlu0 %4049
      %v4099 = vunpack.c.l.b16 %v3459
      %v4100 = vunpack.c.l.b16 %v3460
      %v4101 = vunpack.c.l.b16 %v3461
      %v4102 = vunpack.c.l.b16 %v3462
      %v4103 = vunpack.c.l.b16 %v3463
      %v4104 = vunpack.c.l.b16 %v3464
      %v4105 = vunpack.c.l.b16 %v3465
      %v4106 = vunpack.c.l.b16 %v3466
      %v4107 = vunpack.c.l.b16 %v3467
      %v4108 = vunpack.c.l.b16 %v3468
      %v4109 = vunpack.c.l.b16 %v3469
      %v4110 = vunpack.c.l.b16 %v3470
      %v4111 = vunpack.c.l.b16 %v3471
      %v4112 = vunpack.c.l.b16 %v3472
      %v4113 = vunpack.c.l.b16 %v3473
      %v4114 = vunpack.c.l.b16 %v3474
      %v4115 = vunpack.c.l.b16 %v3475
      %v4116 = vunpack.c.l.b16 %v3476
      %v4117 = vunpack.c.l.b16 %v3477
      %v4118 = vunpack.c.l.b16 %v3478
      %v4119 = vunpack.c.l.b16 %v3479
      %v4120 = vunpack.c.l.b16 %v3480
      %v4121 = vunpack.c.l.b16 %v3481
      %v4122 = vunpack.c.l.b16 %v3482
      %v4123 = vunpack.c.l.b16 %v3483
      %v4124 = vunpack.c.l.b16 %v3484
      %v4125 = vunpack.c.l.b16 %v3485
      %v4126 = vunpack.c.l.b16 %v3486
      %v4127 = vunpack.c.l.b16 %v3487
      %v4128 = vunpack.c.l.b16 %v3488
      %v4129 = vunpack.c.l.b16 %v3489
      %v4130 = vunpack.c.l.b16 %v3490
      %v4131 = vunpack.c.l.b16 %v3491
      %v4132 = vunpack.c.l.b16 %v3492
      %v4133 = vunpack.c.l.b16 %v3493
      %v4134 = vunpack.c.l.b16 %v3494
      %v4135 = vunpack.c.l.b16 %v3495
      %v4136 = vunpack.c.l.b16 %v3496
      %v4137 = vunpack.c.l.b16 %v3497
      %v4138 = vunpack.c.l.b16 %v3498
      %v4139 = vunpack.c.l.b16 %v3499
      %v4140 = vunpack.c.l.b16 %v3500
      %v4141 = vunpack.c.l.b16 %v3501
      %v4142 = vunpack.c.l.b16 %v3502
      %v4143 = vunpack.c.l.b16 %v3503
      %v4144 = vunpack.c.l.b16 %v3504
      %v4145 = vunpack.c.l.b16 %v3505
      %v4146 = vunpack.c.l.b16 %v3506
      %v4147 = vpack.c.b16 %v4100, %v4099
      %v4148 = vpack.c.b16 %v4101, %v4101
      %v4149 = vpack.c.b16 %v4103, %v4102
      %v4150 = vpack.c.b16 %v4104, %v4104
      %v4151 = vpack.c.b16 %v4106, %v4105
      %v4152 = vpack.c.b16 %v4107, %v4107
      %v4153 = vpack.c.b16 %v4109, %v4108
      %v4154 = vpack.c.b16 %v4110, %v4110
      %v4155 = vpack.c.b16 %v4112, %v4111
      %v4156 = vpack.c.b16 %v4113, %v4113
      %v4157 = vpack.c.b16 %v4115, %v4114
      %v4158 = vpack.c.b16 %v4116, %v4116
      %v4159 = vpack.c.b16 %v4118, %v4117
      %v4160 = vpack.c.b16 %v4119, %v4119
      %v4161 = vpack.c.b16 %v4121, %v4120
      %v4162 = vpack.c.b16 %v4122, %v4122
      %v4163 = vpack.c.b16 %v4124, %v4123
      %v4164 = vpack.c.b16 %v4125, %v4125
      %v4165 = vpack.c.b16 %v4127, %v4126
      %v4166 = vpack.c.b16 %v4128, %v4128
      %v4167 = vpack.c.b16 %v4130, %v4129
      %v4168 = vpack.c.b16 %v4131, %v4131
      %v4169 = vpack.c.b16 %v4133, %v4132
      %v4170 = vpack.c.b16 %v4134, %v4134
      %v4171 = vpack.c.b16 %v4136, %v4135
      %v4172 = vpack.c.b16 %v4137, %v4137
      %v4173 = vpack.c.b16 %v4139, %v4138
      %v4174 = vpack.c.b16 %v4140, %v4140
      %v4175 = vpack.c.b16 %v4142, %v4141
      %v4176 = vpack.c.b16 %v4143, %v4143
      %v4177 = vpack.c.b16 %v4145, %v4144
      %v4178 = vpack.c.b16 %v4146, %v4146
      %4179 = vrot.lane.b32.xlu0 %v4147, 24
      %v4180 = vpop.permute.xlu0 %4179
      %4181 = vrot.lane.b32.xlu0 %v4148, 24
      %v4182 = vpop.permute.xlu0 %4181
      %4183 = vrot.lane.b32.xlu0 %v4149, 24
      %v4184 = vpop.permute.xlu0 %4183
      %4185 = vrot.lane.b32.xlu0 %v4150, 24
      %v4186 = vpop.permute.xlu0 %4185
      %4187 = vrot.lane.b32.xlu0 %v4151, 24
      %v4188 = vpop.permute.xlu0 %4187
      %4189 = vrot.lane.b32.xlu0 %v4152, 24
      %v4190 = vpop.permute.xlu0 %4189
      %4191 = vrot.lane.b32.xlu0 %v4153, 24
      %v4192 = vpop.permute.xlu0 %4191
      %4193 = vrot.lane.b32.xlu0 %v4154, 24
      %v4194 = vpop.permute.xlu0 %4193
      %4195 = vrot.lane.b32.xlu0 %v4155, 24
      %v4196 = vpop.permute.xlu0 %4195
      %4197 = vrot.lane.b32.xlu0 %v4156, 24
      %v4198 = vpop.permute.xlu0 %4197
      %4199 = vrot.lane.b32.xlu0 %v4157, 24
      %v4200 = vpop.permute.xlu0 %4199
      %4201 = vrot.lane.b32.xlu0 %v4158, 24
      %v4202 = vpop.permute.xlu0 %4201
      %4203 = vrot.lane.b32.xlu0 %v4159, 24
      %v4204 = vpop.permute.xlu0 %4203
      %4205 = vrot.lane.b32.xlu0 %v4160, 24
      %v4206 = vpop.permute.xlu0 %4205
      %4207 = vrot.lane.b32.xlu0 %v4161, 24
      %v4208 = vpop.permute.xlu0 %4207
      %4209 = vrot.lane.b32.xlu0 %v4162, 24
      %v4210 = vpop.permute.xlu0 %4209
      %4211 = vrot.lane.b32.xlu0 %v4163, 24
      %v4212 = vpop.permute.xlu0 %4211
      %4213 = vrot.lane.b32.xlu0 %v4164, 24
      %v4214 = vpop.permute.xlu0 %4213
      %4215 = vrot.lane.b32.xlu0 %v4165, 24
      %v4216 = vpop.permute.xlu0 %4215
      %4217 = vrot.lane.b32.xlu0 %v4166, 24
      %v4218 = vpop.permute.xlu0 %4217
      %4219 = vrot.lane.b32.xlu0 %v4167, 24
      %v4220 = vpop.permute.xlu0 %4219
      %4221 = vrot.lane.b32.xlu0 %v4168, 24
      %v4222 = vpop.permute.xlu0 %4221
      %4223 = vrot.lane.b32.xlu0 %v4169, 24
      %v4224 = vpop.permute.xlu0 %4223
      %4225 = vrot.lane.b32.xlu0 %v4170, 24
      %v4226 = vpop.permute.xlu0 %4225
      %4227 = vrot.lane.b32.xlu0 %v4171, 24
      %v4228 = vpop.permute.xlu0 %4227
      %4229 = vrot.lane.b32.xlu0 %v4172, 24
      %v4230 = vpop.permute.xlu0 %4229
      %4231 = vrot.lane.b32.xlu0 %v4173, 24
      %v4232 = vpop.permute.xlu0 %4231
      %4233 = vrot.lane.b32.xlu0 %v4174, 24
      %v4234 = vpop.permute.xlu0 %4233
      %4235 = vrot.lane.b32.xlu0 %v4175, 24
      %v4236 = vpop.permute.xlu0 %4235
      %4237 = vrot.lane.b32.xlu0 %v4176, 24
      %v4238 = vpop.permute.xlu0 %4237
      %4239 = vrot.lane.b32.xlu0 %v4177, 24
      %v4240 = vpop.permute.xlu0 %4239
      %4241 = vrot.lane.b32.xlu0 %v4178, 24
      %v4242 = vpop.permute.xlu0 %4241
      %v4243 = vpack.c.b16 %v4101, %v4100
      %v4244 = vpack.c.b16 %v4104, %v4103
      %v4245 = vpack.c.b16 %v4107, %v4106
      %v4246 = vpack.c.b16 %v4110, %v4109
      %v4247 = vpack.c.b16 %v4113, %v4112
      %v4248 = vpack.c.b16 %v4116, %v4115
      %v4249 = vpack.c.b16 %v4119, %v4118
      %v4250 = vpack.c.b16 %v4122, %v4121
      %v4251 = vpack.c.b16 %v4125, %v4124
      %v4252 = vpack.c.b16 %v4128, %v4127
      %v4253 = vpack.c.b16 %v4131, %v4130
      %v4254 = vpack.c.b16 %v4134, %v4133
      %v4255 = vpack.c.b16 %v4137, %v4136
      %v4256 = vpack.c.b16 %v4140, %v4139
      %v4257 = vpack.c.b16 %v4143, %v4142
      %v4258 = vpack.c.b16 %v4146, %v4145
      %v4260 = vshrl.u32 %v4243, 16
      %v4262 = vrot.slane %v4260, 4
      %v4263 = vshll.u32 %v4243, 16
      %v4265 = vrot.slane %v4263, 5
      %v4266 = vor.u32 %v4262, %v4265
      %v4268 = vshrl.u32 %v4244, 16
      %v4270 = vrot.slane %v4268, 4
      %v4271 = vshll.u32 %v4244, 16
      %v4273 = vrot.slane %v4271, 5
      %v4274 = vor.u32 %v4270, %v4273
      %v4276 = vshrl.u32 %v4245, 16
      %v4278 = vrot.slane %v4276, 4
      %v4279 = vshll.u32 %v4245, 16
      %v4281 = vrot.slane %v4279, 5
      %v4282 = vor.u32 %v4278, %v4281
      %v4284 = vshrl.u32 %v4246, 16
      %v4286 = vrot.slane %v4284, 4
      %v4287 = vshll.u32 %v4246, 16
      %v4289 = vrot.slane %v4287, 5
      %v4290 = vor.u32 %v4286, %v4289
      %v4292 = vshrl.u32 %v4247, 16
      %v4294 = vrot.slane %v4292, 4
      %v4295 = vshll.u32 %v4247, 16
      %v4297 = vrot.slane %v4295, 5
      %v4298 = vor.u32 %v4294, %v4297
      %v4300 = vshrl.u32 %v4248, 16
      %v4302 = vrot.slane %v4300, 4
      %v4303 = vshll.u32 %v4248, 16
      %v4305 = vrot.slane %v4303, 5
      %v4306 = vor.u32 %v4302, %v4305
      %v4308 = vshrl.u32 %v4249, 16
      %v4310 = vrot.slane %v4308, 4
      %v4311 = vshll.u32 %v4249, 16
      %v4313 = vrot.slane %v4311, 5
      %v4314 = vor.u32 %v4310, %v4313
      %v4316 = vshrl.u32 %v4250, 16
      %v4318 = vrot.slane %v4316, 4
      %v4319 = vshll.u32 %v4250, 16
      %v4321 = vrot.slane %v4319, 5
      %v4322 = vor.u32 %v4318, %v4321
      %v4324 = vshrl.u32 %v4251, 16
      %v4326 = vrot.slane %v4324, 4
      %v4327 = vshll.u32 %v4251, 16
      %v4329 = vrot.slane %v4327, 5
      %v4330 = vor.u32 %v4326, %v4329
      %v4332 = vshrl.u32 %v4252, 16
      %v4334 = vrot.slane %v4332, 4
      %v4335 = vshll.u32 %v4252, 16
      %v4337 = vrot.slane %v4335, 5
      %v4338 = vor.u32 %v4334, %v4337
      %v4340 = vshrl.u32 %v4253, 16
      %v4342 = vrot.slane %v4340, 4
      %v4343 = vshll.u32 %v4253, 16
      %v4345 = vrot.slane %v4343, 5
      %v4346 = vor.u32 %v4342, %v4345
      %v4348 = vshrl.u32 %v4254, 16
      %v4350 = vrot.slane %v4348, 4
      %v4351 = vshll.u32 %v4254, 16
      %v4353 = vrot.slane %v4351, 5
      %v4354 = vor.u32 %v4350, %v4353
      %v4356 = vshrl.u32 %v4255, 16
      %v4358 = vrot.slane %v4356, 4
      %v4359 = vshll.u32 %v4255, 16
      %v4361 = vrot.slane %v4359, 5
      %v4362 = vor.u32 %v4358, %v4361
      %v4364 = vshrl.u32 %v4256, 16
      %v4366 = vrot.slane %v4364, 4
      %v4367 = vshll.u32 %v4256, 16
      %v4369 = vrot.slane %v4367, 5
      %v4370 = vor.u32 %v4366, %v4369
      %v4372 = vshrl.u32 %v4257, 16
      %v4374 = vrot.slane %v4372, 4
      %v4375 = vshll.u32 %v4257, 16
      %v4377 = vrot.slane %v4375, 5
      %v4378 = vor.u32 %v4374, %v4377
      %v4380 = vshrl.u32 %v4258, 16
      %v4382 = vrot.slane %v4380, 4
      %v4383 = vshll.u32 %v4258, 16
      %v4385 = vrot.slane %v4383, 5
      %v4386 = vor.u32 %v4382, %v4385
      %4387 = vrot.lane.b32.xlu0 %v4266, 32
      %v4388 = vpop.permute.xlu0 %4387
      %4389 = vrot.lane.b32.xlu0 %v4274, 32
      %v4390 = vpop.permute.xlu0 %4389
      %4391 = vrot.lane.b32.xlu0 %v4282, 32
      %v4392 = vpop.permute.xlu0 %4391
      %4393 = vrot.lane.b32.xlu0 %v4290, 32
      %v4394 = vpop.permute.xlu0 %4393
      %4395 = vrot.lane.b32.xlu0 %v4298, 32
      %v4396 = vpop.permute.xlu0 %4395
      %4397 = vrot.lane.b32.xlu0 %v4306, 32
      %v4398 = vpop.permute.xlu0 %4397
      %4399 = vrot.lane.b32.xlu0 %v4314, 32
      %v4400 = vpop.permute.xlu0 %4399
      %4401 = vrot.lane.b32.xlu0 %v4322, 32
      %v4402 = vpop.permute.xlu0 %4401
      %4403 = vrot.lane.b32.xlu0 %v4330, 32
      %v4404 = vpop.permute.xlu0 %4403
      %4405 = vrot.lane.b32.xlu0 %v4338, 32
      %v4406 = vpop.permute.xlu0 %4405
      %4407 = vrot.lane.b32.xlu0 %v4346, 32
      %v4408 = vpop.permute.xlu0 %4407
      %4409 = vrot.lane.b32.xlu0 %v4354, 32
      %v4410 = vpop.permute.xlu0 %4409
      %4411 = vrot.lane.b32.xlu0 %v4362, 32
      %v4412 = vpop.permute.xlu0 %4411
      %4413 = vrot.lane.b32.xlu0 %v4370, 32
      %v4414 = vpop.permute.xlu0 %4413
      %4415 = vrot.lane.b32.xlu0 %v4378, 32
      %v4416 = vpop.permute.xlu0 %4415
      %4417 = vrot.lane.b32.xlu0 %v4386, 32
      %v4418 = vpop.permute.xlu0 %4417
      %v4435 = vunpack.c.l.b16 %v3507
      %v4436 = vunpack.c.l.b16 %v3508
      %v4437 = vunpack.c.l.b16 %v3509
      %v4438 = vunpack.c.l.b16 %v3510
      %v4439 = vunpack.c.l.b16 %v3511
      %v4440 = vunpack.c.l.b16 %v3512
      %v4441 = vunpack.c.l.b16 %v3513
      %v4442 = vunpack.c.l.b16 %v3514
      %v4443 = vunpack.c.l.b16 %v3515
      %v4444 = vunpack.c.l.b16 %v3516
      %v4445 = vunpack.c.l.b16 %v3517
      %v4446 = vunpack.c.l.b16 %v3518
      %v4447 = vunpack.c.l.b16 %v3519
      %v4448 = vunpack.c.l.b16 %v3520
      %v4449 = vunpack.c.l.b16 %v3521
      %v4450 = vunpack.c.l.b16 %v3522
      %v4451 = vpack.c.b16 %v4435, %v4435
      %v4452 = vpack.c.b16 %v4436, %v4436
      %v4453 = vpack.c.b16 %v4437, %v4437
      %v4454 = vpack.c.b16 %v4438, %v4438
      %v4455 = vpack.c.b16 %v4439, %v4439
      %v4456 = vpack.c.b16 %v4440, %v4440
      %v4457 = vpack.c.b16 %v4441, %v4441
      %v4458 = vpack.c.b16 %v4442, %v4442
      %v4459 = vpack.c.b16 %v4443, %v4443
      %v4460 = vpack.c.b16 %v4444, %v4444
      %v4461 = vpack.c.b16 %v4445, %v4445
      %v4462 = vpack.c.b16 %v4446, %v4446
      %v4463 = vpack.c.b16 %v4447, %v4447
      %v4464 = vpack.c.b16 %v4448, %v4448
      %v4465 = vpack.c.b16 %v4449, %v4449
      %v4466 = vpack.c.b16 %v4450, %v4450
      %v4467 = vrot.slane %v4243, 5
      %v4468 = vrot.slane %v4451, 5
      %v4469 = vsel %vm1049, %v4467, %v4468
      %v4470 = vrot.slane %v4244, 5
      %v4471 = vrot.slane %v4452, 5
      %v4472 = vsel %vm1049, %v4470, %v4471
      %v4473 = vrot.slane %v4245, 5
      %v4474 = vrot.slane %v4453, 5
      %v4475 = vsel %vm1049, %v4473, %v4474
      %v4476 = vrot.slane %v4246, 5
      %v4477 = vrot.slane %v4454, 5
      %v4478 = vsel %vm1049, %v4476, %v4477
      %v4479 = vrot.slane %v4247, 5
      %v4480 = vrot.slane %v4455, 5
      %v4481 = vsel %vm1049, %v4479, %v4480
      %v4482 = vrot.slane %v4248, 5
      %v4483 = vrot.slane %v4456, 5
      %v4484 = vsel %vm1049, %v4482, %v4483
      %v4485 = vrot.slane %v4249, 5
      %v4486 = vrot.slane %v4457, 5
      %v4487 = vsel %vm1049, %v4485, %v4486
      %v4488 = vrot.slane %v4250, 5
      %v4489 = vrot.slane %v4458, 5
      %v4490 = vsel %vm1049, %v4488, %v4489
      %v4491 = vrot.slane %v4251, 5
      %v4492 = vrot.slane %v4459, 5
      %v4493 = vsel %vm1049, %v4491, %v4492
      %v4494 = vrot.slane %v4252, 5
      %v4495 = vrot.slane %v4460, 5
      %v4496 = vsel %vm1049, %v4494, %v4495
      %v4497 = vrot.slane %v4253, 5
      %v4498 = vrot.slane %v4461, 5
      %v4499 = vsel %vm1049, %v4497, %v4498
      %v4500 = vrot.slane %v4254, 5
      %v4501 = vrot.slane %v4462, 5
      %v4502 = vsel %vm1049, %v4500, %v4501
      %v4503 = vrot.slane %v4255, 5
      %v4504 = vrot.slane %v4463, 5
      %v4505 = vsel %vm1049, %v4503, %v4504
      %v4506 = vrot.slane %v4256, 5
      %v4507 = vrot.slane %v4464, 5
      %v4508 = vsel %vm1049, %v4506, %v4507
      %v4509 = vrot.slane %v4257, 5
      %v4510 = vrot.slane %v4465, 5
      %v4511 = vsel %vm1049, %v4509, %v4510
      %v4512 = vrot.slane %v4258, 5
      %v4513 = vrot.slane %v4466, 5
      %v4514 = vsel %vm1049, %v4512, %v4513
      %4515 = vrot.lane.b32.xlu0 %v4467, 40
      %v4516 = vpop.permute.xlu0 %4515
      %4517 = vrot.lane.b32.xlu0 %v4469, 40
      %v4518 = vpop.permute.xlu0 %4517
      %4519 = vrot.lane.b32.xlu0 %v4470, 40
      %v4520 = vpop.permute.xlu0 %4519
      %4521 = vrot.lane.b32.xlu0 %v4472, 40
      %v4522 = vpop.permute.xlu0 %4521
      %4523 = vrot.lane.b32.xlu0 %v4473, 40
      %v4524 = vpop.permute.xlu0 %4523
      %4525 = vrot.lane.b32.xlu0 %v4475, 40
      %v4526 = vpop.permute.xlu0 %4525
      %4527 = vrot.lane.b32.xlu0 %v4476, 40
      %v4528 = vpop.permute.xlu0 %4527
      %4529 = vrot.lane.b32.xlu0 %v4478, 40
      %v4530 = vpop.permute.xlu0 %4529
      %4531 = vrot.lane.b32.xlu0 %v4479, 40
      %v4532 = vpop.permute.xlu0 %4531
      %4533 = vrot.lane.b32.xlu0 %v4481, 40
      %v4534 = vpop.permute.xlu0 %4533
      %4535 = vrot.lane.b32.xlu0 %v4482, 40
      %v4536 = vpop.permute.xlu0 %4535
      %4537 = vrot.lane.b32.xlu0 %v4484, 40
      %v4538 = vpop.permute.xlu0 %4537
      %4539 = vrot.lane.b32.xlu0 %v4485, 40
      %v4540 = vpop.permute.xlu0 %4539
      %4541 = vrot.lane.b32.xlu0 %v4487, 40
      %v4542 = vpop.permute.xlu0 %4541
      %4543 = vrot.lane.b32.xlu0 %v4488, 40
      %v4544 = vpop.permute.xlu0 %4543
      %4545 = vrot.lane.b32.xlu0 %v4490, 40
      %v4546 = vpop.permute.xlu0 %4545
      %4547 = vrot.lane.b32.xlu0 %v4491, 40
      %v4548 = vpop.permute.xlu0 %4547
      %4549 = vrot.lane.b32.xlu0 %v4493, 40
      %v4550 = vpop.permute.xlu0 %4549
      %4551 = vrot.lane.b32.xlu0 %v4494, 40
      %v4552 = vpop.permute.xlu0 %4551
      %4553 = vrot.lane.b32.xlu0 %v4496, 40
      %v4554 = vpop.permute.xlu0 %4553
      %4555 = vrot.lane.b32.xlu0 %v4497, 40
      %v4556 = vpop.permute.xlu0 %4555
      %4557 = vrot.lane.b32.xlu0 %v4499, 40
      %v4558 = vpop.permute.xlu0 %4557
      %4559 = vrot.lane.b32.xlu0 %v4500, 40
      %v4560 = vpop.permute.xlu0 %4559
      %4561 = vrot.lane.b32.xlu0 %v4502, 40
      %v4562 = vpop.permute.xlu0 %4561
      %4563 = vrot.lane.b32.xlu0 %v4503, 40
      %v4564 = vpop.permute.xlu0 %4563
      %4565 = vrot.lane.b32.xlu0 %v4505, 40
      %v4566 = vpop.permute.xlu0 %4565
      %4567 = vrot.lane.b32.xlu0 %v4506, 40
      %v4568 = vpop.permute.xlu0 %4567
      %4569 = vrot.lane.b32.xlu0 %v4508, 40
      %v4570 = vpop.permute.xlu0 %4569
      %4571 = vrot.lane.b32.xlu0 %v4509, 40
      %v4572 = vpop.permute.xlu0 %4571
      %4573 = vrot.lane.b32.xlu0 %v4511, 40
      %v4574 = vpop.permute.xlu0 %4573
      %4575 = vrot.lane.b32.xlu0 %v4512, 40
      %v4576 = vpop.permute.xlu0 %4575
      %4577 = vrot.lane.b32.xlu0 %v4514, 40
      %v4578 = vpop.permute.xlu0 %4577
      %v4627 = vunpack.c.l.b16 %v3523
      %v4628 = vunpack.c.l.b16 %v3524
      %v4629 = vunpack.c.l.b16 %v3525
      %v4630 = vunpack.c.l.b16 %v3526
      %v4631 = vunpack.c.l.b16 %v3527
      %v4632 = vunpack.c.l.b16 %v3528
      %v4633 = vunpack.c.l.b16 %v3529
      %v4634 = vunpack.c.l.b16 %v3530
      %v4635 = vunpack.c.l.b16 %v3531
      %v4636 = vunpack.c.l.b16 %v3532
      %v4637 = vunpack.c.l.b16 %v3533
      %v4638 = vunpack.c.l.b16 %v3534
      %v4639 = vunpack.c.l.b16 %v3535
      %v4640 = vunpack.c.l.b16 %v3536
      %v4641 = vunpack.c.l.b16 %v3537
      %v4642 = vunpack.c.l.b16 %v3538
      %v4643 = vunpack.c.l.b16 %v3539
      %v4644 = vunpack.c.l.b16 %v3540
      %v4645 = vunpack.c.l.b16 %v3541
      %v4646 = vunpack.c.l.b16 %v3542
      %v4647 = vunpack.c.l.b16 %v3543
      %v4648 = vunpack.c.l.b16 %v3544
      %v4649 = vunpack.c.l.b16 %v3545
      %v4650 = vunpack.c.l.b16 %v3546
      %v4651 = vunpack.c.l.b16 %v3547
      %v4652 = vunpack.c.l.b16 %v3548
      %v4653 = vunpack.c.l.b16 %v3549
      %v4654 = vunpack.c.l.b16 %v3550
      %v4655 = vunpack.c.l.b16 %v3551
      %v4656 = vunpack.c.l.b16 %v3552
      %v4657 = vunpack.c.l.b16 %v3553
      %v4658 = vunpack.c.l.b16 %v3554
      %v4659 = vunpack.c.l.b16 %v3555
      %v4660 = vunpack.c.l.b16 %v3556
      %v4661 = vunpack.c.l.b16 %v3557
      %v4662 = vunpack.c.l.b16 %v3558
      %v4663 = vunpack.c.l.b16 %v3559
      %v4664 = vunpack.c.l.b16 %v3560
      %v4665 = vunpack.c.l.b16 %v3561
      %v4666 = vunpack.c.l.b16 %v3562
      %v4667 = vunpack.c.l.b16 %v3563
      %v4668 = vunpack.c.l.b16 %v3564
      %v4669 = vunpack.c.l.b16 %v3565
      %v4670 = vunpack.c.l.b16 %v3566
      %v4671 = vunpack.c.l.b16 %v3567
      %v4672 = vunpack.c.l.b16 %v3568
      %v4673 = vunpack.c.l.b16 %v3569
      %v4674 = vunpack.c.l.b16 %v3570
      %v4675 = vpack.c.b16 %v4628, %v4627
      %v4676 = vpack.c.b16 %v4629, %v4629
      %v4677 = vpack.c.b16 %v4631, %v4630
      %v4678 = vpack.c.b16 %v4632, %v4632
      %v4679 = vpack.c.b16 %v4634, %v4633
      %v4680 = vpack.c.b16 %v4635, %v4635
      %v4681 = vpack.c.b16 %v4637, %v4636
      %v4682 = vpack.c.b16 %v4638, %v4638
      %v4683 = vpack.c.b16 %v4640, %v4639
      %v4684 = vpack.c.b16 %v4641, %v4641
      %v4685 = vpack.c.b16 %v4643, %v4642
      %v4686 = vpack.c.b16 %v4644, %v4644
      %v4687 = vpack.c.b16 %v4646, %v4645
      %v4688 = vpack.c.b16 %v4647, %v4647
      %v4689 = vpack.c.b16 %v4649, %v4648
      %v4690 = vpack.c.b16 %v4650, %v4650
      %v4691 = vpack.c.b16 %v4652, %v4651
      %v4692 = vpack.c.b16 %v4653, %v4653
      %v4693 = vpack.c.b16 %v4655, %v4654
      %v4694 = vpack.c.b16 %v4656, %v4656
      %v4695 = vpack.c.b16 %v4658, %v4657
      %v4696 = vpack.c.b16 %v4659, %v4659
      %v4697 = vpack.c.b16 %v4661, %v4660
      %v4698 = vpack.c.b16 %v4662, %v4662
      %v4699 = vpack.c.b16 %v4664, %v4663
      %v4700 = vpack.c.b16 %v4665, %v4665
      %v4701 = vpack.c.b16 %v4667, %v4666
      %v4702 = vpack.c.b16 %v4668, %v4668
      %v4703 = vpack.c.b16 %v4670, %v4669
      %v4704 = vpack.c.b16 %v4671, %v4671
      %v4705 = vpack.c.b16 %v4673, %v4672
      %v4706 = vpack.c.b16 %v4674, %v4674
      %4707 = vrot.lane.b32.xlu0 %v4675, 48
      %v4708 = vpop.permute.xlu0 %4707
      %4709 = vrot.lane.b32.xlu0 %v4676, 48
      %v4710 = vpop.permute.xlu0 %4709
      %4711 = vrot.lane.b32.xlu0 %v4677, 48
      %v4712 = vpop.permute.xlu0 %4711
      %4713 = vrot.lane.b32.xlu0 %v4678, 48
      %v4714 = vpop.permute.xlu0 %4713
      %4715 = vrot.lane.b32.xlu0 %v4679, 48
      %v4716 = vpop.permute.xlu0 %4715
      %4717 = vrot.lane.b32.xlu0 %v4680, 48
      %v4718 = vpop.permute.xlu0 %4717
      %4719 = vrot.lane.b32.xlu0 %v4681, 48
      %v4720 = vpop.permute.xlu0 %4719
      %4721 = vrot.lane.b32.xlu0 %v4682, 48
      %v4722 = vpop.permute.xlu0 %4721
      %4723 = vrot.lane.b32.xlu0 %v4683, 48
      %v4724 = vpop.permute.xlu0 %4723
      %4725 = vrot.lane.b32.xlu0 %v4684, 48
      %v4726 = vpop.permute.xlu0 %4725
      %4727 = vrot.lane.b32.xlu0 %v4685, 48
      %v4728 = vpop.permute.xlu0 %4727
      %4729 = vrot.lane.b32.xlu0 %v4686, 48
      %v4730 = vpop.permute.xlu0 %4729
      %4731 = vrot.lane.b32.xlu0 %v4687, 48
      %v4732 = vpop.permute.xlu0 %4731
      %4733 = vrot.lane.b32.xlu0 %v4688, 48
      %v4734 = vpop.permute.xlu0 %4733
      %4735 = vrot.lane.b32.xlu0 %v4689, 48
      %v4736 = vpop.permute.xlu0 %4735
      %4737 = vrot.lane.b32.xlu0 %v4690, 48
      %v4738 = vpop.permute.xlu0 %4737
      %4739 = vrot.lane.b32.xlu0 %v4691, 48
      %v4740 = vpop.permute.xlu0 %4739
      %4741 = vrot.lane.b32.xlu0 %v4692, 48
      %v4742 = vpop.permute.xlu0 %4741
      %4743 = vrot.lane.b32.xlu0 %v4693, 48
      %v4744 = vpop.permute.xlu0 %4743
      %4745 = vrot.lane.b32.xlu0 %v4694, 48
      %v4746 = vpop.permute.xlu0 %4745
      %4747 = vrot.lane.b32.xlu0 %v4695, 48
      %v4748 = vpop.permute.xlu0 %4747
      %4749 = vrot.lane.b32.xlu0 %v4696, 48
      %v4750 = vpop.permute.xlu0 %4749
      %4751 = vrot.lane.b32.xlu0 %v4697, 48
      %v4752 = vpop.permute.xlu0 %4751
      %4753 = vrot.lane.b32.xlu0 %v4698, 48
      %v4754 = vpop.permute.xlu0 %4753
      %4755 = vrot.lane.b32.xlu0 %v4699, 48
      %v4756 = vpop.permute.xlu0 %4755
      %4757 = vrot.lane.b32.xlu0 %v4700, 48
      %v4758 = vpop.permute.xlu0 %4757
      %4759 = vrot.lane.b32.xlu0 %v4701, 48
      %v4760 = vpop.permute.xlu0 %4759
      %4761 = vrot.lane.b32.xlu0 %v4702, 48
      %v4762 = vpop.permute.xlu0 %4761
      %4763 = vrot.lane.b32.xlu0 %v4703, 48
      %v4764 = vpop.permute.xlu0 %4763
      %4765 = vrot.lane.b32.xlu0 %v4704, 48
      %v4766 = vpop.permute.xlu0 %4765
      %4767 = vrot.lane.b32.xlu0 %v4705, 48
      %v4768 = vpop.permute.xlu0 %4767
      %4769 = vrot.lane.b32.xlu0 %v4706, 48
      %v4770 = vpop.permute.xlu0 %4769
      %v4771 = vpack.c.b16 %v4629, %v4628
      %v4772 = vpack.c.b16 %v4632, %v4631
      %v4773 = vpack.c.b16 %v4635, %v4634
      %v4774 = vpack.c.b16 %v4638, %v4637
      %v4775 = vpack.c.b16 %v4641, %v4640
      %v4776 = vpack.c.b16 %v4644, %v4643
      %v4777 = vpack.c.b16 %v4647, %v4646
      %v4778 = vpack.c.b16 %v4650, %v4649
      %v4779 = vpack.c.b16 %v4653, %v4652
      %v4780 = vpack.c.b16 %v4656, %v4655
      %v4781 = vpack.c.b16 %v4659, %v4658
      %v4782 = vpack.c.b16 %v4662, %v4661
      %v4783 = vpack.c.b16 %v4665, %v4664
      %v4784 = vpack.c.b16 %v4668, %v4667
      %v4785 = vpack.c.b16 %v4671, %v4670
      %v4786 = vpack.c.b16 %v4674, %v4673
      %v4788 = vshrl.u32 %v4771, 16
      %v4790 = vrot.slane %v4788, 4
      %v4791 = vshll.u32 %v4771, 16
      %v4793 = vrot.slane %v4791, 5
      %v4794 = vor.u32 %v4790, %v4793
      %v4796 = vshrl.u32 %v4772, 16
      %v4798 = vrot.slane %v4796, 4
      %v4799 = vshll.u32 %v4772, 16
      %v4801 = vrot.slane %v4799, 5
      %v4802 = vor.u32 %v4798, %v4801
      %v4804 = vshrl.u32 %v4773, 16
      %v4806 = vrot.slane %v4804, 4
      %v4807 = vshll.u32 %v4773, 16
      %v4809 = vrot.slane %v4807, 5
      %v4810 = vor.u32 %v4806, %v4809
      %v4812 = vshrl.u32 %v4774, 16
      %v4814 = vrot.slane %v4812, 4
      %v4815 = vshll.u32 %v4774, 16
      %v4817 = vrot.slane %v4815, 5
      %v4818 = vor.u32 %v4814, %v4817
      %v4820 = vshrl.u32 %v4775, 16
      %v4822 = vrot.slane %v4820, 4
      %v4823 = vshll.u32 %v4775, 16
      %v4825 = vrot.slane %v4823, 5
      %v4826 = vor.u32 %v4822, %v4825
      %v4828 = vshrl.u32 %v4776, 16
      %v4830 = vrot.slane %v4828, 4
      %v4831 = vshll.u32 %v4776, 16
      %v4833 = vrot.slane %v4831, 5
      %v4834 = vor.u32 %v4830, %v4833
      %v4836 = vshrl.u32 %v4777, 16
      %v4838 = vrot.slane %v4836, 4
      %v4839 = vshll.u32 %v4777, 16
      %v4841 = vrot.slane %v4839, 5
      %v4842 = vor.u32 %v4838, %v4841
      %v4844 = vshrl.u32 %v4778, 16
      %v4846 = vrot.slane %v4844, 4
      %v4847 = vshll.u32 %v4778, 16
      %v4849 = vrot.slane %v4847, 5
      %v4850 = vor.u32 %v4846, %v4849
      %v4852 = vshrl.u32 %v4779, 16
      %v4854 = vrot.slane %v4852, 4
      %v4855 = vshll.u32 %v4779, 16
      %v4857 = vrot.slane %v4855, 5
      %v4858 = vor.u32 %v4854, %v4857
      %v4860 = vshrl.u32 %v4780, 16
      %v4862 = vrot.slane %v4860, 4
      %v4863 = vshll.u32 %v4780, 16
      %v4865 = vrot.slane %v4863, 5
      %v4866 = vor.u32 %v4862, %v4865
      %v4868 = vshrl.u32 %v4781, 16
      %v4870 = vrot.slane %v4868, 4
      %v4871 = vshll.u32 %v4781, 16
      %v4873 = vrot.slane %v4871, 5
      %v4874 = vor.u32 %v4870, %v4873
      %v4876 = vshrl.u32 %v4782, 16
      %v4878 = vrot.slane %v4876, 4
      %v4879 = vshll.u32 %v4782, 16
      %v4881 = vrot.slane %v4879, 5
      %v4882 = vor.u32 %v4878, %v4881
      %v4884 = vshrl.u32 %v4783, 16
      %v4886 = vrot.slane %v4884, 4
      %v4887 = vshll.u32 %v4783, 16
      %v4889 = vrot.slane %v4887, 5
      %v4890 = vor.u32 %v4886, %v4889
      %v4892 = vshrl.u32 %v4784, 16
      %v4894 = vrot.slane %v4892, 4
      %v4895 = vshll.u32 %v4784, 16
      %v4897 = vrot.slane %v4895, 5
      %v4898 = vor.u32 %v4894, %v4897
      %v4900 = vshrl.u32 %v4785, 16
      %v4902 = vrot.slane %v4900, 4
      %v4903 = vshll.u32 %v4785, 16
      %v4905 = vrot.slane %v4903, 5
      %v4906 = vor.u32 %v4902, %v4905
      %v4908 = vshrl.u32 %v4786, 16
      %v4910 = vrot.slane %v4908, 4
      %v4911 = vshll.u32 %v4786, 16
      %v4913 = vrot.slane %v4911, 5
      %v4914 = vor.u32 %v4910, %v4913
      %4915 = vrot.lane.b32.xlu0 %v4794, 56
      %v4916 = vpop.permute.xlu0 %4915
      %4917 = vrot.lane.b32.xlu0 %v4802, 56
      %v4918 = vpop.permute.xlu0 %4917
      %4919 = vrot.lane.b32.xlu0 %v4810, 56
      %v4920 = vpop.permute.xlu0 %4919
      %4921 = vrot.lane.b32.xlu0 %v4818, 56
      %v4922 = vpop.permute.xlu0 %4921
      %4923 = vrot.lane.b32.xlu0 %v4826, 56
      %v4924 = vpop.permute.xlu0 %4923
      %4925 = vrot.lane.b32.xlu0 %v4834, 56
      %v4926 = vpop.permute.xlu0 %4925
      %4927 = vrot.lane.b32.xlu0 %v4842, 56
      %v4928 = vpop.permute.xlu0 %4927
      %4929 = vrot.lane.b32.xlu0 %v4850, 56
      %v4930 = vpop.permute.xlu0 %4929
      %4931 = vrot.lane.b32.xlu0 %v4858, 56
      %v4932 = vpop.permute.xlu0 %4931
      %4933 = vrot.lane.b32.xlu0 %v4866, 56
      %v4934 = vpop.permute.xlu0 %4933
      %4935 = vrot.lane.b32.xlu0 %v4874, 56
      %v4936 = vpop.permute.xlu0 %4935
      %4937 = vrot.lane.b32.xlu0 %v4882, 56
      %v4938 = vpop.permute.xlu0 %4937
      %4939 = vrot.lane.b32.xlu0 %v4890, 56
      %v4940 = vpop.permute.xlu0 %4939
      %4941 = vrot.lane.b32.xlu0 %v4898, 56
      %v4942 = vpop.permute.xlu0 %4941
      %4943 = vrot.lane.b32.xlu0 %v4906, 56
      %v4944 = vpop.permute.xlu0 %4943
      %4945 = vrot.lane.b32.xlu0 %v4914, 56
      %v4946 = vpop.permute.xlu0 %4945
      %v4963 = vunpack.c.l.b16 %v3571
      %v4964 = vunpack.c.l.b16 %v3572
      %v4965 = vunpack.c.l.b16 %v3573
      %v4966 = vunpack.c.l.b16 %v3574
      %v4967 = vunpack.c.l.b16 %v3575
      %v4968 = vunpack.c.l.b16 %v3576
      %v4969 = vunpack.c.l.b16 %v3577
      %v4970 = vunpack.c.l.b16 %v3578
      %v4971 = vunpack.c.l.b16 %v3579
      %v4972 = vunpack.c.l.b16 %v3580
      %v4973 = vunpack.c.l.b16 %v3581
      %v4974 = vunpack.c.l.b16 %v3582
      %v4975 = vunpack.c.l.b16 %v3583
      %v4976 = vunpack.c.l.b16 %v3584
      %v4977 = vunpack.c.l.b16 %v3585
      %v4978 = vunpack.c.l.b16 %v3586
      %v4979 = vpack.c.b16 %v4963, %v4963
      %v4980 = vpack.c.b16 %v4964, %v4964
      %v4981 = vpack.c.b16 %v4965, %v4965
      %v4982 = vpack.c.b16 %v4966, %v4966
      %v4983 = vpack.c.b16 %v4967, %v4967
      %v4984 = vpack.c.b16 %v4968, %v4968
      %v4985 = vpack.c.b16 %v4969, %v4969
      %v4986 = vpack.c.b16 %v4970, %v4970
      %v4987 = vpack.c.b16 %v4971, %v4971
      %v4988 = vpack.c.b16 %v4972, %v4972
      %v4989 = vpack.c.b16 %v4973, %v4973
      %v4990 = vpack.c.b16 %v4974, %v4974
      %v4991 = vpack.c.b16 %v4975, %v4975
      %v4992 = vpack.c.b16 %v4976, %v4976
      %v4993 = vpack.c.b16 %v4977, %v4977
      %v4994 = vpack.c.b16 %v4978, %v4978
      %v4995 = vrot.slane %v4771, 5
      %v4996 = vrot.slane %v4979, 5
      %v4997 = vsel %vm1049, %v4995, %v4996
      %v4998 = vrot.slane %v4772, 5
      %v4999 = vrot.slane %v4980, 5
      %v5000 = vsel %vm1049, %v4998, %v4999
      %v5001 = vrot.slane %v4773, 5
      %v5002 = vrot.slane %v4981, 5
      %v5003 = vsel %vm1049, %v5001, %v5002
      %v5004 = vrot.slane %v4774, 5
      %v5005 = vrot.slane %v4982, 5
      %v5006 = vsel %vm1049, %v5004, %v5005
      %v5007 = vrot.slane %v4775, 5
      %v5008 = vrot.slane %v4983, 5
      %v5009 = vsel %vm1049, %v5007, %v5008
      %v5010 = vrot.slane %v4776, 5
      %v5011 = vrot.slane %v4984, 5
      %v5012 = vsel %vm1049, %v5010, %v5011
      %v5013 = vrot.slane %v4777, 5
      %v5014 = vrot.slane %v4985, 5
      %v5015 = vsel %vm1049, %v5013, %v5014
      %v5016 = vrot.slane %v4778, 5
      %v5017 = vrot.slane %v4986, 5
      %v5018 = vsel %vm1049, %v5016, %v5017
      %v5019 = vrot.slane %v4779, 5
      %v5020 = vrot.slane %v4987, 5
      %v5021 = vsel %vm1049, %v5019, %v5020
      %v5022 = vrot.slane %v4780, 5
      %v5023 = vrot.slane %v4988, 5
      %v5024 = vsel %vm1049, %v5022, %v5023
      %v5025 = vrot.slane %v4781, 5
      %v5026 = vrot.slane %v4989, 5
      %v5027 = vsel %vm1049, %v5025, %v5026
      %v5028 = vrot.slane %v4782, 5
      %v5029 = vrot.slane %v4990, 5
      %v5030 = vsel %vm1049, %v5028, %v5029
      %v5031 = vrot.slane %v4783, 5
      %v5032 = vrot.slane %v4991, 5
      %v5033 = vsel %vm1049, %v5031, %v5032
      %v5034 = vrot.slane %v4784, 5
      %v5035 = vrot.slane %v4992, 5
      %v5036 = vsel %vm1049, %v5034, %v5035
      %v5037 = vrot.slane %v4785, 5
      %v5038 = vrot.slane %v4993, 5
      %v5039 = vsel %vm1049, %v5037, %v5038
      %v5040 = vrot.slane %v4786, 5
      %v5041 = vrot.slane %v4994, 5
      %v5042 = vsel %vm1049, %v5040, %v5041
      %5043 = vrot.lane.b32.xlu0 %v4995, 64
      %v5044 = vpop.permute.xlu0 %5043
      %5045 = vrot.lane.b32.xlu0 %v4997, 64
      %v5046 = vpop.permute.xlu0 %5045
      %5047 = vrot.lane.b32.xlu0 %v4998, 64
      %v5048 = vpop.permute.xlu0 %5047
      %5049 = vrot.lane.b32.xlu0 %v5000, 64
      %v5050 = vpop.permute.xlu0 %5049
      %5051 = vrot.lane.b32.xlu0 %v5001, 64
      %v5052 = vpop.permute.xlu0 %5051
      %5053 = vrot.lane.b32.xlu0 %v5003, 64
      %v5054 = vpop.permute.xlu0 %5053
      %5055 = vrot.lane.b32.xlu0 %v5004, 64
      %v5056 = vpop.permute.xlu0 %5055
      %5057 = vrot.lane.b32.xlu0 %v5006, 64
      %v5058 = vpop.permute.xlu0 %5057
      %5059 = vrot.lane.b32.xlu0 %v5007, 64
      %v5060 = vpop.permute.xlu0 %5059
      %5061 = vrot.lane.b32.xlu0 %v5009, 64
      %v5062 = vpop.permute.xlu0 %5061
      %5063 = vrot.lane.b32.xlu0 %v5010, 64
      %v5064 = vpop.permute.xlu0 %5063
      %5065 = vrot.lane.b32.xlu0 %v5012, 64
      %v5066 = vpop.permute.xlu0 %5065
      %5067 = vrot.lane.b32.xlu0 %v5013, 64
      %v5068 = vpop.permute.xlu0 %5067
      %5069 = vrot.lane.b32.xlu0 %v5015, 64
      %v5070 = vpop.permute.xlu0 %5069
      %5071 = vrot.lane.b32.xlu0 %v5016, 64
      %v5072 = vpop.permute.xlu0 %5071
      %5073 = vrot.lane.b32.xlu0 %v5018, 64
      %v5074 = vpop.permute.xlu0 %5073
      %5075 = vrot.lane.b32.xlu0 %v5019, 64
      %v5076 = vpop.permute.xlu0 %5075
      %5077 = vrot.lane.b32.xlu0 %v5021, 64
      %v5078 = vpop.permute.xlu0 %5077
      %5079 = vrot.lane.b32.xlu0 %v5022, 64
      %v5080 = vpop.permute.xlu0 %5079
      %5081 = vrot.lane.b32.xlu0 %v5024, 64
      %v5082 = vpop.permute.xlu0 %5081
      %5083 = vrot.lane.b32.xlu0 %v5025, 64
      %v5084 = vpop.permute.xlu0 %5083
      %5085 = vrot.lane.b32.xlu0 %v5027, 64
      %v5086 = vpop.permute.xlu0 %5085
      %5087 = vrot.lane.b32.xlu0 %v5028, 64
      %v5088 = vpop.permute.xlu0 %5087
      %5089 = vrot.lane.b32.xlu0 %v5030, 64
      %v5090 = vpop.permute.xlu0 %5089
      %5091 = vrot.lane.b32.xlu0 %v5031, 64
      %v5092 = vpop.permute.xlu0 %5091
      %5093 = vrot.lane.b32.xlu0 %v5033, 64
      %v5094 = vpop.permute.xlu0 %5093
      %5095 = vrot.lane.b32.xlu0 %v5034, 64
      %v5096 = vpop.permute.xlu0 %5095
      %5097 = vrot.lane.b32.xlu0 %v5036, 64
      %v5098 = vpop.permute.xlu0 %5097
      %5099 = vrot.lane.b32.xlu0 %v5037, 64
      %v5100 = vpop.permute.xlu0 %5099
      %5101 = vrot.lane.b32.xlu0 %v5039, 64
      %v5102 = vpop.permute.xlu0 %5101
      %5103 = vrot.lane.b32.xlu0 %v5040, 64
      %v5104 = vpop.permute.xlu0 %5103
      %5105 = vrot.lane.b32.xlu0 %v5042, 64
      %v5106 = vpop.permute.xlu0 %5105
      %v5109 = vsel %vm393, %v3683, %v3860
      %v5111 = vsel %vm393, %v3684, %v3860
      %v5114 = vsel %vm393, %v3685, %v3862
      %v5116 = vsel %vm393, %v3686, %v3862
      %v5119 = vsel %vm393, %v3687, %v3864
      %v5121 = vsel %vm393, %v3688, %v3864
      %v5124 = vsel %vm393, %v3689, %v3866
      %v5126 = vsel %vm393, %v3690, %v3866
      %v5129 = vsel %vm393, %v3691, %v3868
      %v5131 = vsel %vm393, %v3692, %v3868
      %v5134 = vsel %vm393, %v3693, %v3870
      %v5136 = vsel %vm393, %v3694, %v3870
      %v5139 = vsel %vm393, %v3695, %v3872
      %v5141 = vsel %vm393, %v3696, %v3872
      %v5144 = vsel %vm393, %v3697, %v3874
      %v5146 = vsel %vm393, %v3698, %v3874
      %v5149 = vsel %vm393, %v3699, %v3876
      %v5151 = vsel %vm393, %v3700, %v3876
      %v5154 = vsel %vm393, %v3701, %v3878
      %v5156 = vsel %vm393, %v3702, %v3878
      %v5159 = vsel %vm393, %v3703, %v3880
      %v5161 = vsel %vm393, %v3704, %v3880
      %v5164 = vsel %vm393, %v3705, %v3882
      %v5166 = vsel %vm393, %v3706, %v3882
      %v5169 = vsel %vm393, %v3707, %v3884
      %v5171 = vsel %vm393, %v3708, %v3884
      %v5174 = vsel %vm393, %v3709, %v3886
      %v5176 = vsel %vm393, %v3710, %v3886
      %v5179 = vsel %vm393, %v3711, %v3888
      %v5181 = vsel %vm393, %v3712, %v3888
      %v5184 = vsel %vm393, %v3713, %v3890
      %v5186 = vsel %vm393, %v3714, %v3890
      %v5188 = vsel %vm2428, %v5109, %v3988
      %v5190 = vsel %vm2428, %v5111, %v3990
      %v5192 = vsel %vm2428, %v5114, %v3992
      %v5194 = vsel %vm2428, %v5116, %v3994
      %v5196 = vsel %vm2428, %v5119, %v3996
      %v5198 = vsel %vm2428, %v5121, %v3998
      %v5200 = vsel %vm2428, %v5124, %v4000
      %v5202 = vsel %vm2428, %v5126, %v4002
      %v5204 = vsel %vm2428, %v5129, %v4004
      %v5206 = vsel %vm2428, %v5131, %v4006
      %v5208 = vsel %vm2428, %v5134, %v4008
      %v5210 = vsel %vm2428, %v5136, %v4010
      %v5212 = vsel %vm2428, %v5139, %v4012
      %v5214 = vsel %vm2428, %v5141, %v4014
      %v5216 = vsel %vm2428, %v5144, %v4016
      %v5218 = vsel %vm2428, %v5146, %v4018
      %v5220 = vsel %vm2428, %v5149, %v4020
      %v5222 = vsel %vm2428, %v5151, %v4022
      %v5224 = vsel %vm2428, %v5154, %v4024
      %v5226 = vsel %vm2428, %v5156, %v4026
      %v5228 = vsel %vm2428, %v5159, %v4028
      %v5230 = vsel %vm2428, %v5161, %v4030
      %v5232 = vsel %vm2428, %v5164, %v4032
      %v5234 = vsel %vm2428, %v5166, %v4034
      %v5236 = vsel %vm2428, %v5169, %v4036
      %v5238 = vsel %vm2428, %v5171, %v4038
      %v5240 = vsel %vm2428, %v5174, %v4040
      %v5242 = vsel %vm2428, %v5176, %v4042
      %v5244 = vsel %vm2428, %v5179, %v4044
      %v5246 = vsel %vm2428, %v5181, %v4046
      %v5248 = vsel %vm2428, %v5184, %v4048
      %v5250 = vsel %vm2428, %v5186, %v4050
      %v5252 = vsel %vm2542, %v5188, %v4180
      %v5254 = vsel %vm2542, %v5190, %v4182
      %v5256 = vsel %vm2542, %v5192, %v4184
      %v5258 = vsel %vm2542, %v5194, %v4186
      %v5260 = vsel %vm2542, %v5196, %v4188
      %v5262 = vsel %vm2542, %v5198, %v4190
      %v5264 = vsel %vm2542, %v5200, %v4192
      %v5266 = vsel %vm2542, %v5202, %v4194
      %v5268 = vsel %vm2542, %v5204, %v4196
      %v5270 = vsel %vm2542, %v5206, %v4198
      %v5272 = vsel %vm2542, %v5208, %v4200
      %v5274 = vsel %vm2542, %v5210, %v4202
      %v5276 = vsel %vm2542, %v5212, %v4204
      %v5278 = vsel %vm2542, %v5214, %v4206
      %v5280 = vsel %vm2542, %v5216, %v4208
      %v5282 = vsel %vm2542, %v5218, %v4210
      %v5284 = vsel %vm2542, %v5220, %v4212
      %v5286 = vsel %vm2542, %v5222, %v4214
      %v5288 = vsel %vm2542, %v5224, %v4216
      %v5290 = vsel %vm2542, %v5226, %v4218
      %v5292 = vsel %vm2542, %v5228, %v4220
      %v5294 = vsel %vm2542, %v5230, %v4222
      %v5296 = vsel %vm2542, %v5232, %v4224
      %v5298 = vsel %vm2542, %v5234, %v4226
      %v5300 = vsel %vm2542, %v5236, %v4228
      %v5302 = vsel %vm2542, %v5238, %v4230
      %v5304 = vsel %vm2542, %v5240, %v4232
      %v5306 = vsel %vm2542, %v5242, %v4234
      %v5308 = vsel %vm2542, %v5244, %v4236
      %v5310 = vsel %vm2542, %v5246, %v4238
      %v5312 = vsel %vm2542, %v5248, %v4240
      %v5314 = vsel %vm2542, %v5250, %v4242
      %v5316 = vsel %vm2656, %v5252, %v4388
      %v5317 = vsel %vm2656, %v5254, %v4388
      %v5319 = vsel %vm2656, %v5256, %v4390
      %v5320 = vsel %vm2656, %v5258, %v4390
      %v5322 = vsel %vm2656, %v5260, %v4392
      %v5323 = vsel %vm2656, %v5262, %v4392
      %v5325 = vsel %vm2656, %v5264, %v4394
      %v5326 = vsel %vm2656, %v5266, %v4394
      %v5328 = vsel %vm2656, %v5268, %v4396
      %v5329 = vsel %vm2656, %v5270, %v4396
      %v5331 = vsel %vm2656, %v5272, %v4398
      %v5332 = vsel %vm2656, %v5274, %v4398
      %v5334 = vsel %vm2656, %v5276, %v4400
      %v5335 = vsel %vm2656, %v5278, %v4400
      %v5337 = vsel %vm2656, %v5280, %v4402
      %v5338 = vsel %vm2656, %v5282, %v4402
      %v5340 = vsel %vm2656, %v5284, %v4404
      %v5341 = vsel %vm2656, %v5286, %v4404
      %v5343 = vsel %vm2656, %v5288, %v4406
      %v5344 = vsel %vm2656, %v5290, %v4406
      %v5346 = vsel %vm2656, %v5292, %v4408
      %v5347 = vsel %vm2656, %v5294, %v4408
      %v5349 = vsel %vm2656, %v5296, %v4410
      %v5350 = vsel %vm2656, %v5298, %v4410
      %v5352 = vsel %vm2656, %v5300, %v4412
      %v5353 = vsel %vm2656, %v5302, %v4412
      %v5355 = vsel %vm2656, %v5304, %v4414
      %v5356 = vsel %vm2656, %v5306, %v4414
      %v5358 = vsel %vm2656, %v5308, %v4416
      %v5359 = vsel %vm2656, %v5310, %v4416
      %v5361 = vsel %vm2656, %v5312, %v4418
      %v5362 = vsel %vm2656, %v5314, %v4418
      %vm5363 = vcmask 326656
      %v5365 = vsel %vm5363, %v5316, %v4516
      %v5367 = vsel %vm5363, %v5317, %v4518
      %v5369 = vsel %vm5363, %v5319, %v4520
      %v5371 = vsel %vm5363, %v5320, %v4522
      %v5373 = vsel %vm5363, %v5322, %v4524
      %v5375 = vsel %vm5363, %v5323, %v4526
      %v5377 = vsel %vm5363, %v5325, %v4528
      %v5379 = vsel %vm5363, %v5326, %v4530
      %v5381 = vsel %vm5363, %v5328, %v4532
      %v5383 = vsel %vm5363, %v5329, %v4534
      %v5385 = vsel %vm5363, %v5331, %v4536
      %v5387 = vsel %vm5363, %v5332, %v4538
      %v5389 = vsel %vm5363, %v5334, %v4540
      %v5391 = vsel %vm5363, %v5335, %v4542
      %v5393 = vsel %vm5363, %v5337, %v4544
      %v5395 = vsel %vm5363, %v5338, %v4546
      %v5397 = vsel %vm5363, %v5340, %v4548
      %v5399 = vsel %vm5363, %v5341, %v4550
      %v5401 = vsel %vm5363, %v5343, %v4552
      %v5403 = vsel %vm5363, %v5344, %v4554
      %v5405 = vsel %vm5363, %v5346, %v4556
      %v5407 = vsel %vm5363, %v5347, %v4558
      %v5409 = vsel %vm5363, %v5349, %v4560
      %v5411 = vsel %vm5363, %v5350, %v4562
      %v5413 = vsel %vm5363, %v5352, %v4564
      %v5415 = vsel %vm5363, %v5353, %v4566
      %v5417 = vsel %vm5363, %v5355, %v4568
      %v5419 = vsel %vm5363, %v5356, %v4570
      %v5421 = vsel %vm5363, %v5358, %v4572
      %v5423 = vsel %vm5363, %v5359, %v4574
      %v5425 = vsel %vm5363, %v5361, %v4576
      %v5427 = vsel %vm5363, %v5362, %v4578
      %vm5428 = vcmask 392192
      %v5430 = vsel %vm5428, %v5365, %v4708
      %v5432 = vsel %vm5428, %v5367, %v4710
      %v5434 = vsel %vm5428, %v5369, %v4712
      %v5436 = vsel %vm5428, %v5371, %v4714
      %v5438 = vsel %vm5428, %v5373, %v4716
      %v5440 = vsel %vm5428, %v5375, %v4718
      %v5442 = vsel %vm5428, %v5377, %v4720
      %v5444 = vsel %vm5428, %v5379, %v4722
      %v5446 = vsel %vm5428, %v5381, %v4724
      %v5448 = vsel %vm5428, %v5383, %v4726
      %v5450 = vsel %vm5428, %v5385, %v4728
      %v5452 = vsel %vm5428, %v5387, %v4730
      %v5454 = vsel %vm5428, %v5389, %v4732
      %v5456 = vsel %vm5428, %v5391, %v4734
      %v5458 = vsel %vm5428, %v5393, %v4736
      %v5460 = vsel %vm5428, %v5395, %v4738
      %v5462 = vsel %vm5428, %v5397, %v4740
      %v5464 = vsel %vm5428, %v5399, %v4742
      %v5466 = vsel %vm5428, %v5401, %v4744
      %v5468 = vsel %vm5428, %v5403, %v4746
      %v5470 = vsel %vm5428, %v5405, %v4748
      %v5472 = vsel %vm5428, %v5407, %v4750
      %v5474 = vsel %vm5428, %v5409, %v4752
      %v5476 = vsel %vm5428, %v5411, %v4754
      %v5478 = vsel %vm5428, %v5413, %v4756
      %v5480 = vsel %vm5428, %v5415, %v4758
      %v5482 = vsel %vm5428, %v5417, %v4760
      %v5484 = vsel %vm5428, %v5419, %v4762
      %v5486 = vsel %vm5428, %v5421, %v4764
      %v5488 = vsel %vm5428, %v5423, %v4766
      %v5490 = vsel %vm5428, %v5425, %v4768
      %v5492 = vsel %vm5428, %v5427, %v4770
      %vm5493 = vcmask 457728
      %v5495 = vsel %vm5493, %v5430, %v4916
      %v5496 = vsel %vm5493, %v5432, %v4916
      %v5498 = vsel %vm5493, %v5434, %v4918
      %v5499 = vsel %vm5493, %v5436, %v4918
      %v5501 = vsel %vm5493, %v5438, %v4920
      %v5502 = vsel %vm5493, %v5440, %v4920
      %v5504 = vsel %vm5493, %v5442, %v4922
      %v5505 = vsel %vm5493, %v5444, %v4922
      %v5507 = vsel %vm5493, %v5446, %v4924
      %v5508 = vsel %vm5493, %v5448, %v4924
      %v5510 = vsel %vm5493, %v5450, %v4926
      %v5511 = vsel %vm5493, %v5452, %v4926
      %v5513 = vsel %vm5493, %v5454, %v4928
      %v5514 = vsel %vm5493, %v5456, %v4928
      %v5516 = vsel %vm5493, %v5458, %v4930
      %v5517 = vsel %vm5493, %v5460, %v4930
      %v5519 = vsel %vm5493, %v5462, %v4932
      %v5520 = vsel %vm5493, %v5464, %v4932
      %v5522 = vsel %vm5493, %v5466, %v4934
      %v5523 = vsel %vm5493, %v5468, %v4934
      %v5525 = vsel %vm5493, %v5470, %v4936
      %v5526 = vsel %vm5493, %v5472, %v4936
      %v5528 = vsel %vm5493, %v5474, %v4938
      %v5529 = vsel %vm5493, %v5476, %v4938
      %v5531 = vsel %vm5493, %v5478, %v4940
      %v5532 = vsel %vm5493, %v5480, %v4940
      %v5534 = vsel %vm5493, %v5482, %v4942
      %v5535 = vsel %vm5493, %v5484, %v4942
      %v5537 = vsel %vm5493, %v5486, %v4944
      %v5538 = vsel %vm5493, %v5488, %v4944
      %v5540 = vsel %vm5493, %v5490, %v4946
      %v5541 = vsel %vm5493, %v5492, %v4946
      %vm5542 = vcmask 523264
      %v5544 = vsel %vm5542, %v5495, %v5044
      %v5546 = vsel %vm5542, %v5496, %v5046
      %v5548 = vsel %vm5542, %v5498, %v5048
      %v5550 = vsel %vm5542, %v5499, %v5050
      %v5552 = vsel %vm5542, %v5501, %v5052
      %v5554 = vsel %vm5542, %v5502, %v5054
      %v5556 = vsel %vm5542, %v5504, %v5056
      %v5558 = vsel %vm5542, %v5505, %v5058
      %v5560 = vsel %vm5542, %v5507, %v5060
      %v5562 = vsel %vm5542, %v5508, %v5062
      %v5564 = vsel %vm5542, %v5510, %v5064
      %v5566 = vsel %vm5542, %v5511, %v5066
      %v5568 = vsel %vm5542, %v5513, %v5068
      %v5570 = vsel %vm5542, %v5514, %v5070
      %v5572 = vsel %vm5542, %v5516, %v5072
      %v5574 = vsel %vm5542, %v5517, %v5074
      %v5576 = vsel %vm5542, %v5519, %v5076
      %v5578 = vsel %vm5542, %v5520, %v5078
      %v5580 = vsel %vm5542, %v5522, %v5080
      %v5582 = vsel %vm5542, %v5523, %v5082
      %v5584 = vsel %vm5542, %v5525, %v5084
      %v5586 = vsel %vm5542, %v5526, %v5086
      %v5588 = vsel %vm5542, %v5528, %v5088
      %v5590 = vsel %vm5542, %v5529, %v5090
      %v5592 = vsel %vm5542, %v5531, %v5092
      %v5594 = vsel %vm5542, %v5532, %v5094
      %v5596 = vsel %vm5542, %v5534, %v5096
      %v5598 = vsel %vm5542, %v5535, %v5098
      %v5600 = vsel %vm5542, %v5537, %v5100
      %v5602 = vsel %vm5542, %v5538, %v5102
      %v5604 = vsel %vm5542, %v5540, %v5104
      %v5606 = vsel %vm5542, %v5541, %v5106
      %v5607 = vshrl.u32 %v5544, 16
      %v5609 = vrot.slane %v5607, 3
      %v5610 = vshll.u32 %v5544, 16
      %v5612 = vrot.slane %v5610, 4
      %v5613 = vor.u32 %v5609, %v5612
      %v5614 = vshrl.u32 %v5546, 16
      %v5616 = vrot.slane %v5614, 3
      %v5617 = vshll.u32 %v5546, 16
      %v5619 = vrot.slane %v5617, 4
      %v5620 = vor.u32 %v5616, %v5619
      %v5621 = vsel %vm2721, %v5613, %v5620
      %v5622 = vshrl.u32 %v5548, 16
      %v5624 = vrot.slane %v5622, 3
      %v5625 = vshll.u32 %v5548, 16
      %v5627 = vrot.slane %v5625, 4
      %v5628 = vor.u32 %v5624, %v5627
      %v5629 = vshrl.u32 %v5550, 16
      %v5631 = vrot.slane %v5629, 3
      %v5632 = vshll.u32 %v5550, 16
      %v5634 = vrot.slane %v5632, 4
      %v5635 = vor.u32 %v5631, %v5634
      %v5636 = vsel %vm2721, %v5628, %v5635
      %v5637 = vshrl.u32 %v5552, 16
      %v5639 = vrot.slane %v5637, 3
      %v5640 = vshll.u32 %v5552, 16
      %v5642 = vrot.slane %v5640, 4
      %v5643 = vor.u32 %v5639, %v5642
      %v5644 = vshrl.u32 %v5554, 16
      %v5646 = vrot.slane %v5644, 3
      %v5647 = vshll.u32 %v5554, 16
      %v5649 = vrot.slane %v5647, 4
      %v5650 = vor.u32 %v5646, %v5649
      %v5651 = vsel %vm2721, %v5643, %v5650
      %v5652 = vshrl.u32 %v5556, 16
      %v5654 = vrot.slane %v5652, 3
      %v5655 = vshll.u32 %v5556, 16
      %v5657 = vrot.slane %v5655, 4
      %v5658 = vor.u32 %v5654, %v5657
      %v5659 = vshrl.u32 %v5558, 16
      %v5661 = vrot.slane %v5659, 3
      %v5662 = vshll.u32 %v5558, 16
      %v5664 = vrot.slane %v5662, 4
      %v5665 = vor.u32 %v5661, %v5664
      %v5666 = vsel %vm2721, %v5658, %v5665
      %v5667 = vshrl.u32 %v5560, 16
      %v5669 = vrot.slane %v5667, 3
      %v5670 = vshll.u32 %v5560, 16
      %v5672 = vrot.slane %v5670, 4
      %v5673 = vor.u32 %v5669, %v5672
      %v5674 = vshrl.u32 %v5562, 16
      %v5676 = vrot.slane %v5674, 3
      %v5677 = vshll.u32 %v5562, 16
      %v5679 = vrot.slane %v5677, 4
      %v5680 = vor.u32 %v5676, %v5679
      %v5681 = vsel %vm2721, %v5673, %v5680
      %v5682 = vshrl.u32 %v5564, 16
      %v5684 = vrot.slane %v5682, 3
      %v5685 = vshll.u32 %v5564, 16
      %v5687 = vrot.slane %v5685, 4
      %v5688 = vor.u32 %v5684, %v5687
      %v5689 = vshrl.u32 %v5566, 16
      %v5691 = vrot.slane %v5689, 3
      %v5692 = vshll.u32 %v5566, 16
      %v5694 = vrot.slane %v5692, 4
      %v5695 = vor.u32 %v5691, %v5694
      %v5696 = vsel %vm2721, %v5688, %v5695
      %v5697 = vshrl.u32 %v5568, 16
      %v5699 = vrot.slane %v5697, 3
      %v5700 = vshll.u32 %v5568, 16
      %v5702 = vrot.slane %v5700, 4
      %v5703 = vor.u32 %v5699, %v5702
      %v5704 = vshrl.u32 %v5570, 16
      %v5706 = vrot.slane %v5704, 3
      %v5707 = vshll.u32 %v5570, 16
      %v5709 = vrot.slane %v5707, 4
      %v5710 = vor.u32 %v5706, %v5709
      %v5711 = vsel %vm2721, %v5703, %v5710
      %v5712 = vshrl.u32 %v5572, 16
      %v5714 = vrot.slane %v5712, 3
      %v5715 = vshll.u32 %v5572, 16
      %v5717 = vrot.slane %v5715, 4
      %v5718 = vor.u32 %v5714, %v5717
      %v5719 = vshrl.u32 %v5574, 16
      %v5721 = vrot.slane %v5719, 3
      %v5722 = vshll.u32 %v5574, 16
      %v5724 = vrot.slane %v5722, 4
      %v5725 = vor.u32 %v5721, %v5724
      %v5726 = vsel %vm2721, %v5718, %v5725
      %v5727 = vshrl.u32 %v5576, 16
      %v5729 = vrot.slane %v5727, 3
      %v5730 = vshll.u32 %v5576, 16
      %v5732 = vrot.slane %v5730, 4
      %v5733 = vor.u32 %v5729, %v5732
      %v5734 = vshrl.u32 %v5578, 16
      %v5736 = vrot.slane %v5734, 3
      %v5737 = vshll.u32 %v5578, 16
      %v5739 = vrot.slane %v5737, 4
      %v5740 = vor.u32 %v5736, %v5739
      %v5741 = vsel %vm2721, %v5733, %v5740
      %v5742 = vshrl.u32 %v5580, 16
      %v5744 = vrot.slane %v5742, 3
      %v5745 = vshll.u32 %v5580, 16
      %v5747 = vrot.slane %v5745, 4
      %v5748 = vor.u32 %v5744, %v5747
      %v5749 = vshrl.u32 %v5582, 16
      %v5751 = vrot.slane %v5749, 3
      %v5752 = vshll.u32 %v5582, 16
      %v5754 = vrot.slane %v5752, 4
      %v5755 = vor.u32 %v5751, %v5754
      %v5756 = vsel %vm2721, %v5748, %v5755
      %v5757 = vshrl.u32 %v5584, 16
      %v5759 = vrot.slane %v5757, 3
      %v5760 = vshll.u32 %v5584, 16
      %v5762 = vrot.slane %v5760, 4
      %v5763 = vor.u32 %v5759, %v5762
      %v5764 = vshrl.u32 %v5586, 16
      %v5766 = vrot.slane %v5764, 3
      %v5767 = vshll.u32 %v5586, 16
      %v5769 = vrot.slane %v5767, 4
      %v5770 = vor.u32 %v5766, %v5769
      %v5771 = vsel %vm2721, %v5763, %v5770
      %v5772 = vshrl.u32 %v5588, 16
      %v5774 = vrot.slane %v5772, 3
      %v5775 = vshll.u32 %v5588, 16
      %v5777 = vrot.slane %v5775, 4
      %v5778 = vor.u32 %v5774, %v5777
      %v5779 = vshrl.u32 %v5590, 16
      %v5781 = vrot.slane %v5779, 3
      %v5782 = vshll.u32 %v5590, 16
      %v5784 = vrot.slane %v5782, 4
      %v5785 = vor.u32 %v5781, %v5784
      %v5786 = vsel %vm2721, %v5778, %v5785
      %v5787 = vshrl.u32 %v5592, 16
      %v5789 = vrot.slane %v5787, 3
      %v5790 = vshll.u32 %v5592, 16
      %v5792 = vrot.slane %v5790, 4
      %v5793 = vor.u32 %v5789, %v5792
      %v5794 = vshrl.u32 %v5594, 16
      %v5796 = vrot.slane %v5794, 3
      %v5797 = vshll.u32 %v5594, 16
      %v5799 = vrot.slane %v5797, 4
      %v5800 = vor.u32 %v5796, %v5799
      %v5801 = vsel %vm2721, %v5793, %v5800
      %v5802 = vshrl.u32 %v5596, 16
      %v5804 = vrot.slane %v5802, 3
      %v5805 = vshll.u32 %v5596, 16
      %v5807 = vrot.slane %v5805, 4
      %v5808 = vor.u32 %v5804, %v5807
      %v5809 = vshrl.u32 %v5598, 16
      %v5811 = vrot.slane %v5809, 3
      %v5812 = vshll.u32 %v5598, 16
      %v5814 = vrot.slane %v5812, 4
      %v5815 = vor.u32 %v5811, %v5814
      %v5816 = vsel %vm2721, %v5808, %v5815
      %v5817 = vshrl.u32 %v5600, 16
      %v5819 = vrot.slane %v5817, 3
      %v5820 = vshll.u32 %v5600, 16
      %v5822 = vrot.slane %v5820, 4
      %v5823 = vor.u32 %v5819, %v5822
      %v5824 = vshrl.u32 %v5602, 16
      %v5826 = vrot.slane %v5824, 3
      %v5827 = vshll.u32 %v5602, 16
      %v5829 = vrot.slane %v5827, 4
      %v5830 = vor.u32 %v5826, %v5829
      %v5831 = vsel %vm2721, %v5823, %v5830
      %v5832 = vshrl.u32 %v5604, 16
      %v5834 = vrot.slane %v5832, 3
      %v5835 = vshll.u32 %v5604, 16
      %v5837 = vrot.slane %v5835, 4
      %v5838 = vor.u32 %v5834, %v5837
      %v5839 = vshrl.u32 %v5606, 16
      %v5841 = vrot.slane %v5839, 3
      %v5842 = vshll.u32 %v5606, 16
      %v5844 = vrot.slane %v5842, 4
      %v5845 = vor.u32 %v5841, %v5844
      %v5846 = vsel %vm2721, %v5838, %v5845
      %v5847 = vld [vmem:[%s3] sm:$0xf]
      %v5848 = vld [vmem:[%s3 + $0x4] sm:$0xf]
      %v5849 = vld [vmem:[%s3 + $0x8] sm:$0xf]
      %v5850 = vld [vmem:[%s3 + $0xc] sm:$0xf]
      %v5851 = vld [vmem:[%s3 + $0x10] sm:$0xf]
      %v5852 = vld [vmem:[%s3 + $0x14] sm:$0xf]
      %v5853 = vld [vmem:[%s3 + $0x18] sm:$0xf]
      %v5854 = vld [vmem:[%s3 + $0x1c] sm:$0xf]
      %v5855 = vld [vmem:[%s3 + $0x20] sm:$0xf]
      %v5856 = vld [vmem:[%s4] sm:$0x1]
      %v5858 = vlaneseq
      %v5859 = vshrl.u32 %v5858, 7
      %v5860 = vsub.s32 0, %v5859
      %v5861 = vrot.slane %v5856, %v5860
      %v5872 = vunpack.c.l.b16 %v5847
      %v5873 = vunpack.c.l.b16 %v5848
      %v5874 = vunpack.c.l.b16 %v5849
      %v5875 = vunpack.c.l.b16 %v5850
      %v5876 = vunpack.c.l.b16 %v5851
      %v5877 = vunpack.c.l.b16 %v5852
      %v5878 = vunpack.c.l.b16 %v5853
      %v5879 = vunpack.c.l.b16 %v5854
      %v5880 = vunpack.c.l.b16 %v5855
      %v5881 = vpack.c.b16 %v5873, %v5872
      %v5882 = vpack.c.b16 %v5875, %v5874
      %v5883 = vpack.c.b16 %v5877, %v5876
      %v5884 = vpack.c.b16 %v5879, %v5878
      %v5885 = vpack.c.b16 %v5880, %v5880
      %vm5890 = vcmask 588800
      %v5892 = vsel %vm5890, %v5621, 0
      %v5895 = vsel %vm5890, %v5636, 0
      %v5898 = vsel %vm5890, %v5651, 0
      %v5901 = vsel %vm5890, %v5666, 0
      %v5904 = vsel %vm5890, %v5681, 0
      %v5907 = vsel %vm5890, %v5696, 0
      %v5910 = vsel %vm5890, %v5711, 0
      %v5913 = vsel %vm5890, %v5726, 0
      %v5916 = vsel %vm5890, %v5741, 0
      %v5919 = vsel %vm5890, %v5756, 0
      %v5922 = vsel %vm5890, %v5771, 0
      %v5925 = vsel %vm5890, %v5786, 0
      %v5928 = vsel %vm5890, %v5801, 0
      %v5931 = vsel %vm5890, %v5816, 0
      %v5934 = vsel %vm5890, %v5831, 0
      %v5937 = vsel %vm5890, %v5846, 0
      %vm5939 = vcmask 1043456
      %v5941 = vsel %vm5939, %v5885, 0
      %5943 = vmatprep.subr.bf16.mxu0 0
      %5944 = vmatpush1.bf16.msra.mxu0 %v5881
      %5945 = vmatprep.subr.bf16.mxu0 0
      %5946 = vmatpush1.bf16.msra.mxu0 %v5882
      %5947 = vmatprep.subr.bf16.mxu0 0
      %5948 = vmatpush1.bf16.msra.mxu0 %v5883
      %5949 = vmatprep.subr.bf16.mxu0 0
      %5950 = vmatpush1.bf16.msra.mxu0 %v5884
      %5951 = vmatprep.subr.bf16.mxu0 0
      %5952 = vmatpush1.bf16.msra.mxu0 %v5941
      %5953 = vmatprep.subr.bf16.mxu0 0
      %5954 = vmatpush1.bf16.msra.mxu0 0
      %5955 = vmatprep.subr.bf16.mxu0 0
      %5956 = vmatpush1.bf16.msra.mxu0 0
      %5957 = vmatprep.subr.bf16.mxu0 0
      %5958 = vmatpush1.bf16.msra.mxu0 0
      %5959 = vmatprep.subr.bf16.mxu0 0
      %5960 = vmatpush1.bf16.msra.mxu0 0
      %5961 = vmatprep.subr.bf16.mxu0 0
      %5962 = vmatpush1.bf16.msra.mxu0 0
      %5963 = vmatprep.subr.bf16.mxu0 0
      %5964 = vmatpush1.bf16.msra.mxu0 0
      %5965 = vmatprep.subr.bf16.mxu0 0
      %5966 = vmatpush1.bf16.msra.mxu0 0
      %5967 = vmatprep.subr.bf16.mxu0 0
      %5968 = vmatpush1.bf16.msra.mxu0 0
      %5969 = vmatprep.subr.bf16.mxu0 0
      %5970 = vmatpush1.bf16.msra.mxu0 0
      %5971 = vmatprep.subr.bf16.mxu0 0
      %5972 = vmatpush1.bf16.msra.mxu0 0
      %5973 = vmatprep.subr.bf16.mxu0 0
      %5974 = vmatpush1.bf16.msra.mxu0 0
      %5975 = vmatprep.mubr.bf16.mxu0 0
      %5976 = vmatmul.mubr.bf16.gmra.mrb[0].mxu0 %v5892
      %v5977 = vpop.f32.mrb[0].mxu0
      %v5978 = vadd.f32 %v5861, %v5977
      %v5979 = vpop.f32.mrb[0].mxu0
      %v5980 = vpop.f32.mrb[0].mxu0
      %v5981 = vadd.f32 %v5861, %v5980
      %v5982 = vpop.f32.mrb[0].mxu0
      %5983 = vmatprep.mubr.bf16.mxu0 0
      %5984 = vmatmul.mubr.bf16.gmra.mrb[0].mxu0 %v5895
      %v5985 = vpop.f32.mrb[0].mxu0
      %v5986 = vadd.f32 %v5861, %v5985
      %v5987 = vpop.f32.mrb[0].mxu0
      %v5988 = vpop.f32.mrb[0].mxu0
      %v5989 = vadd.f32 %v5861, %v5988
      %v5990 = vpop.f32.mrb[0].mxu0
      %5991 = vmatprep.mubr.bf16.mxu0 0
      %5992 = vmatmul.mubr.bf16.gmra.mrb[0].mxu0 %v5898
      %v5993 = vpop.f32.mrb[0].mxu0
      %v5994 = vadd.f32 %v5861, %v5993
      %v5995 = vpop.f32.mrb[0].mxu0
      %v5996 = vpop.f32.mrb[0].mxu0
      %v5997 = vadd.f32 %v5861, %v5996
      %v5998 = vpop.f32.mrb[0].mxu0
      %5999 = vmatprep.mubr.bf16.mxu0 0
      %6000 = vmatmul.mubr.bf16.gmra.mrb[0].mxu0 %v5901
      %v6001 = vpop.f32.mrb[0].mxu0
      %v6002 = vadd.f32 %v5861, %v6001
      %v6003 = vpop.f32.mrb[0].mxu0
      %v6004 = vpop.f32.mrb[0].mxu0
      %v6005 = vadd.f32 %v5861, %v6004
      %v6006 = vpop.f32.mrb[0].mxu0
      %6007 = vmatprep.mubr.bf16.mxu0 0
      %6008 = vmatmul.mubr.bf16.gmra.mrb[0].mxu0 %v5904
      %v6009 = vpop.f32.mrb[0].mxu0
      %v6010 = vadd.f32 %v5861, %v6009
      %v6011 = vpop.f32.mrb[0].mxu0
      %v6012 = vpop.f32.mrb[0].mxu0
      %v6013 = vadd.f32 %v5861, %v6012
      %v6014 = vpop.f32.mrb[0].mxu0
      %6015 = vmatprep.mubr.bf16.mxu0 0
      %6016 = vmatmul.mubr.bf16.gmra.mrb[0].mxu0 %v5907
      %v6017 = vpop.f32.mrb[0].mxu0
      %v6018 = vadd.f32 %v5861, %v6017
      %v6019 = vpop.f32.mrb[0].mxu0
      %v6020 = vpop.f32.mrb[0].mxu0
      %v6021 = vadd.f32 %v5861, %v6020
      %v6022 = vpop.f32.mrb[0].mxu0
      %6023 = vmatprep.mubr.bf16.mxu0 0
      %6024 = vmatmul.mubr.bf16.gmra.mrb[0].mxu0 %v5910
      %v6025 = vpop.f32.mrb[0].mxu0
      %v6026 = vadd.f32 %v5861, %v6025
      %v6027 = vpop.f32.mrb[0].mxu0
      %v6028 = vpop.f32.mrb[0].mxu0
      %v6029 = vadd.f32 %v5861, %v6028
      %v6030 = vpop.f32.mrb[0].mxu0
      %6031 = vmatprep.mubr.bf16.mxu0 0
      %6032 = vmatmul.mubr.bf16.gmra.mrb[0].mxu0 %v5913
      %v6033 = vpop.f32.mrb[0].mxu0
      %v6034 = vadd.f32 %v5861, %v6033
      %v6035 = vpop.f32.mrb[0].mxu0
      %v6036 = vpop.f32.mrb[0].mxu0
      %v6037 = vadd.f32 %v5861, %v6036
      %v6038 = vpop.f32.mrb[0].mxu0
      %6039 = vmatprep.mubr.bf16.mxu0 0
      %6040 = vmatmul.mubr.bf16.gmra.mrb[0].mxu0 %v5916
      %v6041 = vpop.f32.mrb[0].mxu0
      %v6042 = vadd.f32 %v5861, %v6041
      %v6043 = vpop.f32.mrb[0].mxu0
      %v6044 = vpop.f32.mrb[0].mxu0
      %v6045 = vadd.f32 %v5861, %v6044
      %v6046 = vpop.f32.mrb[0].mxu0
      %6047 = vmatprep.mubr.bf16.mxu0 0
      %6048 = vmatmul.mubr.bf16.gmra.mrb[0].mxu0 %v5919
      %v6049 = vpop.f32.mrb[0].mxu0
      %v6050 = vadd.f32 %v5861, %v6049
      %v6051 = vpop.f32.mrb[0].mxu0
      %v6052 = vpop.f32.mrb[0].mxu0
      %v6053 = vadd.f32 %v5861, %v6052
      %v6054 = vpop.f32.mrb[0].mxu0
      %6055 = vmatprep.mubr.bf16.mxu0 0
      %6056 = vmatmul.mubr.bf16.gmra.mrb[0].mxu0 %v5922
      %v6057 = vpop.f32.mrb[0].mxu0
      %v6058 = vadd.f32 %v5861, %v6057
      %v6059 = vpop.f32.mrb[0].mxu0
      %v6060 = vpop.f32.mrb[0].mxu0
      %v6061 = vadd.f32 %v5861, %v6060
      %v6062 = vpop.f32.mrb[0].mxu0
      %6063 = vmatprep.mubr.bf16.mxu0 0
      %6064 = vmatmul.mubr.bf16.gmra.mrb[0].mxu0 %v5925
      %v6065 = vpop.f32.mrb[0].mxu0
      %v6066 = vadd.f32 %v5861, %v6065
      %v6067 = vpop.f32.mrb[0].mxu0
      %v6068 = vpop.f32.mrb[0].mxu0
      %v6069 = vadd.f32 %v5861, %v6068
      %v6070 = vpop.f32.mrb[0].mxu0
      %6071 = vmatprep.mubr.bf16.mxu0 0
      %6072 = vmatmul.mubr.bf16.gmra.mrb[0].mxu0 %v5928
      %v6073 = vpop.f32.mrb[0].mxu0
      %v6074 = vadd.f32 %v5861, %v6073
      %v6075 = vpop.f32.mrb[0].mxu0
      %v6076 = vpop.f32.mrb[0].mxu0
      %v6077 = vadd.f32 %v5861, %v6076
      %v6078 = vpop.f32.mrb[0].mxu0
      %6079 = vmatprep.mubr.bf16.mxu0 0
      %6080 = vmatmul.mubr.bf16.gmra.mrb[0].mxu0 %v5931
      %v6081 = vpop.f32.mrb[0].mxu0
      %v6082 = vadd.f32 %v5861, %v6081
      %v6083 = vpop.f32.mrb[0].mxu0
      %v6084 = vpop.f32.mrb[0].mxu0
      %v6085 = vadd.f32 %v5861, %v6084
      %v6086 = vpop.f32.mrb[0].mxu0
      %6087 = vmatprep.mubr.bf16.mxu0 0
      %6088 = vmatmul.mubr.bf16.gmra.mrb[0].mxu0 %v5934
      %v6089 = vpop.f32.mrb[0].mxu0
      %v6090 = vadd.f32 %v5861, %v6089
      %v6091 = vpop.f32.mrb[0].mxu0
      %v6092 = vpop.f32.mrb[0].mxu0
      %v6093 = vadd.f32 %v5861, %v6092
      %v6094 = vpop.f32.mrb[0].mxu0
      %6095 = vmatprep.mubr.bf16.mxu0 0
      %6096 = vmatmul.mubr.bf16.gmra.mrb[0].mxu0 %v5937
      %v6097 = vpop.f32.mrb[0].mxu0
      %v6098 = vadd.f32 %v5861, %v6097
      %v6099 = vpop.f32.mrb[0].mxu0
      %v6100 = vpop.f32.mrb[0].mxu0
      %v6101 = vadd.f32 %v5861, %v6100
      %v6102 = vpop.f32.mrb[0].mxu0
      %6103 = vdwg.mxu0
      %v6104 = vmax.f32 %v5978, 0.0
      %v6105 = vmax.f32 %v5981, 0.0
      %v6106 = vmax.f32 %v5986, 0.0
      %v6107 = vmax.f32 %v5989, 0.0
      %v6108 = vmax.f32 %v5994, 0.0
      %v6109 = vmax.f32 %v5997, 0.0
      %v6110 = vmax.f32 %v6002, 0.0
      %v6111 = vmax.f32 %v6005, 0.0
      %v6112 = vmax.f32 %v6010, 0.0
      %v6113 = vmax.f32 %v6013, 0.0
      %v6114 = vmax.f32 %v6018, 0.0
      %v6115 = vmax.f32 %v6021, 0.0
      %v6116 = vmax.f32 %v6026, 0.0
      %v6117 = vmax.f32 %v6029, 0.0
      %v6118 = vmax.f32 %v6034, 0.0
      %v6119 = vmax.f32 %v6037, 0.0
      %v6120 = vmax.f32 %v6042, 0.0
      %v6121 = vmax.f32 %v6045, 0.0
      %v6122 = vmax.f32 %v6050, 0.0
      %v6123 = vmax.f32 %v6053, 0.0
      %v6124 = vmax.f32 %v6058, 0.0
      %v6125 = vmax.f32 %v6061, 0.0
      %v6126 = vmax.f32 %v6066, 0.0
      %v6127 = vmax.f32 %v6069, 0.0
      %v6128 = vmax.f32 %v6074, 0.0
      %v6129 = vmax.f32 %v6077, 0.0
      %v6130 = vmax.f32 %v6082, 0.0
      %v6131 = vmax.f32 %v6085, 0.0
      %v6132 = vmax.f32 %v6090, 0.0
      %v6133 = vmax.f32 %v6093, 0.0
      %v6134 = vmax.f32 %v6098, 0.0
      %v6135 = vmax.f32 %v6101, 0.0
      %6168 = vrot.lane.b32.xlu0 %v3077, 120
      %v6169 = vpop.permute.xlu0 %6168
      %6170 = vrot.lane.b32.xlu0 %v3080, 120
      %v6171 = vpop.permute.xlu0 %6170
      %6172 = vrot.lane.b32.xlu0 %v3085, 120
      %v6173 = vpop.permute.xlu0 %6172
      %6174 = vrot.lane.b32.xlu0 %v3088, 120
      %v6175 = vpop.permute.xlu0 %6174
      %6176 = vrot.lane.b32.xlu0 %v3093, 120
      %v6177 = vpop.permute.xlu0 %6176
      %6178 = vrot.lane.b32.xlu0 %v3096, 120
      %v6179 = vpop.permute.xlu0 %6178
      %6180 = vrot.lane.b32.xlu0 %v3101, 120
      %v6181 = vpop.permute.xlu0 %6180
      %6182 = vrot.lane.b32.xlu0 %v3104, 120
      %v6183 = vpop.permute.xlu0 %6182
      %6184 = vrot.lane.b32.xlu0 %v3109, 120
      %v6185 = vpop.permute.xlu0 %6184
      %6186 = vrot.lane.b32.xlu0 %v3112, 120
      %v6187 = vpop.permute.xlu0 %6186
      %6188 = vrot.lane.b32.xlu0 %v3117, 120
      %v6189 = vpop.permute.xlu0 %6188
      %6190 = vrot.lane.b32.xlu0 %v3120, 120
      %v6191 = vpop.permute.xlu0 %6190
      %6192 = vrot.lane.b32.xlu0 %v3125, 120
      %v6193 = vpop.permute.xlu0 %6192
      %6194 = vrot.lane.b32.xlu0 %v3128, 120
      %v6195 = vpop.permute.xlu0 %6194
      %6196 = vrot.lane.b32.xlu0 %v3133, 120
      %v6197 = vpop.permute.xlu0 %6196
      %6198 = vrot.lane.b32.xlu0 %v3136, 120
      %v6199 = vpop.permute.xlu0 %6198
      %6200 = vrot.lane.b32.xlu0 %v3141, 120
      %v6201 = vpop.permute.xlu0 %6200
      %6202 = vrot.lane.b32.xlu0 %v3144, 120
      %v6203 = vpop.permute.xlu0 %6202
      %6204 = vrot.lane.b32.xlu0 %v3149, 120
      %v6205 = vpop.permute.xlu0 %6204
      %6206 = vrot.lane.b32.xlu0 %v3152, 120
      %v6207 = vpop.permute.xlu0 %6206
      %6208 = vrot.lane.b32.xlu0 %v3157, 120
      %v6209 = vpop.permute.xlu0 %6208
      %6210 = vrot.lane.b32.xlu0 %v3160, 120
      %v6211 = vpop.permute.xlu0 %6210
      %6212 = vrot.lane.b32.xlu0 %v3165, 120
      %v6213 = vpop.permute.xlu0 %6212
      %6214 = vrot.lane.b32.xlu0 %v3168, 120
      %v6215 = vpop.permute.xlu0 %6214
      %6216 = vrot.lane.b32.xlu0 %v3173, 120
      %v6217 = vpop.permute.xlu0 %6216
      %6218 = vrot.lane.b32.xlu0 %v3176, 120
      %v6219 = vpop.permute.xlu0 %6218
      %6220 = vrot.lane.b32.xlu0 %v3181, 120
      %v6221 = vpop.permute.xlu0 %6220
      %6222 = vrot.lane.b32.xlu0 %v3184, 120
      %v6223 = vpop.permute.xlu0 %6222
      %6224 = vrot.lane.b32.xlu0 %v3189, 120
      %v6225 = vpop.permute.xlu0 %6224
      %6226 = vrot.lane.b32.xlu0 %v3192, 120
      %v6227 = vpop.permute.xlu0 %6226
      %6228 = vrot.lane.b32.xlu0 %v3197, 120
      %v6229 = vpop.permute.xlu0 %6228
      %6230 = vrot.lane.b32.xlu0 %v3200, 120
      %v6231 = vpop.permute.xlu0 %6230
      %v6264 = vadd.f32 %v6104, %v6169
      %v6265 = vadd.f32 %v6105, %v6171
      %v6266 = vadd.f32 %v6106, %v6173
      %v6267 = vadd.f32 %v6107, %v6175
      %v6268 = vadd.f32 %v6108, %v6177
      %v6269 = vadd.f32 %v6109, %v6179
      %v6270 = vadd.f32 %v6110, %v6181
      %v6271 = vadd.f32 %v6111, %v6183
      %v6272 = vadd.f32 %v6112, %v6185
      %v6273 = vadd.f32 %v6113, %v6187
      %v6274 = vadd.f32 %v6114, %v6189
      %v6275 = vadd.f32 %v6115, %v6191
      %v6276 = vadd.f32 %v6116, %v6193
      %v6277 = vadd.f32 %v6117, %v6195
      %v6278 = vadd.f32 %v6118, %v6197
      %v6279 = vadd.f32 %v6119, %v6199
      %v6280 = vadd.f32 %v6120, %v6201
      %v6281 = vadd.f32 %v6121, %v6203
      %v6282 = vadd.f32 %v6122, %v6205
      %v6283 = vadd.f32 %v6123, %v6207
      %v6284 = vadd.f32 %v6124, %v6209
      %v6285 = vadd.f32 %v6125, %v6211
      %v6286 = vadd.f32 %v6126, %v6213
      %v6287 = vadd.f32 %v6127, %v6215
      %v6288 = vadd.f32 %v6128, %v6217
      %v6289 = vadd.f32 %v6129, %v6219
      %v6290 = vadd.f32 %v6130, %v6221
      %v6291 = vadd.f32 %v6131, %v6223
      %v6292 = vadd.f32 %v6132, %v6225
      %v6293 = vadd.f32 %v6133, %v6227
      %v6294 = vadd.f32 %v6134, %v6229
      %v6295 = vadd.f32 %v6135, %v6231
      %v6296 = vmax.f32 %v6264, 0.0
      %v6297 = vmax.f32 %v6265, 0.0
      %v6298 = vmax.f32 %v6266, 0.0
      %v6299 = vmax.f32 %v6267, 0.0
      %v6300 = vmax.f32 %v6268, 0.0
      %v6301 = vmax.f32 %v6269, 0.0
      %v6302 = vmax.f32 %v6270, 0.0
      %v6303 = vmax.f32 %v6271, 0.0
      %v6304 = vmax.f32 %v6272, 0.0
      %v6305 = vmax.f32 %v6273, 0.0
      %v6306 = vmax.f32 %v6274, 0.0
      %v6307 = vmax.f32 %v6275, 0.0
      %v6308 = vmax.f32 %v6276, 0.0
      %v6309 = vmax.f32 %v6277, 0.0
      %v6310 = vmax.f32 %v6278, 0.0
      %v6311 = vmax.f32 %v6279, 0.0
      %v6312 = vmax.f32 %v6280, 0.0
      %v6313 = vmax.f32 %v6281, 0.0
      %v6314 = vmax.f32 %v6282, 0.0
      %v6315 = vmax.f32 %v6283, 0.0
      %v6316 = vmax.f32 %v6284, 0.0
      %v6317 = vmax.f32 %v6285, 0.0
      %v6318 = vmax.f32 %v6286, 0.0
      %v6319 = vmax.f32 %v6287, 0.0
      %v6320 = vmax.f32 %v6288, 0.0
      %v6321 = vmax.f32 %v6289, 0.0
      %v6322 = vmax.f32 %v6290, 0.0
      %v6323 = vmax.f32 %v6291, 0.0
      %v6324 = vmax.f32 %v6292, 0.0
      %v6325 = vmax.f32 %v6293, 0.0
      %v6326 = vmax.f32 %v6294, 0.0
      %v6327 = vmax.f32 %v6295, 0.0
      %v6328 = vpack.c.bf16 %v6297, %v6296
      %v6329 = vpack.c.bf16 %v6299, %v6298
      %v6330 = vpack.c.bf16 %v6301, %v6300
      %v6331 = vpack.c.bf16 %v6303, %v6302
      %v6332 = vpack.c.bf16 %v6305, %v6304
      %v6333 = vpack.c.bf16 %v6307, %v6306
      %v6334 = vpack.c.bf16 %v6309, %v6308
      %v6335 = vpack.c.bf16 %v6311, %v6310
      %v6336 = vpack.c.bf16 %v6313, %v6312
      %v6337 = vpack.c.bf16 %v6315, %v6314
      %v6338 = vpack.c.bf16 %v6317, %v6316
      %v6339 = vpack.c.bf16 %v6319, %v6318
      %v6340 = vpack.c.bf16 %v6321, %v6320
      %v6341 = vpack.c.bf16 %v6323, %v6322
      %v6342 = vpack.c.bf16 %v6325, %v6324
      %v6343 = vpack.c.bf16 %v6327, %v6326
      %v6360 = vunpack.c.l.b16 %v6328
      %v6361 = vunpack.c.h.b16 %v6328
      %v6362 = vunpack.c.l.b16 %v6329
      %v6363 = vunpack.c.h.b16 %v6329
      %v6364 = vunpack.c.l.b16 %v6330
      %v6365 = vunpack.c.h.b16 %v6330
      %v6366 = vunpack.c.l.b16 %v6331
      %v6367 = vunpack.c.h.b16 %v6331
      %v6368 = vunpack.c.l.b16 %v6332
      %v6369 = vunpack.c.h.b16 %v6332
      %v6370 = vunpack.c.l.b16 %v6333
      %v6371 = vunpack.c.h.b16 %v6333
      %v6372 = vunpack.c.l.b16 %v6334
      %v6373 = vunpack.c.h.b16 %v6334
      %v6374 = vunpack.c.l.b16 %v6335
      %v6375 = vunpack.c.h.b16 %v6335
      %v6376 = vunpack.c.l.b16 %v6336
      %v6377 = vunpack.c.h.b16 %v6336
      %v6378 = vunpack.c.l.b16 %v6337
      %v6379 = vunpack.c.h.b16 %v6337
      %v6380 = vunpack.c.l.b16 %v6338
      %v6381 = vunpack.c.h.b16 %v6338
      %v6382 = vunpack.c.l.b16 %v6339
      %v6383 = vunpack.c.h.b16 %v6339
      %v6384 = vunpack.c.l.b16 %v6340
      %v6385 = vunpack.c.h.b16 %v6340
      %v6386 = vunpack.c.l.b16 %v6341
      %v6387 = vunpack.c.h.b16 %v6341
      %v6388 = vunpack.c.l.b16 %v6342
      %v6389 = vunpack.c.h.b16 %v6342
      %v6390 = vunpack.c.l.b16 %v6343
      %v6391 = vunpack.c.h.b16 %v6343
      %v6392 = vpack.c.b16 %v6360, %v6360
      %v6393 = vpack.c.b16 %v6361, %v6361
      %v6394 = vpack.c.b16 %v6362, %v6362
      %v6395 = vpack.c.b16 %v6363, %v6363
      %v6396 = vpack.c.b16 %v6364, %v6364
      %v6397 = vpack.c.b16 %v6365, %v6365
      %v6398 = vpack.c.b16 %v6366, %v6366
      %v6399 = vpack.c.b16 %v6367, %v6367
      %v6400 = vpack.c.b16 %v6368, %v6368
      %v6401 = vpack.c.b16 %v6369, %v6369
      %v6402 = vpack.c.b16 %v6370, %v6370
      %v6403 = vpack.c.b16 %v6371, %v6371
      %v6404 = vpack.c.b16 %v6372, %v6372
      %v6405 = vpack.c.b16 %v6373, %v6373
      %v6406 = vpack.c.b16 %v6374, %v6374
      %v6407 = vpack.c.b16 %v6375, %v6375
      %v6408 = vpack.c.b16 %v6376, %v6376
      %v6409 = vpack.c.b16 %v6377, %v6377
      %v6410 = vpack.c.b16 %v6378, %v6378
      %v6411 = vpack.c.b16 %v6379, %v6379
      %v6412 = vpack.c.b16 %v6380, %v6380
      %v6413 = vpack.c.b16 %v6381, %v6381
      %v6414 = vpack.c.b16 %v6382, %v6382
      %v6415 = vpack.c.b16 %v6383, %v6383
      %v6416 = vpack.c.b16 %v6384, %v6384
      %v6417 = vpack.c.b16 %v6385, %v6385
      %v6418 = vpack.c.b16 %v6386, %v6386
      %v6419 = vpack.c.b16 %v6387, %v6387
      %v6420 = vpack.c.b16 %v6388, %v6388
      %v6421 = vpack.c.b16 %v6389, %v6389
      %v6422 = vpack.c.b16 %v6390, %v6390
      %v6423 = vpack.c.b16 %v6391, %v6391
      %6456 = vst.msk [vmem:[%s290 + $0x8] sm:$0xf] %vm278, %v6392
      %6457 = vst.msk [vmem:[%s290 + $0xc] sm:$0xf] %vm278, %v6393
      %6458 = vst.msk [vmem:[%s290 + $0x1c] sm:$0xf] %vm278, %v6394
      %6459 = vst.msk [vmem:[%s290 + $0x20] sm:$0xf] %vm278, %v6395
      %6460 = vst.msk [vmem:[%s290 + $0x30] sm:$0xf] %vm278, %v6396
      %6461 = vst.msk [vmem:[%s290 + $0x34] sm:$0xf] %vm278, %v6397
      %6462 = vst.msk [vmem:[%s290 + $0x44] sm:$0xf] %vm278, %v6398
      %6463 = vst.msk [vmem:[%s290 + $0x48] sm:$0xf] %vm278, %v6399
      %6464 = vst.msk [vmem:[%s290 + $0x58] sm:$0xf] %vm278, %v6400
      %6465 = vst.msk [vmem:[%s290 + $0x5c] sm:$0xf] %vm278, %v6401
      %6466 = vst.msk [vmem:[%s290 + $0x6c] sm:$0xf] %vm278, %v6402
      %6467 = vst.msk [vmem:[%s290 + $0x70] sm:$0xf] %vm278, %v6403
      %6468 = vst.msk [vmem:[%s290 + $0x80] sm:$0xf] %vm278, %v6404
      %6469 = vst.msk [vmem:[%s290 + $0x84] sm:$0xf] %vm278, %v6405
      %6470 = vst.msk [vmem:[%s290 + $0x94] sm:$0xf] %vm278, %v6406
      %6471 = vst.msk [vmem:[%s290 + $0x98] sm:$0xf] %vm278, %v6407
      %6472 = vst.msk [vmem:[%s290 + $0xa8] sm:$0xf] %vm278, %v6408
      %6473 = vst.msk [vmem:[%s290 + $0xac] sm:$0xf] %vm278, %v6409
      %6474 = vst.msk [vmem:[%s290 + $0xbc] sm:$0xf] %vm278, %v6410
      %6475 = vst.msk [vmem:[%s290 + $0xc0] sm:$0xf] %vm278, %v6411
      %6476 = vst.msk [vmem:[%s290 + $0xd0] sm:$0xf] %vm278, %v6412
      %6477 = vst.msk [vmem:[%s290 + $0xd4] sm:$0xf] %vm278, %v6413
      %6478 = vst.msk [vmem:[%s290 + $0xe4] sm:$0xf] %vm278, %v6414
      %6479 = vst.msk [vmem:[%s290 + $0xe8] sm:$0xf] %vm278, %v6415
      %6480 = vst.msk [vmem:[%s290 + $0xf8] sm:$0xf] %vm278, %v6416
      %6481 = vst.msk [vmem:[%s290 + $0xfc] sm:$0xf] %vm278, %v6417
      %6482 = vst.msk [vmem:[%s290 + $0x10c] sm:$0xf] %vm278, %v6418
      %6483 = vst.msk [vmem:[%s290 + $0x110] sm:$0xf] %vm278, %v6419
      %6484 = vst.msk [vmem:[%s290 + $0x120] sm:$0xf] %vm278, %v6420
      %6485 = vst.msk [vmem:[%s290 + $0x124] sm:$0xf] %vm278, %v6421
      %6486 = vst.msk [vmem:[%s290 + $0x134] sm:$0xf] %vm278, %v6422
      %6487 = vst.msk [vmem:[%s290 + $0x138] sm:$0xf] %vm278, %v6423
      %v6488 = vld [vmem:[#allocation2 + $0x4] sm:$0x8]
      %v6489 = vld [vmem:[#allocation2 + $0x8] sm:$0xf]
      %v6490 = vld [vmem:[#allocation2 + $0xc] sm:$0xf]
      %v6491 = vld [vmem:[#allocation2 + $0x18] sm:$0x8]
      %v6492 = vld [vmem:[#allocation2 + $0x1c] sm:$0xf]
      %v6493 = vld [vmem:[#allocation2 + $0x20] sm:$0xf]
      %v6494 = vld [vmem:[#allocation2 + $0x2c] sm:$0x8]
      %v6495 = vld [vmem:[#allocation2 + $0x30] sm:$0xf]
      %v6496 = vld [vmem:[#allocation2 + $0x34] sm:$0xf]
      %v6497 = vld [vmem:[#allocation2 + $0x40] sm:$0x8]
      %v6498 = vld [vmem:[#allocation2 + $0x44] sm:$0xf]
      %v6499 = vld [vmem:[#allocation2 + $0x48] sm:$0xf]
      %v6500 = vld [vmem:[#allocation2 + $0x54] sm:$0x8]
      %v6501 = vld [vmem:[#allocation2 + $0x58] sm:$0xf]
      %v6502 = vld [vmem:[#allocation2 + $0x5c] sm:$0xf]
      %v6503 = vld [vmem:[#allocation2 + $0x68] sm:$0x8]
      %v6504 = vld [vmem:[#allocation2 + $0x6c] sm:$0xf]
      %v6505 = vld [vmem:[#allocation2 + $0x70] sm:$0xf]
      %v6506 = vld [vmem:[#allocation2 + $0x7c] sm:$0x8]
      %v6507 = vld [vmem:[#allocation2 + $0x80] sm:$0xf]
      %v6508 = vld [vmem:[#allocation2 + $0x84] sm:$0xf]
      %v6509 = vld [vmem:[#allocation2 + $0x90] sm:$0x8]
      %v6510 = vld [vmem:[#allocation2 + $0x94] sm:$0xf]
      %v6511 = vld [vmem:[#allocation2 + $0x98] sm:$0xf]
      %v6512 = vld [vmem:[#allocation2 + $0xa4] sm:$0x8]
      %v6513 = vld [vmem:[#allocation2 + $0xa8] sm:$0xf]
      %v6514 = vld [vmem:[#allocation2 + $0xac] sm:$0xf]
      %v6515 = vld [vmem:[#allocation2 + $0xb8] sm:$0x8]
      %v6516 = vld [vmem:[#allocation2 + $0xbc] sm:$0xf]
      %v6517 = vld [vmem:[#allocation2 + $0xc0] sm:$0xf]
      %v6518 = vld [vmem:[#allocation2 + $0xcc] sm:$0x8]
      %v6519 = vld [vmem:[#allocation2 + $0xd0] sm:$0xf]
      %v6520 = vld [vmem:[#allocation2 + $0xd4] sm:$0xf]
      %v6521 = vld [vmem:[#allocation2 + $0xe0] sm:$0x8]
      %v6522 = vld [vmem:[#allocation2 + $0xe4] sm:$0xf]
      %v6523 = vld [vmem:[#allocation2 + $0xe8] sm:$0xf]
      %v6524 = vld [vmem:[#allocation2 + $0xf4] sm:$0x8]
      %v6525 = vld [vmem:[#allocation2 + $0xf8] sm:$0xf]
      %v6526 = vld [vmem:[#allocation2 + $0xfc] sm:$0xf]
      %v6527 = vld [vmem:[#allocation2 + $0x108] sm:$0x8]
      %v6528 = vld [vmem:[#allocation2 + $0x10c] sm:$0xf]
      %v6529 = vld [vmem:[#allocation2 + $0x110] sm:$0xf]
      %v6530 = vld [vmem:[#allocation2 + $0x11c] sm:$0x8]
      %v6531 = vld [vmem:[#allocation2 + $0x120] sm:$0xf]
      %v6532 = vld [vmem:[#allocation2 + $0x124] sm:$0xf]
      %v6533 = vld [vmem:[#allocation2 + $0x130] sm:$0x8]
      %v6534 = vld [vmem:[#allocation2 + $0x134] sm:$0xf]
      %v6535 = vld [vmem:[#allocation2 + $0x138] sm:$0xf]
      %v6536 = vld [vmem:[#allocation2 + $0x10] sm:$0x1]
      %v6537 = vld [vmem:[#allocation2 + $0x24] sm:$0x1]
      %v6538 = vld [vmem:[#allocation2 + $0x38] sm:$0x1]
      %v6539 = vld [vmem:[#allocation2 + $0x4c] sm:$0x1]
      %v6540 = vld [vmem:[#allocation2 + $0x60] sm:$0x1]
      %v6541 = vld [vmem:[#allocation2 + $0x74] sm:$0x1]
      %v6542 = vld [vmem:[#allocation2 + $0x88] sm:$0x1]
      %v6543 = vld [vmem:[#allocation2 + $0x9c] sm:$0x1]
      %v6544 = vld [vmem:[#allocation2 + $0xb0] sm:$0x1]
      %v6545 = vld [vmem:[#allocation2 + $0xc4] sm:$0x1]
      %v6546 = vld [vmem:[#allocation2 + $0xd8] sm:$0x1]
      %v6547 = vld [vmem:[#allocation2 + $0xec] sm:$0x1]
      %v6548 = vld [vmem:[#allocation2 + $0x100] sm:$0x1]
      %v6549 = vld [vmem:[#allocation2 + $0x114] sm:$0x1]
      %v6550 = vld [vmem:[#allocation2 + $0x128] sm:$0x1]
      %v6551 = vld [vmem:[#allocation2 + $0x13c] sm:$0x1]
      %v6552 = vld [vmem:[%s290 + $0x4] sm:$0x8]
      %v6553 = vld [vmem:[%s290 + $0x8] sm:$0xf]
      %v6554 = vld [vmem:[%s290 + $0xc] sm:$0xf]
      %v6555 = vld [vmem:[%s290 + $0x18] sm:$0x8]
      %v6556 = vld [vmem:[%s290 + $0x1c] sm:$0xf]
      %v6557 = vld [vmem:[%s290 + $0x20] sm:$0xf]
      %v6558 = vld [vmem:[%s290 + $0x2c] sm:$0x8]
      %v6559 = vld [vmem:[%s290 + $0x30] sm:$0xf]
      %v6560 = vld [vmem:[%s290 + $0x34] sm:$0xf]
      %v6561 = vld [vmem:[%s290 + $0x40] sm:$0x8]
      %v6562 = vld [vmem:[%s290 + $0x44] sm:$0xf]
      %v6563 = vld [vmem:[%s290 + $0x48] sm:$0xf]
      %v6564 = vld [vmem:[%s290 + $0x54] sm:$0x8]
      %v6565 = vld [vmem:[%s290 + $0x58] sm:$0xf]
      %v6566 = vld [vmem:[%s290 + $0x5c] sm:$0xf]
      %v6567 = vld [vmem:[%s290 + $0x68] sm:$0x8]
      %v6568 = vld [vmem:[%s290 + $0x6c] sm:$0xf]
      %v6569 = vld [vmem:[%s290 + $0x70] sm:$0xf]
      %v6570 = vld [vmem:[%s290 + $0x7c] sm:$0x8]
      %v6571 = vld [vmem:[%s290 + $0x80] sm:$0xf]
      %v6572 = vld [vmem:[%s290 + $0x84] sm:$0xf]
      %v6573 = vld [vmem:[%s290 + $0x90] sm:$0x8]
      %v6574 = vld [vmem:[%s290 + $0x94] sm:$0xf]
      %v6575 = vld [vmem:[%s290 + $0x98] sm:$0xf]
      %v6576 = vld [vmem:[%s290 + $0xa4] sm:$0x8]
      %v6577 = vld [vmem:[%s290 + $0xa8] sm:$0xf]
      %v6578 = vld [vmem:[%s290 + $0xac] sm:$0xf]
      %v6579 = vld [vmem:[%s290 + $0xb8] sm:$0x8]
      %v6580 = vld [vmem:[%s290 + $0xbc] sm:$0xf]
      %v6581 = vld [vmem:[%s290 + $0xc0] sm:$0xf]
      %v6582 = vld [vmem:[%s290 + $0xcc] sm:$0x8]
      %v6583 = vld [vmem:[%s290 + $0xd0] sm:$0xf]
      %v6584 = vld [vmem:[%s290 + $0xd4] sm:$0xf]
      %v6585 = vld [vmem:[%s290 + $0xe0] sm:$0x8]
      %v6586 = vld [vmem:[%s290 + $0xe4] sm:$0xf]
      %v6587 = vld [vmem:[%s290 + $0xe8] sm:$0xf]
      %v6588 = vld [vmem:[%s290 + $0xf4] sm:$0x8]
      %v6589 = vld [vmem:[%s290 + $0xf8] sm:$0xf]
      %v6590 = vld [vmem:[%s290 + $0xfc] sm:$0xf]
      %v6591 = vld [vmem:[%s290 + $0x108] sm:$0x8]
      %v6592 = vld [vmem:[%s290 + $0x10c] sm:$0xf]
      %v6593 = vld [vmem:[%s290 + $0x110] sm:$0xf]
      %v6594 = vld [vmem:[%s290 + $0x11c] sm:$0x8]
      %v6595 = vld [vmem:[%s290 + $0x120] sm:$0xf]
      %v6596 = vld [vmem:[%s290 + $0x124] sm:$0xf]
      %v6597 = vld [vmem:[%s290 + $0x130] sm:$0x8]
      %v6598 = vld [vmem:[%s290 + $0x134] sm:$0xf]
      %v6599 = vld [vmem:[%s290 + $0x138] sm:$0xf]
      %v6600 = vld [vmem:[%s290 + $0x10] sm:$0x1]
      %v6601 = vld [vmem:[%s290 + $0x24] sm:$0x1]
      %v6602 = vld [vmem:[%s290 + $0x38] sm:$0x1]
      %v6603 = vld [vmem:[%s290 + $0x4c] sm:$0x1]
      %v6604 = vld [vmem:[%s290 + $0x60] sm:$0x1]
      %v6605 = vld [vmem:[%s290 + $0x74] sm:$0x1]
      %v6606 = vld [vmem:[%s290 + $0x88] sm:$0x1]
      %v6607 = vld [vmem:[%s290 + $0x9c] sm:$0x1]
      %v6608 = vld [vmem:[%s290 + $0xb0] sm:$0x1]
      %v6609 = vld [vmem:[%s290 + $0xc4] sm:$0x1]
      %v6610 = vld [vmem:[%s290 + $0xd8] sm:$0x1]
      %v6611 = vld [vmem:[%s290 + $0xec] sm:$0x1]
      %v6612 = vld [vmem:[%s290 + $0x100] sm:$0x1]
      %v6613 = vld [vmem:[%s290 + $0x114] sm:$0x1]
      %v6614 = vld [vmem:[%s290 + $0x128] sm:$0x1]
      %v6615 = vld [vmem:[%s290 + $0x13c] sm:$0x1]
      %v6616 = vld [vmem:[%s632 + $0x4] sm:$0x8]
      %v6617 = vld [vmem:[%s632 + $0x8] sm:$0xf]
      %v6618 = vld [vmem:[%s632 + $0xc] sm:$0xf]
      %v6619 = vld [vmem:[%s632 + $0x18] sm:$0x8]
      %v6620 = vld [vmem:[%s632 + $0x1c] sm:$0xf]
      %v6621 = vld [vmem:[%s632 + $0x20] sm:$0xf]
      %v6622 = vld [vmem:[%s632 + $0x2c] sm:$0x8]
      %v6623 = vld [vmem:[%s632 + $0x30] sm:$0xf]
      %v6624 = vld [vmem:[%s632 + $0x34] sm:$0xf]
      %v6625 = vld [vmem:[%s632 + $0x40] sm:$0x8]
      %v6626 = vld [vmem:[%s632 + $0x44] sm:$0xf]
      %v6627 = vld [vmem:[%s632 + $0x48] sm:$0xf]
      %v6628 = vld [vmem:[%s632 + $0x54] sm:$0x8]
      %v6629 = vld [vmem:[%s632 + $0x58] sm:$0xf]
      %v6630 = vld [vmem:[%s632 + $0x5c] sm:$0xf]
      %v6631 = vld [vmem:[%s632 + $0x68] sm:$0x8]
      %v6632 = vld [vmem:[%s632 + $0x6c] sm:$0xf]
      %v6633 = vld [vmem:[%s632 + $0x70] sm:$0xf]
      %v6634 = vld [vmem:[%s632 + $0x7c] sm:$0x8]
      %v6635 = vld [vmem:[%s632 + $0x80] sm:$0xf]
      %v6636 = vld [vmem:[%s632 + $0x84] sm:$0xf]
      %v6637 = vld [vmem:[%s632 + $0x90] sm:$0x8]
      %v6638 = vld [vmem:[%s632 + $0x94] sm:$0xf]
      %v6639 = vld [vmem:[%s632 + $0x98] sm:$0xf]
      %v6640 = vld [vmem:[%s632 + $0xa4] sm:$0x8]
      %v6641 = vld [vmem:[%s632 + $0xa8] sm:$0xf]
      %v6642 = vld [vmem:[%s632 + $0xac] sm:$0xf]
      %v6643 = vld [vmem:[%s632 + $0xb8] sm:$0x8]
      %v6644 = vld [vmem:[%s632 + $0xbc] sm:$0xf]
      %v6645 = vld [vmem:[%s632 + $0xc0] sm:$0xf]
      %v6646 = vld [vmem:[%s632 + $0xcc] sm:$0x8]
      %v6647 = vld [vmem:[%s632 + $0xd0] sm:$0xf]
      %v6648 = vld [vmem:[%s632 + $0xd4] sm:$0xf]
      %v6649 = vld [vmem:[%s632 + $0xe0] sm:$0x8]
      %v6650 = vld [vmem:[%s632 + $0xe4] sm:$0xf]
      %v6651 = vld [vmem:[%s632 + $0xe8] sm:$0xf]
      %v6652 = vld [vmem:[%s632 + $0xf4] sm:$0x8]
      %v6653 = vld [vmem:[%s632 + $0xf8] sm:$0xf]
      %v6654 = vld [vmem:[%s632 + $0xfc] sm:$0xf]
      %v6655 = vld [vmem:[%s632 + $0x108] sm:$0x8]
      %v6656 = vld [vmem:[%s632 + $0x10c] sm:$0xf]
      %v6657 = vld [vmem:[%s632 + $0x110] sm:$0xf]
      %v6658 = vld [vmem:[%s632 + $0x11c] sm:$0x8]
      %v6659 = vld [vmem:[%s632 + $0x120] sm:$0xf]
      %v6660 = vld [vmem:[%s632 + $0x124] sm:$0xf]
      %v6661 = vld [vmem:[%s632 + $0x130] sm:$0x8]
      %v6662 = vld [vmem:[%s632 + $0x134] sm:$0xf]
      %v6663 = vld [vmem:[%s632 + $0x138] sm:$0xf]
      %v6664 = vld [vmem:[%s632 + $0x10] sm:$0x1]
      %v6665 = vld [vmem:[%s632 + $0x24] sm:$0x1]
      %v6666 = vld [vmem:[%s632 + $0x38] sm:$0x1]
      %v6667 = vld [vmem:[%s632 + $0x4c] sm:$0x1]
      %v6668 = vld [vmem:[%s632 + $0x60] sm:$0x1]
      %v6669 = vld [vmem:[%s632 + $0x74] sm:$0x1]
      %v6670 = vld [vmem:[%s632 + $0x88] sm:$0x1]
      %v6671 = vld [vmem:[%s632 + $0x9c] sm:$0x1]
      %v6672 = vld [vmem:[%s632 + $0xb0] sm:$0x1]
      %v6673 = vld [vmem:[%s632 + $0xc4] sm:$0x1]
      %v6674 = vld [vmem:[%s632 + $0xd8] sm:$0x1]
      %v6675 = vld [vmem:[%s632 + $0xec] sm:$0x1]
      %v6676 = vld [vmem:[%s632 + $0x100] sm:$0x1]
      %v6677 = vld [vmem:[%s632 + $0x114] sm:$0x1]
      %v6678 = vld [vmem:[%s632 + $0x128] sm:$0x1]
      %v6679 = vld [vmem:[%s632 + $0x13c] sm:$0x1]
      %v6728 = vunpack.c.l.b16 %v6488
      %v6729 = vunpack.c.l.b16 %v6489
      %v6730 = vunpack.c.l.b16 %v6490
      %v6731 = vunpack.c.l.b16 %v6491
      %v6732 = vunpack.c.l.b16 %v6492
      %v6733 = vunpack.c.l.b16 %v6493
      %v6734 = vunpack.c.l.b16 %v6494
      %v6735 = vunpack.c.l.b16 %v6495
      %v6736 = vunpack.c.l.b16 %v6496
      %v6737 = vunpack.c.l.b16 %v6497
      %v6738 = vunpack.c.l.b16 %v6498
      %v6739 = vunpack.c.l.b16 %v6499
      %v6740 = vunpack.c.l.b16 %v6500
      %v6741 = vunpack.c.l.b16 %v6501
      %v6742 = vunpack.c.l.b16 %v6502
      %v6743 = vunpack.c.l.b16 %v6503
      %v6744 = vunpack.c.l.b16 %v6504
      %v6745 = vunpack.c.l.b16 %v6505
      %v6746 = vunpack.c.l.b16 %v6506
      %v6747 = vunpack.c.l.b16 %v6507
      %v6748 = vunpack.c.l.b16 %v6508
      %v6749 = vunpack.c.l.b16 %v6509
      %v6750 = vunpack.c.l.b16 %v6510
      %v6751 = vunpack.c.l.b16 %v6511
      %v6752 = vunpack.c.l.b16 %v6512
      %v6753 = vunpack.c.l.b16 %v6513
      %v6754 = vunpack.c.l.b16 %v6514
      %v6755 = vunpack.c.l.b16 %v6515
      %v6756 = vunpack.c.l.b16 %v6516
      %v6757 = vunpack.c.l.b16 %v6517
      %v6758 = vunpack.c.l.b16 %v6518
      %v6759 = vunpack.c.l.b16 %v6519
      %v6760 = vunpack.c.l.b16 %v6520
      %v6761 = vunpack.c.l.b16 %v6521
      %v6762 = vunpack.c.l.b16 %v6522
      %v6763 = vunpack.c.l.b16 %v6523
      %v6764 = vunpack.c.l.b16 %v6524
      %v6765 = vunpack.c.l.b16 %v6525
      %v6766 = vunpack.c.l.b16 %v6526
      %v6767 = vunpack.c.l.b16 %v6527
      %v6768 = vunpack.c.l.b16 %v6528
      %v6769 = vunpack.c.l.b16 %v6529
      %v6770 = vunpack.c.l.b16 %v6530
      %v6771 = vunpack.c.l.b16 %v6531
      %v6772 = vunpack.c.l.b16 %v6532
      %v6773 = vunpack.c.l.b16 %v6533
      %v6774 = vunpack.c.l.b16 %v6534
      %v6775 = vunpack.c.l.b16 %v6535
      %v6776 = vpack.c.b16 %v6729, %v6728
      %v6777 = vpack.c.b16 %v6730, %v6730
      %v6778 = vpack.c.b16 %v6732, %v6731
      %v6779 = vpack.c.b16 %v6733, %v6733
      %v6780 = vpack.c.b16 %v6735, %v6734
      %v6781 = vpack.c.b16 %v6736, %v6736
      %v6782 = vpack.c.b16 %v6738, %v6737
      %v6783 = vpack.c.b16 %v6739, %v6739
      %v6784 = vpack.c.b16 %v6741, %v6740
      %v6785 = vpack.c.b16 %v6742, %v6742
      %v6786 = vpack.c.b16 %v6744, %v6743
      %v6787 = vpack.c.b16 %v6745, %v6745
      %v6788 = vpack.c.b16 %v6747, %v6746
      %v6789 = vpack.c.b16 %v6748, %v6748
      %v6790 = vpack.c.b16 %v6750, %v6749
      %v6791 = vpack.c.b16 %v6751, %v6751
      %v6792 = vpack.c.b16 %v6753, %v6752
      %v6793 = vpack.c.b16 %v6754, %v6754
      %v6794 = vpack.c.b16 %v6756, %v6755
      %v6795 = vpack.c.b16 %v6757, %v6757
      %v6796 = vpack.c.b16 %v6759, %v6758
      %v6797 = vpack.c.b16 %v6760, %v6760
      %v6798 = vpack.c.b16 %v6762, %v6761
      %v6799 = vpack.c.b16 %v6763, %v6763
      %v6800 = vpack.c.b16 %v6765, %v6764
      %v6801 = vpack.c.b16 %v6766, %v6766
      %v6802 = vpack.c.b16 %v6768, %v6767
      %v6803 = vpack.c.b16 %v6769, %v6769
      %v6804 = vpack.c.b16 %v6771, %v6770
      %v6805 = vpack.c.b16 %v6772, %v6772
      %v6806 = vpack.c.b16 %v6774, %v6773
      %v6807 = vpack.c.b16 %v6775, %v6775
      %v6808 = vpack.c.b16 %v6730, %v6729
      %v6809 = vpack.c.b16 %v6733, %v6732
      %v6810 = vpack.c.b16 %v6736, %v6735
      %v6811 = vpack.c.b16 %v6739, %v6738
      %v6812 = vpack.c.b16 %v6742, %v6741
      %v6813 = vpack.c.b16 %v6745, %v6744
      %v6814 = vpack.c.b16 %v6748, %v6747
      %v6815 = vpack.c.b16 %v6751, %v6750
      %v6816 = vpack.c.b16 %v6754, %v6753
      %v6817 = vpack.c.b16 %v6757, %v6756
      %v6818 = vpack.c.b16 %v6760, %v6759
      %v6819 = vpack.c.b16 %v6763, %v6762
      %v6820 = vpack.c.b16 %v6766, %v6765
      %v6821 = vpack.c.b16 %v6769, %v6768
      %v6822 = vpack.c.b16 %v6772, %v6771
      %v6823 = vpack.c.b16 %v6775, %v6774
      %v6825 = vshrl.u32 %v6808, 16
      %v6827 = vrot.slane %v6825, 4
      %v6828 = vshll.u32 %v6808, 16
      %v6830 = vrot.slane %v6828, 5
      %v6831 = vor.u32 %v6827, %v6830
      %v6833 = vshrl.u32 %v6809, 16
      %v6835 = vrot.slane %v6833, 4
      %v6836 = vshll.u32 %v6809, 16
      %v6838 = vrot.slane %v6836, 5
      %v6839 = vor.u32 %v6835, %v6838
      %v6841 = vshrl.u32 %v6810, 16
      %v6843 = vrot.slane %v6841, 4
      %v6844 = vshll.u32 %v6810, 16
      %v6846 = vrot.slane %v6844, 5
      %v6847 = vor.u32 %v6843, %v6846
      %v6849 = vshrl.u32 %v6811, 16
      %v6851 = vrot.slane %v6849, 4
      %v6852 = vshll.u32 %v6811, 16
      %v6854 = vrot.slane %v6852, 5
      %v6855 = vor.u32 %v6851, %v6854
      %v6857 = vshrl.u32 %v6812, 16
      %v6859 = vrot.slane %v6857, 4
      %v6860 = vshll.u32 %v6812, 16
      %v6862 = vrot.slane %v6860, 5
      %v6863 = vor.u32 %v6859, %v6862
      %v6865 = vshrl.u32 %v6813, 16
      %v6867 = vrot.slane %v6865, 4
      %v6868 = vshll.u32 %v6813, 16
      %v6870 = vrot.slane %v6868, 5
      %v6871 = vor.u32 %v6867, %v6870
      %v6873 = vshrl.u32 %v6814, 16
      %v6875 = vrot.slane %v6873, 4
      %v6876 = vshll.u32 %v6814, 16
      %v6878 = vrot.slane %v6876, 5
      %v6879 = vor.u32 %v6875, %v6878
      %v6881 = vshrl.u32 %v6815, 16
      %v6883 = vrot.slane %v6881, 4
      %v6884 = vshll.u32 %v6815, 16
      %v6886 = vrot.slane %v6884, 5
      %v6887 = vor.u32 %v6883, %v6886
      %v6889 = vshrl.u32 %v6816, 16
      %v6891 = vrot.slane %v6889, 4
      %v6892 = vshll.u32 %v6816, 16
      %v6894 = vrot.slane %v6892, 5
      %v6895 = vor.u32 %v6891, %v6894
      %v6897 = vshrl.u32 %v6817, 16
      %v6899 = vrot.slane %v6897, 4
      %v6900 = vshll.u32 %v6817, 16
      %v6902 = vrot.slane %v6900, 5
      %v6903 = vor.u32 %v6899, %v6902
      %v6905 = vshrl.u32 %v6818, 16
      %v6907 = vrot.slane %v6905, 4
      %v6908 = vshll.u32 %v6818, 16
      %v6910 = vrot.slane %v6908, 5
      %v6911 = vor.u32 %v6907, %v6910
      %v6913 = vshrl.u32 %v6819, 16
      %v6915 = vrot.slane %v6913, 4
      %v6916 = vshll.u32 %v6819, 16
      %v6918 = vrot.slane %v6916, 5
      %v6919 = vor.u32 %v6915, %v6918
      %v6921 = vshrl.u32 %v6820, 16
      %v6923 = vrot.slane %v6921, 4
      %v6924 = vshll.u32 %v6820, 16
      %v6926 = vrot.slane %v6924, 5
      %v6927 = vor.u32 %v6923, %v6926
      %v6929 = vshrl.u32 %v6821, 16
      %v6931 = vrot.slane %v6929, 4
      %v6932 = vshll.u32 %v6821, 16
      %v6934 = vrot.slane %v6932, 5
      %v6935 = vor.u32 %v6931, %v6934
      %v6937 = vshrl.u32 %v6822, 16
      %v6939 = vrot.slane %v6937, 4
      %v6940 = vshll.u32 %v6822, 16
      %v6942 = vrot.slane %v6940, 5
      %v6943 = vor.u32 %v6939, %v6942
      %v6945 = vshrl.u32 %v6823, 16
      %v6947 = vrot.slane %v6945, 4
      %v6948 = vshll.u32 %v6823, 16
      %v6950 = vrot.slane %v6948, 5
      %v6951 = vor.u32 %v6947, %v6950
      %6952 = vrot.lane.b32.xlu0 %v6831, 8
      %v6953 = vpop.permute.xlu0 %6952
      %6954 = vrot.lane.b32.xlu0 %v6839, 8
      %v6955 = vpop.permute.xlu0 %6954
      %6956 = vrot.lane.b32.xlu0 %v6847, 8
      %v6957 = vpop.permute.xlu0 %6956
      %6958 = vrot.lane.b32.xlu0 %v6855, 8
      %v6959 = vpop.permute.xlu0 %6958
      %6960 = vrot.lane.b32.xlu0 %v6863, 8
      %v6961 = vpop.permute.xlu0 %6960
      %6962 = vrot.lane.b32.xlu0 %v6871, 8
      %v6963 = vpop.permute.xlu0 %6962
      %6964 = vrot.lane.b32.xlu0 %v6879, 8
      %v6965 = vpop.permute.xlu0 %6964
      %6966 = vrot.lane.b32.xlu0 %v6887, 8
      %v6967 = vpop.permute.xlu0 %6966
      %6968 = vrot.lane.b32.xlu0 %v6895, 8
      %v6969 = vpop.permute.xlu0 %6968
      %6970 = vrot.lane.b32.xlu0 %v6903, 8
      %v6971 = vpop.permute.xlu0 %6970
      %6972 = vrot.lane.b32.xlu0 %v6911, 8
      %v6973 = vpop.permute.xlu0 %6972
      %6974 = vrot.lane.b32.xlu0 %v6919, 8
      %v6975 = vpop.permute.xlu0 %6974
      %6976 = vrot.lane.b32.xlu0 %v6927, 8
      %v6977 = vpop.permute.xlu0 %6976
      %6978 = vrot.lane.b32.xlu0 %v6935, 8
      %v6979 = vpop.permute.xlu0 %6978
      %6980 = vrot.lane.b32.xlu0 %v6943, 8
      %v6981 = vpop.permute.xlu0 %6980
      %6982 = vrot.lane.b32.xlu0 %v6951, 8
      %v6983 = vpop.permute.xlu0 %6982
      %v7000 = vunpack.c.l.b16 %v6536
      %v7001 = vunpack.c.l.b16 %v6537
      %v7002 = vunpack.c.l.b16 %v6538
      %v7003 = vunpack.c.l.b16 %v6539
      %v7004 = vunpack.c.l.b16 %v6540
      %v7005 = vunpack.c.l.b16 %v6541
      %v7006 = vunpack.c.l.b16 %v6542
      %v7007 = vunpack.c.l.b16 %v6543
      %v7008 = vunpack.c.l.b16 %v6544
      %v7009 = vunpack.c.l.b16 %v6545
      %v7010 = vunpack.c.l.b16 %v6546
      %v7011 = vunpack.c.l.b16 %v6547
      %v7012 = vunpack.c.l.b16 %v6548
      %v7013 = vunpack.c.l.b16 %v6549
      %v7014 = vunpack.c.l.b16 %v6550
      %v7015 = vunpack.c.l.b16 %v6551
      %v7016 = vpack.c.b16 %v7000, %v7000
      %v7017 = vpack.c.b16 %v7001, %v7001
      %v7018 = vpack.c.b16 %v7002, %v7002
      %v7019 = vpack.c.b16 %v7003, %v7003
      %v7020 = vpack.c.b16 %v7004, %v7004
      %v7021 = vpack.c.b16 %v7005, %v7005
      %v7022 = vpack.c.b16 %v7006, %v7006
      %v7023 = vpack.c.b16 %v7007, %v7007
      %v7024 = vpack.c.b16 %v7008, %v7008
      %v7025 = vpack.c.b16 %v7009, %v7009
      %v7026 = vpack.c.b16 %v7010, %v7010
      %v7027 = vpack.c.b16 %v7011, %v7011
      %v7028 = vpack.c.b16 %v7012, %v7012
      %v7029 = vpack.c.b16 %v7013, %v7013
      %v7030 = vpack.c.b16 %v7014, %v7014
      %v7031 = vpack.c.b16 %v7015, %v7015
      %v7032 = vrot.slane %v6808, 5
      %v7033 = vrot.slane %v7016, 5
      %v7034 = vsel %vm1049, %v7032, %v7033
      %v7035 = vrot.slane %v6809, 5
      %v7036 = vrot.slane %v7017, 5
      %v7037 = vsel %vm1049, %v7035, %v7036
      %v7038 = vrot.slane %v6810, 5
      %v7039 = vrot.slane %v7018, 5
      %v7040 = vsel %vm1049, %v7038, %v7039
      %v7041 = vrot.slane %v6811, 5
      %v7042 = vrot.slane %v7019, 5
      %v7043 = vsel %vm1049, %v7041, %v7042
      %v7044 = vrot.slane %v6812, 5
      %v7045 = vrot.slane %v7020, 5
      %v7046 = vsel %vm1049, %v7044, %v7045
      %v7047 = vrot.slane %v6813, 5
      %v7048 = vrot.slane %v7021, 5
      %v7049 = vsel %vm1049, %v7047, %v7048
      %v7050 = vrot.slane %v6814, 5
      %v7051 = vrot.slane %v7022, 5
      %v7052 = vsel %vm1049, %v7050, %v7051
      %v7053 = vrot.slane %v6815, 5
      %v7054 = vrot.slane %v7023, 5
      %v7055 = vsel %vm1049, %v7053, %v7054
      %v7056 = vrot.slane %v6816, 5
      %v7057 = vrot.slane %v7024, 5
      %v7058 = vsel %vm1049, %v7056, %v7057
      %v7059 = vrot.slane %v6817, 5
      %v7060 = vrot.slane %v7025, 5
      %v7061 = vsel %vm1049, %v7059, %v7060
      %v7062 = vrot.slane %v6818, 5
      %v7063 = vrot.slane %v7026, 5
      %v7064 = vsel %vm1049, %v7062, %v7063
      %v7065 = vrot.slane %v6819, 5
      %v7066 = vrot.slane %v7027, 5
      %v7067 = vsel %vm1049, %v7065, %v7066
      %v7068 = vrot.slane %v6820, 5
      %v7069 = vrot.slane %v7028, 5
      %v7070 = vsel %vm1049, %v7068, %v7069
      %v7071 = vrot.slane %v6821, 5
      %v7072 = vrot.slane %v7029, 5
      %v7073 = vsel %vm1049, %v7071, %v7072
      %v7074 = vrot.slane %v6822, 5
      %v7075 = vrot.slane %v7030, 5
      %v7076 = vsel %vm1049, %v7074, %v7075
      %v7077 = vrot.slane %v6823, 5
      %v7078 = vrot.slane %v7031, 5
      %v7079 = vsel %vm1049, %v7077, %v7078
      %7080 = vrot.lane.b32.xlu0 %v7032, 16
      %v7081 = vpop.permute.xlu0 %7080
      %7082 = vrot.lane.b32.xlu0 %v7034, 16
      %v7083 = vpop.permute.xlu0 %7082
      %7084 = vrot.lane.b32.xlu0 %v7035, 16
      %v7085 = vpop.permute.xlu0 %7084
      %7086 = vrot.lane.b32.xlu0 %v7037, 16
      %v7087 = vpop.permute.xlu0 %7086
      %7088 = vrot.lane.b32.xlu0 %v7038, 16
      %v7089 = vpop.permute.xlu0 %7088
      %7090 = vrot.lane.b32.xlu0 %v7040, 16
      %v7091 = vpop.permute.xlu0 %7090
      %7092 = vrot.lane.b32.xlu0 %v7041, 16
      %v7093 = vpop.permute.xlu0 %7092
      %7094 = vrot.lane.b32.xlu0 %v7043, 16
      %v7095 = vpop.permute.xlu0 %7094
      %7096 = vrot.lane.b32.xlu0 %v7044, 16
      %v7097 = vpop.permute.xlu0 %7096
      %7098 = vrot.lane.b32.xlu0 %v7046, 16
      %v7099 = vpop.permute.xlu0 %7098
      %7100 = vrot.lane.b32.xlu0 %v7047, 16
      %v7101 = vpop.permute.xlu0 %7100
      %7102 = vrot.lane.b32.xlu0 %v7049, 16
      %v7103 = vpop.permute.xlu0 %7102
      %7104 = vrot.lane.b32.xlu0 %v7050, 16
      %v7105 = vpop.permute.xlu0 %7104
      %7106 = vrot.lane.b32.xlu0 %v7052, 16
      %v7107 = vpop.permute.xlu0 %7106
      %7108 = vrot.lane.b32.xlu0 %v7053, 16
      %v7109 = vpop.permute.xlu0 %7108
      %7110 = vrot.lane.b32.xlu0 %v7055, 16
      %v7111 = vpop.permute.xlu0 %7110
      %7112 = vrot.lane.b32.xlu0 %v7056, 16
      %v7113 = vpop.permute.xlu0 %7112
      %7114 = vrot.lane.b32.xlu0 %v7058, 16
      %v7115 = vpop.permute.xlu0 %7114
      %7116 = vrot.lane.b32.xlu0 %v7059, 16
      %v7117 = vpop.permute.xlu0 %7116
      %7118 = vrot.lane.b32.xlu0 %v7061, 16
      %v7119 = vpop.permute.xlu0 %7118
      %7120 = vrot.lane.b32.xlu0 %v7062, 16
      %v7121 = vpop.permute.xlu0 %7120
      %7122 = vrot.lane.b32.xlu0 %v7064, 16
      %v7123 = vpop.permute.xlu0 %7122
      %7124 = vrot.lane.b32.xlu0 %v7065, 16
      %v7125 = vpop.permute.xlu0 %7124
      %7126 = vrot.lane.b32.xlu0 %v7067, 16
      %v7127 = vpop.permute.xlu0 %7126
      %7128 = vrot.lane.b32.xlu0 %v7068, 16
      %v7129 = vpop.permute.xlu0 %7128
      %7130 = vrot.lane.b32.xlu0 %v7070, 16
      %v7131 = vpop.permute.xlu0 %7130
      %7132 = vrot.lane.b32.xlu0 %v7071, 16
      %v7133 = vpop.permute.xlu0 %7132
      %7134 = vrot.lane.b32.xlu0 %v7073, 16
      %v7135 = vpop.permute.xlu0 %7134
      %7136 = vrot.lane.b32.xlu0 %v7074, 16
      %v7137 = vpop.permute.xlu0 %7136
      %7138 = vrot.lane.b32.xlu0 %v7076, 16
      %v7139 = vpop.permute.xlu0 %7138
      %7140 = vrot.lane.b32.xlu0 %v7077, 16
      %v7141 = vpop.permute.xlu0 %7140
      %7142 = vrot.lane.b32.xlu0 %v7079, 16
      %v7143 = vpop.permute.xlu0 %7142
      %v7192 = vunpack.c.l.b16 %v6552
      %v7193 = vunpack.c.l.b16 %v6553
      %v7194 = vunpack.c.l.b16 %v6554
      %v7195 = vunpack.c.l.b16 %v6555
      %v7196 = vunpack.c.l.b16 %v6556
      %v7197 = vunpack.c.l.b16 %v6557
      %v7198 = vunpack.c.l.b16 %v6558
      %v7199 = vunpack.c.l.b16 %v6559
      %v7200 = vunpack.c.l.b16 %v6560
      %v7201 = vunpack.c.l.b16 %v6561
      %v7202 = vunpack.c.l.b16 %v6562
      %v7203 = vunpack.c.l.b16 %v6563
      %v7204 = vunpack.c.l.b16 %v6564
      %v7205 = vunpack.c.l.b16 %v6565
      %v7206 = vunpack.c.l.b16 %v6566
      %v7207 = vunpack.c.l.b16 %v6567
      %v7208 = vunpack.c.l.b16 %v6568
      %v7209 = vunpack.c.l.b16 %v6569
      %v7210 = vunpack.c.l.b16 %v6570
      %v7211 = vunpack.c.l.b16 %v6571
      %v7212 = vunpack.c.l.b16 %v6572
      %v7213 = vunpack.c.l.b16 %v6573
      %v7214 = vunpack.c.l.b16 %v6574
      %v7215 = vunpack.c.l.b16 %v6575
      %v7216 = vunpack.c.l.b16 %v6576
      %v7217 = vunpack.c.l.b16 %v6577
      %v7218 = vunpack.c.l.b16 %v6578
      %v7219 = vunpack.c.l.b16 %v6579
      %v7220 = vunpack.c.l.b16 %v6580
      %v7221 = vunpack.c.l.b16 %v6581
      %v7222 = vunpack.c.l.b16 %v6582
      %v7223 = vunpack.c.l.b16 %v6583
      %v7224 = vunpack.c.l.b16 %v6584
      %v7225 = vunpack.c.l.b16 %v6585
      %v7226 = vunpack.c.l.b16 %v6586
      %v7227 = vunpack.c.l.b16 %v6587
      %v7228 = vunpack.c.l.b16 %v6588
      %v7229 = vunpack.c.l.b16 %v6589
      %v7230 = vunpack.c.l.b16 %v6590
      %v7231 = vunpack.c.l.b16 %v6591
      %v7232 = vunpack.c.l.b16 %v6592
      %v7233 = vunpack.c.l.b16 %v6593
      %v7234 = vunpack.c.l.b16 %v6594
      %v7235 = vunpack.c.l.b16 %v6595
      %v7236 = vunpack.c.l.b16 %v6596
      %v7237 = vunpack.c.l.b16 %v6597
      %v7238 = vunpack.c.l.b16 %v6598
      %v7239 = vunpack.c.l.b16 %v6599
      %v7240 = vpack.c.b16 %v7193, %v7192
      %v7241 = vpack.c.b16 %v7194, %v7194
      %v7242 = vpack.c.b16 %v7196, %v7195
      %v7243 = vpack.c.b16 %v7197, %v7197
      %v7244 = vpack.c.b16 %v7199, %v7198
      %v7245 = vpack.c.b16 %v7200, %v7200
      %v7246 = vpack.c.b16 %v7202, %v7201
      %v7247 = vpack.c.b16 %v7203, %v7203
      %v7248 = vpack.c.b16 %v7205, %v7204
      %v7249 = vpack.c.b16 %v7206, %v7206
      %v7250 = vpack.c.b16 %v7208, %v7207
      %v7251 = vpack.c.b16 %v7209, %v7209
      %v7252 = vpack.c.b16 %v7211, %v7210
      %v7253 = vpack.c.b16 %v7212, %v7212
      %v7254 = vpack.c.b16 %v7214, %v7213
      %v7255 = vpack.c.b16 %v7215, %v7215
      %v7256 = vpack.c.b16 %v7217, %v7216
      %v7257 = vpack.c.b16 %v7218, %v7218
      %v7258 = vpack.c.b16 %v7220, %v7219
      %v7259 = vpack.c.b16 %v7221, %v7221
      %v7260 = vpack.c.b16 %v7223, %v7222
      %v7261 = vpack.c.b16 %v7224, %v7224
      %v7262 = vpack.c.b16 %v7226, %v7225
      %v7263 = vpack.c.b16 %v7227, %v7227
      %v7264 = vpack.c.b16 %v7229, %v7228
      %v7265 = vpack.c.b16 %v7230, %v7230
      %v7266 = vpack.c.b16 %v7232, %v7231
      %v7267 = vpack.c.b16 %v7233, %v7233
      %v7268 = vpack.c.b16 %v7235, %v7234
      %v7269 = vpack.c.b16 %v7236, %v7236
      %v7270 = vpack.c.b16 %v7238, %v7237
      %v7271 = vpack.c.b16 %v7239, %v7239
      %7272 = vrot.lane.b32.xlu0 %v7240, 24
      %v7273 = vpop.permute.xlu0 %7272
      %7274 = vrot.lane.b32.xlu0 %v7241, 24
      %v7275 = vpop.permute.xlu0 %7274
      %7276 = vrot.lane.b32.xlu0 %v7242, 24
      %v7277 = vpop.permute.xlu0 %7276
      %7278 = vrot.lane.b32.xlu0 %v7243, 24
      %v7279 = vpop.permute.xlu0 %7278
      %7280 = vrot.lane.b32.xlu0 %v7244, 24
      %v7281 = vpop.permute.xlu0 %7280
      %7282 = vrot.lane.b32.xlu0 %v7245, 24
      %v7283 = vpop.permute.xlu0 %7282
      %7284 = vrot.lane.b32.xlu0 %v7246, 24
      %v7285 = vpop.permute.xlu0 %7284
      %7286 = vrot.lane.b32.xlu0 %v7247, 24
      %v7287 = vpop.permute.xlu0 %7286
      %7288 = vrot.lane.b32.xlu0 %v7248, 24
      %v7289 = vpop.permute.xlu0 %7288
      %7290 = vrot.lane.b32.xlu0 %v7249, 24
      %v7291 = vpop.permute.xlu0 %7290
      %7292 = vrot.lane.b32.xlu0 %v7250, 24
      %v7293 = vpop.permute.xlu0 %7292
      %7294 = vrot.lane.b32.xlu0 %v7251, 24
      %v7295 = vpop.permute.xlu0 %7294
      %7296 = vrot.lane.b32.xlu0 %v7252, 24
      %v7297 = vpop.permute.xlu0 %7296
      %7298 = vrot.lane.b32.xlu0 %v7253, 24
      %v7299 = vpop.permute.xlu0 %7298
      %7300 = vrot.lane.b32.xlu0 %v7254, 24
      %v7301 = vpop.permute.xlu0 %7300
      %7302 = vrot.lane.b32.xlu0 %v7255, 24
      %v7303 = vpop.permute.xlu0 %7302
      %7304 = vrot.lane.b32.xlu0 %v7256, 24
      %v7305 = vpop.permute.xlu0 %7304
      %7306 = vrot.lane.b32.xlu0 %v7257, 24
      %v7307 = vpop.permute.xlu0 %7306
      %7308 = vrot.lane.b32.xlu0 %v7258, 24
      %v7309 = vpop.permute.xlu0 %7308
      %7310 = vrot.lane.b32.xlu0 %v7259, 24
      %v7311 = vpop.permute.xlu0 %7310
      %7312 = vrot.lane.b32.xlu0 %v7260, 24
      %v7313 = vpop.permute.xlu0 %7312
      %7314 = vrot.lane.b32.xlu0 %v7261, 24
      %v7315 = vpop.permute.xlu0 %7314
      %7316 = vrot.lane.b32.xlu0 %v7262, 24
      %v7317 = vpop.permute.xlu0 %7316
      %7318 = vrot.lane.b32.xlu0 %v7263, 24
      %v7319 = vpop.permute.xlu0 %7318
      %7320 = vrot.lane.b32.xlu0 %v7264, 24
      %v7321 = vpop.permute.xlu0 %7320
      %7322 = vrot.lane.b32.xlu0 %v7265, 24
      %v7323 = vpop.permute.xlu0 %7322
      %7324 = vrot.lane.b32.xlu0 %v7266, 24
      %v7325 = vpop.permute.xlu0 %7324
      %7326 = vrot.lane.b32.xlu0 %v7267, 24
      %v7327 = vpop.permute.xlu0 %7326
      %7328 = vrot.lane.b32.xlu0 %v7268, 24
      %v7329 = vpop.permute.xlu0 %7328
      %7330 = vrot.lane.b32.xlu0 %v7269, 24
      %v7331 = vpop.permute.xlu0 %7330
      %7332 = vrot.lane.b32.xlu0 %v7270, 24
      %v7333 = vpop.permute.xlu0 %7332
      %7334 = vrot.lane.b32.xlu0 %v7271, 24
      %v7335 = vpop.permute.xlu0 %7334
      %v7336 = vpack.c.b16 %v7194, %v7193
      %v7337 = vpack.c.b16 %v7197, %v7196
      %v7338 = vpack.c.b16 %v7200, %v7199
      %v7339 = vpack.c.b16 %v7203, %v7202
      %v7340 = vpack.c.b16 %v7206, %v7205
      %v7341 = vpack.c.b16 %v7209, %v7208
      %v7342 = vpack.c.b16 %v7212, %v7211
      %v7343 = vpack.c.b16 %v7215, %v7214
      %v7344 = vpack.c.b16 %v7218, %v7217
      %v7345 = vpack.c.b16 %v7221, %v7220
      %v7346 = vpack.c.b16 %v7224, %v7223
      %v7347 = vpack.c.b16 %v7227, %v7226
      %v7348 = vpack.c.b16 %v7230, %v7229
      %v7349 = vpack.c.b16 %v7233, %v7232
      %v7350 = vpack.c.b16 %v7236, %v7235
      %v7351 = vpack.c.b16 %v7239, %v7238
      %v7353 = vshrl.u32 %v7336, 16
      %v7355 = vrot.slane %v7353, 4
      %v7356 = vshll.u32 %v7336, 16
      %v7358 = vrot.slane %v7356, 5
      %v7359 = vor.u32 %v7355, %v7358
      %v7361 = vshrl.u32 %v7337, 16
      %v7363 = vrot.slane %v7361, 4
      %v7364 = vshll.u32 %v7337, 16
      %v7366 = vrot.slane %v7364, 5
      %v7367 = vor.u32 %v7363, %v7366
      %v7369 = vshrl.u32 %v7338, 16
      %v7371 = vrot.slane %v7369, 4
      %v7372 = vshll.u32 %v7338, 16
      %v7374 = vrot.slane %v7372, 5
      %v7375 = vor.u32 %v7371, %v7374
      %v7377 = vshrl.u32 %v7339, 16
      %v7379 = vrot.slane %v7377, 4
      %v7380 = vshll.u32 %v7339, 16
      %v7382 = vrot.slane %v7380, 5
      %v7383 = vor.u32 %v7379, %v7382
      %v7385 = vshrl.u32 %v7340, 16
      %v7387 = vrot.slane %v7385, 4
      %v7388 = vshll.u32 %v7340, 16
      %v7390 = vrot.slane %v7388, 5
      %v7391 = vor.u32 %v7387, %v7390
      %v7393 = vshrl.u32 %v7341, 16
      %v7395 = vrot.slane %v7393, 4
      %v7396 = vshll.u32 %v7341, 16
      %v7398 = vrot.slane %v7396, 5
      %v7399 = vor.u32 %v7395, %v7398
      %v7401 = vshrl.u32 %v7342, 16
      %v7403 = vrot.slane %v7401, 4
      %v7404 = vshll.u32 %v7342, 16
      %v7406 = vrot.slane %v7404, 5
      %v7407 = vor.u32 %v7403, %v7406
      %v7409 = vshrl.u32 %v7343, 16
      %v7411 = vrot.slane %v7409, 4
      %v7412 = vshll.u32 %v7343, 16
      %v7414 = vrot.slane %v7412, 5
      %v7415 = vor.u32 %v7411, %v7414
      %v7417 = vshrl.u32 %v7344, 16
      %v7419 = vrot.slane %v7417, 4
      %v7420 = vshll.u32 %v7344, 16
      %v7422 = vrot.slane %v7420, 5
      %v7423 = vor.u32 %v7419, %v7422
      %v7425 = vshrl.u32 %v7345, 16
      %v7427 = vrot.slane %v7425, 4
      %v7428 = vshll.u32 %v7345, 16
      %v7430 = vrot.slane %v7428, 5
      %v7431 = vor.u32 %v7427, %v7430
      %v7433 = vshrl.u32 %v7346, 16
      %v7435 = vrot.slane %v7433, 4
      %v7436 = vshll.u32 %v7346, 16
      %v7438 = vrot.slane %v7436, 5
      %v7439 = vor.u32 %v7435, %v7438
      %v7441 = vshrl.u32 %v7347, 16
      %v7443 = vrot.slane %v7441, 4
      %v7444 = vshll.u32 %v7347, 16
      %v7446 = vrot.slane %v7444, 5
      %v7447 = vor.u32 %v7443, %v7446
      %v7449 = vshrl.u32 %v7348, 16
      %v7451 = vrot.slane %v7449, 4
      %v7452 = vshll.u32 %v7348, 16
      %v7454 = vrot.slane %v7452, 5
      %v7455 = vor.u32 %v7451, %v7454
      %v7457 = vshrl.u32 %v7349, 16
      %v7459 = vrot.slane %v7457, 4
      %v7460 = vshll.u32 %v7349, 16
      %v7462 = vrot.slane %v7460, 5
      %v7463 = vor.u32 %v7459, %v7462
      %v7465 = vshrl.u32 %v7350, 16
      %v7467 = vrot.slane %v7465, 4
      %v7468 = vshll.u32 %v7350, 16
      %v7470 = vrot.slane %v7468, 5
      %v7471 = vor.u32 %v7467, %v7470
      %v7473 = vshrl.u32 %v7351, 16
      %v7475 = vrot.slane %v7473, 4
      %v7476 = vshll.u32 %v7351, 16
      %v7478 = vrot.slane %v7476, 5
      %v7479 = vor.u32 %v7475, %v7478
      %7480 = vrot.lane.b32.xlu0 %v7359, 32
      %v7481 = vpop.permute.xlu0 %7480
      %7482 = vrot.lane.b32.xlu0 %v7367, 32
      %v7483 = vpop.permute.xlu0 %7482
      %7484 = vrot.lane.b32.xlu0 %v7375, 32
      %v7485 = vpop.permute.xlu0 %7484
      %7486 = vrot.lane.b32.xlu0 %v7383, 32
      %v7487 = vpop.permute.xlu0 %7486
      %7488 = vrot.lane.b32.xlu0 %v7391, 32
      %v7489 = vpop.permute.xlu0 %7488
      %7490 = vrot.lane.b32.xlu0 %v7399, 32
      %v7491 = vpop.permute.xlu0 %7490
      %7492 = vrot.lane.b32.xlu0 %v7407, 32
      %v7493 = vpop.permute.xlu0 %7492
      %7494 = vrot.lane.b32.xlu0 %v7415, 32
      %v7495 = vpop.permute.xlu0 %7494
      %7496 = vrot.lane.b32.xlu0 %v7423, 32
      %v7497 = vpop.permute.xlu0 %7496
      %7498 = vrot.lane.b32.xlu0 %v7431, 32
      %v7499 = vpop.permute.xlu0 %7498
      %7500 = vrot.lane.b32.xlu0 %v7439, 32
      %v7501 = vpop.permute.xlu0 %7500
      %7502 = vrot.lane.b32.xlu0 %v7447, 32
      %v7503 = vpop.permute.xlu0 %7502
      %7504 = vrot.lane.b32.xlu0 %v7455, 32
      %v7505 = vpop.permute.xlu0 %7504
      %7506 = vrot.lane.b32.xlu0 %v7463, 32
      %v7507 = vpop.permute.xlu0 %7506
      %7508 = vrot.lane.b32.xlu0 %v7471, 32
      %v7509 = vpop.permute.xlu0 %7508
      %7510 = vrot.lane.b32.xlu0 %v7479, 32
      %v7511 = vpop.permute.xlu0 %7510
      %v7528 = vunpack.c.l.b16 %v6600
      %v7529 = vunpack.c.l.b16 %v6601
      %v7530 = vunpack.c.l.b16 %v6602
      %v7531 = vunpack.c.l.b16 %v6603
      %v7532 = vunpack.c.l.b16 %v6604
      %v7533 = vunpack.c.l.b16 %v6605
      %v7534 = vunpack.c.l.b16 %v6606
      %v7535 = vunpack.c.l.b16 %v6607
      %v7536 = vunpack.c.l.b16 %v6608
      %v7537 = vunpack.c.l.b16 %v6609
      %v7538 = vunpack.c.l.b16 %v6610
      %v7539 = vunpack.c.l.b16 %v6611
      %v7540 = vunpack.c.l.b16 %v6612
      %v7541 = vunpack.c.l.b16 %v6613
      %v7542 = vunpack.c.l.b16 %v6614
      %v7543 = vunpack.c.l.b16 %v6615
      %v7544 = vpack.c.b16 %v7528, %v7528
      %v7545 = vpack.c.b16 %v7529, %v7529
      %v7546 = vpack.c.b16 %v7530, %v7530
      %v7547 = vpack.c.b16 %v7531, %v7531
      %v7548 = vpack.c.b16 %v7532, %v7532
      %v7549 = vpack.c.b16 %v7533, %v7533
      %v7550 = vpack.c.b16 %v7534, %v7534
      %v7551 = vpack.c.b16 %v7535, %v7535
      %v7552 = vpack.c.b16 %v7536, %v7536
      %v7553 = vpack.c.b16 %v7537, %v7537
      %v7554 = vpack.c.b16 %v7538, %v7538
      %v7555 = vpack.c.b16 %v7539, %v7539
      %v7556 = vpack.c.b16 %v7540, %v7540
      %v7557 = vpack.c.b16 %v7541, %v7541
      %v7558 = vpack.c.b16 %v7542, %v7542
      %v7559 = vpack.c.b16 %v7543, %v7543
      %v7560 = vrot.slane %v7336, 5
      %v7561 = vrot.slane %v7544, 5
      %v7562 = vsel %vm1049, %v7560, %v7561
      %v7563 = vrot.slane %v7337, 5
      %v7564 = vrot.slane %v7545, 5
      %v7565 = vsel %vm1049, %v7563, %v7564
      %v7566 = vrot.slane %v7338, 5
      %v7567 = vrot.slane %v7546, 5
      %v7568 = vsel %vm1049, %v7566, %v7567
      %v7569 = vrot.slane %v7339, 5
      %v7570 = vrot.slane %v7547, 5
      %v7571 = vsel %vm1049, %v7569, %v7570
      %v7572 = vrot.slane %v7340, 5
      %v7573 = vrot.slane %v7548, 5
      %v7574 = vsel %vm1049, %v7572, %v7573
      %v7575 = vrot.slane %v7341, 5
      %v7576 = vrot.slane %v7549, 5
      %v7577 = vsel %vm1049, %v7575, %v7576
      %v7578 = vrot.slane %v7342, 5
      %v7579 = vrot.slane %v7550, 5
      %v7580 = vsel %vm1049, %v7578, %v7579
      %v7581 = vrot.slane %v7343, 5
      %v7582 = vrot.slane %v7551, 5
      %v7583 = vsel %vm1049, %v7581, %v7582
      %v7584 = vrot.slane %v7344, 5
      %v7585 = vrot.slane %v7552, 5
      %v7586 = vsel %vm1049, %v7584, %v7585
      %v7587 = vrot.slane %v7345, 5
      %v7588 = vrot.slane %v7553, 5
      %v7589 = vsel %vm1049, %v7587, %v7588
      %v7590 = vrot.slane %v7346, 5
      %v7591 = vrot.slane %v7554, 5
      %v7592 = vsel %vm1049, %v7590, %v7591
      %v7593 = vrot.slane %v7347, 5
      %v7594 = vrot.slane %v7555, 5
      %v7595 = vsel %vm1049, %v7593, %v7594
      %v7596 = vrot.slane %v7348, 5
      %v7597 = vrot.slane %v7556, 5
      %v7598 = vsel %vm1049, %v7596, %v7597
      %v7599 = vrot.slane %v7349, 5
      %v7600 = vrot.slane %v7557, 5
      %v7601 = vsel %vm1049, %v7599, %v7600
      %v7602 = vrot.slane %v7350, 5
      %v7603 = vrot.slane %v7558, 5
      %v7604 = vsel %vm1049, %v7602, %v7603
      %v7605 = vrot.slane %v7351, 5
      %v7606 = vrot.slane %v7559, 5
      %v7607 = vsel %vm1049, %v7605, %v7606
      %7608 = vrot.lane.b32.xlu0 %v7560, 40
      %v7609 = vpop.permute.xlu0 %7608
      %7610 = vrot.lane.b32.xlu0 %v7562, 40
      %v7611 = vpop.permute.xlu0 %7610
      %7612 = vrot.lane.b32.xlu0 %v7563, 40
      %v7613 = vpop.permute.xlu0 %7612
      %7614 = vrot.lane.b32.xlu0 %v7565, 40
      %v7615 = vpop.permute.xlu0 %7614
      %7616 = vrot.lane.b32.xlu0 %v7566, 40
      %v7617 = vpop.permute.xlu0 %7616
      %7618 = vrot.lane.b32.xlu0 %v7568, 40
      %v7619 = vpop.permute.xlu0 %7618
      %7620 = vrot.lane.b32.xlu0 %v7569, 40
      %v7621 = vpop.permute.xlu0 %7620
      %7622 = vrot.lane.b32.xlu0 %v7571, 40
      %v7623 = vpop.permute.xlu0 %7622
      %7624 = vrot.lane.b32.xlu0 %v7572, 40
      %v7625 = vpop.permute.xlu0 %7624
      %7626 = vrot.lane.b32.xlu0 %v7574, 40
      %v7627 = vpop.permute.xlu0 %7626
      %7628 = vrot.lane.b32.xlu0 %v7575, 40
      %v7629 = vpop.permute.xlu0 %7628
      %7630 = vrot.lane.b32.xlu0 %v7577, 40
      %v7631 = vpop.permute.xlu0 %7630
      %7632 = vrot.lane.b32.xlu0 %v7578, 40
      %v7633 = vpop.permute.xlu0 %7632
      %7634 = vrot.lane.b32.xlu0 %v7580, 40
      %v7635 = vpop.permute.xlu0 %7634
      %7636 = vrot.lane.b32.xlu0 %v7581, 40
      %v7637 = vpop.permute.xlu0 %7636
      %7638 = vrot.lane.b32.xlu0 %v7583, 40
      %v7639 = vpop.permute.xlu0 %7638
      %7640 = vrot.lane.b32.xlu0 %v7584, 40
      %v7641 = vpop.permute.xlu0 %7640
      %7642 = vrot.lane.b32.xlu0 %v7586, 40
      %v7643 = vpop.permute.xlu0 %7642
      %7644 = vrot.lane.b32.xlu0 %v7587, 40
      %v7645 = vpop.permute.xlu0 %7644
      %7646 = vrot.lane.b32.xlu0 %v7589, 40
      %v7647 = vpop.permute.xlu0 %7646
      %7648 = vrot.lane.b32.xlu0 %v7590, 40
      %v7649 = vpop.permute.xlu0 %7648
      %7650 = vrot.lane.b32.xlu0 %v7592, 40
      %v7651 = vpop.permute.xlu0 %7650
      %7652 = vrot.lane.b32.xlu0 %v7593, 40
      %v7653 = vpop.permute.xlu0 %7652
      %7654 = vrot.lane.b32.xlu0 %v7595, 40
      %v7655 = vpop.permute.xlu0 %7654
      %7656 = vrot.lane.b32.xlu0 %v7596, 40
      %v7657 = vpop.permute.xlu0 %7656
      %7658 = vrot.lane.b32.xlu0 %v7598, 40
      %v7659 = vpop.permute.xlu0 %7658
      %7660 = vrot.lane.b32.xlu0 %v7599, 40
      %v7661 = vpop.permute.xlu0 %7660
      %7662 = vrot.lane.b32.xlu0 %v7601, 40
      %v7663 = vpop.permute.xlu0 %7662
      %7664 = vrot.lane.b32.xlu0 %v7602, 40
      %v7665 = vpop.permute.xlu0 %7664
      %7666 = vrot.lane.b32.xlu0 %v7604, 40
      %v7667 = vpop.permute.xlu0 %7666
      %7668 = vrot.lane.b32.xlu0 %v7605, 40
      %v7669 = vpop.permute.xlu0 %7668
      %7670 = vrot.lane.b32.xlu0 %v7607, 40
      %v7671 = vpop.permute.xlu0 %7670
      %v7720 = vunpack.c.l.b16 %v6616
      %v7721 = vunpack.c.l.b16 %v6617
      %v7722 = vunpack.c.l.b16 %v6618
      %v7723 = vunpack.c.l.b16 %v6619
      %v7724 = vunpack.c.l.b16 %v6620
      %v7725 = vunpack.c.l.b16 %v6621
      %v7726 = vunpack.c.l.b16 %v6622
      %v7727 = vunpack.c.l.b16 %v6623
      %v7728 = vunpack.c.l.b16 %v6624
      %v7729 = vunpack.c.l.b16 %v6625
      %v7730 = vunpack.c.l.b16 %v6626
      %v7731 = vunpack.c.l.b16 %v6627
      %v7732 = vunpack.c.l.b16 %v6628
      %v7733 = vunpack.c.l.b16 %v6629
      %v7734 = vunpack.c.l.b16 %v6630
      %v7735 = vunpack.c.l.b16 %v6631
      %v7736 = vunpack.c.l.b16 %v6632
      %v7737 = vunpack.c.l.b16 %v6633
      %v7738 = vunpack.c.l.b16 %v6634
      %v7739 = vunpack.c.l.b16 %v6635
      %v7740 = vunpack.c.l.b16 %v6636
      %v7741 = vunpack.c.l.b16 %v6637
      %v7742 = vunpack.c.l.b16 %v6638
      %v7743 = vunpack.c.l.b16 %v6639
      %v7744 = vunpack.c.l.b16 %v6640
      %v7745 = vunpack.c.l.b16 %v6641
      %v7746 = vunpack.c.l.b16 %v6642
      %v7747 = vunpack.c.l.b16 %v6643
      %v7748 = vunpack.c.l.b16 %v6644
      %v7749 = vunpack.c.l.b16 %v6645
      %v7750 = vunpack.c.l.b16 %v6646
      %v7751 = vunpack.c.l.b16 %v6647
      %v7752 = vunpack.c.l.b16 %v6648
      %v7753 = vunpack.c.l.b16 %v6649
      %v7754 = vunpack.c.l.b16 %v6650
      %v7755 = vunpack.c.l.b16 %v6651
      %v7756 = vunpack.c.l.b16 %v6652
      %v7757 = vunpack.c.l.b16 %v6653
      %v7758 = vunpack.c.l.b16 %v6654
      %v7759 = vunpack.c.l.b16 %v6655
      %v7760 = vunpack.c.l.b16 %v6656
      %v7761 = vunpack.c.l.b16 %v6657
      %v7762 = vunpack.c.l.b16 %v6658
      %v7763 = vunpack.c.l.b16 %v6659
      %v7764 = vunpack.c.l.b16 %v6660
      %v7765 = vunpack.c.l.b16 %v6661
      %v7766 = vunpack.c.l.b16 %v6662
      %v7767 = vunpack.c.l.b16 %v6663
      %v7768 = vpack.c.b16 %v7721, %v7720
      %v7769 = vpack.c.b16 %v7722, %v7722
      %v7770 = vpack.c.b16 %v7724, %v7723
      %v7771 = vpack.c.b16 %v7725, %v7725
      %v7772 = vpack.c.b16 %v7727, %v7726
      %v7773 = vpack.c.b16 %v7728, %v7728
      %v7774 = vpack.c.b16 %v7730, %v7729
      %v7775 = vpack.c.b16 %v7731, %v7731
      %v7776 = vpack.c.b16 %v7733, %v7732
      %v7777 = vpack.c.b16 %v7734, %v7734
      %v7778 = vpack.c.b16 %v7736, %v7735
      %v7779 = vpack.c.b16 %v7737, %v7737
      %v7780 = vpack.c.b16 %v7739, %v7738
      %v7781 = vpack.c.b16 %v7740, %v7740
      %v7782 = vpack.c.b16 %v7742, %v7741
      %v7783 = vpack.c.b16 %v7743, %v7743
      %v7784 = vpack.c.b16 %v7745, %v7744
      %v7785 = vpack.c.b16 %v7746, %v7746
      %v7786 = vpack.c.b16 %v7748, %v7747
      %v7787 = vpack.c.b16 %v7749, %v7749
      %v7788 = vpack.c.b16 %v7751, %v7750
      %v7789 = vpack.c.b16 %v7752, %v7752
      %v7790 = vpack.c.b16 %v7754, %v7753
      %v7791 = vpack.c.b16 %v7755, %v7755
      %v7792 = vpack.c.b16 %v7757, %v7756
      %v7793 = vpack.c.b16 %v7758, %v7758
      %v7794 = vpack.c.b16 %v7760, %v7759
      %v7795 = vpack.c.b16 %v7761, %v7761
      %v7796 = vpack.c.b16 %v7763, %v7762
      %v7797 = vpack.c.b16 %v7764, %v7764
      %v7798 = vpack.c.b16 %v7766, %v7765
      %v7799 = vpack.c.b16 %v7767, %v7767
      %7800 = vrot.lane.b32.xlu0 %v7768, 48
      %v7801 = vpop.permute.xlu0 %7800
      %7802 = vrot.lane.b32.xlu0 %v7769, 48
      %v7803 = vpop.permute.xlu0 %7802
      %7804 = vrot.lane.b32.xlu0 %v7770, 48
      %v7805 = vpop.permute.xlu0 %7804
      %7806 = vrot.lane.b32.xlu0 %v7771, 48
      %v7807 = vpop.permute.xlu0 %7806
      %7808 = vrot.lane.b32.xlu0 %v7772, 48
      %v7809 = vpop.permute.xlu0 %7808
      %7810 = vrot.lane.b32.xlu0 %v7773, 48
      %v7811 = vpop.permute.xlu0 %7810
      %7812 = vrot.lane.b32.xlu0 %v7774, 48
      %v7813 = vpop.permute.xlu0 %7812
      %7814 = vrot.lane.b32.xlu0 %v7775, 48
      %v7815 = vpop.permute.xlu0 %7814
      %7816 = vrot.lane.b32.xlu0 %v7776, 48
      %v7817 = vpop.permute.xlu0 %7816
      %7818 = vrot.lane.b32.xlu0 %v7777, 48
      %v7819 = vpop.permute.xlu0 %7818
      %7820 = vrot.lane.b32.xlu0 %v7778, 48
      %v7821 = vpop.permute.xlu0 %7820
      %7822 = vrot.lane.b32.xlu0 %v7779, 48
      %v7823 = vpop.permute.xlu0 %7822
      %7824 = vrot.lane.b32.xlu0 %v7780, 48
      %v7825 = vpop.permute.xlu0 %7824
      %7826 = vrot.lane.b32.xlu0 %v7781, 48
      %v7827 = vpop.permute.xlu0 %7826
      %7828 = vrot.lane.b32.xlu0 %v7782, 48
      %v7829 = vpop.permute.xlu0 %7828
      %7830 = vrot.lane.b32.xlu0 %v7783, 48
      %v7831 = vpop.permute.xlu0 %7830
      %7832 = vrot.lane.b32.xlu0 %v7784, 48
      %v7833 = vpop.permute.xlu0 %7832
      %7834 = vrot.lane.b32.xlu0 %v7785, 48
      %v7835 = vpop.permute.xlu0 %7834
      %7836 = vrot.lane.b32.xlu0 %v7786, 48
      %v7837 = vpop.permute.xlu0 %7836
      %7838 = vrot.lane.b32.xlu0 %v7787, 48
      %v7839 = vpop.permute.xlu0 %7838
      %7840 = vrot.lane.b32.xlu0 %v7788, 48
      %v7841 = vpop.permute.xlu0 %7840
      %7842 = vrot.lane.b32.xlu0 %v7789, 48
      %v7843 = vpop.permute.xlu0 %7842
      %7844 = vrot.lane.b32.xlu0 %v7790, 48
      %v7845 = vpop.permute.xlu0 %7844
      %7846 = vrot.lane.b32.xlu0 %v7791, 48
      %v7847 = vpop.permute.xlu0 %7846
      %7848 = vrot.lane.b32.xlu0 %v7792, 48
      %v7849 = vpop.permute.xlu0 %7848
      %7850 = vrot.lane.b32.xlu0 %v7793, 48
      %v7851 = vpop.permute.xlu0 %7850
      %7852 = vrot.lane.b32.xlu0 %v7794, 48
      %v7853 = vpop.permute.xlu0 %7852
      %7854 = vrot.lane.b32.xlu0 %v7795, 48
      %v7855 = vpop.permute.xlu0 %7854
      %7856 = vrot.lane.b32.xlu0 %v7796, 48
      %v7857 = vpop.permute.xlu0 %7856
      %7858 = vrot.lane.b32.xlu0 %v7797, 48
      %v7859 = vpop.permute.xlu0 %7858
      %7860 = vrot.lane.b32.xlu0 %v7798, 48
      %v7861 = vpop.permute.xlu0 %7860
      %7862 = vrot.lane.b32.xlu0 %v7799, 48
      %v7863 = vpop.permute.xlu0 %7862
      %v7864 = vpack.c.b16 %v7722, %v7721
      %v7865 = vpack.c.b16 %v7725, %v7724
      %v7866 = vpack.c.b16 %v7728, %v7727
      %v7867 = vpack.c.b16 %v7731, %v7730
      %v7868 = vpack.c.b16 %v7734, %v7733
      %v7869 = vpack.c.b16 %v7737, %v7736
      %v7870 = vpack.c.b16 %v7740, %v7739
      %v7871 = vpack.c.b16 %v7743, %v7742
      %v7872 = vpack.c.b16 %v7746, %v7745
      %v7873 = vpack.c.b16 %v7749, %v7748
      %v7874 = vpack.c.b16 %v7752, %v7751
      %v7875 = vpack.c.b16 %v7755, %v7754
      %v7876 = vpack.c.b16 %v7758, %v7757
      %v7877 = vpack.c.b16 %v7761, %v7760
      %v7878 = vpack.c.b16 %v7764, %v7763
      %v7879 = vpack.c.b16 %v7767, %v7766
      %v7881 = vshrl.u32 %v7864, 16
      %v7883 = vrot.slane %v7881, 4
      %v7884 = vshll.u32 %v7864, 16
      %v7886 = vrot.slane %v7884, 5
      %v7887 = vor.u32 %v7883, %v7886
      %v7889 = vshrl.u32 %v7865, 16
      %v7891 = vrot.slane %v7889, 4
      %v7892 = vshll.u32 %v7865, 16
      %v7894 = vrot.slane %v7892, 5
      %v7895 = vor.u32 %v7891, %v7894
      %v7897 = vshrl.u32 %v7866, 16
      %v7899 = vrot.slane %v7897, 4
      %v7900 = vshll.u32 %v7866, 16
      %v7902 = vrot.slane %v7900, 5
      %v7903 = vor.u32 %v7899, %v7902
      %v7905 = vshrl.u32 %v7867, 16
      %v7907 = vrot.slane %v7905, 4
      %v7908 = vshll.u32 %v7867, 16
      %v7910 = vrot.slane %v7908, 5
      %v7911 = vor.u32 %v7907, %v7910
      %v7913 = vshrl.u32 %v7868, 16
      %v7915 = vrot.slane %v7913, 4
      %v7916 = vshll.u32 %v7868, 16
      %v7918 = vrot.slane %v7916, 5
      %v7919 = vor.u32 %v7915, %v7918
      %v7921 = vshrl.u32 %v7869, 16
      %v7923 = vrot.slane %v7921, 4
      %v7924 = vshll.u32 %v7869, 16
      %v7926 = vrot.slane %v7924, 5
      %v7927 = vor.u32 %v7923, %v7926
      %v7929 = vshrl.u32 %v7870, 16
      %v7931 = vrot.slane %v7929, 4
      %v7932 = vshll.u32 %v7870, 16
      %v7934 = vrot.slane %v7932, 5
      %v7935 = vor.u32 %v7931, %v7934
      %v7937 = vshrl.u32 %v7871, 16
      %v7939 = vrot.slane %v7937, 4
      %v7940 = vshll.u32 %v7871, 16
      %v7942 = vrot.slane %v7940, 5
      %v7943 = vor.u32 %v7939, %v7942
      %v7945 = vshrl.u32 %v7872, 16
      %v7947 = vrot.slane %v7945, 4
      %v7948 = vshll.u32 %v7872, 16
      %v7950 = vrot.slane %v7948, 5
      %v7951 = vor.u32 %v7947, %v7950
      %v7953 = vshrl.u32 %v7873, 16
      %v7955 = vrot.slane %v7953, 4
      %v7956 = vshll.u32 %v7873, 16
      %v7958 = vrot.slane %v7956, 5
      %v7959 = vor.u32 %v7955, %v7958
      %v7961 = vshrl.u32 %v7874, 16
      %v7963 = vrot.slane %v7961, 4
      %v7964 = vshll.u32 %v7874, 16
      %v7966 = vrot.slane %v7964, 5
      %v7967 = vor.u32 %v7963, %v7966
      %v7969 = vshrl.u32 %v7875, 16
      %v7971 = vrot.slane %v7969, 4
      %v7972 = vshll.u32 %v7875, 16
      %v7974 = vrot.slane %v7972, 5
      %v7975 = vor.u32 %v7971, %v7974
      %v7977 = vshrl.u32 %v7876, 16
      %v7979 = vrot.slane %v7977, 4
      %v7980 = vshll.u32 %v7876, 16
      %v7982 = vrot.slane %v7980, 5
      %v7983 = vor.u32 %v7979, %v7982
      %v7985 = vshrl.u32 %v7877, 16
      %v7987 = vrot.slane %v7985, 4
      %v7988 = vshll.u32 %v7877, 16
      %v7990 = vrot.slane %v7988, 5
      %v7991 = vor.u32 %v7987, %v7990
      %v7993 = vshrl.u32 %v7878, 16
      %v7995 = vrot.slane %v7993, 4
      %v7996 = vshll.u32 %v7878, 16
      %v7998 = vrot.slane %v7996, 5
      %v7999 = vor.u32 %v7995, %v7998
      %v8001 = vshrl.u32 %v7879, 16
      %v8003 = vrot.slane %v8001, 4
      %v8004 = vshll.u32 %v7879, 16
      %v8006 = vrot.slane %v8004, 5
      %v8007 = vor.u32 %v8003, %v8006
      %8008 = vrot.lane.b32.xlu0 %v7887, 56
      %v8009 = vpop.permute.xlu0 %8008
      %8010 = vrot.lane.b32.xlu0 %v7895, 56
      %v8011 = vpop.permute.xlu0 %8010
      %8012 = vrot.lane.b32.xlu0 %v7903, 56
      %v8013 = vpop.permute.xlu0 %8012
      %8014 = vrot.lane.b32.xlu0 %v7911, 56
      %v8015 = vpop.permute.xlu0 %8014
      %8016 = vrot.lane.b32.xlu0 %v7919, 56
      %v8017 = vpop.permute.xlu0 %8016
      %8018 = vrot.lane.b32.xlu0 %v7927, 56
      %v8019 = vpop.permute.xlu0 %8018
      %8020 = vrot.lane.b32.xlu0 %v7935, 56
      %v8021 = vpop.permute.xlu0 %8020
      %8022 = vrot.lane.b32.xlu0 %v7943, 56
      %v8023 = vpop.permute.xlu0 %8022
      %8024 = vrot.lane.b32.xlu0 %v7951, 56
      %v8025 = vpop.permute.xlu0 %8024
      %8026 = vrot.lane.b32.xlu0 %v7959, 56
      %v8027 = vpop.permute.xlu0 %8026
      %8028 = vrot.lane.b32.xlu0 %v7967, 56
      %v8029 = vpop.permute.xlu0 %8028
      %8030 = vrot.lane.b32.xlu0 %v7975, 56
      %v8031 = vpop.permute.xlu0 %8030
      %8032 = vrot.lane.b32.xlu0 %v7983, 56
      %v8033 = vpop.permute.xlu0 %8032
      %8034 = vrot.lane.b32.xlu0 %v7991, 56
      %v8035 = vpop.permute.xlu0 %8034
      %8036 = vrot.lane.b32.xlu0 %v7999, 56
      %v8037 = vpop.permute.xlu0 %8036
      %8038 = vrot.lane.b32.xlu0 %v8007, 56
      %v8039 = vpop.permute.xlu0 %8038
      %v8056 = vunpack.c.l.b16 %v6664
      %v8057 = vunpack.c.l.b16 %v6665
      %v8058 = vunpack.c.l.b16 %v6666
      %v8059 = vunpack.c.l.b16 %v6667
      %v8060 = vunpack.c.l.b16 %v6668
      %v8061 = vunpack.c.l.b16 %v6669
      %v8062 = vunpack.c.l.b16 %v6670
      %v8063 = vunpack.c.l.b16 %v6671
      %v8064 = vunpack.c.l.b16 %v6672
      %v8065 = vunpack.c.l.b16 %v6673
      %v8066 = vunpack.c.l.b16 %v6674
      %v8067 = vunpack.c.l.b16 %v6675
      %v8068 = vunpack.c.l.b16 %v6676
      %v8069 = vunpack.c.l.b16 %v6677
      %v8070 = vunpack.c.l.b16 %v6678
      %v8071 = vunpack.c.l.b16 %v6679
      %v8072 = vpack.c.b16 %v8056, %v8056
      %v8073 = vpack.c.b16 %v8057, %v8057
      %v8074 = vpack.c.b16 %v8058, %v8058
      %v8075 = vpack.c.b16 %v8059, %v8059
      %v8076 = vpack.c.b16 %v8060, %v8060
      %v8077 = vpack.c.b16 %v8061, %v8061
      %v8078 = vpack.c.b16 %v8062, %v8062
      %v8079 = vpack.c.b16 %v8063, %v8063
      %v8080 = vpack.c.b16 %v8064, %v8064
      %v8081 = vpack.c.b16 %v8065, %v8065
      %v8082 = vpack.c.b16 %v8066, %v8066
      %v8083 = vpack.c.b16 %v8067, %v8067
      %v8084 = vpack.c.b16 %v8068, %v8068
      %v8085 = vpack.c.b16 %v8069, %v8069
      %v8086 = vpack.c.b16 %v8070, %v8070
      %v8087 = vpack.c.b16 %v8071, %v8071
      %v8088 = vrot.slane %v7864, 5
      %v8089 = vrot.slane %v8072, 5
      %v8090 = vsel %vm1049, %v8088, %v8089
      %v8091 = vrot.slane %v7865, 5
      %v8092 = vrot.slane %v8073, 5
      %v8093 = vsel %vm1049, %v8091, %v8092
      %v8094 = vrot.slane %v7866, 5
      %v8095 = vrot.slane %v8074, 5
      %v8096 = vsel %vm1049, %v8094, %v8095
      %v8097 = vrot.slane %v7867, 5
      %v8098 = vrot.slane %v8075, 5
      %v8099 = vsel %vm1049, %v8097, %v8098
      %v8100 = vrot.slane %v7868, 5
      %v8101 = vrot.slane %v8076, 5
      %v8102 = vsel %vm1049, %v8100, %v8101
      %v8103 = vrot.slane %v7869, 5
      %v8104 = vrot.slane %v8077, 5
      %v8105 = vsel %vm1049, %v8103, %v8104
      %v8106 = vrot.slane %v7870, 5
      %v8107 = vrot.slane %v8078, 5
      %v8108 = vsel %vm1049, %v8106, %v8107
      %v8109 = vrot.slane %v7871, 5
      %v8110 = vrot.slane %v8079, 5
      %v8111 = vsel %vm1049, %v8109, %v8110
      %v8112 = vrot.slane %v7872, 5
      %v8113 = vrot.slane %v8080, 5
      %v8114 = vsel %vm1049, %v8112, %v8113
      %v8115 = vrot.slane %v7873, 5
      %v8116 = vrot.slane %v8081, 5
      %v8117 = vsel %vm1049, %v8115, %v8116
      %v8118 = vrot.slane %v7874, 5
      %v8119 = vrot.slane %v8082, 5
      %v8120 = vsel %vm1049, %v8118, %v8119
      %v8121 = vrot.slane %v7875, 5
      %v8122 = vrot.slane %v8083, 5
      %v8123 = vsel %vm1049, %v8121, %v8122
      %v8124 = vrot.slane %v7876, 5
      %v8125 = vrot.slane %v8084, 5
      %v8126 = vsel %vm1049, %v8124, %v8125
      %v8127 = vrot.slane %v7877, 5
      %v8128 = vrot.slane %v8085, 5
      %v8129 = vsel %vm1049, %v8127, %v8128
      %v8130 = vrot.slane %v7878, 5
      %v8131 = vrot.slane %v8086, 5
      %v8132 = vsel %vm1049, %v8130, %v8131
      %v8133 = vrot.slane %v7879, 5
      %v8134 = vrot.slane %v8087, 5
      %v8135 = vsel %vm1049, %v8133, %v8134
      %8136 = vrot.lane.b32.xlu0 %v8088, 64
      %v8137 = vpop.permute.xlu0 %8136
      %8138 = vrot.lane.b32.xlu0 %v8090, 64
      %v8139 = vpop.permute.xlu0 %8138
      %8140 = vrot.lane.b32.xlu0 %v8091, 64
      %v8141 = vpop.permute.xlu0 %8140
      %8142 = vrot.lane.b32.xlu0 %v8093, 64
      %v8143 = vpop.permute.xlu0 %8142
      %8144 = vrot.lane.b32.xlu0 %v8094, 64
      %v8145 = vpop.permute.xlu0 %8144
      %8146 = vrot.lane.b32.xlu0 %v8096, 64
      %v8147 = vpop.permute.xlu0 %8146
      %8148 = vrot.lane.b32.xlu0 %v8097, 64
      %v8149 = vpop.permute.xlu0 %8148
      %8150 = vrot.lane.b32.xlu0 %v8099, 64
      %v8151 = vpop.permute.xlu0 %8150
      %8152 = vrot.lane.b32.xlu0 %v8100, 64
      %v8153 = vpop.permute.xlu0 %8152
      %8154 = vrot.lane.b32.xlu0 %v8102, 64
      %v8155 = vpop.permute.xlu0 %8154
      %8156 = vrot.lane.b32.xlu0 %v8103, 64
      %v8157 = vpop.permute.xlu0 %8156
      %8158 = vrot.lane.b32.xlu0 %v8105, 64
      %v8159 = vpop.permute.xlu0 %8158
      %8160 = vrot.lane.b32.xlu0 %v8106, 64
      %v8161 = vpop.permute.xlu0 %8160
      %8162 = vrot.lane.b32.xlu0 %v8108, 64
      %v8163 = vpop.permute.xlu0 %8162
      %8164 = vrot.lane.b32.xlu0 %v8109, 64
      %v8165 = vpop.permute.xlu0 %8164
      %8166 = vrot.lane.b32.xlu0 %v8111, 64
      %v8167 = vpop.permute.xlu0 %8166
      %8168 = vrot.lane.b32.xlu0 %v8112, 64
      %v8169 = vpop.permute.xlu0 %8168
      %8170 = vrot.lane.b32.xlu0 %v8114, 64
      %v8171 = vpop.permute.xlu0 %8170
      %8172 = vrot.lane.b32.xlu0 %v8115, 64
      %v8173 = vpop.permute.xlu0 %8172
      %8174 = vrot.lane.b32.xlu0 %v8117, 64
      %v8175 = vpop.permute.xlu0 %8174
      %8176 = vrot.lane.b32.xlu0 %v8118, 64
      %v8177 = vpop.permute.xlu0 %8176
      %8178 = vrot.lane.b32.xlu0 %v8120, 64
      %v8179 = vpop.permute.xlu0 %8178
      %8180 = vrot.lane.b32.xlu0 %v8121, 64
      %v8181 = vpop.permute.xlu0 %8180
      %8182 = vrot.lane.b32.xlu0 %v8123, 64
      %v8183 = vpop.permute.xlu0 %8182
      %8184 = vrot.lane.b32.xlu0 %v8124, 64
      %v8185 = vpop.permute.xlu0 %8184
      %8186 = vrot.lane.b32.xlu0 %v8126, 64
      %v8187 = vpop.permute.xlu0 %8186
      %8188 = vrot.lane.b32.xlu0 %v8127, 64
      %v8189 = vpop.permute.xlu0 %8188
      %8190 = vrot.lane.b32.xlu0 %v8129, 64
      %v8191 = vpop.permute.xlu0 %8190
      %8192 = vrot.lane.b32.xlu0 %v8130, 64
      %v8193 = vpop.permute.xlu0 %8192
      %8194 = vrot.lane.b32.xlu0 %v8132, 64
      %v8195 = vpop.permute.xlu0 %8194
      %8196 = vrot.lane.b32.xlu0 %v8133, 64
      %v8197 = vpop.permute.xlu0 %8196
      %8198 = vrot.lane.b32.xlu0 %v8135, 64
      %v8199 = vpop.permute.xlu0 %8198
      %v8202 = vsel %vm393, %v6776, %v6953
      %v8204 = vsel %vm393, %v6777, %v6953
      %v8207 = vsel %vm393, %v6778, %v6955
      %v8209 = vsel %vm393, %v6779, %v6955
      %v8212 = vsel %vm393, %v6780, %v6957
      %v8214 = vsel %vm393, %v6781, %v6957
      %v8217 = vsel %vm393, %v6782, %v6959
      %v8219 = vsel %vm393, %v6783, %v6959
      %v8222 = vsel %vm393, %v6784, %v6961
      %v8224 = vsel %vm393, %v6785, %v6961
      %v8227 = vsel %vm393, %v6786, %v6963
      %v8229 = vsel %vm393, %v6787, %v6963
      %v8232 = vsel %vm393, %v6788, %v6965
      %v8234 = vsel %vm393, %v6789, %v6965
      %v8237 = vsel %vm393, %v6790, %v6967
      %v8239 = vsel %vm393, %v6791, %v6967
      %v8242 = vsel %vm393, %v6792, %v6969
      %v8244 = vsel %vm393, %v6793, %v6969
      %v8247 = vsel %vm393, %v6794, %v6971
      %v8249 = vsel %vm393, %v6795, %v6971
      %v8252 = vsel %vm393, %v6796, %v6973
      %v8254 = vsel %vm393, %v6797, %v6973
      %v8257 = vsel %vm393, %v6798, %v6975
      %v8259 = vsel %vm393, %v6799, %v6975
      %v8262 = vsel %vm393, %v6800, %v6977
      %v8264 = vsel %vm393, %v6801, %v6977
      %v8267 = vsel %vm393, %v6802, %v6979
      %v8269 = vsel %vm393, %v6803, %v6979
      %v8272 = vsel %vm393, %v6804, %v6981
      %v8274 = vsel %vm393, %v6805, %v6981
      %v8277 = vsel %vm393, %v6806, %v6983
      %v8279 = vsel %vm393, %v6807, %v6983
      %v8281 = vsel %vm2428, %v8202, %v7081
      %v8283 = vsel %vm2428, %v8204, %v7083
      %v8285 = vsel %vm2428, %v8207, %v7085
      %v8287 = vsel %vm2428, %v8209, %v7087
      %v8289 = vsel %vm2428, %v8212, %v7089
      %v8291 = vsel %vm2428, %v8214, %v7091
      %v8293 = vsel %vm2428, %v8217, %v7093
      %v8295 = vsel %vm2428, %v8219, %v7095
      %v8297 = vsel %vm2428, %v8222, %v7097
      %v8299 = vsel %vm2428, %v8224, %v7099
      %v8301 = vsel %vm2428, %v8227, %v7101
      %v8303 = vsel %vm2428, %v8229, %v7103
      %v8305 = vsel %vm2428, %v8232, %v7105
      %v8307 = vsel %vm2428, %v8234, %v7107
      %v8309 = vsel %vm2428, %v8237, %v7109
      %v8311 = vsel %vm2428, %v8239, %v7111
      %v8313 = vsel %vm2428, %v8242, %v7113
      %v8315 = vsel %vm2428, %v8244, %v7115
      %v8317 = vsel %vm2428, %v8247, %v7117
      %v8319 = vsel %vm2428, %v8249, %v7119
      %v8321 = vsel %vm2428, %v8252, %v7121
      %v8323 = vsel %vm2428, %v8254, %v7123
      %v8325 = vsel %vm2428, %v8257, %v7125
      %v8327 = vsel %vm2428, %v8259, %v7127
      %v8329 = vsel %vm2428, %v8262, %v7129
      %v8331 = vsel %vm2428, %v8264, %v7131
      %v8333 = vsel %vm2428, %v8267, %v7133
      %v8335 = vsel %vm2428, %v8269, %v7135
      %v8337 = vsel %vm2428, %v8272, %v7137
      %v8339 = vsel %vm2428, %v8274, %v7139
      %v8341 = vsel %vm2428, %v8277, %v7141
      %v8343 = vsel %vm2428, %v8279, %v7143
      %v8345 = vsel %vm2542, %v8281, %v7273
      %v8347 = vsel %vm2542, %v8283, %v7275
      %v8349 = vsel %vm2542, %v8285, %v7277
      %v8351 = vsel %vm2542, %v8287, %v7279
      %v8353 = vsel %vm2542, %v8289, %v7281
      %v8355 = vsel %vm2542, %v8291, %v7283
      %v8357 = vsel %vm2542, %v8293, %v7285
      %v8359 = vsel %vm2542, %v8295, %v7287
      %v8361 = vsel %vm2542, %v8297, %v7289
      %v8363 = vsel %vm2542, %v8299, %v7291
      %v8365 = vsel %vm2542, %v8301, %v7293
      %v8367 = vsel %vm2542, %v8303, %v7295
      %v8369 = vsel %vm2542, %v8305, %v7297
      %v8371 = vsel %vm2542, %v8307, %v7299
      %v8373 = vsel %vm2542, %v8309, %v7301
      %v8375 = vsel %vm2542, %v8311, %v7303
      %v8377 = vsel %vm2542, %v8313, %v7305
      %v8379 = vsel %vm2542, %v8315, %v7307
      %v8381 = vsel %vm2542, %v8317, %v7309
      %v8383 = vsel %vm2542, %v8319, %v7311
      %v8385 = vsel %vm2542, %v8321, %v7313
      %v8387 = vsel %vm2542, %v8323, %v7315
      %v8389 = vsel %vm2542, %v8325, %v7317
      %v8391 = vsel %vm2542, %v8327, %v7319
      %v8393 = vsel %vm2542, %v8329, %v7321
      %v8395 = vsel %vm2542, %v8331, %v7323
      %v8397 = vsel %vm2542, %v8333, %v7325
      %v8399 = vsel %vm2542, %v8335, %v7327
      %v8401 = vsel %vm2542, %v8337, %v7329
      %v8403 = vsel %vm2542, %v8339, %v7331
      %v8405 = vsel %vm2542, %v8341, %v7333
      %v8407 = vsel %vm2542, %v8343, %v7335
      %v8409 = vsel %vm2656, %v8345, %v7481
      %v8410 = vsel %vm2656, %v8347, %v7481
      %v8412 = vsel %vm2656, %v8349, %v7483
      %v8413 = vsel %vm2656, %v8351, %v7483
      %v8415 = vsel %vm2656, %v8353, %v7485
      %v8416 = vsel %vm2656, %v8355, %v7485
      %v8418 = vsel %vm2656, %v8357, %v7487
      %v8419 = vsel %vm2656, %v8359, %v7487
      %v8421 = vsel %vm2656, %v8361, %v7489
      %v8422 = vsel %vm2656, %v8363, %v7489
      %v8424 = vsel %vm2656, %v8365, %v7491
      %v8425 = vsel %vm2656, %v8367, %v7491
      %v8427 = vsel %vm2656, %v8369, %v7493
      %v8428 = vsel %vm2656, %v8371, %v7493
      %v8430 = vsel %vm2656, %v8373, %v7495
      %v8431 = vsel %vm2656, %v8375, %v7495
      %v8433 = vsel %vm2656, %v8377, %v7497
      %v8434 = vsel %vm2656, %v8379, %v7497
      %v8436 = vsel %vm2656, %v8381, %v7499
      %v8437 = vsel %vm2656, %v8383, %v7499
      %v8439 = vsel %vm2656, %v8385, %v7501
      %v8440 = vsel %vm2656, %v8387, %v7501
      %v8442 = vsel %vm2656, %v8389, %v7503
      %v8443 = vsel %vm2656, %v8391, %v7503
      %v8445 = vsel %vm2656, %v8393, %v7505
      %v8446 = vsel %vm2656, %v8395, %v7505
      %v8448 = vsel %vm2656, %v8397, %v7507
      %v8449 = vsel %vm2656, %v8399, %v7507
      %v8451 = vsel %vm2656, %v8401, %v7509
      %v8452 = vsel %vm2656, %v8403, %v7509
      %v8454 = vsel %vm2656, %v8405, %v7511
      %v8455 = vsel %vm2656, %v8407, %v7511
      %v8457 = vsel %vm5363, %v8409, %v7609
      %v8459 = vsel %vm5363, %v8410, %v7611
      %v8461 = vsel %vm5363, %v8412, %v7613
      %v8463 = vsel %vm5363, %v8413, %v7615
      %v8465 = vsel %vm5363, %v8415, %v7617
      %v8467 = vsel %vm5363, %v8416, %v7619
      %v8469 = vsel %vm5363, %v8418, %v7621
      %v8471 = vsel %vm5363, %v8419, %v7623
      %v8473 = vsel %vm5363, %v8421, %v7625
      %v8475 = vsel %vm5363, %v8422, %v7627
      %v8477 = vsel %vm5363, %v8424, %v7629
      %v8479 = vsel %vm5363, %v8425, %v7631
      %v8481 = vsel %vm5363, %v8427, %v7633
      %v8483 = vsel %vm5363, %v8428, %v7635
      %v8485 = vsel %vm5363, %v8430, %v7637
      %v8487 = vsel %vm5363, %v8431, %v7639
      %v8489 = vsel %vm5363, %v8433, %v7641
      %v8491 = vsel %vm5363, %v8434, %v7643
      %v8493 = vsel %vm5363, %v8436, %v7645
      %v8495 = vsel %vm5363, %v8437, %v7647
      %v8497 = vsel %vm5363, %v8439, %v7649
      %v8499 = vsel %vm5363, %v8440, %v7651
      %v8501 = vsel %vm5363, %v8442, %v7653
      %v8503 = vsel %vm5363, %v8443, %v7655
      %v8505 = vsel %vm5363, %v8445, %v7657
      %v8507 = vsel %vm5363, %v8446, %v7659
      %v8509 = vsel %vm5363, %v8448, %v7661
      %v8511 = vsel %vm5363, %v8449, %v7663
      %v8513 = vsel %vm5363, %v8451, %v7665
      %v8515 = vsel %vm5363, %v8452, %v7667
      %v8517 = vsel %vm5363, %v8454, %v7669
      %v8519 = vsel %vm5363, %v8455, %v7671
      %v8521 = vsel %vm5428, %v8457, %v7801
      %v8523 = vsel %vm5428, %v8459, %v7803
      %v8525 = vsel %vm5428, %v8461, %v7805
      %v8527 = vsel %vm5428, %v8463, %v7807
      %v8529 = vsel %vm5428, %v8465, %v7809
      %v8531 = vsel %vm5428, %v8467, %v7811
      %v8533 = vsel %vm5428, %v8469, %v7813
      %v8535 = vsel %vm5428, %v8471, %v7815
      %v8537 = vsel %vm5428, %v8473, %v7817
      %v8539 = vsel %vm5428, %v8475, %v7819
      %v8541 = vsel %vm5428, %v8477, %v7821
      %v8543 = vsel %vm5428, %v8479, %v7823
      %v8545 = vsel %vm5428, %v8481, %v7825
      %v8547 = vsel %vm5428, %v8483, %v7827
      %v8549 = vsel %vm5428, %v8485, %v7829
      %v8551 = vsel %vm5428, %v8487, %v7831
      %v8553 = vsel %vm5428, %v8489, %v7833
      %v8555 = vsel %vm5428, %v8491, %v7835
      %v8557 = vsel %vm5428, %v8493, %v7837
      %v8559 = vsel %vm5428, %v8495, %v7839
      %v8561 = vsel %vm5428, %v8497, %v7841
      %v8563 = vsel %vm5428, %v8499, %v7843
      %v8565 = vsel %vm5428, %v8501, %v7845
      %v8567 = vsel %vm5428, %v8503, %v7847
      %v8569 = vsel %vm5428, %v8505, %v7849
      %v8571 = vsel %vm5428, %v8507, %v7851
      %v8573 = vsel %vm5428, %v8509, %v7853
      %v8575 = vsel %vm5428, %v8511, %v7855
      %v8577 = vsel %vm5428, %v8513, %v7857
      %v8579 = vsel %vm5428, %v8515, %v7859
      %v8581 = vsel %vm5428, %v8517, %v7861
      %v8583 = vsel %vm5428, %v8519, %v7863
      %v8585 = vsel %vm5493, %v8521, %v8009
      %v8586 = vsel %vm5493, %v8523, %v8009
      %v8588 = vsel %vm5493, %v8525, %v8011
      %v8589 = vsel %vm5493, %v8527, %v8011
      %v8591 = vsel %vm5493, %v8529, %v8013
      %v8592 = vsel %vm5493, %v8531, %v8013
      %v8594 = vsel %vm5493, %v8533, %v8015
      %v8595 = vsel %vm5493, %v8535, %v8015
      %v8597 = vsel %vm5493, %v8537, %v8017
      %v8598 = vsel %vm5493, %v8539, %v8017
      %v8600 = vsel %vm5493, %v8541, %v8019
      %v8601 = vsel %vm5493, %v8543, %v8019
      %v8603 = vsel %vm5493, %v8545, %v8021
      %v8604 = vsel %vm5493, %v8547, %v8021
      %v8606 = vsel %vm5493, %v8549, %v8023
      %v8607 = vsel %vm5493, %v8551, %v8023
      %v8609 = vsel %vm5493, %v8553, %v8025
      %v8610 = vsel %vm5493, %v8555, %v8025
      %v8612 = vsel %vm5493, %v8557, %v8027
      %v8613 = vsel %vm5493, %v8559, %v8027
      %v8615 = vsel %vm5493, %v8561, %v8029
      %v8616 = vsel %vm5493, %v8563, %v8029
      %v8618 = vsel %vm5493, %v8565, %v8031
      %v8619 = vsel %vm5493, %v8567, %v8031
      %v8621 = vsel %vm5493, %v8569, %v8033
      %v8622 = vsel %vm5493, %v8571, %v8033
      %v8624 = vsel %vm5493, %v8573, %v8035
      %v8625 = vsel %vm5493, %v8575, %v8035
      %v8627 = vsel %vm5493, %v8577, %v8037
      %v8628 = vsel %vm5493, %v8579, %v8037
      %v8630 = vsel %vm5493, %v8581, %v8039
      %v8631 = vsel %vm5493, %v8583, %v8039
      %v8633 = vsel %vm5542, %v8585, %v8137
      %v8635 = vsel %vm5542, %v8586, %v8139
      %v8637 = vsel %vm5542, %v8588, %v8141
      %v8639 = vsel %vm5542, %v8589, %v8143
      %v8641 = vsel %vm5542, %v8591, %v8145
      %v8643 = vsel %vm5542, %v8592, %v8147
      %v8645 = vsel %vm5542, %v8594, %v8149
      %v8647 = vsel %vm5542, %v8595, %v8151
      %v8649 = vsel %vm5542, %v8597, %v8153
      %v8651 = vsel %vm5542, %v8598, %v8155
      %v8653 = vsel %vm5542, %v8600, %v8157
      %v8655 = vsel %vm5542, %v8601, %v8159
      %v8657 = vsel %vm5542, %v8603, %v8161
      %v8659 = vsel %vm5542, %v8604, %v8163
      %v8661 = vsel %vm5542, %v8606, %v8165
      %v8663 = vsel %vm5542, %v8607, %v8167
      %v8665 = vsel %vm5542, %v8609, %v8169
      %v8667 = vsel %vm5542, %v8610, %v8171
      %v8669 = vsel %vm5542, %v8612, %v8173
      %v8671 = vsel %vm5542, %v8613, %v8175
      %v8673 = vsel %vm5542, %v8615, %v8177
      %v8675 = vsel %vm5542, %v8616, %v8179
      %v8677 = vsel %vm5542, %v8618, %v8181
      %v8679 = vsel %vm5542, %v8619, %v8183
      %v8681 = vsel %vm5542, %v8621, %v8185
      %v8683 = vsel %vm5542, %v8622, %v8187
      %v8685 = vsel %vm5542, %v8624, %v8189
      %v8687 = vsel %vm5542, %v8625, %v8191
      %v8689 = vsel %vm5542, %v8627, %v8193
      %v8691 = vsel %vm5542, %v8628, %v8195
      %v8693 = vsel %vm5542, %v8630, %v8197
      %v8695 = vsel %vm5542, %v8631, %v8199
      %v8696 = vshrl.u32 %v8633, 16
      %v8698 = vrot.slane %v8696, 3
      %v8699 = vshll.u32 %v8633, 16
      %v8701 = vrot.slane %v8699, 4
      %v8702 = vor.u32 %v8698, %v8701
      %v8703 = vshrl.u32 %v8635, 16
      %v8705 = vrot.slane %v8703, 3
      %v8706 = vshll.u32 %v8635, 16
      %v8708 = vrot.slane %v8706, 4
      %v8709 = vor.u32 %v8705, %v8708
      %v8710 = vsel %vm2721, %v8702, %v8709
      %v8711 = vshrl.u32 %v8637, 16
      %v8713 = vrot.slane %v8711, 3
      %v8714 = vshll.u32 %v8637, 16
      %v8716 = vrot.slane %v8714, 4
      %v8717 = vor.u32 %v8713, %v8716
      %v8718 = vshrl.u32 %v8639, 16
      %v8720 = vrot.slane %v8718, 3
      %v8721 = vshll.u32 %v8639, 16
      %v8723 = vrot.slane %v8721, 4
      %v8724 = vor.u32 %v8720, %v8723
      %v8725 = vsel %vm2721, %v8717, %v8724
      %v8726 = vshrl.u32 %v8641, 16
      %v8728 = vrot.slane %v8726, 3
      %v8729 = vshll.u32 %v8641, 16
      %v8731 = vrot.slane %v8729, 4
      %v8732 = vor.u32 %v8728, %v8731
      %v8733 = vshrl.u32 %v8643, 16
      %v8735 = vrot.slane %v8733, 3
      %v8736 = vshll.u32 %v8643, 16
      %v8738 = vrot.slane %v8736, 4
      %v8739 = vor.u32 %v8735, %v8738
      %v8740 = vsel %vm2721, %v8732, %v8739
      %v8741 = vshrl.u32 %v8645, 16
      %v8743 = vrot.slane %v8741, 3
      %v8744 = vshll.u32 %v8645, 16
      %v8746 = vrot.slane %v8744, 4
      %v8747 = vor.u32 %v8743, %v8746
      %v8748 = vshrl.u32 %v8647, 16
      %v8750 = vrot.slane %v8748, 3
      %v8751 = vshll.u32 %v8647, 16
      %v8753 = vrot.slane %v8751, 4
      %v8754 = vor.u32 %v8750, %v8753
      %v8755 = vsel %vm2721, %v8747, %v8754
      %v8756 = vshrl.u32 %v8649, 16
      %v8758 = vrot.slane %v8756, 3
      %v8759 = vshll.u32 %v8649, 16
      %v8761 = vrot.slane %v8759, 4
      %v8762 = vor.u32 %v8758, %v8761
      %v8763 = vshrl.u32 %v8651, 16
      %v8765 = vrot.slane %v8763, 3
      %v8766 = vshll.u32 %v8651, 16
      %v8768 = vrot.slane %v8766, 4
      %v8769 = vor.u32 %v8765, %v8768
      %v8770 = vsel %vm2721, %v8762, %v8769
      %v8771 = vshrl.u32 %v8653, 16
      %v8773 = vrot.slane %v8771, 3
      %v8774 = vshll.u32 %v8653, 16
      %v8776 = vrot.slane %v8774, 4
      %v8777 = vor.u32 %v8773, %v8776
      %v8778 = vshrl.u32 %v8655, 16
      %v8780 = vrot.slane %v8778, 3
      %v8781 = vshll.u32 %v8655, 16
      %v8783 = vrot.slane %v8781, 4
      %v8784 = vor.u32 %v8780, %v8783
      %v8785 = vsel %vm2721, %v8777, %v8784
      %v8786 = vshrl.u32 %v8657, 16
      %v8788 = vrot.slane %v8786, 3
      %v8789 = vshll.u32 %v8657, 16
      %v8791 = vrot.slane %v8789, 4
      %v8792 = vor.u32 %v8788, %v8791
      %v8793 = vshrl.u32 %v8659, 16
      %v8795 = vrot.slane %v8793, 3
      %v8796 = vshll.u32 %v8659, 16
      %v8798 = vrot.slane %v8796, 4
      %v8799 = vor.u32 %v8795, %v8798
      %v8800 = vsel %vm2721, %v8792, %v8799
      %v8801 = vshrl.u32 %v8661, 16
      %v8803 = vrot.slane %v8801, 3
      %v8804 = vshll.u32 %v8661, 16
      %v8806 = vrot.slane %v8804, 4
      %v8807 = vor.u32 %v8803, %v8806
      %v8808 = vshrl.u32 %v8663, 16
      %v8810 = vrot.slane %v8808, 3
      %v8811 = vshll.u32 %v8663, 16
      %v8813 = vrot.slane %v8811, 4
      %v8814 = vor.u32 %v8810, %v8813
      %v8815 = vsel %vm2721, %v8807, %v8814
      %v8816 = vshrl.u32 %v8665, 16
      %v8818 = vrot.slane %v8816, 3
      %v8819 = vshll.u32 %v8665, 16
      %v8821 = vrot.slane %v8819, 4
      %v8822 = vor.u32 %v8818, %v8821
      %v8823 = vshrl.u32 %v8667, 16
      %v8825 = vrot.slane %v8823, 3
      %v8826 = vshll.u32 %v8667, 16
      %v8828 = vrot.slane %v8826, 4
      %v8829 = vor.u32 %v8825, %v8828
      %v8830 = vsel %vm2721, %v8822, %v8829
      %v8831 = vshrl.u32 %v8669, 16
      %v8833 = vrot.slane %v8831, 3
      %v8834 = vshll.u32 %v8669, 16
      %v8836 = vrot.slane %v8834, 4
      %v8837 = vor.u32 %v8833, %v8836
      %v8838 = vshrl.u32 %v8671, 16
      %v8840 = vrot.slane %v8838, 3
      %v8841 = vshll.u32 %v8671, 16
      %v8843 = vrot.slane %v8841, 4
      %v8844 = vor.u32 %v8840, %v8843
      %v8845 = vsel %vm2721, %v8837, %v8844
      %v8846 = vshrl.u32 %v8673, 16
      %v8848 = vrot.slane %v8846, 3
      %v8849 = vshll.u32 %v8673, 16
      %v8851 = vrot.slane %v8849, 4
      %v8852 = vor.u32 %v8848, %v8851
      %v8853 = vshrl.u32 %v8675, 16
      %v8855 = vrot.slane %v8853, 3
      %v8856 = vshll.u32 %v8675, 16
      %v8858 = vrot.slane %v8856, 4
      %v8859 = vor.u32 %v8855, %v8858
      %v8860 = vsel %vm2721, %v8852, %v8859
      %v8861 = vshrl.u32 %v8677, 16
      %v8863 = vrot.slane %v8861, 3
      %v8864 = vshll.u32 %v8677, 16
      %v8866 = vrot.slane %v8864, 4
      %v8867 = vor.u32 %v8863, %v8866
      %v8868 = vshrl.u32 %v8679, 16
      %v8870 = vrot.slane %v8868, 3
      %v8871 = vshll.u32 %v8679, 16
      %v8873 = vrot.slane %v8871, 4
      %v8874 = vor.u32 %v8870, %v8873
      %v8875 = vsel %vm2721, %v8867, %v8874
      %v8876 = vshrl.u32 %v8681, 16
      %v8878 = vrot.slane %v8876, 3
      %v8879 = vshll.u32 %v8681, 16
      %v8881 = vrot.slane %v8879, 4
      %v8882 = vor.u32 %v8878, %v8881
      %v8883 = vshrl.u32 %v8683, 16
      %v8885 = vrot.slane %v8883, 3
      %v8886 = vshll.u32 %v8683, 16
      %v8888 = vrot.slane %v8886, 4
      %v8889 = vor.u32 %v8885, %v8888
      %v8890 = vsel %vm2721, %v8882, %v8889
      %v8891 = vshrl.u32 %v8685, 16
      %v8893 = vrot.slane %v8891, 3
      %v8894 = vshll.u32 %v8685, 16
      %v8896 = vrot.slane %v8894, 4
      %v8897 = vor.u32 %v8893, %v8896
      %v8898 = vshrl.u32 %v8687, 16
      %v8900 = vrot.slane %v8898, 3
      %v8901 = vshll.u32 %v8687, 16
      %v8903 = vrot.slane %v8901, 4
      %v8904 = vor.u32 %v8900, %v8903
      %v8905 = vsel %vm2721, %v8897, %v8904
      %v8906 = vshrl.u32 %v8689, 16
      %v8908 = vrot.slane %v8906, 3
      %v8909 = vshll.u32 %v8689, 16
      %v8911 = vrot.slane %v8909, 4
      %v8912 = vor.u32 %v8908, %v8911
      %v8913 = vshrl.u32 %v8691, 16
      %v8915 = vrot.slane %v8913, 3
      %v8916 = vshll.u32 %v8691, 16
      %v8918 = vrot.slane %v8916, 4
      %v8919 = vor.u32 %v8915, %v8918
      %v8920 = vsel %vm2721, %v8912, %v8919
      %v8921 = vshrl.u32 %v8693, 16
      %v8923 = vrot.slane %v8921, 3
      %v8924 = vshll.u32 %v8693, 16
      %v8926 = vrot.slane %v8924, 4
      %v8927 = vor.u32 %v8923, %v8926
      %v8928 = vshrl.u32 %v8695, 16
      %v8930 = vrot.slane %v8928, 3
      %v8931 = vshll.u32 %v8695, 16
      %v8933 = vrot.slane %v8931, 4
      %v8934 = vor.u32 %v8930, %v8933
      %v8935 = vsel %vm2721, %v8927, %v8934
      %v8936 = vld [vmem:[%s5] sm:$0xf]
      %v8937 = vld [vmem:[%s5 + $0x4] sm:$0xf]
      %v8938 = vld [vmem:[%s5 + $0x8] sm:$0xf]
      %v8939 = vld [vmem:[%s5 + $0xc] sm:$0xf]
      %v8940 = vld [vmem:[%s5 + $0x10] sm:$0xf]
      %v8941 = vld [vmem:[%s5 + $0x14] sm:$0xf]
      %v8942 = vld [vmem:[%s5 + $0x18] sm:$0xf]
      %v8943 = vld [vmem:[%s5 + $0x1c] sm:$0xf]
      %v8944 = vld [vmem:[%s5 + $0x20] sm:$0xf]
      %v8945 = vld [vmem:[%s6] sm:$0x1]
      %v8947 = vlaneseq
      %v8948 = vshrl.u32 %v8947, 7
      %v8949 = vsub.s32 0, %v8948
      %v8950 = vrot.slane %v8945, %v8949
      %v8961 = vunpack.c.l.b16 %v8936
      %v8962 = vunpack.c.l.b16 %v8937
      %v8963 = vunpack.c.l.b16 %v8938
      %v8964 = vunpack.c.l.b16 %v8939
      %v8965 = vunpack.c.l.b16 %v8940
      %v8966 = vunpack.c.l.b16 %v8941
      %v8967 = vunpack.c.l.b16 %v8942
      %v8968 = vunpack.c.l.b16 %v8943
      %v8969 = vunpack.c.l.b16 %v8944
      %v8970 = vpack.c.b16 %v8962, %v8961
      %v8971 = vpack.c.b16 %v8964, %v8963
      %v8972 = vpack.c.b16 %v8966, %v8965
      %v8973 = vpack.c.b16 %v8968, %v8967
      %v8974 = vpack.c.b16 %v8969, %v8969
      %v8980 = vsel %vm5890, %v8710, 0
      %v8983 = vsel %vm5890, %v8725, 0
      %v8986 = vsel %vm5890, %v8740, 0
      %v8989 = vsel %vm5890, %v8755, 0
      %v8992 = vsel %vm5890, %v8770, 0
      %v8995 = vsel %vm5890, %v8785, 0
      %v8998 = vsel %vm5890, %v8800, 0
      %v9001 = vsel %vm5890, %v8815, 0
      %v9004 = vsel %vm5890, %v8830, 0
      %v9007 = vsel %vm5890, %v8845, 0
      %v9010 = vsel %vm5890, %v8860, 0
      %v9013 = vsel %vm5890, %v8875, 0
      %v9016 = vsel %vm5890, %v8890, 0
      %v9019 = vsel %vm5890, %v8905, 0
      %v9022 = vsel %vm5890, %v8920, 0
      %v9025 = vsel %vm5890, %v8935, 0
      %v9028 = vsel %vm5939, %v8974, 0
      %9030 = vmatprep.subr.bf16.mxu0 0
      %9031 = vmatpush1.bf16.msra.mxu0 %v8970
      %9032 = vmatprep.subr.bf16.mxu0 0
      %9033 = vmatpush1.bf16.msra.mxu0 %v8971
      %9034 = vmatprep.subr.bf16.mxu0 0
      %9035 = vmatpush1.bf16.msra.mxu0 %v8972
      %9036 = vmatprep.subr.bf16.mxu0 0
      %9037 = vmatpush1.bf16.msra.mxu0 %v8973
      %9038 = vmatprep.subr.bf16.mxu0 0
      %9039 = vmatpush1.bf16.msra.mxu0 %v9028
      %9040 = vmatprep.subr.bf16.mxu0 0
      %9041 = vmatpush1.bf16.msra.mxu0 0
      %9042 = vmatprep.subr.bf16.mxu0 0
      %9043 = vmatpush1.bf16.msra.mxu0 0
      %9044 = vmatprep.subr.bf16.mxu0 0
      %9045 = vmatpush1.bf16.msra.mxu0 0
      %9046 = vmatprep.subr.bf16.mxu0 0
      %9047 = vmatpush1.bf16.msra.mxu0 0
      %9048 = vmatprep.subr.bf16.mxu0 0
      %9049 = vmatpush1.bf16.msra.mxu0 0
      %9050 = vmatprep.subr.bf16.mxu0 0
      %9051 = vmatpush1.bf16.msra.mxu0 0
      %9052 = vmatprep.subr.bf16.mxu0 0
      %9053 = vmatpush1.bf16.msra.mxu0 0
      %9054 = vmatprep.subr.bf16.mxu0 0
      %9055 = vmatpush1.bf16.msra.mxu0 0
      %9056 = vmatprep.subr.bf16.mxu0 0
      %9057 = vmatpush1.bf16.msra.mxu0 0
      %9058 = vmatprep.subr.bf16.mxu0 0
      %9059 = vmatpush1.bf16.msra.mxu0 0
      %9060 = vmatprep.subr.bf16.mxu0 0
      %9061 = vmatpush1.bf16.msra.mxu0 0
      %9062 = vmatprep.mubr.bf16.mxu0 0
      %9063 = vmatmul.mubr.bf16.gmra.mrb[0].mxu0 %v8980
      %v9064 = vpop.f32.mrb[0].mxu0
      %v9065 = vadd.f32 %v8950, %v9064
      %v9066 = vpop.f32.mrb[0].mxu0
      %v9067 = vpop.f32.mrb[0].mxu0
      %v9068 = vadd.f32 %v8950, %v9067
      %v9069 = vpop.f32.mrb[0].mxu0
      %9070 = vmatprep.mubr.bf16.mxu0 0
      %9071 = vmatmul.mubr.bf16.gmra.mrb[0].mxu0 %v8983
      %v9072 = vpop.f32.mrb[0].mxu0
      %v9073 = vadd.f32 %v8950, %v9072
      %v9074 = vpop.f32.mrb[0].mxu0
      %v9075 = vpop.f32.mrb[0].mxu0
      %v9076 = vadd.f32 %v8950, %v9075
      %v9077 = vpop.f32.mrb[0].mxu0
      %9078 = vmatprep.mubr.bf16.mxu0 0
      %9079 = vmatmul.mubr.bf16.gmra.mrb[0].mxu0 %v8986
      %v9080 = vpop.f32.mrb[0].mxu0
      %v9081 = vadd.f32 %v8950, %v9080
      %v9082 = vpop.f32.mrb[0].mxu0
      %v9083 = vpop.f32.mrb[0].mxu0
      %v9084 = vadd.f32 %v8950, %v9083
      %v9085 = vpop.f32.mrb[0].mxu0
      %9086 = vmatprep.mubr.bf16.mxu0 0
      %9087 = vmatmul.mubr.bf16.gmra.mrb[0].mxu0 %v8989
      %v9088 = vpop.f32.mrb[0].mxu0
      %v9089 = vadd.f32 %v8950, %v9088
      %v9090 = vpop.f32.mrb[0].mxu0
      %v9091 = vpop.f32.mrb[0].mxu0
      %v9092 = vadd.f32 %v8950, %v9091
      %v9093 = vpop.f32.mrb[0].mxu0
      %9094 = vmatprep.mubr.bf16.mxu0 0
      %9095 = vmatmul.mubr.bf16.gmra.mrb[0].mxu0 %v8992
      %v9096 = vpop.f32.mrb[0].mxu0
      %v9097 = vadd.f32 %v8950, %v9096
      %v9098 = vpop.f32.mrb[0].mxu0
      %v9099 = vpop.f32.mrb[0].mxu0
      %v9100 = vadd.f32 %v8950, %v9099
      %v9101 = vpop.f32.mrb[0].mxu0
      %9102 = vmatprep.mubr.bf16.mxu0 0
      %9103 = vmatmul.mubr.bf16.gmra.mrb[0].mxu0 %v8995
      %v9104 = vpop.f32.mrb[0].mxu0
      %v9105 = vadd.f32 %v8950, %v9104
      %v9106 = vpop.f32.mrb[0].mxu0
      %v9107 = vpop.f32.mrb[0].mxu0
      %v9108 = vadd.f32 %v8950, %v9107
      %v9109 = vpop.f32.mrb[0].mxu0
      %9110 = vmatprep.mubr.bf16.mxu0 0
      %9111 = vmatmul.mubr.bf16.gmra.mrb[0].mxu0 %v8998
      %v9112 = vpop.f32.mrb[0].mxu0
      %v9113 = vadd.f32 %v8950, %v9112
      %v9114 = vpop.f32.mrb[0].mxu0
      %v9115 = vpop.f32.mrb[0].mxu0
      %v9116 = vadd.f32 %v8950, %v9115
      %v9117 = vpop.f32.mrb[0].mxu0
      %9118 = vmatprep.mubr.bf16.mxu0 0
      %9119 = vmatmul.mubr.bf16.gmra.mrb[0].mxu0 %v9001
      %v9120 = vpop.f32.mrb[0].mxu0
      %v9121 = vadd.f32 %v8950, %v9120
      %v9122 = vpop.f32.mrb[0].mxu0
      %v9123 = vpop.f32.mrb[0].mxu0
      %v9124 = vadd.f32 %v8950, %v9123
      %v9125 = vpop.f32.mrb[0].mxu0
      %9126 = vmatprep.mubr.bf16.mxu0 0
      %9127 = vmatmul.mubr.bf16.gmra.mrb[0].mxu0 %v9004
      %v9128 = vpop.f32.mrb[0].mxu0
      %v9129 = vadd.f32 %v8950, %v9128
      %v9130 = vpop.f32.mrb[0].mxu0
      %v9131 = vpop.f32.mrb[0].mxu0
      %v9132 = vadd.f32 %v8950, %v9131
      %v9133 = vpop.f32.mrb[0].mxu0
      %9134 = vmatprep.mubr.bf16.mxu0 0
      %9135 = vmatmul.mubr.bf16.gmra.mrb[0].mxu0 %v9007
      %v9136 = vpop.f32.mrb[0].mxu0
      %v9137 = vadd.f32 %v8950, %v9136
      %v9138 = vpop.f32.mrb[0].mxu0
      %v9139 = vpop.f32.mrb[0].mxu0
      %v9140 = vadd.f32 %v8950, %v9139
      %v9141 = vpop.f32.mrb[0].mxu0
      %9142 = vmatprep.mubr.bf16.mxu0 0
      %9143 = vmatmul.mubr.bf16.gmra.mrb[0].mxu0 %v9010
      %v9144 = vpop.f32.mrb[0].mxu0
      %v9145 = vadd.f32 %v8950, %v9144
      %v9146 = vpop.f32.mrb[0].mxu0
      %v9147 = vpop.f32.mrb[0].mxu0
      %v9148 = vadd.f32 %v8950, %v9147
      %v9149 = vpop.f32.mrb[0].mxu0
      %9150 = vmatprep.mubr.bf16.mxu0 0
      %9151 = vmatmul.mubr.bf16.gmra.mrb[0].mxu0 %v9013
      %v9152 = vpop.f32.mrb[0].mxu0
      %v9153 = vadd.f32 %v8950, %v9152
      %v9154 = vpop.f32.mrb[0].mxu0
      %v9155 = vpop.f32.mrb[0].mxu0
      %v9156 = vadd.f32 %v8950, %v9155
      %v9157 = vpop.f32.mrb[0].mxu0
      %9158 = vmatprep.mubr.bf16.mxu0 0
      %9159 = vmatmul.mubr.bf16.gmra.mrb[0].mxu0 %v9016
      %v9160 = vpop.f32.mrb[0].mxu0
      %v9161 = vadd.f32 %v8950, %v9160
      %v9162 = vpop.f32.mrb[0].mxu0
      %v9163 = vpop.f32.mrb[0].mxu0
      %v9164 = vadd.f32 %v8950, %v9163
      %v9165 = vpop.f32.mrb[0].mxu0
      %9166 = vmatprep.mubr.bf16.mxu0 0
      %9167 = vmatmul.mubr.bf16.gmra.mrb[0].mxu0 %v9019
      %v9168 = vpop.f32.mrb[0].mxu0
      %v9169 = vadd.f32 %v8950, %v9168
      %v9170 = vpop.f32.mrb[0].mxu0
      %v9171 = vpop.f32.mrb[0].mxu0
      %v9172 = vadd.f32 %v8950, %v9171
      %v9173 = vpop.f32.mrb[0].mxu0
      %9174 = vmatprep.mubr.bf16.mxu0 0
      %9175 = vmatmul.mubr.bf16.gmra.mrb[0].mxu0 %v9022
      %v9176 = vpop.f32.mrb[0].mxu0
      %v9177 = vadd.f32 %v8950, %v9176
      %v9178 = vpop.f32.mrb[0].mxu0
      %v9179 = vpop.f32.mrb[0].mxu0
      %v9180 = vadd.f32 %v8950, %v9179
      %v9181 = vpop.f32.mrb[0].mxu0
      %9182 = vmatprep.mubr.bf16.mxu0 0
      %9183 = vmatmul.mubr.bf16.gmra.mrb[0].mxu0 %v9025
      %v9184 = vpop.f32.mrb[0].mxu0
      %v9185 = vadd.f32 %v8950, %v9184
      %v9186 = vpop.f32.mrb[0].mxu0
      %v9187 = vpop.f32.mrb[0].mxu0
      %v9188 = vadd.f32 %v8950, %v9187
      %v9189 = vpop.f32.mrb[0].mxu0
      %9190 = vdwg.mxu0
      %s9191 = scalar_lea.vmem [#allocation3], 32
      %9192 = vst.msk [vmem:[%s9191 + $0x8] sm:$0xff] %vm393, %v9065
      %9193 = vst.msk [vmem:[%s9191 + $0x10] sm:$0xff] %vm393, %v9068
      %9194 = vst.msk [vmem:[%s9191 + $0x28] sm:$0xff] %vm393, %v9073
      %9195 = vst.msk [vmem:[%s9191 + $0x30] sm:$0xff] %vm393, %v9076
      %9196 = vst.msk [vmem:[%s9191 + $0x48] sm:$0xff] %vm393, %v9081
      %9197 = vst.msk [vmem:[%s9191 + $0x50] sm:$0xff] %vm393, %v9084
      %9198 = vst.msk [vmem:[%s9191 + $0x68] sm:$0xff] %vm393, %v9089
      %9199 = vst.msk [vmem:[%s9191 + $0x70] sm:$0xff] %vm393, %v9092
      %9200 = vst.msk [vmem:[%s9191 + $0x88] sm:$0xff] %vm393, %v9097
      %9201 = vst.msk [vmem:[%s9191 + $0x90] sm:$0xff] %vm393, %v9100
      %9202 = vst.msk [vmem:[%s9191 + $0xa8] sm:$0xff] %vm393, %v9105
      %9203 = vst.msk [vmem:[%s9191 + $0xb0] sm:$0xff] %vm393, %v9108
      %9204 = vst.msk [vmem:[%s9191 + $0xc8] sm:$0xff] %vm393, %v9113
      %9205 = vst.msk [vmem:[%s9191 + $0xd0] sm:$0xff] %vm393, %v9116
      %9206 = vst.msk [vmem:[%s9191 + $0xe8] sm:$0xff] %vm393, %v9121
      %9207 = vst.msk [vmem:[%s9191 + $0xf0] sm:$0xff] %vm393, %v9124
      %9208 = vst.msk [vmem:[%s9191 + $0x108] sm:$0xff] %vm393, %v9129
      %9209 = vst.msk [vmem:[%s9191 + $0x110] sm:$0xff] %vm393, %v9132
      %9210 = vst.msk [vmem:[%s9191 + $0x128] sm:$0xff] %vm393, %v9137
      %9211 = vst.msk [vmem:[%s9191 + $0x130] sm:$0xff] %vm393, %v9140
      %9212 = vst.msk [vmem:[%s9191 + $0x148] sm:$0xff] %vm393, %v9145
      %9213 = vst.msk [vmem:[%s9191 + $0x150] sm:$0xff] %vm393, %v9148
      %9214 = vst.msk [vmem:[%s9191 + $0x168] sm:$0xff] %vm393, %v9153
      %9215 = vst.msk [vmem:[%s9191 + $0x170] sm:$0xff] %vm393, %v9156
      %9216 = vst.msk [vmem:[%s9191 + $0x188] sm:$0xff] %vm393, %v9161
      %9217 = vst.msk [vmem:[%s9191 + $0x190] sm:$0xff] %vm393, %v9164
      %9218 = vst.msk [vmem:[%s9191 + $0x1a8] sm:$0xff] %vm393, %v9169
      %9219 = vst.msk [vmem:[%s9191 + $0x1b0] sm:$0xff] %vm393, %v9172
      %9220 = vst.msk [vmem:[%s9191 + $0x1c8] sm:$0xff] %vm393, %v9177
      %9221 = vst.msk [vmem:[%s9191 + $0x1d0] sm:$0xff] %vm393, %v9180
      %9222 = vst.msk [vmem:[%s9191 + $0x1e8] sm:$0xff] %vm393, %v9185
      %9223 = vst.msk [vmem:[%s9191 + $0x1f0] sm:$0xff] %vm393, %v9188
      %s9224 = scalar_lea.vmem [#allocation3], 7
      %v9225 = vld [vmem:[%s9224] ss:$2 sm:$0xff]
      %s9226 = scalar_lea.vmem [#allocation3], 39
      %v9227 = vld [vmem:[%s9226] ss:$2 sm:$0xff]
      %s9228 = scalar_lea.vmem [#allocation3], 71
      %v9229 = vld [vmem:[%s9228] ss:$2 sm:$0xff]
      %s9230 = scalar_lea.vmem [#allocation3], 103
      %v9231 = vld [vmem:[%s9230] ss:$2 sm:$0xff]
      %s9232 = scalar_lea.vmem [#allocation3], 135
      %v9233 = vld [vmem:[%s9232] ss:$2 sm:$0xff]
      %s9234 = scalar_lea.vmem [#allocation3], 167
      %v9235 = vld [vmem:[%s9234] ss:$2 sm:$0xff]
      %s9236 = scalar_lea.vmem [#allocation3], 199
      %v9237 = vld [vmem:[%s9236] ss:$2 sm:$0xff]
      %s9238 = scalar_lea.vmem [#allocation3], 231
      %v9239 = vld [vmem:[%s9238] ss:$2 sm:$0xff]
      %s9240 = scalar_lea.vmem [#allocation3], 263
      %v9241 = vld [vmem:[%s9240] ss:$2 sm:$0xff]
      %s9242 = scalar_lea.vmem [#allocation3], 295
      %v9243 = vld [vmem:[%s9242] ss:$2 sm:$0xff]
      %s9244 = scalar_lea.vmem [#allocation3], 327
      %v9245 = vld [vmem:[%s9244] ss:$2 sm:$0xff]
      %s9246 = scalar_lea.vmem [#allocation3], 359
      %v9247 = vld [vmem:[%s9246] ss:$2 sm:$0xff]
      %s9248 = scalar_lea.vmem [#allocation3], 391
      %v9249 = vld [vmem:[%s9248] ss:$2 sm:$0xff]
      %s9250 = scalar_lea.vmem [#allocation3], 423
      %v9251 = vld [vmem:[%s9250] ss:$2 sm:$0xff]
      %s9252 = scalar_lea.vmem [#allocation3], 455
      %v9253 = vld [vmem:[%s9252] ss:$2 sm:$0xff]
      %s9254 = scalar_lea.vmem [#allocation3], 487
      %v9255 = vld [vmem:[%s9254] ss:$2 sm:$0xff]
      %s9256 = scalar_lea.vmem [#allocation3], 519
      %v9257 = vld [vmem:[%s9256] ss:$2 sm:$0xff]
      %s9258 = scalar_lea.vmem [#allocation3], 8
      %v9259 = vld [vmem:[%s9258] ss:$2 sm:$0xff]
      %s9260 = scalar_lea.vmem [#allocation3], 40
      %v9261 = vld [vmem:[%s9260] ss:$2 sm:$0xff]
      %s9262 = scalar_lea.vmem [#allocation3], 72
      %v9263 = vld [vmem:[%s9262] ss:$2 sm:$0xff]
      %s9264 = scalar_lea.vmem [#allocation3], 104
      %v9265 = vld [vmem:[%s9264] ss:$2 sm:$0xff]
      %s9266 = scalar_lea.vmem [#allocation3], 136
      %v9267 = vld [vmem:[%s9266] ss:$2 sm:$0xff]
      %s9268 = scalar_lea.vmem [#allocation3], 168
      %v9269 = vld [vmem:[%s9268] ss:$2 sm:$0xff]
      %s9270 = scalar_lea.vmem [#allocation3], 200
      %v9271 = vld [vmem:[%s9270] ss:$2 sm:$0xff]
      %s9272 = scalar_lea.vmem [#allocation3], 232
      %v9273 = vld [vmem:[%s9272] ss:$2 sm:$0xff]
      %s9274 = scalar_lea.vmem [#allocation3], 264
      %v9275 = vld [vmem:[%s9274] ss:$2 sm:$0xff]
      %s9276 = scalar_lea.vmem [#allocation3], 296
      %v9277 = vld [vmem:[%s9276] ss:$2 sm:$0xff]
      %s9278 = scalar_lea.vmem [#allocation3], 328
      %v9279 = vld [vmem:[%s9278] ss:$2 sm:$0xff]
      %s9280 = scalar_lea.vmem [#allocation3], 360
      %v9281 = vld [vmem:[%s9280] ss:$2 sm:$0xff]
      %s9282 = scalar_lea.vmem [#allocation3], 392
      %v9283 = vld [vmem:[%s9282] ss:$2 sm:$0xff]
      %s9284 = scalar_lea.vmem [#allocation3], 424
      %v9285 = vld [vmem:[%s9284] ss:$2 sm:$0xff]
      %s9286 = scalar_lea.vmem [#allocation3], 456
      %v9287 = vld [vmem:[%s9286] ss:$2 sm:$0xff]
      %s9288 = scalar_lea.vmem [#allocation3], 488
      %v9289 = vld [vmem:[%s9288] ss:$2 sm:$0xff]
      %s9290 = scalar_lea.vmem [#allocation3], 520
      %v9291 = vld [vmem:[%s9290] ss:$2 sm:$0xff]
      %v9292 = vmax.f32 %v9225, %v9259
      %v9293 = vmax.f32 %v9227, %v9261
      %v9294 = vmax.f32 %v9229, %v9263
      %v9295 = vmax.f32 %v9231, %v9265
      %v9296 = vmax.f32 %v9233, %v9267
      %v9297 = vmax.f32 %v9235, %v9269
      %v9298 = vmax.f32 %v9237, %v9271
      %v9299 = vmax.f32 %v9239, %v9273
      %v9300 = vmax.f32 %v9241, %v9275
      %v9301 = vmax.f32 %v9243, %v9277
      %v9302 = vmax.f32 %v9245, %v9279
      %v9303 = vmax.f32 %v9247, %v9281
      %v9304 = vmax.f32 %v9249, %v9283
      %v9305 = vmax.f32 %v9251, %v9285
      %v9306 = vmax.f32 %v9253, %v9287
      %v9307 = vmax.f32 %v9255, %v9289
      %v9308 = vmax.f32 %v9257, %v9291
      %s9309 = scalar_lea.vmem [#allocation3], 9
      %v9310 = vld [vmem:[%s9309] ss:$2 sm:$0xff]
      %s9311 = scalar_lea.vmem [#allocation3], 41
      %v9312 = vld [vmem:[%s9311] ss:$2 sm:$0xff]
      %s9313 = scalar_lea.vmem [#allocation3], 73
      %v9314 = vld [vmem:[%s9313] ss:$2 sm:$0xff]
      %s9315 = scalar_lea.vmem [#allocation3], 105
      %v9316 = vld [vmem:[%s9315] ss:$2 sm:$0xff]
      %s9317 = scalar_lea.vmem [#allocation3], 137
      %v9318 = vld [vmem:[%s9317] ss:$2 sm:$0xff]
      %s9319 = scalar_lea.vmem [#allocation3], 169
      %v9320 = vld [vmem:[%s9319] ss:$2 sm:$0xff]
      %s9321 = scalar_lea.vmem [#allocation3], 201
      %v9322 = vld [vmem:[%s9321] ss:$2 sm:$0xff]
      %s9323 = scalar_lea.vmem [#allocation3], 233
      %v9324 = vld [vmem:[%s9323] ss:$2 sm:$0xff]
      %s9325 = scalar_lea.vmem [#allocation3], 265
      %v9326 = vld [vmem:[%s9325] ss:$2 sm:$0xff]
      %s9327 = scalar_lea.vmem [#allocation3], 297
      %v9328 = vld [vmem:[%s9327] ss:$2 sm:$0xff]
      %s9329 = scalar_lea.vmem [#allocation3], 329
      %v9330 = vld [vmem:[%s9329] ss:$2 sm:$0xff]
      %s9331 = scalar_lea.vmem [#allocation3], 361
      %v9332 = vld [vmem:[%s9331] ss:$2 sm:$0xff]
      %s9333 = scalar_lea.vmem [#allocation3], 393
      %v9334 = vld [vmem:[%s9333] ss:$2 sm:$0xff]
      %s9335 = scalar_lea.vmem [#allocation3], 425
      %v9336 = vld [vmem:[%s9335] ss:$2 sm:$0xff]
      %s9337 = scalar_lea.vmem [#allocation3], 457
      %v9338 = vld [vmem:[%s9337] ss:$2 sm:$0xff]
      %s9339 = scalar_lea.vmem [#allocation3], 489
      %v9340 = vld [vmem:[%s9339] ss:$2 sm:$0xff]
      %s9341 = scalar_lea.vmem [#allocation3], 521
      %v9342 = vld [vmem:[%s9341] ss:$2 sm:$0xff]
      %v9343 = vmax.f32 %v9292, %v9310
      %v9344 = vmax.f32 %v9293, %v9312
      %v9345 = vmax.f32 %v9294, %v9314
      %v9346 = vmax.f32 %v9295, %v9316
      %v9347 = vmax.f32 %v9296, %v9318
      %v9348 = vmax.f32 %v9297, %v9320
      %v9349 = vmax.f32 %v9298, %v9322
      %v9350 = vmax.f32 %v9299, %v9324
      %v9351 = vmax.f32 %v9300, %v9326
      %v9352 = vmax.f32 %v9301, %v9328
      %v9353 = vmax.f32 %v9302, %v9330
      %v9354 = vmax.f32 %v9303, %v9332
      %v9355 = vmax.f32 %v9304, %v9334
      %v9356 = vmax.f32 %v9305, %v9336
      %v9357 = vmax.f32 %v9306, %v9338
      %v9358 = vmax.f32 %v9307, %v9340
      %v9359 = vmax.f32 %v9308, %v9342
      %v9360 = vmax.f32 %v9343, %v9344
      %v9361 = vmax.f32 %v9345, %v9346
      %v9362 = vmax.f32 %v9347, %v9348
      %v9363 = vmax.f32 %v9349, %v9350
      %v9364 = vmax.f32 %v9351, %v9352
      %v9365 = vmax.f32 %v9353, %v9354
      %v9366 = vmax.f32 %v9355, %v9356
      %v9367 = vmax.f32 %v9357, %v9358
      %v9368 = vmax.f32 %v9360, %v9345
      %v9369 = vmax.f32 %v9361, %v9347
      %v9370 = vmax.f32 %v9362, %v9349
      %v9371 = vmax.f32 %v9363, %v9351
      %v9372 = vmax.f32 %v9364, %v9353
      %v9373 = vmax.f32 %v9365, %v9355
      %v9374 = vmax.f32 %v9366, %v9357
      %v9375 = vmax.f32 %v9367, %v9359
      %vm9376 = vcmp.gt.f32.partialorder %v9368, 0.0
      %vm9377 = vcmp.gt.f32.partialorder %v9369, 0.0
      %vm9378 = vcmp.gt.f32.partialorder %v9370, 0.0
      %vm9379 = vcmp.gt.f32.partialorder %v9371, 0.0
      %vm9380 = vcmp.gt.f32.partialorder %v9372, 0.0
      %vm9381 = vcmp.gt.f32.partialorder %v9373, 0.0
      %vm9382 = vcmp.gt.f32.partialorder %v9374, 0.0
      %vm9383 = vcmp.gt.f32.partialorder %v9375, 0.0
      %v9384 = vmul.f32 %v9368, 0.1
      %v9385 = vmul.f32 %v9369, 0.1
      %v9386 = vmul.f32 %v9370, 0.1
      %v9387 = vmul.f32 %v9371, 0.1
      %v9388 = vmul.f32 %v9372, 0.1
      %v9389 = vmul.f32 %v9373, 0.1
      %v9390 = vmul.f32 %v9374, 0.1
      %v9391 = vmul.f32 %v9375, 0.1
      %v9392 = vsel %vm9376, %v9368, %v9384
      %v9393 = vsel %vm9377, %v9369, %v9385
      %v9394 = vsel %vm9378, %v9370, %v9386
      %v9395 = vsel %vm9379, %v9371, %v9387
      %v9396 = vsel %vm9380, %v9372, %v9388
      %v9397 = vsel %vm9381, %v9373, %v9389
      %v9398 = vsel %vm9382, %v9374, %v9390
      %v9399 = vsel %vm9383, %v9375, %v9391
      %v9400 = vcombine.low %v9392, %v9394
      %v9401 = vcombine.high %v9392, %v9394
      %v9403 = vunpack.c.l.s4 1983009808
      %v9404 = vunpack.c.0.s8 %v9403
      %v9405 = vlaneseq
      %v9406 = vshrl.u32 %v9405, 7
      %v9407 = vsub.s32 %v9404, %v9406
      %v9408 = vrot.slane %v9400, %v9407
      %v9410 = vunpack.c.l.s4 1983009808
      %v9411 = vunpack.c.0.s8 %v9410
      %v9412 = vlaneseq
      %v9413 = vshrl.u32 %v9412, 7
      %v9414 = vsub.s32 %v9411, %v9413
      %v9415 = vrot.slane %v9401, %v9414
      %v9416 = vcombine.low %v9393, %v9395
      %v9417 = vcombine.high %v9393, %v9395
      %v9419 = vunpack.c.l.s4 1983009808
      %v9420 = vunpack.c.0.s8 %v9419
      %v9421 = vlaneseq
      %v9422 = vshrl.u32 %v9421, 7
      %v9423 = vsub.s32 %v9420, %v9422
      %v9424 = vrot.slane %v9416, %v9423
      %v9426 = vunpack.c.l.s4 1983009808
      %v9427 = vunpack.c.0.s8 %v9426
      %v9428 = vlaneseq
      %v9429 = vshrl.u32 %v9428, 7
      %v9430 = vsub.s32 %v9427, %v9429
      %v9431 = vrot.slane %v9417, %v9430
      %v9432 = vcombine.low %v9396, %v9398
      %v9433 = vcombine.high %v9396, %v9398
      %v9435 = vunpack.c.l.s4 1983009808
      %v9436 = vunpack.c.0.s8 %v9435
      %v9437 = vlaneseq
      %v9438 = vshrl.u32 %v9437, 7
      %v9439 = vsub.s32 %v9436, %v9438
      %v9440 = vrot.slane %v9432, %v9439
      %v9442 = vunpack.c.l.s4 1983009808
      %v9443 = vunpack.c.0.s8 %v9442
      %v9444 = vlaneseq
      %v9445 = vshrl.u32 %v9444, 7
      %v9446 = vsub.s32 %v9443, %v9445
      %v9447 = vrot.slane %v9433, %v9446
      %v9448 = vcombine.low %v9397, %v9399
      %v9449 = vcombine.high %v9397, %v9399
      %v9451 = vunpack.c.l.s4 1983009808
      %v9452 = vunpack.c.0.s8 %v9451
      %v9453 = vlaneseq
      %v9454 = vshrl.u32 %v9453, 7
      %v9455 = vsub.s32 %v9452, %v9454
      %v9456 = vrot.slane %v9448, %v9455
      %v9458 = vunpack.c.l.s4 1983009808
      %v9459 = vunpack.c.0.s8 %v9458
      %v9460 = vlaneseq
      %v9461 = vshrl.u32 %v9460, 7
      %v9462 = vsub.s32 %v9459, %v9461
      %v9463 = vrot.slane %v9449, %v9462
      %v9464 = vcombine.low %v9408, %v9424
      %v9465 = vcombine.high %v9408, %v9424
      %v9467 = vunpack.c.l.s4 1934713408
      %v9468 = vunpack.c.0.s8 %v9467
      %v9469 = vlaneseq
      %v9470 = vshrl.u32 %v9469, 7
      %v9471 = vsub.s32 %v9468, %v9470
      %v9472 = vrot.slane %v9464, %v9471
      %v9474 = vunpack.c.l.s4 1934713408
      %v9475 = vunpack.c.0.s8 %v9474
      %v9476 = vlaneseq
      %v9477 = vshrl.u32 %v9476, 7
      %v9478 = vsub.s32 %v9475, %v9477
      %v9479 = vrot.slane %v9465, %v9478
      %v9480 = vcombine.low %v9415, %v9431
      %v9481 = vcombine.high %v9415, %v9431
      %v9483 = vunpack.c.l.s4 1934713408
      %v9484 = vunpack.c.0.s8 %v9483
      %v9485 = vlaneseq
      %v9486 = vshrl.u32 %v9485, 7
      %v9487 = vsub.s32 %v9484, %v9486
      %v9488 = vrot.slane %v9480, %v9487
      %v9490 = vunpack.c.l.s4 1934713408
      %v9491 = vunpack.c.0.s8 %v9490
      %v9492 = vlaneseq
      %v9493 = vshrl.u32 %v9492, 7
      %v9494 = vsub.s32 %v9491, %v9493
      %v9495 = vrot.slane %v9481, %v9494
      %v9496 = vcombine.low %v9440, %v9456
      %v9497 = vcombine.high %v9440, %v9456
      %v9499 = vunpack.c.l.s4 1934713408
      %v9500 = vunpack.c.0.s8 %v9499
      %v9501 = vlaneseq
      %v9502 = vshrl.u32 %v9501, 7
      %v9503 = vsub.s32 %v9500, %v9502
      %v9504 = vrot.slane %v9496, %v9503
      %v9506 = vunpack.c.l.s4 1934713408
      %v9507 = vunpack.c.0.s8 %v9506
      %v9508 = vlaneseq
      %v9509 = vshrl.u32 %v9508, 7
      %v9510 = vsub.s32 %v9507, %v9509
      %v9511 = vrot.slane %v9497, %v9510
      %v9512 = vcombine.low %v9447, %v9463
      %v9513 = vcombine.high %v9447, %v9463
      %v9515 = vunpack.c.l.s4 1934713408
      %v9516 = vunpack.c.0.s8 %v9515
      %v9517 = vlaneseq
      %v9518 = vshrl.u32 %v9517, 7
      %v9519 = vsub.s32 %v9516, %v9518
      %v9520 = vrot.slane %v9512, %v9519
      %v9522 = vunpack.c.l.s4 1934713408
      %v9523 = vunpack.c.0.s8 %v9522
      %v9524 = vlaneseq
      %v9525 = vshrl.u32 %v9524, 7
      %v9526 = vsub.s32 %v9523, %v9525
      %v9527 = vrot.slane %v9513, %v9526
      %v9528 = vcombine.low %v9472, %v9504
      %v9529 = vcombine.high %v9472, %v9504
      %v9530 = vcombine.low %v9479, %v9511
      %v9531 = vcombine.high %v9479, %v9511
      %v9532 = vcombine.low %v9488, %v9520
      %v9533 = vcombine.high %v9488, %v9520
      %v9534 = vcombine.low %v9495, %v9527
      %v9535 = vcombine.high %v9495, %v9527
      %9537 = vrot.lane.b32.xlu0 %v9529, 8
      %v9538 = vpop.permute.xlu0 %9537
      %9541 = vrot.lane.b32.xlu0 %v9530, 16
      %v9542 = vpop.permute.xlu0 %9541
      %9545 = vrot.lane.b32.xlu0 %v9531, 24
      %v9546 = vpop.permute.xlu0 %9545
      %9549 = vrot.lane.b32.xlu0 %v9532, 32
      %v9550 = vpop.permute.xlu0 %9549
      %9553 = vrot.lane.b32.xlu0 %v9533, 40
      %v9554 = vpop.permute.xlu0 %9553
      %9557 = vrot.lane.b32.xlu0 %v9534, 48
      %v9558 = vpop.permute.xlu0 %9557
      %9561 = vrot.lane.b32.xlu0 %v9535, 56
      %v9562 = vpop.permute.xlu0 %9561
      %v9564 = vsel %vm393, %v9528, %v9538
      %v9565 = vsel %vm2428, %v9564, %v9542
      %v9566 = vsel %vm2542, %v9565, %v9546
      %v9567 = vsel %vm2656, %v9566, %v9550
      %v9568 = vsel %vm5363, %v9567, %v9554
      %v9569 = vsel %vm5428, %v9568, %v9558
      %v9570 = vsel %vm5493, %v9569, %v9562
      %9571 = vst.msk [vmem:[%s276] sm:$0xff] %vm5542, %v9570
      %p9572 = scmp.lt.s32.totalorder %s18, 1
      %s9573 = scalar_select %p9572, %s18, 1
      %s9574 = smul.addr %s9573, 8
      %s9575 = scalar_lea.vmem %s7, %s9574
      // Predicated region
      $region49: #{residual_block_forward.1} parent=47 // pred_check
        %p9576 = pneg %p188
      $region50: #{residual_block_forward.1} parent=47 // pred_check_branch
        %9578 = sbr.rel (%p9576) target = $region52
      $region51: #{residual_block_forward.1} parent=47 // pred_region
        _
      $region52: #{residual_block_forward.1} parent=47 // pred_fallthru
        _
    $region48: #{residual_block_forward.1} parent=5 // pred_fallthru
      _
    %p9579 = scmp.le.s32.totalorder 2, %s13
    // Predicated region
    $region53: #{residual_block_forward.1} parent=5 // pred_check
      %p9580 = pneg %p9579
    $region54: #{residual_block_forward.1} parent=5 // pred_check_branch
      %9582 = sbr.rel (%p9580) target = $region56
    $region55: #{residual_block_forward.1} parent=5 // pred_region
      %s9583 = ssub.s32 %s13, 2
      // Predicated region
      $region57: #{residual_block_forward.1} parent=55 // pred_check
        %p9584 = pneg %p194
      $region58: #{residual_block_forward.1} parent=55 // pred_check_branch
        %9586 = sbr.rel (%p9584) target = $region60
      $region59: #{residual_block_forward.1} parent=55 // pred_region
        %p9587 = scmp.lt.s32.totalorder %s19, 1
        %s9588 = scalar_select %p9587, %s19, 1
        %s9589 = smul.addr %s9588, 8
        %s9590 = scalar_lea.vmem %s7, %s9589
      $region60: #{residual_block_forward.1} parent=55 // pred_fallthru
        _
    $region56: #{residual_block_forward.1} parent=5 // pred_fallthru
      _
  $region6: #{residual_block_forward.1} parent=0 // loop_footer
    %s17 = sadd.s32 1, %s13
  $region7: #{residual_block_forward.1} parent=0 // loop_footer_branch
    %12 = sbr.rel target = $region3
  $region8: #{residual_block_forward.1} parent=0 // loop_exit
    _

</llo_original>
